<compile_context>
chip_gen: v7x
topology: tpu7x:2x2x1
jax: 0.10.0
libtpu: 0.0.40
codegen_flags: <defaults>
</compile_context>

<pallas_src>
import jax
import jax.numpy as jnp
from jax import lax
from jax.experimental import pallas as pl
from jax.experimental.pallas import tpu as pltpu

EPS = 1e-5           # nn.InstanceNorm2d default eps
NEG_SLOPE = 0.01     # nn.LeakyReLU default negative_slope


# ---------------------------------------------------------------------------
# Kernel factory (shapes / dtypes are static, baked in at trace time)
# ---------------------------------------------------------------------------
def _make_residual_block_kernel(H, W, C, use_im2col, conv_dtype):
    def kernel(x_ref, w1_ref, b1_ref, w2_ref, b2_ref, o_ref, pad_ref):
        # pad_ref: (H+2, W+2, C) f32 VMEM scratch, reused for both convs.

        def fill_reflect_pad(src):
            # src: (H, W, C) f32 value.  Interior first, then 4 halo strips.
            pad_ref[1:H + 1, 1:W + 1, :] = src
            pad_ref[0:1, 1:W + 1, :] = pad_ref[2:3, 1:W + 1, :]              # top
            pad_ref[H + 1:H + 2, 1:W + 1, :] = pad_ref[H - 1:H, 1:W + 1, :]  # bottom
            pad_ref[:, 0:1, :] = pad_ref[:, 2:3, :]                          # left  (+corners)
            pad_ref[:, W + 1:W + 2, :] = pad_ref[:, W - 1:W, :]              # right (+corners)

        def conv3x3(w_ref_, b_ref_):
            bias = b_ref_[...].reshape(1, 1, C)                # f32
            if use_im2col:
                # Single MXU contraction with K = 9*C (lane-aligned concat).
                cols = [pad_ref[kh:kh + H, kw:kw + W, :].astype(conv_dtype)
                        for kh in range(3) for kw in range(3)]
                patches = jnp.concatenate(cols, axis=-1).reshape(H * W, 9 * C)
                acc = jnp.dot(patches, w_ref_[...].reshape(9 * C, C),
                              preferred_element_type=jnp.float32)
            else:
                # Small-C fallback: 9 accumulated dots (K = C).
                acc = jnp.zeros((H * W, C), jnp.float32)
                for kh in range(3):
                    for kw in range(3):
                        patch = pad_ref[kh:kh + H, kw:kw + W, :].astype(conv_dtype)
                        acc = acc + jnp.dot(patch.reshape(H * W, C),
                                            w_ref_[kh * 3 + kw],
                                            preferred_element_type=jnp.float32)
            return acc.reshape(H, W, C) + bias

        def instance_norm(y):
            mean = jnp.mean(y, axis=(0, 1), keepdims=True)
            centered = y - mean
            var = jnp.mean(centered * centered, axis=(0, 1), keepdims=True)
            return centered * lax.rsqrt(var + EPS)

        fill_reflect_pad(x_ref[0].astype(jnp.float32))
        y = conv3x3(w1_ref, b1_ref)
        y = instance_norm(y)
        y = jnp.where(y > 0, y, NEG_SLOPE * y)          # LeakyReLU(0.01)
        fill_reflect_pad(y)
        y = conv3x3(w2_ref, b2_ref)
        y = instance_norm(y)
        # Residual add: re-read x lazily from the VMEM-resident input block.
        o_ref[0] = (x_ref[0].astype(jnp.float32) + y).astype(o_ref.dtype)

    return kernel


# ---------------------------------------------------------------------------
# NHWC entry point (no layout transposes)
# ---------------------------------------------------------------------------
def residual_block_nhwc(x_nhwc, w1_kkio, b1, w2_kkio, b2, *,
                        conv_dtype=jnp.bfloat16,
                        vmem_limit_bytes=48 * 1024 * 1024):
    """x_nhwc: (N, H, W, C); w*_kkio: (3, 3, Cin, Cout); b*: (C,)."""
    N, H, W, C = x_nhwc.shape
    assert H >= 2 and W >= 2, "ReflectionPad2d(1) needs H, W >= 2"
    # NOTE: this channels-on-lanes layout is intended for C >= 128 (typical
    # style-transfer residual block).  For small C most lanes are idle.
    # TODO(synk): for small C a W*C-on-lanes layout with a VPU conv would be
    # lane-dense; not implemented here.
    # TODO(synk): for N == 1 on v7x, add a second parallel grid axis (split H
    # with a halo and a two-pass instance norm) so both TensorCores are used.
    use_im2col = (C % 128 == 0)

    w1_r = jnp.reshape(w1_kkio, (9, C, C)).astype(conv_dtype)
    w2_r = jnp.reshape(w2_kkio, (9, C, C)).astype(conv_dtype)
    b1_r = jnp.reshape(b1, (1, C)).astype(jnp.float32)
    b2_r = jnp.reshape(b2, (1, C)).astype(jnp.float32)

    kernel = _make_residual_block_kernel(H, W, C, use_im2col, conv_dtype)

    return pl.pallas_call(
        kernel,
        out_shape=jax.ShapeDtypeStruct((N, H, W, C), x_nhwc.dtype),
        grid_spec=pltpu.PrefetchScalarGridSpec(
            num_scalar_prefetch=0,
            grid=(N,),
            in_specs=[
                pl.BlockSpec((1, H, W, C), lambda n: (n, 0, 0, 0)),
                pl.BlockSpec((9, C, C), lambda n: (0, 0, 0)),
                pl.BlockSpec((1, C), lambda n: (0, 0)),
                pl.BlockSpec((9, C, C), lambda n: (0, 0, 0)),
                pl.BlockSpec((1, C), lambda n: (0, 0)),
            ],
            out_specs=pl.BlockSpec((1, H, W, C), lambda n: (n, 0, 0, 0)),
            scratch_shapes=[pltpu.VMEM((H + 2, W + 2, C), jnp.float32)],
        ),
        compiler_params=pltpu.CompilerParams(
            dimension_semantics=("parallel",),
            vmem_limit_bytes=vmem_limit_bytes),
    )(x_nhwc, w1_r, b1_r, w2_r, b2_r)


# ---------------------------------------------------------------------------
# PyTorch-layout wrapper (NCHW in/out, OIHW weights)
# ---------------------------------------------------------------------------
def residual_block(x_nchw, w1_oihw, b1, w2_oihw, b2, *, conv_dtype=jnp.bfloat16):
    # TODO(synk): these two transposes are full extra HBM passes; callers that
    # already hold NHWC activations should call residual_block_nhwc directly.
    x_nhwc = jnp.transpose(x_nchw, (0, 2, 3, 1))
    w1 = jnp.transpose(w1_oihw, (2, 3, 1, 0))           # OIHW -> (kh, kw, Cin, Cout)
    w2 = jnp.transpose(w2_oihw, (2, 3, 1, 0))
    out_nhwc = residual_block_nhwc(x_nhwc, w1, b1, w2, b2, conv_dtype=conv_dtype)
    return jnp.transpose(out_nhwc, (0, 3, 1, 2))


# ---------------------------------------------------------------------------
# Pure-JAX reference (NCHW) — conv_dtype controls the matmul operand dtype
# ---------------------------------------------------------------------------
def reference_forward(x, w1, b1, w2, b2, conv_dtype=jnp.float32):
    def conv(z, w, b):
        zp = jnp.pad(z, ((0, 0), (0, 0), (1, 1), (1, 1)), mode="reflect")
        y = lax.conv_general_dilated(
            zp.astype(conv_dtype), w.astype(conv_dtype),
            window_strides=(1, 1), padding="VALID",
            dimension_numbers=("NCHW", "OIHW", "NCHW"),
            preferred_element_type=jnp.float32)
        return y + b[None, :, None, None]

    def inorm(z):
        m = jnp.mean(z, axis=(2, 3), keepdims=True)
        c = z - m
        v = jnp.mean(c * c, axis=(2, 3), keepdims=True)
        return c / jnp.sqrt(v + EPS)

    y = conv(x, w1, b1)
    y = inorm(y)
    y = jnp.where(y > 0, y, NEG_SLOPE * y)
    y = conv(y, w2, b2)
    y = inorm(y)
    return x + y


if __name__ == "__main__":
    key = jax.random.PRNGKey(0)

    def make_params(k, C):
        k1, k2, k3, k4 = jax.random.split(k, 4)
        w1 = 0.1 * jax.random.normal(k1, (C, C, 3, 3), jnp.float32)
        b1 = 0.1 * jax.random.normal(k2, (C,), jnp.float32)
        w2 = 0.1 * jax.random.normal(k3, (C, C, 3, 3), jnp.float32)
        b2 = 0.1 * jax.random.normal(k4, (C,), jnp.float32)
        return w1, b1, w2, b2

    # --- Case 1: small channels (C=4): per-tap MXU path --------------------
    k_x, k_p, key = jax.random.split(key, 3)
    N, C, H, W = 2, 4, 16, 16
    x = jax.random.normal(k_x, (N, C, H, W), dtype=jnp.float32)
    w1, b1, w2, b2 = make_params(k_p, C)

    out_f32 = jax.block_until_ready(
        residual_block(x, w1, b1, w2, b2, conv_dtype=jnp.float32))
    ref_f32 = reference_forward(x, w1, b1, w2, b2, conv_dtype=jnp.float32)
    assert out_f32.shape == (N, C, H, W)
    assert jnp.allclose(out_f32, ref_f32, atol=1e-4, rtol=1e-4), "f32 mismatch"

    out_bf16 = jax.block_until_ready(
        residual_block(x, w1, b1, w2, b2, conv_dtype=jnp.bfloat16))
    ref_bf16 = reference_forward(x, w1, b1, w2, b2, conv_dtype=jnp.bfloat16)
    assert jnp.allclose(out_bf16, ref_bf16, atol=1e-2, rtol=1e-2), "bf16 mismatch"

    # --- Case 2: lane-dense channels (C=128): single im2col dot, K = 9*C ---
    k_x2, k_p2, key = jax.random.split(key, 3)
    N2, C2, H2, W2 = 1, 128, 8, 8
    x2 = jax.random.normal(k_x2, (N2, C2, H2, W2), dtype=jnp.float32)
    p2 = make_params(k_p2, C2)
    out2 = jax.block_until_ready(residual_block(x2, *p2, conv_dtype=jnp.bfloat16))
    ref2 = reference_forward(x2, *p2, conv_dtype=jnp.bfloat16)
    assert out2.shape == (N2, C2, H2, W2)
    assert jnp.allclose(out2, ref2, atol=1e-2, rtol=1e-2), "C=128 mismatch"

    print("KERNEL_OK")
</pallas_src>

<mosaic_0001>
module attributes {stable_mosaic.version = 11 : i64} {
  func.func @kernel(%arg0: i32, %arg1: memref<1x16x16x4xf32, #tpu.memory_space<vmem>>, %arg2: memref<9x4x4xf32, #tpu.memory_space<vmem>>, %arg3: memref<1x4xf32, #tpu.memory_space<vmem>>, %arg4: memref<9x4x4xf32, #tpu.memory_space<vmem>>, %arg5: memref<1x4xf32, #tpu.memory_space<vmem>>, %arg6: memref<1x16x16x4xf32, #tpu.memory_space<vmem>>, %arg7: memref<18x18x4xf32, #tpu.memory_space<vmem>>) attributes {dimension_semantics = [#tpu.dimension_semantics<parallel>], iteration_bounds = array<i64: 2>, scalar_prefetch = 0 : i64, scratch_operands = 1 : i64, tpu.core_type = #tpu.core_type<tc>, window_params = [{transform_indices = @transform_0, window_bounds = array<i64: 1, 16, 16, 4>}, {pipeline_mode = #tpu.pipeline_mode<synchronous>, transform_indices = @transform_1, window_bounds = array<i64: 9, 4, 4>}, {pipeline_mode = #tpu.pipeline_mode<synchronous>, transform_indices = @transform_2, window_bounds = array<i64: 1, 4>}, {pipeline_mode = #tpu.pipeline_mode<synchronous>, transform_indices = @transform_3, window_bounds = array<i64: 9, 4, 4>}, {pipeline_mode = #tpu.pipeline_mode<synchronous>, transform_indices = @transform_4, window_bounds = array<i64: 1, 4>}, {transform_indices = @transform_5, window_bounds = array<i64: 1, 16, 16, 4>}]} {
    %c0 = arith.constant 0 : index
    %c0_0 = arith.constant 0 : index
    %c0_1 = arith.constant 0 : index
    %c0_2 = arith.constant 0 : index
    %0 = vector.load %arg1[%c0, %c0_0, %c0_1, %c0_2] : memref<1x16x16x4xf32, #tpu.memory_space<vmem>>, vector<1x16x16x4xf32>
    %1 = vector.shape_cast %0 : vector<1x16x16x4xf32> to vector<16x16x4xf32>
    %c1 = arith.constant 1 : index
    %c1_3 = arith.constant 1 : index
    %c0_4 = arith.constant 0 : index
    %2 = vector.load %arg7[%c1, %c1_3, %c0_4] : memref<18x18x4xf32, #tpu.memory_space<vmem>>, vector<16x16x4xf32>
    tpu.vector_store %arg7[%c1, %c1_3, %c0_4], %1 {strides = array<i32>} : memref<18x18x4xf32, #tpu.memory_space<vmem>>, vector<16x16x4xf32>,
    %c2 = arith.constant 2 : index
    %c1_5 = arith.constant 1 : index
    %c0_6 = arith.constant 0 : index
    %3 = vector.load %arg7[%c2, %c1_5, %c0_6] : memref<18x18x4xf32, #tpu.memory_space<vmem>>, vector<1x16x4xf32>
    %c0_7 = arith.constant 0 : index
    %c1_8 = arith.constant 1 : index
    %c0_9 = arith.constant 0 : index
    %4 = vector.load %arg7[%c0_7, %c1_8, %c0_9] : memref<18x18x4xf32, #tpu.memory_space<vmem>>, vector<1x16x4xf32>
    tpu.vector_store %arg7[%c0_7, %c1_8, %c0_9], %3 {strides = array<i32>} : memref<18x18x4xf32, #tpu.memory_space<vmem>>, vector<1x16x4xf32>,
    %c15 = arith.constant 15 : index
    %c1_10 = arith.constant 1 : index
    %c0_11 = arith.constant 0 : index
    %5 = vector.load %arg7[%c15, %c1_10, %c0_11] : memref<18x18x4xf32, #tpu.memory_space<vmem>>, vector<1x16x4xf32>
    %c17 = arith.constant 17 : index
    %c1_12 = arith.constant 1 : index
    %c0_13 = arith.constant 0 : index
    %6 = vector.load %arg7[%c17, %c1_12, %c0_13] : memref<18x18x4xf32, #tpu.memory_space<vmem>>, vector<1x16x4xf32>
    tpu.vector_store %arg7[%c17, %c1_12, %c0_13], %5 {strides = array<i32>} : memref<18x18x4xf32, #tpu.memory_space<vmem>>, vector<1x16x4xf32>,
    %c0_14 = arith.constant 0 : index
    %c2_15 = arith.constant 2 : index
    %c0_16 = arith.constant 0 : index
    %7 = vector.load %arg7[%c0_14, %c2_15, %c0_16] : memref<18x18x4xf32, #tpu.memory_space<vmem>>, vector<18x1x4xf32>
    %c0_17 = arith.constant 0 : index
    %c0_18 = arith.constant 0 : index
    %c0_19 = arith.constant 0 : index
    %8 = vector.load %arg7[%c0_17, %c0_18, %c0_19] : memref<18x18x4xf32, #tpu.memory_space<vmem>>, vector<18x1x4xf32>
    tpu.vector_store %arg7[%c0_17, %c0_18, %c0_19], %7 {strides = array<i32>} : memref<18x18x4xf32, #tpu.memory_space<vmem>>, vector<18x1x4xf32>,
    %c0_20 = arith.constant 0 : index
    %c15_21 = arith.constant 15 : index
    %c0_22 = arith.constant 0 : index
    %9 = vector.load %arg7[%c0_20, %c15_21, %c0_22] : memref<18x18x4xf32, #tpu.memory_space<vmem>>, vector<18x1x4xf32>
    %c0_23 = arith.constant 0 : index
    %c17_24 = arith.constant 17 : index
    %c0_25 = arith.constant 0 : index
    %10 = vector.load %arg7[%c0_23, %c17_24, %c0_25] : memref<18x18x4xf32, #tpu.memory_space<vmem>>, vector<18x1x4xf32>
    tpu.vector_store %arg7[%c0_23, %c17_24, %c0_25], %9 {strides = array<i32>} : memref<18x18x4xf32, #tpu.memory_space<vmem>>, vector<18x1x4xf32>,
    %c0_26 = arith.constant 0 : index
    %c0_27 = arith.constant 0 : index
    %11 = vector.load %arg3[%c0_26, %c0_27] : memref<1x4xf32, #tpu.memory_space<vmem>>, vector<1x4xf32>
    %12 = vector.shape_cast %11 : vector<1x4xf32> to vector<1x1x4xf32>
    %cst = arith.constant 0.000000e+00 : f32
    %13 = vector.broadcast %cst : f32 to vector<256x4xf32>
    %c0_28 = arith.constant 0 : index
    %c0_29 = arith.constant 0 : index
    %c0_30 = arith.constant 0 : index
    %14 = vector.load %arg7[%c0_28, %c0_29, %c0_30] : memref<18x18x4xf32, #tpu.memory_space<vmem>>, vector<16x16x4xf32>
    %15 = vector.shape_cast %14 : vector<16x16x4xf32> to vector<256x4xf32>
    %c0_31 = arith.constant 0 : index
    %c0_32 = arith.constant 0 : index
    %c0_33 = arith.constant 0 : index
    %16 = vector.load %arg2[%c0_31, %c0_32, %c0_33] : memref<9x4x4xf32, #tpu.memory_space<vmem>>, vector<1x4x4xf32>
    %17 = vector.shape_cast %16 : vector<1x4x4xf32> to vector<4x4xf32>
    %cst_34 = arith.constant dense<0.000000e+00> : vector<256x4xf32>
    %18 = tpu.matmul %15, %17, %cst_34 {dimension_numbers = #tpu.dot_dimension_numbers<[1], [0], [0], [1], [0, 0, 1, 1], [], []>} : vector<256x4xf32>, vector<4x4xf32>, vector<256x4xf32> -> vector<256x4xf32>
    %19 = arith.addf %13, %18 : vector<256x4xf32>
    %c0_35 = arith.constant 0 : index
    %c1_36 = arith.constant 1 : index
    %c0_37 = arith.constant 0 : index
    %20 = vector.load %arg7[%c0_35, %c1_36, %c0_37] : memref<18x18x4xf32, #tpu.memory_space<vmem>>, vector<16x16x4xf32>
    %21 = vector.shape_cast %20 : vector<16x16x4xf32> to vector<256x4xf32>
    %c1_38 = arith.constant 1 : index
    %c0_39 = arith.constant 0 : index
    %c0_40 = arith.constant 0 : index
    %22 = vector.load %arg2[%c1_38, %c0_39, %c0_40] : memref<9x4x4xf32, #tpu.memory_space<vmem>>, vector<1x4x4xf32>
    %23 = vector.shape_cast %22 : vector<1x4x4xf32> to vector<4x4xf32>
    %cst_41 = arith.constant dense<0.000000e+00> : vector<256x4xf32>
    %24 = tpu.matmul %21, %23, %cst_41 {dimension_numbers = #tpu.dot_dimension_numbers<[1], [0], [0], [1], [0, 0, 1, 1], [], []>} : vector<256x4xf32>, vector<4x4xf32>, vector<256x4xf32> -> vector<256x4xf32>
    %25 = arith.addf %19, %24 : vector<256x4xf32>
    %c0_42 = arith.constant 0 : index
    %c2_43 = arith.constant 2 : index
    %c0_44 = arith.constant 0 : index
    %26 = vector.load %arg7[%c0_42, %c2_43, %c0_44] : memref<18x18x4xf32, #tpu.memory_space<vmem>>, vector<16x16x4xf32>
    %27 = vector.shape_cast %26 : vector<16x16x4xf32> to vector<256x4xf32>
    %c2_45 = arith.constant 2 : index
    %c0_46 = arith.constant 0 : index
    %c0_47 = arith.constant 0 : index
    %28 = vector.load %arg2[%c2_45, %c0_46, %c0_47] : memref<9x4x4xf32, #tpu.memory_space<vmem>>, vector<1x4x4xf32>
    %29 = vector.shape_cast %28 : vector<1x4x4xf32> to vector<4x4xf32>
    %cst_48 = arith.constant dense<0.000000e+00> : vector<256x4xf32>
    %30 = tpu.matmul %27, %29, %cst_48 {dimension_numbers = #tpu.dot_dimension_numbers<[1], [0], [0], [1], [0, 0, 1, 1], [], []>} : vector<256x4xf32>, vector<4x4xf32>, vector<256x4xf32> -> vector<256x4xf32>
    %31 = arith.addf %25, %30 : vector<256x4xf32>
    %c1_49 = arith.constant 1 : index
    %c0_50 = arith.constant 0 : index
    %c0_51 = arith.constant 0 : index
    %32 = vector.load %arg7[%c1_49, %c0_50, %c0_51] : memref<18x18x4xf32, #tpu.memory_space<vmem>>, vector<16x16x4xf32>
    %33 = vector.shape_cast %32 : vector<16x16x4xf32> to vector<256x4xf32>
    %c3 = arith.constant 3 : index
    %c0_52 = arith.constant 0 : index
    %c0_53 = arith.constant 0 : index
    %34 = vector.load %arg2[%c3, %c0_52, %c0_53] : memref<9x4x4xf32, #tpu.memory_space<vmem>>, vector<1x4x4xf32>
    %35 = vector.shape_cast %34 : vector<1x4x4xf32> to vector<4x4xf32>
    %cst_54 = arith.constant dense<0.000000e+00> : vector<256x4xf32>
    %36 = tpu.matmul %33, %35, %cst_54 {dimension_numbers = #tpu.dot_dimension_numbers<[1], [0], [0], [1], [0, 0, 1, 1], [], []>} : vector<256x4xf32>, vector<4x4xf32>, vector<256x4xf32> -> vector<256x4xf32>
    %37 = arith.addf %31, %36 : vector<256x4xf32>
    %c1_55 = arith.constant 1 : index
    %c1_56 = arith.constant 1 : index
    %c0_57 = arith.constant 0 : index
    %38 = vector.load %arg7[%c1_55, %c1_56, %c0_57] : memref<18x18x4xf32, #tpu.memory_space<vmem>>, vector<16x16x4xf32>
    %39 = vector.shape_cast %38 : vector<16x16x4xf32> to vector<256x4xf32>
    %c4 = arith.constant 4 : index
    %c0_58 = arith.constant 0 : index
    %c0_59 = arith.constant 0 : index
    %40 = vector.load %arg2[%c4, %c0_58, %c0_59] : memref<9x4x4xf32, #tpu.memory_space<vmem>>, vector<1x4x4xf32>
    %41 = vector.shape_cast %40 : vector<1x4x4xf32> to vector<4x4xf32>
    %cst_60 = arith.constant dense<0.000000e+00> : vector<256x4xf32>
    %42 = tpu.matmul %39, %41, %cst_60 {dimension_numbers = #tpu.dot_dimension_numbers<[1], [0], [0], [1], [0, 0, 1, 1], [], []>} : vector<256x4xf32>, vector<4x4xf32>, vector<256x4xf32> -> vector<256x4xf32>
    %43 = arith.addf %37, %42 : vector<256x4xf32>
    %c1_61 = arith.constant 1 : index
    %c2_62 = arith.constant 2 : index
    %c0_63 = arith.constant 0 : index
    %44 = vector.load %arg7[%c1_61, %c2_62, %c0_63] : memref<18x18x4xf32, #tpu.memory_space<vmem>>, vector<16x16x4xf32>
    %45 = vector.shape_cast %44 : vector<16x16x4xf32> to vector<256x4xf32>
    %c5 = arith.constant 5 : index
    %c0_64 = arith.constant 0 : index
    %c0_65 = arith.constant 0 : index
    %46 = vector.load %arg2[%c5, %c0_64, %c0_65] : memref<9x4x4xf32, #tpu.memory_space<vmem>>, vector<1x4x4xf32>
    %47 = vector.shape_cast %46 : vector<1x4x4xf32> to vector<4x4xf32>
    %cst_66 = arith.constant dense<0.000000e+00> : vector<256x4xf32>
    %48 = tpu.matmul %45, %47, %cst_66 {dimension_numbers = #tpu.dot_dimension_numbers<[1], [0], [0], [1], [0, 0, 1, 1], [], []>} : vector<256x4xf32>, vector<4x4xf32>, vector<256x4xf32> -> vector<256x4xf32>
    %49 = arith.addf %43, %48 : vector<256x4xf32>
    %c2_67 = arith.constant 2 : index
    %c0_68 = arith.constant 0 : index
    %c0_69 = arith.constant 0 : index
    %50 = vector.load %arg7[%c2_67, %c0_68, %c0_69] : memref<18x18x4xf32, #tpu.memory_space<vmem>>, vector<16x16x4xf32>
    %51 = vector.shape_cast %50 : vector<16x16x4xf32> to vector<256x4xf32>
    %c6 = arith.constant 6 : index
    %c0_70 = arith.constant 0 : index
    %c0_71 = arith.constant 0 : index
    %52 = vector.load %arg2[%c6, %c0_70, %c0_71] : memref<9x4x4xf32, #tpu.memory_space<vmem>>, vector<1x4x4xf32>
    %53 = vector.shape_cast %52 : vector<1x4x4xf32> to vector<4x4xf32>
    %cst_72 = arith.constant dense<0.000000e+00> : vector<256x4xf32>
    %54 = tpu.matmul %51, %53, %cst_72 {dimension_numbers = #tpu.dot_dimension_numbers<[1], [0], [0], [1], [0, 0, 1, 1], [], []>} : vector<256x4xf32>, vector<4x4xf32>, vector<256x4xf32> -> vector<256x4xf32>
    %55 = arith.addf %49, %54 : vector<256x4xf32>
    %c2_73 = arith.constant 2 : index
    %c1_74 = arith.constant 1 : index
    %c0_75 = arith.constant 0 : index
    %56 = vector.load %arg7[%c2_73, %c1_74, %c0_75] : memref<18x18x4xf32, #tpu.memory_space<vmem>>, vector<16x16x4xf32>
    %57 = vector.shape_cast %56 : vector<16x16x4xf32> to vector<256x4xf32>
    %c7 = arith.constant 7 : index
    %c0_76 = arith.constant 0 : index
    %c0_77 = arith.constant 0 : index
    %58 = vector.load %arg2[%c7, %c0_76, %c0_77] : memref<9x4x4xf32, #tpu.memory_space<vmem>>, vector<1x4x4xf32>
    %59 = vector.shape_cast %58 : vector<1x4x4xf32> to vector<4x4xf32>
    %cst_78 = arith.constant dense<0.000000e+00> : vector<256x4xf32>
    %60 = tpu.matmul %57, %59, %cst_78 {dimension_numbers = #tpu.dot_dimension_numbers<[1], [0], [0], [1], [0, 0, 1, 1], [], []>} : vector<256x4xf32>, vector<4x4xf32>, vector<256x4xf32> -> vector<256x4xf32>
    %61 = arith.addf %55, %60 : vector<256x4xf32>
    %c2_79 = arith.constant 2 : index
    %c2_80 = arith.constant 2 : index
    %c0_81 = arith.constant 0 : index
    %62 = vector.load %arg7[%c2_79, %c2_80, %c0_81] : memref<18x18x4xf32, #tpu.memory_space<vmem>>, vector<16x16x4xf32>
    %63 = vector.shape_cast %62 : vector<16x16x4xf32> to vector<256x4xf32>
    %c8 = arith.constant 8 : index
    %c0_82 = arith.constant 0 : index
    %c0_83 = arith.constant 0 : index
    %64 = vector.load %arg2[%c8, %c0_82, %c0_83] : memref<9x4x4xf32, #tpu.memory_space<vmem>>, vector<1x4x4xf32>
    %65 = vector.shape_cast %64 : vector<1x4x4xf32> to vector<4x4xf32>
    %cst_84 = arith.constant dense<0.000000e+00> : vector<256x4xf32>
    %66 = tpu.matmul %63, %65, %cst_84 {dimension_numbers = #tpu.dot_dimension_numbers<[1], [0], [0], [1], [0, 0, 1, 1], [], []>} : vector<256x4xf32>, vector<4x4xf32>, vector<256x4xf32> -> vector<256x4xf32>
    %67 = arith.addf %61, %66 : vector<256x4xf32>
    %68 = vector.shape_cast %67 : vector<256x4xf32> to vector<16x16x4xf32>
    %69 = vector.broadcast %12 : vector<1x1x4xf32> to vector<16x16x4xf32>
    %70 = arith.addf %68, %69 : vector<16x16x4xf32>
    %cst_85 = arith.constant dense<0.000000e+00> : vector<4xf32>
    %71 = vector.multi_reduction <add>, %70, %cst_85 [0, 1] : vector<16x16x4xf32> to vector<4xf32>
    %72 = vector.shape_cast %71 : vector<4xf32> to vector<1x1x4xf32>
    %cst_86 = arith.constant 2.560000e+02 : f32
    %73 = vector.broadcast %cst_86 : f32 to vector<1x1x4xf32>
    %74 = arith.divf %72, %73 : vector<1x1x4xf32>
    %75 = vector.broadcast %74 : vector<1x1x4xf32> to vector<16x16x4xf32>
    %76 = arith.subf %70, %75 : vector<16x16x4xf32>
    %77 = arith.mulf %76, %76 : vector<16x16x4xf32>
    %cst_87 = arith.constant dense<0.000000e+00> : vector<4xf32>
    %78 = vector.multi_reduction <add>, %77, %cst_87 [0, 1] : vector<16x16x4xf32> to vector<4xf32>
    %79 = vector.shape_cast %78 : vector<4xf32> to vector<1x1x4xf32>
    %cst_88 = arith.constant 2.560000e+02 : f32
    %80 = vector.broadcast %cst_88 : f32 to vector<1x1x4xf32>
    %81 = arith.divf %79, %80 : vector<1x1x4xf32>
    %cst_89 = arith.constant 9.99999974E-6 : f32
    %82 = vector.broadcast %cst_89 : f32 to vector<1x1x4xf32>
    %83 = arith.addf %81, %82 : vector<1x1x4xf32>
    %84 = math.rsqrt %83 : vector<1x1x4xf32>
    %85 = vector.broadcast %84 : vector<1x1x4xf32> to vector<16x16x4xf32>
    %86 = arith.mulf %76, %85 : vector<16x16x4xf32>
    %cst_90 = arith.constant 0.000000e+00 : f32
    %87 = vector.broadcast %cst_90 : f32 to vector<16x16x4xf32>
    %88 = arith.cmpf ogt, %86, %87 : vector<16x16x4xf32>
    %cst_91 = arith.constant 0.00999999977 : f32
    %89 = vector.broadcast %cst_91 : f32 to vector<16x16x4xf32>
    %90 = arith.mulf %89, %86 : vector<16x16x4xf32>
    %91 = arith.select %88, %86, %90 : vector<16x16x4xi1>, vector<16x16x4xf32>
    %c1_92 = arith.constant 1 : index
    %c1_93 = arith.constant 1 : index
    %c0_94 = arith.constant 0 : index
    %92 = vector.load %arg7[%c1_92, %c1_93, %c0_94] : memref<18x18x4xf32, #tpu.memory_space<vmem>>, vector<16x16x4xf32>
    tpu.vector_store %arg7[%c1_92, %c1_93, %c0_94], %91 {strides = array<i32>} : memref<18x18x4xf32, #tpu.memory_space<vmem>>, vector<16x16x4xf32>,
    %c2_95 = arith.constant 2 : index
    %c1_96 = arith.constant 1 : index
    %c0_97 = arith.constant 0 : index
    %93 = vector.load %arg7[%c2_95, %c1_96, %c0_97] : memref<18x18x4xf32, #tpu.memory_space<vmem>>, vector<1x16x4xf32>
    %c0_98 = arith.constant 0 : index
    %c1_99 = arith.constant 1 : index
    %c0_100 = arith.constant 0 : index
    %94 = vector.load %arg7[%c0_98, %c1_99, %c0_100] : memref<18x18x4xf32, #tpu.memory_space<vmem>>, vector<1x16x4xf32>
    tpu.vector_store %arg7[%c0_98, %c1_99, %c0_100], %93 {strides = array<i32>} : memref<18x18x4xf32, #tpu.memory_space<vmem>>, vector<1x16x4xf32>,
    %c15_101 = arith.constant 15 : index
    %c1_102 = arith.constant 1 : index
    %c0_103 = arith.constant 0 : index
    %95 = vector.load %arg7[%c15_101, %c1_102, %c0_103] : memref<18x18x4xf32, #tpu.memory_space<vmem>>, vector<1x16x4xf32>
    %c17_104 = arith.constant 17 : index
    %c1_105 = arith.constant 1 : index
    %c0_106 = arith.constant 0 : index
    %96 = vector.load %arg7[%c17_104, %c1_105, %c0_106] : memref<18x18x4xf32, #tpu.memory_space<vmem>>, vector<1x16x4xf32>
    tpu.vector_store %arg7[%c17_104, %c1_105, %c0_106], %95 {strides = array<i32>} : memref<18x18x4xf32, #tpu.memory_space<vmem>>, vector<1x16x4xf32>,
    %c0_107 = arith.constant 0 : index
    %c2_108 = arith.constant 2 : index
    %c0_109 = arith.constant 0 : index
    %97 = vector.load %arg7[%c0_107, %c2_108, %c0_109] : memref<18x18x4xf32, #tpu.memory_space<vmem>>, vector<18x1x4xf32>
    %c0_110 = arith.constant 0 : index
    %c0_111 = arith.constant 0 : index
    %c0_112 = arith.constant 0 : index
    %98 = vector.load %arg7[%c0_110, %c0_111, %c0_112] : memref<18x18x4xf32, #tpu.memory_space<vmem>>, vector<18x1x4xf32>
    tpu.vector_store %arg7[%c0_110, %c0_111, %c0_112], %97 {strides = array<i32>} : memref<18x18x4xf32, #tpu.memory_space<vmem>>, vector<18x1x4xf32>,
    %c0_113 = arith.constant 0 : index
    %c15_114 = arith.constant 15 : index
    %c0_115 = arith.constant 0 : index
    %99 = vector.load %arg7[%c0_113, %c15_114, %c0_115] : memref<18x18x4xf32, #tpu.memory_space<vmem>>, vector<18x1x4xf32>
    %c0_116 = arith.constant 0 : index
    %c17_117 = arith.constant 17 : index
    %c0_118 = arith.constant 0 : index
    %100 = vector.load %arg7[%c0_116, %c17_117, %c0_118] : memref<18x18x4xf32, #tpu.memory_space<vmem>>, vector<18x1x4xf32>
    tpu.vector_store %arg7[%c0_116, %c17_117, %c0_118], %99 {strides = array<i32>} : memref<18x18x4xf32, #tpu.memory_space<vmem>>, vector<18x1x4xf32>,
    %c0_119 = arith.constant 0 : index
    %c0_120 = arith.constant 0 : index
    %101 = vector.load %arg5[%c0_119, %c0_120] : memref<1x4xf32, #tpu.memory_space<vmem>>, vector<1x4xf32>
    %102 = vector.shape_cast %101 : vector<1x4xf32> to vector<1x1x4xf32>
    %cst_121 = arith.constant 0.000000e+00 : f32
    %103 = vector.broadcast %cst_121 : f32 to vector<256x4xf32>
    %c0_122 = arith.constant 0 : index
    %c0_123 = arith.constant 0 : index
    %c0_124 = arith.constant 0 : index
    %104 = vector.load %arg7[%c0_122, %c0_123, %c0_124] : memref<18x18x4xf32, #tpu.memory_space<vmem>>, vector<16x16x4xf32>
    %105 = vector.shape_cast %104 : vector<16x16x4xf32> to vector<256x4xf32>
    %c0_125 = arith.constant 0 : index
    %c0_126 = arith.constant 0 : index
    %c0_127 = arith.constant 0 : index
    %106 = vector.load %arg4[%c0_125, %c0_126, %c0_127] : memref<9x4x4xf32, #tpu.memory_space<vmem>>, vector<1x4x4xf32>
    %107 = vector.shape_cast %106 : vector<1x4x4xf32> to vector<4x4xf32>
    %cst_128 = arith.constant dense<0.000000e+00> : vector<256x4xf32>
    %108 = tpu.matmul %105, %107, %cst_128 {dimension_numbers = #tpu.dot_dimension_numbers<[1], [0], [0], [1], [0, 0, 1, 1], [], []>} : vector<256x4xf32>, vector<4x4xf32>, vector<256x4xf32> -> vector<256x4xf32>
    %109 = arith.addf %103, %108 : vector<256x4xf32>
    %c0_129 = arith.constant 0 : index
    %c1_130 = arith.constant 1 : index
    %c0_131 = arith.constant 0 : index
    %110 = vector.load %arg7[%c0_129, %c1_130, %c0_131] : memref<18x18x4xf32, #tpu.memory_space<vmem>>, vector<16x16x4xf32>
    %111 = vector.shape_cast %110 : vector<16x16x4xf32> to vector<256x4xf32>
    %c1_132 = arith.constant 1 : index
    %c0_133 = arith.constant 0 : index
    %c0_134 = arith.constant 0 : index
    %112 = vector.load %arg4[%c1_132, %c0_133, %c0_134] : memref<9x4x4xf32, #tpu.memory_space<vmem>>, vector<1x4x4xf32>
    %113 = vector.shape_cast %112 : vector<1x4x4xf32> to vector<4x4xf32>
    %cst_135 = arith.constant dense<0.000000e+00> : vector<256x4xf32>
    %114 = tpu.matmul %111, %113, %cst_135 {dimension_numbers = #tpu.dot_dimension_numbers<[1], [0], [0], [1], [0, 0, 1, 1], [], []>} : vector<256x4xf32>, vector<4x4xf32>, vector<256x4xf32> -> vector<256x4xf32>
    %115 = arith.addf %109, %114 : vector<256x4xf32>
    %c0_136 = arith.constant 0 : index
    %c2_137 = arith.constant 2 : index
    %c0_138 = arith.constant 0 : index
    %116 = vector.load %arg7[%c0_136, %c2_137, %c0_138] : memref<18x18x4xf32, #tpu.memory_space<vmem>>, vector<16x16x4xf32>
    %117 = vector.shape_cast %116 : vector<16x16x4xf32> to vector<256x4xf32>
    %c2_139 = arith.constant 2 : index
    %c0_140 = arith.constant 0 : index
    %c0_141 = arith.constant 0 : index
    %118 = vector.load %arg4[%c2_139, %c0_140, %c0_141] : memref<9x4x4xf32, #tpu.memory_space<vmem>>, vector<1x4x4xf32>
    %119 = vector.shape_cast %118 : vector<1x4x4xf32> to vector<4x4xf32>
    %cst_142 = arith.constant dense<0.000000e+00> : vector<256x4xf32>
    %120 = tpu.matmul %117, %119, %cst_142 {dimension_numbers = #tpu.dot_dimension_numbers<[1], [0], [0], [1], [0, 0, 1, 1], [], []>} : vector<256x4xf32>, vector<4x4xf32>, vector<256x4xf32> -> vector<256x4xf32>
    %121 = arith.addf %115, %120 : vector<256x4xf32>
    %c1_143 = arith.constant 1 : index
    %c0_144 = arith.constant 0 : index
    %c0_145 = arith.constant 0 : index
    %122 = vector.load %arg7[%c1_143, %c0_144, %c0_145] : memref<18x18x4xf32, #tpu.memory_space<vmem>>, vector<16x16x4xf32>
    %123 = vector.shape_cast %122 : vector<16x16x4xf32> to vector<256x4xf32>
    %c3_146 = arith.constant 3 : index
    %c0_147 = arith.constant 0 : index
    %c0_148 = arith.constant 0 : index
    %124 = vector.load %arg4[%c3_146, %c0_147, %c0_148] : memref<9x4x4xf32, #tpu.memory_space<vmem>>, vector<1x4x4xf32>
    %125 = vector.shape_cast %124 : vector<1x4x4xf32> to vector<4x4xf32>
    %cst_149 = arith.constant dense<0.000000e+00> : vector<256x4xf32>
    %126 = tpu.matmul %123, %125, %cst_149 {dimension_numbers = #tpu.dot_dimension_numbers<[1], [0], [0], [1], [0, 0, 1, 1], [], []>} : vector<256x4xf32>, vector<4x4xf32>, vector<256x4xf32> -> vector<256x4xf32>
    %127 = arith.addf %121, %126 : vector<256x4xf32>
    %c1_150 = arith.constant 1 : index
    %c1_151 = arith.constant 1 : index
    %c0_152 = arith.constant 0 : index
    %128 = vector.load %arg7[%c1_150, %c1_151, %c0_152] : memref<18x18x4xf32, #tpu.memory_space<vmem>>, vector<16x16x4xf32>
    %129 = vector.shape_cast %128 : vector<16x16x4xf32> to vector<256x4xf32>
    %c4_153 = arith.constant 4 : index
    %c0_154 = arith.constant 0 : index
    %c0_155 = arith.constant 0 : index
    %130 = vector.load %arg4[%c4_153, %c0_154, %c0_155] : memref<9x4x4xf32, #tpu.memory_space<vmem>>, vector<1x4x4xf32>
    %131 = vector.shape_cast %130 : vector<1x4x4xf32> to vector<4x4xf32>
    %cst_156 = arith.constant dense<0.000000e+00> : vector<256x4xf32>
    %132 = tpu.matmul %129, %131, %cst_156 {dimension_numbers = #tpu.dot_dimension_numbers<[1], [0], [0], [1], [0, 0, 1, 1], [], []>} : vector<256x4xf32>, vector<4x4xf32>, vector<256x4xf32> -> vector<256x4xf32>
    %133 = arith.addf %127, %132 : vector<256x4xf32>
    %c1_157 = arith.constant 1 : index
    %c2_158 = arith.constant 2 : index
    %c0_159 = arith.constant 0 : index
    %134 = vector.load %arg7[%c1_157, %c2_158, %c0_159] : memref<18x18x4xf32, #tpu.memory_space<vmem>>, vector<16x16x4xf32>
    %135 = vector.shape_cast %134 : vector<16x16x4xf32> to vector<256x4xf32>
    %c5_160 = arith.constant 5 : index
    %c0_161 = arith.constant 0 : index
    %c0_162 = arith.constant 0 : index
    %136 = vector.load %arg4[%c5_160, %c0_161, %c0_162] : memref<9x4x4xf32, #tpu.memory_space<vmem>>, vector<1x4x4xf32>
    %137 = vector.shape_cast %136 : vector<1x4x4xf32> to vector<4x4xf32>
    %cst_163 = arith.constant dense<0.000000e+00> : vector<256x4xf32>
    %138 = tpu.matmul %135, %137, %cst_163 {dimension_numbers = #tpu.dot_dimension_numbers<[1], [0], [0], [1], [0, 0, 1, 1], [], []>} : vector<256x4xf32>, vector<4x4xf32>, vector<256x4xf32> -> vector<256x4xf32>
    %139 = arith.addf %133, %138 : vector<256x4xf32>
    %c2_164 = arith.constant 2 : index
    %c0_165 = arith.constant 0 : index
    %c0_166 = arith.constant 0 : index
    %140 = vector.load %arg7[%c2_164, %c0_165, %c0_166] : memref<18x18x4xf32, #tpu.memory_space<vmem>>, vector<16x16x4xf32>
    %141 = vector.shape_cast %140 : vector<16x16x4xf32> to vector<256x4xf32>
    %c6_167 = arith.constant 6 : index
    %c0_168 = arith.constant 0 : index
    %c0_169 = arith.constant 0 : index
    %142 = vector.load %arg4[%c6_167, %c0_168, %c0_169] : memref<9x4x4xf32, #tpu.memory_space<vmem>>, vector<1x4x4xf32>
    %143 = vector.shape_cast %142 : vector<1x4x4xf32> to vector<4x4xf32>
    %cst_170 = arith.constant dense<0.000000e+00> : vector<256x4xf32>
    %144 = tpu.matmul %141, %143, %cst_170 {dimension_numbers = #tpu.dot_dimension_numbers<[1], [0], [0], [1], [0, 0, 1, 1], [], []>} : vector<256x4xf32>, vector<4x4xf32>, vector<256x4xf32> -> vector<256x4xf32>
    %145 = arith.addf %139, %144 : vector<256x4xf32>
    %c2_171 = arith.constant 2 : index
    %c1_172 = arith.constant 1 : index
    %c0_173 = arith.constant 0 : index
    %146 = vector.load %arg7[%c2_171, %c1_172, %c0_173] : memref<18x18x4xf32, #tpu.memory_space<vmem>>, vector<16x16x4xf32>
    %147 = vector.shape_cast %146 : vector<16x16x4xf32> to vector<256x4xf32>
    %c7_174 = arith.constant 7 : index
    %c0_175 = arith.constant 0 : index
    %c0_176 = arith.constant 0 : index
    %148 = vector.load %arg4[%c7_174, %c0_175, %c0_176] : memref<9x4x4xf32, #tpu.memory_space<vmem>>, vector<1x4x4xf32>
    %149 = vector.shape_cast %148 : vector<1x4x4xf32> to vector<4x4xf32>
    %cst_177 = arith.constant dense<0.000000e+00> : vector<256x4xf32>
    %150 = tpu.matmul %147, %149, %cst_177 {dimension_numbers = #tpu.dot_dimension_numbers<[1], [0], [0], [1], [0, 0, 1, 1], [], []>} : vector<256x4xf32>, vector<4x4xf32>, vector<256x4xf32> -> vector<256x4xf32>
    %151 = arith.addf %145, %150 : vector<256x4xf32>
    %c2_178 = arith.constant 2 : index
    %c2_179 = arith.constant 2 : index
    %c0_180 = arith.constant 0 : index
    %152 = vector.load %arg7[%c2_178, %c2_179, %c0_180] : memref<18x18x4xf32, #tpu.memory_space<vmem>>, vector<16x16x4xf32>
    %153 = vector.shape_cast %152 : vector<16x16x4xf32> to vector<256x4xf32>
    %c8_181 = arith.constant 8 : index
    %c0_182 = arith.constant 0 : index
    %c0_183 = arith.constant 0 : index
    %154 = vector.load %arg4[%c8_181, %c0_182, %c0_183] : memref<9x4x4xf32, #tpu.memory_space<vmem>>, vector<1x4x4xf32>
    %155 = vector.shape_cast %154 : vector<1x4x4xf32> to vector<4x4xf32>
    %cst_184 = arith.constant dense<0.000000e+00> : vector<256x4xf32>
    %156 = tpu.matmul %153, %155, %cst_184 {dimension_numbers = #tpu.dot_dimension_numbers<[1], [0], [0], [1], [0, 0, 1, 1], [], []>} : vector<256x4xf32>, vector<4x4xf32>, vector<256x4xf32> -> vector<256x4xf32>
    %157 = arith.addf %151, %156 : vector<256x4xf32>
    %158 = vector.shape_cast %157 : vector<256x4xf32> to vector<16x16x4xf32>
    %159 = vector.broadcast %102 : vector<1x1x4xf32> to vector<16x16x4xf32>
    %160 = arith.addf %158, %159 : vector<16x16x4xf32>
    %cst_185 = arith.constant dense<0.000000e+00> : vector<4xf32>
    %161 = vector.multi_reduction <add>, %160, %cst_185 [0, 1] : vector<16x16x4xf32> to vector<4xf32>
    %162 = vector.shape_cast %161 : vector<4xf32> to vector<1x1x4xf32>
    %cst_186 = arith.constant 2.560000e+02 : f32
    %163 = vector.broadcast %cst_186 : f32 to vector<1x1x4xf32>
    %164 = arith.divf %162, %163 : vector<1x1x4xf32>
    %165 = vector.broadcast %164 : vector<1x1x4xf32> to vector<16x16x4xf32>
    %166 = arith.subf %160, %165 : vector<16x16x4xf32>
    %167 = arith.mulf %166, %166 : vector<16x16x4xf32>
    %cst_187 = arith.constant dense<0.000000e+00> : vector<4xf32>
    %168 = vector.multi_reduction <add>, %167, %cst_187 [0, 1] : vector<16x16x4xf32> to vector<4xf32>
    %169 = vector.shape_cast %168 : vector<4xf32> to vector<1x1x4xf32>
    %cst_188 = arith.constant 2.560000e+02 : f32
    %170 = vector.broadcast %cst_188 : f32 to vector<1x1x4xf32>
    %171 = arith.divf %169, %170 : vector<1x1x4xf32>
    %cst_189 = arith.constant 9.99999974E-6 : f32
    %172 = vector.broadcast %cst_189 : f32 to vector<1x1x4xf32>
    %173 = arith.addf %171, %172 : vector<1x1x4xf32>
    %174 = math.rsqrt %173 : vector<1x1x4xf32>
    %175 = vector.broadcast %174 : vector<1x1x4xf32> to vector<16x16x4xf32>
    %176 = arith.mulf %166, %175 : vector<16x16x4xf32>
    %c0_190 = arith.constant 0 : index
    %c0_191 = arith.constant 0 : index
    %c0_192 = arith.constant 0 : index
    %c0_193 = arith.constant 0 : index
    %177 = vector.load %arg1[%c0_190, %c0_191, %c0_192, %c0_193] : memref<1x16x16x4xf32, #tpu.memory_space<vmem>>, vector<1x16x16x4xf32>
    %178 = vector.shape_cast %177 : vector<1x16x16x4xf32> to vector<16x16x4xf32>
    %179 = arith.addf %178, %176 : vector<16x16x4xf32>
    %c0_194 = arith.constant 0 : index
    %c0_195 = arith.constant 0 : index
    %c0_196 = arith.constant 0 : index
    %c0_197 = arith.constant 0 : index
    %180 = vector.load %arg6[%c0_194, %c0_195, %c0_196, %c0_197] : memref<1x16x16x4xf32, #tpu.memory_space<vmem>>, vector<1x16x16x4xf32>
    %181 = vector.shape_cast %180 : vector<1x16x16x4xf32> to vector<16x16x4xf32>
    %182 = vector.shape_cast %179 : vector<16x16x4xf32> to vector<1x16x16x4xf32>
    tpu.vector_store %arg6[%c0_194, %c0_195, %c0_196, %c0_197], %182 {strides = array<i32>} : memref<1x16x16x4xf32, #tpu.memory_space<vmem>>, vector<1x16x16x4xf32>,
    return
  }
  func.func @transform_0(%arg0: i32) -> (i32, i32, i32, i32) {
    %c0_i32 = arith.constant 0 : i32
    %c0_i32_0 = arith.constant 0 : i32
    %c0_i32_1 = arith.constant 0 : i32
    %c0_i32_2 = arith.constant 0 : i32
    return %arg0, %c0_i32, %c0_i32_0, %c0_i32_1 : i32, i32, i32, i32
  }
  func.func @transform_1(%arg0: i32) -> (i32, i32, i32) {
    %c0_i32 = arith.constant 0 : i32
    %c0_i32_0 = arith.constant 0 : i32
    %c0_i32_1 = arith.constant 0 : i32
    %c0_i32_2 = arith.constant 0 : i32
    return %c0_i32, %c0_i32_0, %c0_i32_1 : i32, i32, i32
  }
  func.func @transform_2(%arg0: i32) -> (i32, i32) {
    %c0_i32 = arith.constant 0 : i32
    %c0_i32_0 = arith.constant 0 : i32
    %c0_i32_1 = arith.constant 0 : i32
    return %c0_i32, %c0_i32_0 : i32, i32
  }
  func.func @transform_3(%arg0: i32) -> (i32, i32, i32) {
    %c0_i32 = arith.constant 0 : i32
    %c0_i32_0 = arith.constant 0 : i32
    %c0_i32_1 = arith.constant 0 : i32
    %c0_i32_2 = arith.constant 0 : i32
    return %c0_i32, %c0_i32_0, %c0_i32_1 : i32, i32, i32
  }
  func.func @transform_4(%arg0: i32) -> (i32, i32) {
    %c0_i32 = arith.constant 0 : i32
    %c0_i32_0 = arith.constant 0 : i32
    %c0_i32_1 = arith.constant 0 : i32
    return %c0_i32, %c0_i32_0 : i32, i32
  }
  func.func @transform_5(%arg0: i32) -> (i32, i32, i32, i32) {
    %c0_i32 = arith.constant 0 : i32
    %c0_i32_0 = arith.constant 0 : i32
    %c0_i32_1 = arith.constant 0 : i32
    %c0_i32_2 = arith.constant 0 : i32
    return %arg0, %c0_i32, %c0_i32_0, %c0_i32_1 : i32, i32, i32, i32
  }
}

</mosaic_0001>

<llo_original>
// kernel: tpu_custom_call.1
$region0: #{tpu_custom_call.1}
  #allocation0 [shape = 'u32[]', space=smem, size = 0x4, offset = 0x4, fixed_abs, tag = 'smem constant byte address 0x4 - core index']
  #allocation1 [shape = 'u32[144,128]{1,0:T(1,128)}', space=vmem, size = 0x12000, scoped, tag = 'internal scratch']
  #allocation2 [shape = 'f32[18,18,4]{2,1,0:T(8,128)}', space=vmem, size = 0x36000, scoped, tag = 'scratch operand']
  %s0 = inlined_call_operand.vmem [shape: f32[2,16,16,4], index: 0, kind: input, shape index: {}]
  %s1 = inlined_call_operand.vmem [shape: f32[9,4,4], index: 1, kind: input, shape index: {}]
  %s2 = inlined_call_operand.vmem [shape: f32[1,4], index: 2, kind: input, shape index: {}]
  %s3 = inlined_call_operand.vmem [shape: f32[9,4,4], index: 3, kind: input, shape index: {}]
  %s4 = inlined_call_operand.vmem [shape: f32[1,4], index: 4, kind: input, shape index: {}]
  %s5 = inlined_call_operand.vmem [shape: f32[2,16,16,4], index: 5, kind: output, shape index: {}]
  %s6 = sld [smem:[#allocation0]]
  $region53: #{tpu_custom_call.1} parent=0
    _
  %s8 = ssub.s32 1, %s6
  %s9 = scalar_select 0, %s8, %s6
  loop: start=0, step=1, limit=4
  $region2: #{tpu_custom_call.1} parent=0 // loop_pre_header
    _
  $region3: #{tpu_custom_call.1} parent=0 // loop_header
    %s11 = sphi 0, %s15
    %p12 = scmp.ge.s32.totalorder %s11, 4
    %s21 = sphi 0, %s23
    %s24 = sphi 0, %s21
    %s25 = sphi 0, %s24
    %s41 = sphi 0, %s25
    %s45 = sphi 0, %s45
    %s47 = sphi 0, %s45
    %s48 = sphi 0, %s47
    %s62 = sphi 0, %s48
    %s66 = sphi 0, %s66
    %s68 = sphi 0, %s66
    %s69 = sphi 0, %s68
    %s83 = sphi 0, %s69
    %s87 = sphi 0, %s87
    %s89 = sphi 0, %s87
    %s90 = sphi 0, %s89
    %s104 = sphi 0, %s90
    %s108 = sphi 0, %s108
    %s110 = sphi 0, %s108
    %s111 = sphi 0, %s110
    %s125 = sphi 0, %s111
    %s131 = sphi 0, %s133
    %s134 = sphi 0, %s131
    %s135 = sphi 0, %s134
    %s151 = sphi 0, %s135
  $region4: #{tpu_custom_call.1} parent=0 // loop_header_branch
    %14 = sbr.rel (%p12) target = $region8
  $region5: #{tpu_custom_call.1} parent=0 // loop_body
    %s16 = ssub.s32 %s11, 1
    %s17 = ssub.s32 %s11, 2
    %s18 = sadd.s32 %s11, 1
    %s19 = ssub.s32 %s11, %s18
    %p20 = scmp.eq.s32.totalorder %s19, 0
    %s22 = sadd.s32 %s21, 1
    %s23 = scalar_select %p20, %s21, %s22
    %p26 = pneg %p20
    %p27 = scmp.eq.s32.totalorder %s11, 1
    %p28 = por %p26, %p27
    %p29 = scmp.ne.s32.totalorder %s21, %s24
    %p30 = scmp.eq.s32.totalorder %s11, 0
    %p31 = por %p29, %p30
    %p32 = scmp.ne.s32.totalorder %s21, %s24
    %p33 = scmp.eq.s32.totalorder %s16, 1
    %p34 = por %p32, %p33
    %p35 = scmp.ne.s32.totalorder %s24, %s25
    %p36 = scmp.eq.s32.totalorder %s16, 0
    %p37 = por %p35, %p36
    %p38 = scmp.ne.s32.totalorder %s24, %s25
    %p39 = scmp.eq.s32.totalorder %s17, 1
    %p40 = por %p38, %p39
    %p42 = scmp.ne.s32.totalorder %s25, %s41
    %p43 = scmp.eq.s32.totalorder %s17, 0
    %p44 = por %p42, %p43
    %s46 = sadd.s32 %s45, 1
    %p49 = scmp.eq.s32.totalorder %s11, 1
    %p50 = scmp.ne.s32.totalorder %s45, %s47
    %p51 = scmp.eq.s32.totalorder %s11, 0
    %p52 = por %p50, %p51
    %p53 = scmp.ne.s32.totalorder %s45, %s47
    %p54 = scmp.eq.s32.totalorder %s16, 1
    %p55 = por %p53, %p54
    %p56 = scmp.ne.s32.totalorder %s47, %s48
    %p57 = scmp.eq.s32.totalorder %s16, 0
    %p58 = por %p56, %p57
    %p59 = scmp.ne.s32.totalorder %s47, %s48
    %p60 = scmp.eq.s32.totalorder %s17, 1
    %p61 = por %p59, %p60
    %p63 = scmp.ne.s32.totalorder %s48, %s62
    %p64 = scmp.eq.s32.totalorder %s17, 0
    %p65 = por %p63, %p64
    %s67 = sadd.s32 %s66, 1
    %p70 = scmp.eq.s32.totalorder %s11, 1
    %p71 = scmp.ne.s32.totalorder %s66, %s68
    %p72 = scmp.eq.s32.totalorder %s11, 0
    %p73 = por %p71, %p72
    %p74 = scmp.ne.s32.totalorder %s66, %s68
    %p75 = scmp.eq.s32.totalorder %s16, 1
    %p76 = por %p74, %p75
    %p77 = scmp.ne.s32.totalorder %s68, %s69
    %p78 = scmp.eq.s32.totalorder %s16, 0
    %p79 = por %p77, %p78
    %p80 = scmp.ne.s32.totalorder %s68, %s69
    %p81 = scmp.eq.s32.totalorder %s17, 1
    %p82 = por %p80, %p81
    %p84 = scmp.ne.s32.totalorder %s69, %s83
    %p85 = scmp.eq.s32.totalorder %s17, 0
    %p86 = por %p84, %p85
    %s88 = sadd.s32 %s87, 1
    %p91 = scmp.eq.s32.totalorder %s11, 1
    %p92 = scmp.ne.s32.totalorder %s87, %s89
    %p93 = scmp.eq.s32.totalorder %s11, 0
    %p94 = por %p92, %p93
    %p95 = scmp.ne.s32.totalorder %s87, %s89
    %p96 = scmp.eq.s32.totalorder %s16, 1
    %p97 = por %p95, %p96
    %p98 = scmp.ne.s32.totalorder %s89, %s90
    %p99 = scmp.eq.s32.totalorder %s16, 0
    %p100 = por %p98, %p99
    %p101 = scmp.ne.s32.totalorder %s89, %s90
    %p102 = scmp.eq.s32.totalorder %s17, 1
    %p103 = por %p101, %p102
    %p105 = scmp.ne.s32.totalorder %s90, %s104
    %p106 = scmp.eq.s32.totalorder %s17, 0
    %p107 = por %p105, %p106
    %s109 = sadd.s32 %s108, 1
    %p112 = scmp.eq.s32.totalorder %s11, 1
    %p113 = scmp.ne.s32.totalorder %s108, %s110
    %p114 = scmp.eq.s32.totalorder %s11, 0
    %p115 = por %p113, %p114
    %p116 = scmp.ne.s32.totalorder %s108, %s110
    %p117 = scmp.eq.s32.totalorder %s16, 1
    %p118 = por %p116, %p117
    %p119 = scmp.ne.s32.totalorder %s110, %s111
    %p120 = scmp.eq.s32.totalorder %s16, 0
    %p121 = por %p119, %p120
    %p122 = scmp.ne.s32.totalorder %s110, %s111
    %p123 = scmp.eq.s32.totalorder %s17, 1
    %p124 = por %p122, %p123
    %p126 = scmp.ne.s32.totalorder %s111, %s125
    %p127 = scmp.eq.s32.totalorder %s17, 0
    %p128 = por %p126, %p127
    %s129 = ssub.s32 %s11, %s18
    %p130 = scmp.eq.s32.totalorder %s129, 0
    %s132 = sadd.s32 %s131, 1
    %s133 = scalar_select %p130, %s131, %s132
    %p136 = pneg %p130
    %p137 = scmp.eq.s32.totalorder %s11, 1
    %p138 = por %p136, %p137
    %p139 = scmp.ne.s32.totalorder %s131, %s134
    %p140 = scmp.eq.s32.totalorder %s11, 0
    %p141 = por %p139, %p140
    %p142 = scmp.ne.s32.totalorder %s131, %s134
    %p143 = scmp.eq.s32.totalorder %s16, 1
    %p144 = por %p142, %p143
    %p145 = scmp.ne.s32.totalorder %s134, %s135
    %p146 = scmp.eq.s32.totalorder %s16, 0
    %p147 = por %p145, %p146
    %p148 = scmp.ne.s32.totalorder %s134, %s135
    %p149 = scmp.eq.s32.totalorder %s17, 1
    %p150 = por %p148, %p149
    %p152 = scmp.ne.s32.totalorder %s135, %s151
    %p153 = scmp.eq.s32.totalorder %s17, 0
    %p154 = por %p152, %p153
    %p155 = scmp.le.s32.totalorder 1, %s11
    %p156 = scmp.lt.s32.totalorder %s11, 3
    %p157 = pnand %p155, %p156
    %p158 = pneg %p157
    // Predicated region
    $region9: #{tpu_custom_call.1} parent=5 // pred_check
      _
    $region10: #{tpu_custom_call.1} parent=5 // pred_check_branch
      %160 = sbr.rel (%p157) target = $region12
    $region11: #{tpu_custom_call.1} parent=5 // pred_region
      %s161 = ssub.s32 %s11, 1
      // Predicated region
      $region13: #{tpu_custom_call.1} parent=11 // pred_check
        %p162 = pneg %p58
      $region14: #{tpu_custom_call.1} parent=11 // pred_check_branch
        %164 = sbr.rel (%p162) target = $region16
      $region15: #{tpu_custom_call.1} parent=11 // pred_region
        _
      $region16: #{tpu_custom_call.1} parent=11 // pred_fallthru
        _
      // Predicated region
      $region17: #{tpu_custom_call.1} parent=11 // pred_check
        %p165 = pneg %p79
      $region18: #{tpu_custom_call.1} parent=11 // pred_check_branch
        %167 = sbr.rel (%p165) target = $region20
      $region19: #{tpu_custom_call.1} parent=11 // pred_region
        _
      $region20: #{tpu_custom_call.1} parent=11 // pred_fallthru
        _
      // Predicated region
      $region21: #{tpu_custom_call.1} parent=11 // pred_check
        %p168 = pneg %p100
      $region22: #{tpu_custom_call.1} parent=11 // pred_check_branch
        %170 = sbr.rel (%p168) target = $region24
      $region23: #{tpu_custom_call.1} parent=11 // pred_region
        _
      $region24: #{tpu_custom_call.1} parent=11 // pred_fallthru
        _
      // Predicated region
      $region25: #{tpu_custom_call.1} parent=11 // pred_check
        %p171 = pneg %p121
      $region26: #{tpu_custom_call.1} parent=11 // pred_check_branch
        %173 = sbr.rel (%p171) target = $region28
      $region27: #{tpu_custom_call.1} parent=11 // pred_region
        _
      $region28: #{tpu_custom_call.1} parent=11 // pred_fallthru
        _
    $region12: #{tpu_custom_call.1} parent=5 // pred_fallthru
      _
    %p174 = scmp.lt.s32.totalorder %s11, 2
    // Predicated region
    $region29: #{tpu_custom_call.1} parent=5 // pred_check
      %p175 = pneg %p174
    $region30: #{tpu_custom_call.1} parent=5 // pred_check_branch
      %177 = sbr.rel (%p175) target = $region32
    $region31: #{tpu_custom_call.1} parent=5 // pred_region
      // Predicated region
      $region33: #{tpu_custom_call.1} parent=31 // pred_check
        %p178 = pneg %p31
      $region34: #{tpu_custom_call.1} parent=31 // pred_check_branch
        %180 = sbr.rel (%p178) target = $region36
      $region35: #{tpu_custom_call.1} parent=31 // pred_region
        %p181 = scmp.lt.s32.totalorder %s11, 1
        %s182 = scalar_select %p181, %s11, 1
        %s183 = smul.addr %s182, 32
        %s184 = smul.addr %s183, 8
        %s185 = scalar_lea.vmem %s0, %s184
      $region36: #{tpu_custom_call.1} parent=31 // pred_fallthru
        _
    $region32: #{tpu_custom_call.1} parent=5 // pred_fallthru
      _
    %p186 = scmp.le.s32.totalorder 1, %s11
    %p187 = scmp.lt.s32.totalorder %s11, 3
    %p188 = pnand %p186, %p187
    %p189 = pneg %p188
    // Predicated region
    $region37: #{tpu_custom_call.1} parent=5 // pred_check
      _
    $region38: #{tpu_custom_call.1} parent=5 // pred_check_branch
      %191 = sbr.rel (%p188) target = $region40
    $region39: #{tpu_custom_call.1} parent=5 // pred_region
      %s192 = ssub.s32 %s11, 1
      %p193 = scmp.lt.s32.totalorder %s16, 1
      %s194 = scalar_select %p193, %s16, 1
      %s195 = smul.addr %s194, 32
      %s196 = smul.addr %s195, 8
      %s197 = scalar_lea.vmem %s0, %s196
      %p198 = pneg %p37
      %p199 = pneg %p34
      %p200 = pneg %p58
      %p201 = pneg %p55
      %p202 = pneg %p79
      %p203 = pneg %p76
      %p204 = pneg %p100
      %p205 = pneg %p97
      %p206 = pneg %p121
      %p207 = pneg %p118
      %p208 = pneg %p147
      %p209 = pneg %p144
      %p210 = scmp.lt.s32.totalorder %s16, 1
      %s211 = scalar_select %p210, %s16, 1
      %s212 = smul.addr %s211, 32
      %s213 = smul.addr %s212, 8
      %s214 = scalar_lea.vmem %s5, %s213
      %p215 = scmp.lt.s32.totalorder %s16, 1
      %s216 = scalar_select %p215, %s16, 1
      %s217 = smul.addr %s216, 32
      %s218 = smul.addr %s217, 8
      %s219 = scalar_lea.vmem %s0, %s218
      %p220 = scmp.lt.s32.totalorder %s16, 1
      %s221 = scalar_select %p220, %s16, 1
      %s222 = smul.addr %s221, 32
      %s223 = smul.addr %s222, 8
      %s224 = scalar_lea.vmem %s5, %s223
      %v225 = vld [vmem:[%s219] sm:$0xff]
      %v226 = vld [vmem:[%s219 + $0x8] sm:$0xff]
      %v227 = vld [vmem:[%s219 + $0x10] sm:$0xff]
      %v228 = vld [vmem:[%s219 + $0x18] sm:$0xff]
      %v229 = vld [vmem:[%s219 + $0x20] sm:$0xff]
      %v230 = vld [vmem:[%s219 + $0x28] sm:$0xff]
      %v231 = vld [vmem:[%s219 + $0x30] sm:$0xff]
      %v232 = vld [vmem:[%s219 + $0x38] sm:$0xff]
      %v233 = vld [vmem:[%s219 + $0x40] sm:$0xff]
      %v234 = vld [vmem:[%s219 + $0x48] sm:$0xff]
      %v235 = vld [vmem:[%s219 + $0x50] sm:$0xff]
      %v236 = vld [vmem:[%s219 + $0x58] sm:$0xff]
      %v237 = vld [vmem:[%s219 + $0x60] sm:$0xff]
      %v238 = vld [vmem:[%s219 + $0x68] sm:$0xff]
      %v239 = vld [vmem:[%s219 + $0x70] sm:$0xff]
      %v240 = vld [vmem:[%s219 + $0x78] sm:$0xff]
      %v241 = vld [vmem:[%s219 + $0x80] sm:$0xff]
      %v242 = vld [vmem:[%s219 + $0x88] sm:$0xff]
      %v243 = vld [vmem:[%s219 + $0x90] sm:$0xff]
      %v244 = vld [vmem:[%s219 + $0x98] sm:$0xff]
      %v245 = vld [vmem:[%s219 + $0xa0] sm:$0xff]
      %v246 = vld [vmem:[%s219 + $0xa8] sm:$0xff]
      %v247 = vld [vmem:[%s219 + $0xb0] sm:$0xff]
      %v248 = vld [vmem:[%s219 + $0xb8] sm:$0xff]
      %v249 = vld [vmem:[%s219 + $0xc0] sm:$0xff]
      %v250 = vld [vmem:[%s219 + $0xc8] sm:$0xff]
      %v251 = vld [vmem:[%s219 + $0xd0] sm:$0xff]
      %v252 = vld [vmem:[%s219 + $0xd8] sm:$0xff]
      %v253 = vld [vmem:[%s219 + $0xe0] sm:$0xff]
      %v254 = vld [vmem:[%s219 + $0xe8] sm:$0xff]
      %v255 = vld [vmem:[%s219 + $0xf0] sm:$0xff]
      %v256 = vld [vmem:[%s219 + $0xf8] sm:$0xff]
      %s257 = scalar_lea.vmem [#allocation2], 24
      %vm258 = vcmask 31744
      %259 = vst.msk [vmem:[%s257 + $0x1] sm:$0xff] %vm258, %v225
      %260 = vst.msk [vmem:[%s257 + $0x9] sm:$0xff] %vm258, %v226
      %261 = vst.msk [vmem:[%s257 + $0x19] sm:$0xff] %vm258, %v227
      %262 = vst.msk [vmem:[%s257 + $0x21] sm:$0xff] %vm258, %v228
      %263 = vst.msk [vmem:[%s257 + $0x31] sm:$0xff] %vm258, %v229
      %264 = vst.msk [vmem:[%s257 + $0x39] sm:$0xff] %vm258, %v230
      %265 = vst.msk [vmem:[%s257 + $0x49] sm:$0xff] %vm258, %v231
      %266 = vst.msk [vmem:[%s257 + $0x51] sm:$0xff] %vm258, %v232
      %267 = vst.msk [vmem:[%s257 + $0x61] sm:$0xff] %vm258, %v233
      %268 = vst.msk [vmem:[%s257 + $0x69] sm:$0xff] %vm258, %v234
      %269 = vst.msk [vmem:[%s257 + $0x79] sm:$0xff] %vm258, %v235
      %270 = vst.msk [vmem:[%s257 + $0x81] sm:$0xff] %vm258, %v236
      %271 = vst.msk [vmem:[%s257 + $0x91] sm:$0xff] %vm258, %v237
      %272 = vst.msk [vmem:[%s257 + $0x99] sm:$0xff] %vm258, %v238
      %273 = vst.msk [vmem:[%s257 + $0xa9] sm:$0xff] %vm258, %v239
      %274 = vst.msk [vmem:[%s257 + $0xb1] sm:$0xff] %vm258, %v240
      %275 = vst.msk [vmem:[%s257 + $0xc1] sm:$0xff] %vm258, %v241
      %276 = vst.msk [vmem:[%s257 + $0xc9] sm:$0xff] %vm258, %v242
      %277 = vst.msk [vmem:[%s257 + $0xd9] sm:$0xff] %vm258, %v243
      %278 = vst.msk [vmem:[%s257 + $0xe1] sm:$0xff] %vm258, %v244
      %279 = vst.msk [vmem:[%s257 + $0xf1] sm:$0xff] %vm258, %v245
      %280 = vst.msk [vmem:[%s257 + $0xf9] sm:$0xff] %vm258, %v246
      %281 = vst.msk [vmem:[%s257 + $0x109] sm:$0xff] %vm258, %v247
      %282 = vst.msk [vmem:[%s257 + $0x111] sm:$0xff] %vm258, %v248
      %283 = vst.msk [vmem:[%s257 + $0x121] sm:$0xff] %vm258, %v249
      %284 = vst.msk [vmem:[%s257 + $0x129] sm:$0xff] %vm258, %v250
      %285 = vst.msk [vmem:[%s257 + $0x139] sm:$0xff] %vm258, %v251
      %286 = vst.msk [vmem:[%s257 + $0x141] sm:$0xff] %vm258, %v252
      %287 = vst.msk [vmem:[%s257 + $0x151] sm:$0xff] %vm258, %v253
      %288 = vst.msk [vmem:[%s257 + $0x159] sm:$0xff] %vm258, %v254
      %289 = vst.msk [vmem:[%s257 + $0x169] sm:$0xff] %vm258, %v255
      %290 = vst.msk [vmem:[%s257 + $0x171] sm:$0xff] %vm258, %v256
      %s291 = scalar_lea.vmem [#allocation2], 48
      %v292 = vld [vmem:[%s291 + $0x1] sm:$0xff]
      %v293 = vld [vmem:[%s291 + $0x9] sm:$0xff]
      %294 = vst.msk [vmem:[#allocation2 + $0x1] sm:$0xff] %vm258, %v292
      %295 = vst.msk [vmem:[#allocation2 + $0x9] sm:$0xff] %vm258, %v293
      %s296 = scalar_lea.vmem [#allocation2], 360
      %v297 = vld [vmem:[%s296 + $0x1] sm:$0xff]
      %v298 = vld [vmem:[%s296 + $0x9] sm:$0xff]
      %s299 = scalar_lea.vmem [#allocation2], 408
      %300 = vst.msk [vmem:[%s299 + $0x1] sm:$0xff] %vm258, %v297
      %301 = vst.msk [vmem:[%s299 + $0x9] sm:$0xff] %vm258, %v298
      %v302 = vld [vmem:[#allocation2 + $0x2] sm:$0x1]
      %v303 = vld [vmem:[#allocation2 + $0x1a] sm:$0x1]
      %v304 = vld [vmem:[#allocation2 + $0x32] sm:$0x1]
      %v305 = vld [vmem:[#allocation2 + $0x4a] sm:$0x1]
      %v306 = vld [vmem:[#allocation2 + $0x62] sm:$0x1]
      %v307 = vld [vmem:[#allocation2 + $0x7a] sm:$0x1]
      %v308 = vld [vmem:[#allocation2 + $0x92] sm:$0x1]
      %v309 = vld [vmem:[#allocation2 + $0xaa] sm:$0x1]
      %v310 = vld [vmem:[#allocation2 + $0xc2] sm:$0x1]
      %v311 = vld [vmem:[#allocation2 + $0xda] sm:$0x1]
      %v312 = vld [vmem:[#allocation2 + $0xf2] sm:$0x1]
      %v313 = vld [vmem:[#allocation2 + $0x10a] sm:$0x1]
      %v314 = vld [vmem:[#allocation2 + $0x122] sm:$0x1]
      %v315 = vld [vmem:[#allocation2 + $0x13a] sm:$0x1]
      %v316 = vld [vmem:[#allocation2 + $0x152] sm:$0x1]
      %v317 = vld [vmem:[#allocation2 + $0x16a] sm:$0x1]
      %v318 = vld [vmem:[#allocation2 + $0x182] sm:$0x1]
      %v319 = vld [vmem:[#allocation2 + $0x19a] sm:$0x1]
      %vm320 = vcmask 24576
      %321 = vst.msk [vmem:[#allocation2] sm:$0x1] %vm320, %v302
      %322 = vst.msk [vmem:[#allocation2 + $0x18] sm:$0x1] %vm320, %v303
      %323 = vst.msk [vmem:[#allocation2 + $0x30] sm:$0x1] %vm320, %v304
      %324 = vst.msk [vmem:[#allocation2 + $0x48] sm:$0x1] %vm320, %v305
      %325 = vst.msk [vmem:[#allocation2 + $0x60] sm:$0x1] %vm320, %v306
      %326 = vst.msk [vmem:[#allocation2 + $0x78] sm:$0x1] %vm320, %v307
      %327 = vst.msk [vmem:[#allocation2 + $0x90] sm:$0x1] %vm320, %v308
      %328 = vst.msk [vmem:[#allocation2 + $0xa8] sm:$0x1] %vm320, %v309
      %329 = vst.msk [vmem:[#allocation2 + $0xc0] sm:$0x1] %vm320, %v310
      %330 = vst.msk [vmem:[#allocation2 + $0xd8] sm:$0x1] %vm320, %v311
      %331 = vst.msk [vmem:[#allocation2 + $0xf0] sm:$0x1] %vm320, %v312
      %332 = vst.msk [vmem:[#allocation2 + $0x108] sm:$0x1] %vm320, %v313
      %333 = vst.msk [vmem:[#allocation2 + $0x120] sm:$0x1] %vm320, %v314
      %334 = vst.msk [vmem:[#allocation2 + $0x138] sm:$0x1] %vm320, %v315
      %335 = vst.msk [vmem:[#allocation2 + $0x150] sm:$0x1] %vm320, %v316
      %336 = vst.msk [vmem:[#allocation2 + $0x168] sm:$0x1] %vm320, %v317
      %337 = vst.msk [vmem:[#allocation2 + $0x180] sm:$0x1] %vm320, %v318
      %338 = vst.msk [vmem:[#allocation2 + $0x198] sm:$0x1] %vm320, %v319
      %v339 = vld [vmem:[#allocation2 + $0xf] sm:$0x1]
      %v340 = vld [vmem:[#allocation2 + $0x27] sm:$0x1]
      %v341 = vld [vmem:[#allocation2 + $0x3f] sm:$0x1]
      %v342 = vld [vmem:[#allocation2 + $0x57] sm:$0x1]
      %v343 = vld [vmem:[#allocation2 + $0x6f] sm:$0x1]
      %v344 = vld [vmem:[#allocation2 + $0x87] sm:$0x1]
      %v345 = vld [vmem:[#allocation2 + $0x9f] sm:$0x1]
      %v346 = vld [vmem:[#allocation2 + $0xb7] sm:$0x1]
      %v347 = vld [vmem:[#allocation2 + $0xcf] sm:$0x1]
      %v348 = vld [vmem:[#allocation2 + $0xe7] sm:$0x1]
      %v349 = vld [vmem:[#allocation2 + $0xff] sm:$0x1]
      %v350 = vld [vmem:[#allocation2 + $0x117] sm:$0x1]
      %v351 = vld [vmem:[#allocation2 + $0x12f] sm:$0x1]
      %v352 = vld [vmem:[#allocation2 + $0x147] sm:$0x1]
      %v353 = vld [vmem:[#allocation2 + $0x15f] sm:$0x1]
      %v354 = vld [vmem:[#allocation2 + $0x177] sm:$0x1]
      %v355 = vld [vmem:[#allocation2 + $0x18f] sm:$0x1]
      %v356 = vld [vmem:[#allocation2 + $0x1a7] sm:$0x1]
      %357 = vst.msk [vmem:[#allocation2 + $0x11] sm:$0x1] %vm320, %v339
      %358 = vst.msk [vmem:[#allocation2 + $0x29] sm:$0x1] %vm320, %v340
      %359 = vst.msk [vmem:[#allocation2 + $0x41] sm:$0x1] %vm320, %v341
      %360 = vst.msk [vmem:[#allocation2 + $0x59] sm:$0x1] %vm320, %v342
      %361 = vst.msk [vmem:[#allocation2 + $0x71] sm:$0x1] %vm320, %v343
      %362 = vst.msk [vmem:[#allocation2 + $0x89] sm:$0x1] %vm320, %v344
      %363 = vst.msk [vmem:[#allocation2 + $0xa1] sm:$0x1] %vm320, %v345
      %364 = vst.msk [vmem:[#allocation2 + $0xb9] sm:$0x1] %vm320, %v346
      %365 = vst.msk [vmem:[#allocation2 + $0xd1] sm:$0x1] %vm320, %v347
      %366 = vst.msk [vmem:[#allocation2 + $0xe9] sm:$0x1] %vm320, %v348
      %367 = vst.msk [vmem:[#allocation2 + $0x101] sm:$0x1] %vm320, %v349
      %368 = vst.msk [vmem:[#allocation2 + $0x119] sm:$0x1] %vm320, %v350
      %369 = vst.msk [vmem:[#allocation2 + $0x131] sm:$0x1] %vm320, %v351
      %370 = vst.msk [vmem:[#allocation2 + $0x149] sm:$0x1] %vm320, %v352
      %371 = vst.msk [vmem:[#allocation2 + $0x161] sm:$0x1] %vm320, %v353
      %372 = vst.msk [vmem:[#allocation2 + $0x179] sm:$0x1] %vm320, %v354
      %373 = vst.msk [vmem:[#allocation2 + $0x191] sm:$0x1] %vm320, %v355
      %374 = vst.msk [vmem:[#allocation2 + $0x1a9] sm:$0x1] %vm320, %v356
      %v375 = vld [vmem:[%s2] sm:$0x1]
      %v376 = vld [vmem:[#allocation2] sm:$0xff]
      %v377 = vld [vmem:[#allocation2 + $0x8] sm:$0xff]
      %v378 = vld [vmem:[#allocation2 + $0x18] sm:$0xff]
      %v379 = vld [vmem:[#allocation2 + $0x20] sm:$0xff]
      %v380 = vld [vmem:[#allocation2 + $0x30] sm:$0xff]
      %v381 = vld [vmem:[#allocation2 + $0x38] sm:$0xff]
      %v382 = vld [vmem:[#allocation2 + $0x48] sm:$0xff]
      %v383 = vld [vmem:[#allocation2 + $0x50] sm:$0xff]
      %v384 = vld [vmem:[#allocation2 + $0x60] sm:$0xff]
      %v385 = vld [vmem:[#allocation2 + $0x68] sm:$0xff]
      %v386 = vld [vmem:[#allocation2 + $0x78] sm:$0xff]
      %v387 = vld [vmem:[#allocation2 + $0x80] sm:$0xff]
      %v388 = vld [vmem:[#allocation2 + $0x90] sm:$0xff]
      %v389 = vld [vmem:[#allocation2 + $0x98] sm:$0xff]
      %v390 = vld [vmem:[#allocation2 + $0xa8] sm:$0xff]
      %v391 = vld [vmem:[#allocation2 + $0xb0] sm:$0xff]
      %v392 = vld [vmem:[#allocation2 + $0xc0] sm:$0xff]
      %v393 = vld [vmem:[#allocation2 + $0xc8] sm:$0xff]
      %v394 = vld [vmem:[#allocation2 + $0xd8] sm:$0xff]
      %v395 = vld [vmem:[#allocation2 + $0xe0] sm:$0xff]
      %v396 = vld [vmem:[#allocation2 + $0xf0] sm:$0xff]
      %v397 = vld [vmem:[#allocation2 + $0xf8] sm:$0xff]
      %v398 = vld [vmem:[#allocation2 + $0x108] sm:$0xff]
      %v399 = vld [vmem:[#allocation2 + $0x110] sm:$0xff]
      %v400 = vld [vmem:[#allocation2 + $0x120] sm:$0xff]
      %v401 = vld [vmem:[#allocation2 + $0x128] sm:$0xff]
      %v402 = vld [vmem:[#allocation2 + $0x138] sm:$0xff]
      %v403 = vld [vmem:[#allocation2 + $0x140] sm:$0xff]
      %v404 = vld [vmem:[#allocation2 + $0x150] sm:$0xff]
      %v405 = vld [vmem:[#allocation2 + $0x158] sm:$0xff]
      %v406 = vld [vmem:[#allocation2 + $0x168] sm:$0xff]
      %v407 = vld [vmem:[#allocation2 + $0x170] sm:$0xff]
      %v408 = vld [vmem:[%s1] sm:$0xf]
      %v409 = vld [vmem:[#allocation2 + $0x1] sm:$0xff]
      %v410 = vld [vmem:[#allocation2 + $0x9] sm:$0xff]
      %v411 = vld [vmem:[#allocation2 + $0x19] sm:$0xff]
      %v412 = vld [vmem:[#allocation2 + $0x21] sm:$0xff]
      %v413 = vld [vmem:[#allocation2 + $0x31] sm:$0xff]
      %v414 = vld [vmem:[#allocation2 + $0x39] sm:$0xff]
      %v415 = vld [vmem:[#allocation2 + $0x49] sm:$0xff]
      %v416 = vld [vmem:[#allocation2 + $0x51] sm:$0xff]
      %v417 = vld [vmem:[#allocation2 + $0x61] sm:$0xff]
      %v418 = vld [vmem:[#allocation2 + $0x69] sm:$0xff]
      %v419 = vld [vmem:[#allocation2 + $0x79] sm:$0xff]
      %v420 = vld [vmem:[#allocation2 + $0x81] sm:$0xff]
      %v421 = vld [vmem:[#allocation2 + $0x91] sm:$0xff]
      %v422 = vld [vmem:[#allocation2 + $0x99] sm:$0xff]
      %v423 = vld [vmem:[#allocation2 + $0xa9] sm:$0xff]
      %v424 = vld [vmem:[#allocation2 + $0xb1] sm:$0xff]
      %v425 = vld [vmem:[#allocation2 + $0xc1] sm:$0xff]
      %v426 = vld [vmem:[#allocation2 + $0xc9] sm:$0xff]
      %v427 = vld [vmem:[#allocation2 + $0xd9] sm:$0xff]
      %v428 = vld [vmem:[#allocation2 + $0xe1] sm:$0xff]
      %v429 = vld [vmem:[#allocation2 + $0xf1] sm:$0xff]
      %v430 = vld [vmem:[#allocation2 + $0xf9] sm:$0xff]
      %v431 = vld [vmem:[#allocation2 + $0x109] sm:$0xff]
      %v432 = vld [vmem:[#allocation2 + $0x111] sm:$0xff]
      %v433 = vld [vmem:[#allocation2 + $0x121] sm:$0xff]
      %v434 = vld [vmem:[#allocation2 + $0x129] sm:$0xff]
      %v435 = vld [vmem:[#allocation2 + $0x139] sm:$0xff]
      %v436 = vld [vmem:[#allocation2 + $0x141] sm:$0xff]
      %v437 = vld [vmem:[#allocation2 + $0x151] sm:$0xff]
      %v438 = vld [vmem:[#allocation2 + $0x159] sm:$0xff]
      %v439 = vld [vmem:[#allocation2 + $0x169] sm:$0xff]
      %v440 = vld [vmem:[#allocation2 + $0x171] sm:$0xff]
      %s441 = scalar_lea.vmem %s1, 4
      %v442 = vld [vmem:[%s441] sm:$0xf]
      %v444 = vsel %vm258, %v409, 0
      %v447 = vsel %vm258, %v410, 0
      %v450 = vsel %vm258, %v411, 0
      %v453 = vsel %vm258, %v412, 0
      %v456 = vsel %vm258, %v413, 0
      %v459 = vsel %vm258, %v414, 0
      %v462 = vsel %vm258, %v415, 0
      %v465 = vsel %vm258, %v416, 0
      %v468 = vsel %vm258, %v417, 0
      %v471 = vsel %vm258, %v418, 0
      %v474 = vsel %vm258, %v419, 0
      %v477 = vsel %vm258, %v420, 0
      %v480 = vsel %vm258, %v421, 0
      %v483 = vsel %vm258, %v422, 0
      %v486 = vsel %vm258, %v423, 0
      %v489 = vsel %vm258, %v424, 0
      %v492 = vsel %vm258, %v425, 0
      %v495 = vsel %vm258, %v426, 0
      %v498 = vsel %vm258, %v427, 0
      %v501 = vsel %vm258, %v428, 0
      %v504 = vsel %vm258, %v429, 0
      %v507 = vsel %vm258, %v430, 0
      %v510 = vsel %vm258, %v431, 0
      %v513 = vsel %vm258, %v432, 0
      %v516 = vsel %vm258, %v433, 0
      %v519 = vsel %vm258, %v434, 0
      %v522 = vsel %vm258, %v435, 0
      %v525 = vsel %vm258, %v436, 0
      %v528 = vsel %vm258, %v437, 0
      %v531 = vsel %vm258, %v438, 0
      %v534 = vsel %vm258, %v439, 0
      %v537 = vsel %vm258, %v440, 0
      %vm539 = vcmask 1043456
      %v541 = vsel %vm539, %v442, 0
      %543 = vmatprep.subr.mxu0 0.0
      %544 = vmatpush1.msra.mxu0 %v541
      %545 = vmatprep.subr.mxu0 0.0
      %546 = vmatpush1.msra.mxu0 0.0
      %547 = vmatprep.subr.mxu0 0.0
      %548 = vmatpush1.msra.mxu0 0.0
      %549 = vmatprep.subr.mxu0 0.0
      %550 = vmatpush1.msra.mxu0 0.0
      %551 = vmatprep.subr.mxu0 0.0
      %552 = vmatpush1.msra.mxu0 0.0
      %553 = vmatprep.subr.mxu0 0.0
      %554 = vmatpush1.msra.mxu0 0.0
      %555 = vmatprep.subr.mxu0 0.0
      %556 = vmatpush1.msra.mxu0 0.0
      %557 = vmatprep.subr.mxu0 0.0
      %558 = vmatpush1.msra.mxu0 0.0
      %559 = vmatprep.subr.mxu0 0.0
      %560 = vmatpush1.msra.mxu0 0.0
      %561 = vmatprep.subr.mxu0 0.0
      %562 = vmatpush1.msra.mxu0 0.0
      %563 = vmatprep.subr.mxu0 0.0
      %564 = vmatpush1.msra.mxu0 0.0
      %565 = vmatprep.subr.mxu0 0.0
      %566 = vmatpush1.msra.mxu0 0.0
      %567 = vmatprep.subr.mxu0 0.0
      %568 = vmatpush1.msra.mxu0 0.0
      %569 = vmatprep.subr.mxu0 0.0
      %570 = vmatpush1.msra.mxu0 0.0
      %571 = vmatprep.subr.mxu0 0.0
      %572 = vmatpush1.msra.mxu0 0.0
      %573 = vmatprep.subr.mxu0 0.0
      %574 = vmatpush1.msra.mxu0 0.0
      %575 = vmatprep.subr.mxu0 0.0
      %576 = vmatpush1.msra.mxu0 0.0
      %577 = vmatprep.subr.mxu0 0.0
      %578 = vmatpush1.msra.mxu0 0.0
      %579 = vmatprep.subr.mxu0 0.0
      %580 = vmatpush1.msra.mxu0 0.0
      %581 = vmatprep.subr.mxu0 0.0
      %582 = vmatpush1.msra.mxu0 0.0
      %583 = vmatprep.subr.mxu0 0.0
      %584 = vmatpush1.msra.mxu0 0.0
      %585 = vmatprep.subr.mxu0 0.0
      %586 = vmatpush1.msra.mxu0 0.0
      %587 = vmatprep.subr.mxu0 0.0
      %588 = vmatpush1.msra.mxu0 0.0
      %589 = vmatprep.subr.mxu0 0.0
      %590 = vmatpush1.msra.mxu0 0.0
      %591 = vmatprep.subr.mxu0 0.0
      %592 = vmatpush1.msra.mxu0 0.0
      %593 = vmatprep.subr.mxu0 0.0
      %594 = vmatpush1.msra.mxu0 0.0
      %595 = vmatprep.subr.mxu0 0.0
      %596 = vmatpush1.msra.mxu0 0.0
      %597 = vmatprep.subr.mxu0 0.0
      %598 = vmatpush1.msra.mxu0 0.0
      %599 = vmatprep.subr.mxu0 0.0
      %600 = vmatpush1.msra.mxu0 0.0
      %601 = vmatprep.subr.mxu0 0.0
      %602 = vmatpush1.msra.mxu0 0.0
      %603 = vmatprep.subr.mxu0 0.0
      %604 = vmatpush1.msra.mxu0 0.0
      %605 = vmatprep.subr.mxu0 0.0
      %606 = vmatpush1.msra.mxu0 0.0
      %607 = vmatprep.mubr.f32.mxu0 0.0
      %608 = vmatmul.mubr.f32.gmra.mrb[0].mxu0 %v444
      %v609 = vpop.f32.mrb[0].mxu0
      %v610 = vadd.f32 0.0, %v609
      %v611 = vpop.f32.mrb[0].mxu0
      %612 = vmatprep.mubr.f32.mxu0 0.0
      %613 = vmatmul.mubr.f32.gmra.mrb[0].mxu0 %v447
      %v614 = vpop.f32.mrb[0].mxu0
      %v615 = vadd.f32 0.0, %v614
      %v616 = vpop.f32.mrb[0].mxu0
      %617 = vmatprep.mubr.f32.mxu0 0.0
      %618 = vmatmul.mubr.f32.gmra.mrb[0].mxu0 %v450
      %v619 = vpop.f32.mrb[0].mxu0
      %v620 = vadd.f32 0.0, %v619
      %v621 = vpop.f32.mrb[0].mxu0
      %622 = vmatprep.mubr.f32.mxu0 0.0
      %623 = vmatmul.mubr.f32.gmra.mrb[0].mxu0 %v453
      %v624 = vpop.f32.mrb[0].mxu0
      %v625 = vadd.f32 0.0, %v624
      %v626 = vpop.f32.mrb[0].mxu0
      %627 = vmatprep.mubr.f32.mxu0 0.0
      %628 = vmatmul.mubr.f32.gmra.mrb[0].mxu0 %v456
      %v629 = vpop.f32.mrb[0].mxu0
      %v630 = vadd.f32 0.0, %v629
      %v631 = vpop.f32.mrb[0].mxu0
      %632 = vmatprep.mubr.f32.mxu0 0.0
      %633 = vmatmul.mubr.f32.gmra.mrb[0].mxu0 %v459
      %v634 = vpop.f32.mrb[0].mxu0
      %v635 = vadd.f32 0.0, %v634
      %v636 = vpop.f32.mrb[0].mxu0
      %637 = vmatprep.mubr.f32.mxu0 0.0
      %638 = vmatmul.mubr.f32.gmra.mrb[0].mxu0 %v462
      %v639 = vpop.f32.mrb[0].mxu0
      %v640 = vadd.f32 0.0, %v639
      %v641 = vpop.f32.mrb[0].mxu0
      %642 = vmatprep.mubr.f32.mxu0 0.0
      %643 = vmatmul.mubr.f32.gmra.mrb[0].mxu0 %v465
      %v644 = vpop.f32.mrb[0].mxu0
      %v645 = vadd.f32 0.0, %v644
      %v646 = vpop.f32.mrb[0].mxu0
      %647 = vmatprep.mubr.f32.mxu0 0.0
      %648 = vmatmul.mubr.f32.gmra.mrb[0].mxu0 %v468
      %v649 = vpop.f32.mrb[0].mxu0
      %v650 = vadd.f32 0.0, %v649
      %v651 = vpop.f32.mrb[0].mxu0
      %652 = vmatprep.mubr.f32.mxu0 0.0
      %653 = vmatmul.mubr.f32.gmra.mrb[0].mxu0 %v471
      %v654 = vpop.f32.mrb[0].mxu0
      %v655 = vadd.f32 0.0, %v654
      %v656 = vpop.f32.mrb[0].mxu0
      %657 = vmatprep.mubr.f32.mxu0 0.0
      %658 = vmatmul.mubr.f32.gmra.mrb[0].mxu0 %v474
      %v659 = vpop.f32.mrb[0].mxu0
      %v660 = vadd.f32 0.0, %v659
      %v661 = vpop.f32.mrb[0].mxu0
      %662 = vmatprep.mubr.f32.mxu0 0.0
      %663 = vmatmul.mubr.f32.gmra.mrb[0].mxu0 %v477
      %v664 = vpop.f32.mrb[0].mxu0
      %v665 = vadd.f32 0.0, %v664
      %v666 = vpop.f32.mrb[0].mxu0
      %667 = vmatprep.mubr.f32.mxu0 0.0
      %668 = vmatmul.mubr.f32.gmra.mrb[0].mxu0 %v480
      %v669 = vpop.f32.mrb[0].mxu0
      %v670 = vadd.f32 0.0, %v669
      %v671 = vpop.f32.mrb[0].mxu0
      %672 = vmatprep.mubr.f32.mxu0 0.0
      %673 = vmatmul.mubr.f32.gmra.mrb[0].mxu0 %v483
      %v674 = vpop.f32.mrb[0].mxu0
      %v675 = vadd.f32 0.0, %v674
      %v676 = vpop.f32.mrb[0].mxu0
      %677 = vmatprep.mubr.f32.mxu0 0.0
      %678 = vmatmul.mubr.f32.gmra.mrb[0].mxu0 %v486
      %v679 = vpop.f32.mrb[0].mxu0
      %v680 = vadd.f32 0.0, %v679
      %v681 = vpop.f32.mrb[0].mxu0
      %682 = vmatprep.mubr.f32.mxu0 0.0
      %683 = vmatmul.mubr.f32.gmra.mrb[0].mxu0 %v489
      %v684 = vpop.f32.mrb[0].mxu0
      %v685 = vadd.f32 0.0, %v684
      %v686 = vpop.f32.mrb[0].mxu0
      %687 = vmatprep.mubr.f32.mxu0 0.0
      %688 = vmatmul.mubr.f32.gmra.mrb[0].mxu0 %v492
      %v689 = vpop.f32.mrb[0].mxu0
      %v690 = vadd.f32 0.0, %v689
      %v691 = vpop.f32.mrb[0].mxu0
      %692 = vmatprep.mubr.f32.mxu0 0.0
      %693 = vmatmul.mubr.f32.gmra.mrb[0].mxu0 %v495
      %v694 = vpop.f32.mrb[0].mxu0
      %v695 = vadd.f32 0.0, %v694
      %v696 = vpop.f32.mrb[0].mxu0
      %697 = vmatprep.mubr.f32.mxu0 0.0
      %698 = vmatmul.mubr.f32.gmra.mrb[0].mxu0 %v498
      %v699 = vpop.f32.mrb[0].mxu0
      %v700 = vadd.f32 0.0, %v699
      %v701 = vpop.f32.mrb[0].mxu0
      %702 = vmatprep.mubr.f32.mxu0 0.0
      %703 = vmatmul.mubr.f32.gmra.mrb[0].mxu0 %v501
      %v704 = vpop.f32.mrb[0].mxu0
      %v705 = vadd.f32 0.0, %v704
      %v706 = vpop.f32.mrb[0].mxu0
      %707 = vmatprep.mubr.f32.mxu0 0.0
      %708 = vmatmul.mubr.f32.gmra.mrb[0].mxu0 %v504
      %v709 = vpop.f32.mrb[0].mxu0
      %v710 = vadd.f32 0.0, %v709
      %v711 = vpop.f32.mrb[0].mxu0
      %712 = vmatprep.mubr.f32.mxu0 0.0
      %713 = vmatmul.mubr.f32.gmra.mrb[0].mxu0 %v507
      %v714 = vpop.f32.mrb[0].mxu0
      %v715 = vadd.f32 0.0, %v714
      %v716 = vpop.f32.mrb[0].mxu0
      %717 = vmatprep.mubr.f32.mxu0 0.0
      %718 = vmatmul.mubr.f32.gmra.mrb[0].mxu0 %v510
      %v719 = vpop.f32.mrb[0].mxu0
      %v720 = vadd.f32 0.0, %v719
      %v721 = vpop.f32.mrb[0].mxu0
      %722 = vmatprep.mubr.f32.mxu0 0.0
      %723 = vmatmul.mubr.f32.gmra.mrb[0].mxu0 %v513
      %v724 = vpop.f32.mrb[0].mxu0
      %v725 = vadd.f32 0.0, %v724
      %v726 = vpop.f32.mrb[0].mxu0
      %727 = vmatprep.mubr.f32.mxu0 0.0
      %728 = vmatmul.mubr.f32.gmra.mrb[0].mxu0 %v516
      %v729 = vpop.f32.mrb[0].mxu0
      %v730 = vadd.f32 0.0, %v729
      %v731 = vpop.f32.mrb[0].mxu0
      %732 = vmatprep.mubr.f32.mxu0 0.0
      %733 = vmatmul.mubr.f32.gmra.mrb[0].mxu0 %v519
      %v734 = vpop.f32.mrb[0].mxu0
      %v735 = vadd.f32 0.0, %v734
      %v736 = vpop.f32.mrb[0].mxu0
      %737 = vmatprep.mubr.f32.mxu0 0.0
      %738 = vmatmul.mubr.f32.gmra.mrb[0].mxu0 %v522
      %v739 = vpop.f32.mrb[0].mxu0
      %v740 = vadd.f32 0.0, %v739
      %v741 = vpop.f32.mrb[0].mxu0
      %742 = vmatprep.mubr.f32.mxu0 0.0
      %743 = vmatmul.mubr.f32.gmra.mrb[0].mxu0 %v525
      %v744 = vpop.f32.mrb[0].mxu0
      %v745 = vadd.f32 0.0, %v744
      %v746 = vpop.f32.mrb[0].mxu0
      %747 = vmatprep.mubr.f32.mxu0 0.0
      %748 = vmatmul.mubr.f32.gmra.mrb[0].mxu0 %v528
      %v749 = vpop.f32.mrb[0].mxu0
      %v750 = vadd.f32 0.0, %v749
      %v751 = vpop.f32.mrb[0].mxu0
      %752 = vmatprep.mubr.f32.mxu0 0.0
      %753 = vmatmul.mubr.f32.gmra.mrb[0].mxu0 %v531
      %v754 = vpop.f32.mrb[0].mxu0
      %v755 = vadd.f32 0.0, %v754
      %v756 = vpop.f32.mrb[0].mxu0
      %757 = vmatprep.mubr.f32.mxu0 0.0
      %758 = vmatmul.mubr.f32.gmra.mrb[0].mxu0 %v534
      %v759 = vpop.f32.mrb[0].mxu0
      %v760 = vadd.f32 0.0, %v759
      %v761 = vpop.f32.mrb[0].mxu0
      %762 = vmatprep.mubr.f32.mxu0 0.0
      %763 = vmatmul.mubr.f32.gmra.mrb[0].mxu0 %v537
      %v764 = vpop.f32.mrb[0].mxu0
      %v765 = vadd.f32 0.0, %v764
      %v766 = vpop.f32.mrb[0].mxu0
      %767 = vdwg.mxu0
      %v769 = vsel %vm258, %v376, 0
      %v772 = vsel %vm258, %v377, 0
      %v775 = vsel %vm258, %v378, 0
      %v778 = vsel %vm258, %v379, 0
      %v781 = vsel %vm258, %v380, 0
      %v784 = vsel %vm258, %v381, 0
      %v787 = vsel %vm258, %v382, 0
      %v790 = vsel %vm258, %v383, 0
      %v793 = vsel %vm258, %v384, 0
      %v796 = vsel %vm258, %v385, 0
      %v799 = vsel %vm258, %v386, 0
      %v802 = vsel %vm258, %v387, 0
      %v805 = vsel %vm258, %v388, 0
      %v808 = vsel %vm258, %v389, 0
      %v811 = vsel %vm258, %v390, 0
      %v814 = vsel %vm258, %v391, 0
      %v817 = vsel %vm258, %v392, 0
      %v820 = vsel %vm258, %v393, 0
      %v823 = vsel %vm258, %v394, 0
      %v826 = vsel %vm258, %v395, 0
      %v829 = vsel %vm258, %v396, 0
      %v832 = vsel %vm258, %v397, 0
      %v835 = vsel %vm258, %v398, 0
      %v838 = vsel %vm258, %v399, 0
      %v841 = vsel %vm258, %v400, 0
      %v844 = vsel %vm258, %v401, 0
      %v847 = vsel %vm258, %v402, 0
      %v850 = vsel %vm258, %v403, 0
      %v853 = vsel %vm258, %v404, 0
      %v856 = vsel %vm258, %v405, 0
      %v859 = vsel %vm258, %v406, 0
      %v862 = vsel %vm258, %v407, 0
      %v865 = vsel %vm539, %v408, 0
      %867 = vmatprep.subr.mxu0 0.0
      %868 = vmatpush1.msra.mxu0 %v865
      %869 = vmatprep.subr.mxu0 0.0
      %870 = vmatpush1.msra.mxu0 0.0
      %871 = vmatprep.subr.mxu0 0.0
      %872 = vmatpush1.msra.mxu0 0.0
      %873 = vmatprep.subr.mxu0 0.0
      %874 = vmatpush1.msra.mxu0 0.0
      %875 = vmatprep.subr.mxu0 0.0
      %876 = vmatpush1.msra.mxu0 0.0
      %877 = vmatprep.subr.mxu0 0.0
      %878 = vmatpush1.msra.mxu0 0.0
      %879 = vmatprep.subr.mxu0 0.0
      %880 = vmatpush1.msra.mxu0 0.0
      %881 = vmatprep.subr.mxu0 0.0
      %882 = vmatpush1.msra.mxu0 0.0
      %883 = vmatprep.subr.mxu0 0.0
      %884 = vmatpush1.msra.mxu0 0.0
      %885 = vmatprep.subr.mxu0 0.0
      %886 = vmatpush1.msra.mxu0 0.0
      %887 = vmatprep.subr.mxu0 0.0
      %888 = vmatpush1.msra.mxu0 0.0
      %889 = vmatprep.subr.mxu0 0.0
      %890 = vmatpush1.msra.mxu0 0.0
      %891 = vmatprep.subr.mxu0 0.0
      %892 = vmatpush1.msra.mxu0 0.0
      %893 = vmatprep.subr.mxu0 0.0
      %894 = vmatpush1.msra.mxu0 0.0
      %895 = vmatprep.subr.mxu0 0.0
      %896 = vmatpush1.msra.mxu0 0.0
      %897 = vmatprep.subr.mxu0 0.0
      %898 = vmatpush1.msra.mxu0 0.0
      %899 = vmatprep.subr.mxu0 0.0
      %900 = vmatpush1.msra.mxu0 0.0
      %901 = vmatprep.subr.mxu0 0.0
      %902 = vmatpush1.msra.mxu0 0.0
      %903 = vmatprep.subr.mxu0 0.0
      %904 = vmatpush1.msra.mxu0 0.0
      %905 = vmatprep.subr.mxu0 0.0
      %906 = vmatpush1.msra.mxu0 0.0
      %907 = vmatprep.subr.mxu0 0.0
      %908 = vmatpush1.msra.mxu0 0.0
      %909 = vmatprep.subr.mxu0 0.0
      %910 = vmatpush1.msra.mxu0 0.0
      %911 = vmatprep.subr.mxu0 0.0
      %912 = vmatpush1.msra.mxu0 0.0
      %913 = vmatprep.subr.mxu0 0.0
      %914 = vmatpush1.msra.mxu0 0.0
      %915 = vmatprep.subr.mxu0 0.0
      %916 = vmatpush1.msra.mxu0 0.0
      %917 = vmatprep.subr.mxu0 0.0
      %918 = vmatpush1.msra.mxu0 0.0
      %919 = vmatprep.subr.mxu0 0.0
      %920 = vmatpush1.msra.mxu0 0.0
      %921 = vmatprep.subr.mxu0 0.0
      %922 = vmatpush1.msra.mxu0 0.0
      %923 = vmatprep.subr.mxu0 0.0
      %924 = vmatpush1.msra.mxu0 0.0
      %925 = vmatprep.subr.mxu0 0.0
      %926 = vmatpush1.msra.mxu0 0.0
      %927 = vmatprep.subr.mxu0 0.0
      %928 = vmatpush1.msra.mxu0 0.0
      %929 = vmatprep.subr.mxu0 0.0
      %930 = vmatpush1.msra.mxu0 0.0
      %931 = vmatprep.mubr.f32.mxu0 0.0
      %932 = vmatmul.mubr.f32.gmra.mrb[0].mxu0 %v769
      %v933 = vpop.f32.mrb[0].mxu0
      %v934 = vadd.f32 %v610, %v933
      %v935 = vpop.f32.mrb[0].mxu0
      %936 = vmatprep.mubr.f32.mxu0 0.0
      %937 = vmatmul.mubr.f32.gmra.mrb[0].mxu0 %v772
      %v938 = vpop.f32.mrb[0].mxu0
      %v939 = vadd.f32 %v615, %v938
      %v940 = vpop.f32.mrb[0].mxu0
      %941 = vmatprep.mubr.f32.mxu0 0.0
      %942 = vmatmul.mubr.f32.gmra.mrb[0].mxu0 %v775
      %v943 = vpop.f32.mrb[0].mxu0
      %v944 = vadd.f32 %v620, %v943
      %v945 = vpop.f32.mrb[0].mxu0
      %946 = vmatprep.mubr.f32.mxu0 0.0
      %947 = vmatmul.mubr.f32.gmra.mrb[0].mxu0 %v778
      %v948 = vpop.f32.mrb[0].mxu0
      %v949 = vadd.f32 %v625, %v948
      %v950 = vpop.f32.mrb[0].mxu0
      %951 = vmatprep.mubr.f32.mxu0 0.0
      %952 = vmatmul.mubr.f32.gmra.mrb[0].mxu0 %v781
      %v953 = vpop.f32.mrb[0].mxu0
      %v954 = vadd.f32 %v630, %v953
      %v955 = vpop.f32.mrb[0].mxu0
      %956 = vmatprep.mubr.f32.mxu0 0.0
      %957 = vmatmul.mubr.f32.gmra.mrb[0].mxu0 %v784
      %v958 = vpop.f32.mrb[0].mxu0
      %v959 = vadd.f32 %v635, %v958
      %v960 = vpop.f32.mrb[0].mxu0
      %961 = vmatprep.mubr.f32.mxu0 0.0
      %962 = vmatmul.mubr.f32.gmra.mrb[0].mxu0 %v787
      %v963 = vpop.f32.mrb[0].mxu0
      %v964 = vadd.f32 %v640, %v963
      %v965 = vpop.f32.mrb[0].mxu0
      %966 = vmatprep.mubr.f32.mxu0 0.0
      %967 = vmatmul.mubr.f32.gmra.mrb[0].mxu0 %v790
      %v968 = vpop.f32.mrb[0].mxu0
      %v969 = vadd.f32 %v645, %v968
      %v970 = vpop.f32.mrb[0].mxu0
      %971 = vmatprep.mubr.f32.mxu0 0.0
      %972 = vmatmul.mubr.f32.gmra.mrb[0].mxu0 %v793
      %v973 = vpop.f32.mrb[0].mxu0
      %v974 = vadd.f32 %v650, %v973
      %v975 = vpop.f32.mrb[0].mxu0
      %976 = vmatprep.mubr.f32.mxu0 0.0
      %977 = vmatmul.mubr.f32.gmra.mrb[0].mxu0 %v796
      %v978 = vpop.f32.mrb[0].mxu0
      %v979 = vadd.f32 %v655, %v978
      %v980 = vpop.f32.mrb[0].mxu0
      %981 = vmatprep.mubr.f32.mxu0 0.0
      %982 = vmatmul.mubr.f32.gmra.mrb[0].mxu0 %v799
      %v983 = vpop.f32.mrb[0].mxu0
      %v984 = vadd.f32 %v660, %v983
      %v985 = vpop.f32.mrb[0].mxu0
      %986 = vmatprep.mubr.f32.mxu0 0.0
      %987 = vmatmul.mubr.f32.gmra.mrb[0].mxu0 %v802
      %v988 = vpop.f32.mrb[0].mxu0
      %v989 = vadd.f32 %v665, %v988
      %v990 = vpop.f32.mrb[0].mxu0
      %991 = vmatprep.mubr.f32.mxu0 0.0
      %992 = vmatmul.mubr.f32.gmra.mrb[0].mxu0 %v805
      %v993 = vpop.f32.mrb[0].mxu0
      %v994 = vadd.f32 %v670, %v993
      %v995 = vpop.f32.mrb[0].mxu0
      %996 = vmatprep.mubr.f32.mxu0 0.0
      %997 = vmatmul.mubr.f32.gmra.mrb[0].mxu0 %v808
      %v998 = vpop.f32.mrb[0].mxu0
      %v999 = vadd.f32 %v675, %v998
      %v1000 = vpop.f32.mrb[0].mxu0
      %1001 = vmatprep.mubr.f32.mxu0 0.0
      %1002 = vmatmul.mubr.f32.gmra.mrb[0].mxu0 %v811
      %v1003 = vpop.f32.mrb[0].mxu0
      %v1004 = vadd.f32 %v680, %v1003
      %v1005 = vpop.f32.mrb[0].mxu0
      %1006 = vmatprep.mubr.f32.mxu0 0.0
      %1007 = vmatmul.mubr.f32.gmra.mrb[0].mxu0 %v814
      %v1008 = vpop.f32.mrb[0].mxu0
      %v1009 = vadd.f32 %v685, %v1008
      %v1010 = vpop.f32.mrb[0].mxu0
      %1011 = vmatprep.mubr.f32.mxu0 0.0
      %1012 = vmatmul.mubr.f32.gmra.mrb[0].mxu0 %v817
      %v1013 = vpop.f32.mrb[0].mxu0
      %v1014 = vadd.f32 %v690, %v1013
      %v1015 = vpop.f32.mrb[0].mxu0
      %1016 = vmatprep.mubr.f32.mxu0 0.0
      %1017 = vmatmul.mubr.f32.gmra.mrb[0].mxu0 %v820
      %v1018 = vpop.f32.mrb[0].mxu0
      %v1019 = vadd.f32 %v695, %v1018
      %v1020 = vpop.f32.mrb[0].mxu0
      %1021 = vmatprep.mubr.f32.mxu0 0.0
      %1022 = vmatmul.mubr.f32.gmra.mrb[0].mxu0 %v823
      %v1023 = vpop.f32.mrb[0].mxu0
      %v1024 = vadd.f32 %v700, %v1023
      %v1025 = vpop.f32.mrb[0].mxu0
      %1026 = vmatprep.mubr.f32.mxu0 0.0
      %1027 = vmatmul.mubr.f32.gmra.mrb[0].mxu0 %v826
      %v1028 = vpop.f32.mrb[0].mxu0
      %v1029 = vadd.f32 %v705, %v1028
      %v1030 = vpop.f32.mrb[0].mxu0
      %1031 = vmatprep.mubr.f32.mxu0 0.0
      %1032 = vmatmul.mubr.f32.gmra.mrb[0].mxu0 %v829
      %v1033 = vpop.f32.mrb[0].mxu0
      %v1034 = vadd.f32 %v710, %v1033
      %v1035 = vpop.f32.mrb[0].mxu0
      %1036 = vmatprep.mubr.f32.mxu0 0.0
      %1037 = vmatmul.mubr.f32.gmra.mrb[0].mxu0 %v832
      %v1038 = vpop.f32.mrb[0].mxu0
      %v1039 = vadd.f32 %v715, %v1038
      %v1040 = vpop.f32.mrb[0].mxu0
      %1041 = vmatprep.mubr.f32.mxu0 0.0
      %1042 = vmatmul.mubr.f32.gmra.mrb[0].mxu0 %v835
      %v1043 = vpop.f32.mrb[0].mxu0
      %v1044 = vadd.f32 %v720, %v1043
      %v1045 = vpop.f32.mrb[0].mxu0
      %1046 = vmatprep.mubr.f32.mxu0 0.0
      %1047 = vmatmul.mubr.f32.gmra.mrb[0].mxu0 %v838
      %v1048 = vpop.f32.mrb[0].mxu0
      %v1049 = vadd.f32 %v725, %v1048
      %v1050 = vpop.f32.mrb[0].mxu0
      %1051 = vmatprep.mubr.f32.mxu0 0.0
      %1052 = vmatmul.mubr.f32.gmra.mrb[0].mxu0 %v841
      %v1053 = vpop.f32.mrb[0].mxu0
      %v1054 = vadd.f32 %v730, %v1053
      %v1055 = vpop.f32.mrb[0].mxu0
      %1056 = vmatprep.mubr.f32.mxu0 0.0
      %1057 = vmatmul.mubr.f32.gmra.mrb[0].mxu0 %v844
      %v1058 = vpop.f32.mrb[0].mxu0
      %v1059 = vadd.f32 %v735, %v1058
      %v1060 = vpop.f32.mrb[0].mxu0
      %1061 = vmatprep.mubr.f32.mxu0 0.0
      %1062 = vmatmul.mubr.f32.gmra.mrb[0].mxu0 %v847
      %v1063 = vpop.f32.mrb[0].mxu0
      %v1064 = vadd.f32 %v740, %v1063
      %v1065 = vpop.f32.mrb[0].mxu0
      %1066 = vmatprep.mubr.f32.mxu0 0.0
      %1067 = vmatmul.mubr.f32.gmra.mrb[0].mxu0 %v850
      %v1068 = vpop.f32.mrb[0].mxu0
      %v1069 = vadd.f32 %v745, %v1068
      %v1070 = vpop.f32.mrb[0].mxu0
      %1071 = vmatprep.mubr.f32.mxu0 0.0
      %1072 = vmatmul.mubr.f32.gmra.mrb[0].mxu0 %v853
      %v1073 = vpop.f32.mrb[0].mxu0
      %v1074 = vadd.f32 %v750, %v1073
      %v1075 = vpop.f32.mrb[0].mxu0
      %1076 = vmatprep.mubr.f32.mxu0 0.0
      %1077 = vmatmul.mubr.f32.gmra.mrb[0].mxu0 %v856
      %v1078 = vpop.f32.mrb[0].mxu0
      %v1079 = vadd.f32 %v755, %v1078
      %v1080 = vpop.f32.mrb[0].mxu0
      %1081 = vmatprep.mubr.f32.mxu0 0.0
      %1082 = vmatmul.mubr.f32.gmra.mrb[0].mxu0 %v859
      %v1083 = vpop.f32.mrb[0].mxu0
      %v1084 = vadd.f32 %v760, %v1083
      %v1085 = vpop.f32.mrb[0].mxu0
      %1086 = vmatprep.mubr.f32.mxu0 0.0
      %1087 = vmatmul.mubr.f32.gmra.mrb[0].mxu0 %v862
      %v1088 = vpop.f32.mrb[0].mxu0
      %v1089 = vadd.f32 %v765, %v1088
      %v1090 = vpop.f32.mrb[0].mxu0
      %1091 = vdwg.mxu0
      %v1092 = vld [vmem:[#allocation2 + $0x2] sm:$0xff]
      %v1093 = vld [vmem:[#allocation2 + $0xa] sm:$0xff]
      %v1094 = vld [vmem:[#allocation2 + $0x1a] sm:$0xff]
      %v1095 = vld [vmem:[#allocation2 + $0x22] sm:$0xff]
      %v1096 = vld [vmem:[#allocation2 + $0x32] sm:$0xff]
      %v1097 = vld [vmem:[#allocation2 + $0x3a] sm:$0xff]
      %v1098 = vld [vmem:[#allocation2 + $0x4a] sm:$0xff]
      %v1099 = vld [vmem:[#allocation2 + $0x52] sm:$0xff]
      %v1100 = vld [vmem:[#allocation2 + $0x62] sm:$0xff]
      %v1101 = vld [vmem:[#allocation2 + $0x6a] sm:$0xff]
      %v1102 = vld [vmem:[#allocation2 + $0x7a] sm:$0xff]
      %v1103 = vld [vmem:[#allocation2 + $0x82] sm:$0xff]
      %v1104 = vld [vmem:[#allocation2 + $0x92] sm:$0xff]
      %v1105 = vld [vmem:[#allocation2 + $0x9a] sm:$0xff]
      %v1106 = vld [vmem:[#allocation2 + $0xaa] sm:$0xff]
      %v1107 = vld [vmem:[#allocation2 + $0xb2] sm:$0xff]
      %v1108 = vld [vmem:[#allocation2 + $0xc2] sm:$0xff]
      %v1109 = vld [vmem:[#allocation2 + $0xca] sm:$0xff]
      %v1110 = vld [vmem:[#allocation2 + $0xda] sm:$0xff]
      %v1111 = vld [vmem:[#allocation2 + $0xe2] sm:$0xff]
      %v1112 = vld [vmem:[#allocation2 + $0xf2] sm:$0xff]
      %v1113 = vld [vmem:[#allocation2 + $0xfa] sm:$0xff]
      %v1114 = vld [vmem:[#allocation2 + $0x10a] sm:$0xff]
      %v1115 = vld [vmem:[#allocation2 + $0x112] sm:$0xff]
      %v1116 = vld [vmem:[#allocation2 + $0x122] sm:$0xff]
      %v1117 = vld [vmem:[#allocation2 + $0x12a] sm:$0xff]
      %v1118 = vld [vmem:[#allocation2 + $0x13a] sm:$0xff]
      %v1119 = vld [vmem:[#allocation2 + $0x142] sm:$0xff]
      %v1120 = vld [vmem:[#allocation2 + $0x152] sm:$0xff]
      %v1121 = vld [vmem:[#allocation2 + $0x15a] sm:$0xff]
      %v1122 = vld [vmem:[#allocation2 + $0x16a] sm:$0xff]
      %v1123 = vld [vmem:[#allocation2 + $0x172] sm:$0xff]
      %s1124 = scalar_lea.vmem %s1, 8
      %v1125 = vld [vmem:[%s1124] sm:$0xf]
      %v1127 = vsel %vm258, %v1092, 0
      %v1130 = vsel %vm258, %v1093, 0
      %v1133 = vsel %vm258, %v1094, 0
      %v1136 = vsel %vm258, %v1095, 0
      %v1139 = vsel %vm258, %v1096, 0
      %v1142 = vsel %vm258, %v1097, 0
      %v1145 = vsel %vm258, %v1098, 0
      %v1148 = vsel %vm258, %v1099, 0
      %v1151 = vsel %vm258, %v1100, 0
      %v1154 = vsel %vm258, %v1101, 0
      %v1157 = vsel %vm258, %v1102, 0
      %v1160 = vsel %vm258, %v1103, 0
      %v1163 = vsel %vm258, %v1104, 0
      %v1166 = vsel %vm258, %v1105, 0
      %v1169 = vsel %vm258, %v1106, 0
      %v1172 = vsel %vm258, %v1107, 0
      %v1175 = vsel %vm258, %v1108, 0
      %v1178 = vsel %vm258, %v1109, 0
      %v1181 = vsel %vm258, %v1110, 0
      %v1184 = vsel %vm258, %v1111, 0
      %v1187 = vsel %vm258, %v1112, 0
      %v1190 = vsel %vm258, %v1113, 0
      %v1193 = vsel %vm258, %v1114, 0
      %v1196 = vsel %vm258, %v1115, 0
      %v1199 = vsel %vm258, %v1116, 0
      %v1202 = vsel %vm258, %v1117, 0
      %v1205 = vsel %vm258, %v1118, 0
      %v1208 = vsel %vm258, %v1119, 0
      %v1211 = vsel %vm258, %v1120, 0
      %v1214 = vsel %vm258, %v1121, 0
      %v1217 = vsel %vm258, %v1122, 0
      %v1220 = vsel %vm258, %v1123, 0
      %v1223 = vsel %vm539, %v1125, 0
      %1225 = vmatprep.subr.mxu0 0.0
      %1226 = vmatpush1.msra.mxu0 %v1223
      %1227 = vmatprep.subr.mxu0 0.0
      %1228 = vmatpush1.msra.mxu0 0.0
      %1229 = vmatprep.subr.mxu0 0.0
      %1230 = vmatpush1.msra.mxu0 0.0
      %1231 = vmatprep.subr.mxu0 0.0
      %1232 = vmatpush1.msra.mxu0 0.0
      %1233 = vmatprep.subr.mxu0 0.0
      %1234 = vmatpush1.msra.mxu0 0.0
      %1235 = vmatprep.subr.mxu0 0.0
      %1236 = vmatpush1.msra.mxu0 0.0
      %1237 = vmatprep.subr.mxu0 0.0
      %1238 = vmatpush1.msra.mxu0 0.0
      %1239 = vmatprep.subr.mxu0 0.0
      %1240 = vmatpush1.msra.mxu0 0.0
      %1241 = vmatprep.subr.mxu0 0.0
      %1242 = vmatpush1.msra.mxu0 0.0
      %1243 = vmatprep.subr.mxu0 0.0
      %1244 = vmatpush1.msra.mxu0 0.0
      %1245 = vmatprep.subr.mxu0 0.0
      %1246 = vmatpush1.msra.mxu0 0.0
      %1247 = vmatprep.subr.mxu0 0.0
      %1248 = vmatpush1.msra.mxu0 0.0
      %1249 = vmatprep.subr.mxu0 0.0
      %1250 = vmatpush1.msra.mxu0 0.0
      %1251 = vmatprep.subr.mxu0 0.0
      %1252 = vmatpush1.msra.mxu0 0.0
      %1253 = vmatprep.subr.mxu0 0.0
      %1254 = vmatpush1.msra.mxu0 0.0
      %1255 = vmatprep.subr.mxu0 0.0
      %1256 = vmatpush1.msra.mxu0 0.0
      %1257 = vmatprep.subr.mxu0 0.0
      %1258 = vmatpush1.msra.mxu0 0.0
      %1259 = vmatprep.subr.mxu0 0.0
      %1260 = vmatpush1.msra.mxu0 0.0
      %1261 = vmatprep.subr.mxu0 0.0
      %1262 = vmatpush1.msra.mxu0 0.0
      %1263 = vmatprep.subr.mxu0 0.0
      %1264 = vmatpush1.msra.mxu0 0.0
      %1265 = vmatprep.subr.mxu0 0.0
      %1266 = vmatpush1.msra.mxu0 0.0
      %1267 = vmatprep.subr.mxu0 0.0
      %1268 = vmatpush1.msra.mxu0 0.0
      %1269 = vmatprep.subr.mxu0 0.0
      %1270 = vmatpush1.msra.mxu0 0.0
      %1271 = vmatprep.subr.mxu0 0.0
      %1272 = vmatpush1.msra.mxu0 0.0
      %1273 = vmatprep.subr.mxu0 0.0
      %1274 = vmatpush1.msra.mxu0 0.0
      %1275 = vmatprep.subr.mxu0 0.0
      %1276 = vmatpush1.msra.mxu0 0.0
      %1277 = vmatprep.subr.mxu0 0.0
      %1278 = vmatpush1.msra.mxu0 0.0
      %1279 = vmatprep.subr.mxu0 0.0
      %1280 = vmatpush1.msra.mxu0 0.0
      %1281 = vmatprep.subr.mxu0 0.0
      %1282 = vmatpush1.msra.mxu0 0.0
      %1283 = vmatprep.subr.mxu0 0.0
      %1284 = vmatpush1.msra.mxu0 0.0
      %1285 = vmatprep.subr.mxu0 0.0
      %1286 = vmatpush1.msra.mxu0 0.0
      %1287 = vmatprep.subr.mxu0 0.0
      %1288 = vmatpush1.msra.mxu0 0.0
      %1289 = vmatprep.mubr.f32.mxu0 0.0
      %1290 = vmatmul.mubr.f32.gmra.mrb[0].mxu0 %v1127
      %v1291 = vpop.f32.mrb[0].mxu0
      %v1292 = vadd.f32 0.0, %v1291
      %v1293 = vpop.f32.mrb[0].mxu0
      %1294 = vmatprep.mubr.f32.mxu0 0.0
      %1295 = vmatmul.mubr.f32.gmra.mrb[0].mxu0 %v1130
      %v1296 = vpop.f32.mrb[0].mxu0
      %v1297 = vadd.f32 0.0, %v1296
      %v1298 = vpop.f32.mrb[0].mxu0
      %1299 = vmatprep.mubr.f32.mxu0 0.0
      %1300 = vmatmul.mubr.f32.gmra.mrb[0].mxu0 %v1133
      %v1301 = vpop.f32.mrb[0].mxu0
      %v1302 = vadd.f32 0.0, %v1301
      %v1303 = vpop.f32.mrb[0].mxu0
      %1304 = vmatprep.mubr.f32.mxu0 0.0
      %1305 = vmatmul.mubr.f32.gmra.mrb[0].mxu0 %v1136
      %v1306 = vpop.f32.mrb[0].mxu0
      %v1307 = vadd.f32 0.0, %v1306
      %v1308 = vpop.f32.mrb[0].mxu0
      %1309 = vmatprep.mubr.f32.mxu0 0.0
      %1310 = vmatmul.mubr.f32.gmra.mrb[0].mxu0 %v1139
      %v1311 = vpop.f32.mrb[0].mxu0
      %v1312 = vadd.f32 0.0, %v1311
      %v1313 = vpop.f32.mrb[0].mxu0
      %1314 = vmatprep.mubr.f32.mxu0 0.0
      %1315 = vmatmul.mubr.f32.gmra.mrb[0].mxu0 %v1142
      %v1316 = vpop.f32.mrb[0].mxu0
      %v1317 = vadd.f32 0.0, %v1316
      %v1318 = vpop.f32.mrb[0].mxu0
      %1319 = vmatprep.mubr.f32.mxu0 0.0
      %1320 = vmatmul.mubr.f32.gmra.mrb[0].mxu0 %v1145
      %v1321 = vpop.f32.mrb[0].mxu0
      %v1322 = vadd.f32 0.0, %v1321
      %v1323 = vpop.f32.mrb[0].mxu0
      %1324 = vmatprep.mubr.f32.mxu0 0.0
      %1325 = vmatmul.mubr.f32.gmra.mrb[0].mxu0 %v1148
      %v1326 = vpop.f32.mrb[0].mxu0
      %v1327 = vadd.f32 0.0, %v1326
      %v1328 = vpop.f32.mrb[0].mxu0
      %1329 = vmatprep.mubr.f32.mxu0 0.0
      %1330 = vmatmul.mubr.f32.gmra.mrb[0].mxu0 %v1151
      %v1331 = vpop.f32.mrb[0].mxu0
      %v1332 = vadd.f32 0.0, %v1331
      %v1333 = vpop.f32.mrb[0].mxu0
      %1334 = vmatprep.mubr.f32.mxu0 0.0
      %1335 = vmatmul.mubr.f32.gmra.mrb[0].mxu0 %v1154
      %v1336 = vpop.f32.mrb[0].mxu0
      %v1337 = vadd.f32 0.0, %v1336
      %v1338 = vpop.f32.mrb[0].mxu0
      %1339 = vmatprep.mubr.f32.mxu0 0.0
      %1340 = vmatmul.mubr.f32.gmra.mrb[0].mxu0 %v1157
      %v1341 = vpop.f32.mrb[0].mxu0
      %v1342 = vadd.f32 0.0, %v1341
      %v1343 = vpop.f32.mrb[0].mxu0
      %1344 = vmatprep.mubr.f32.mxu0 0.0
      %1345 = vmatmul.mubr.f32.gmra.mrb[0].mxu0 %v1160
      %v1346 = vpop.f32.mrb[0].mxu0
      %v1347 = vadd.f32 0.0, %v1346
      %v1348 = vpop.f32.mrb[0].mxu0
      %1349 = vmatprep.mubr.f32.mxu0 0.0
      %1350 = vmatmul.mubr.f32.gmra.mrb[0].mxu0 %v1163
      %v1351 = vpop.f32.mrb[0].mxu0
      %v1352 = vadd.f32 0.0, %v1351
      %v1353 = vpop.f32.mrb[0].mxu0
      %1354 = vmatprep.mubr.f32.mxu0 0.0
      %1355 = vmatmul.mubr.f32.gmra.mrb[0].mxu0 %v1166
      %v1356 = vpop.f32.mrb[0].mxu0
      %v1357 = vadd.f32 0.0, %v1356
      %v1358 = vpop.f32.mrb[0].mxu0
      %1359 = vmatprep.mubr.f32.mxu0 0.0
      %1360 = vmatmul.mubr.f32.gmra.mrb[0].mxu0 %v1169
      %v1361 = vpop.f32.mrb[0].mxu0
      %v1362 = vadd.f32 0.0, %v1361
      %v1363 = vpop.f32.mrb[0].mxu0
      %1364 = vmatprep.mubr.f32.mxu0 0.0
      %1365 = vmatmul.mubr.f32.gmra.mrb[0].mxu0 %v1172
      %v1366 = vpop.f32.mrb[0].mxu0
      %v1367 = vadd.f32 0.0, %v1366
      %v1368 = vpop.f32.mrb[0].mxu0
      %1369 = vmatprep.mubr.f32.mxu0 0.0
      %1370 = vmatmul.mubr.f32.gmra.mrb[0].mxu0 %v1175
      %v1371 = vpop.f32.mrb[0].mxu0
      %v1372 = vadd.f32 0.0, %v1371
      %v1373 = vpop.f32.mrb[0].mxu0
      %1374 = vmatprep.mubr.f32.mxu0 0.0
      %1375 = vmatmul.mubr.f32.gmra.mrb[0].mxu0 %v1178
      %v1376 = vpop.f32.mrb[0].mxu0
      %v1377 = vadd.f32 0.0, %v1376
      %v1378 = vpop.f32.mrb[0].mxu0
      %1379 = vmatprep.mubr.f32.mxu0 0.0
      %1380 = vmatmul.mubr.f32.gmra.mrb[0].mxu0 %v1181
      %v1381 = vpop.f32.mrb[0].mxu0
      %v1382 = vadd.f32 0.0, %v1381
      %v1383 = vpop.f32.mrb[0].mxu0
      %1384 = vmatprep.mubr.f32.mxu0 0.0
      %1385 = vmatmul.mubr.f32.gmra.mrb[0].mxu0 %v1184
      %v1386 = vpop.f32.mrb[0].mxu0
      %v1387 = vadd.f32 0.0, %v1386
      %v1388 = vpop.f32.mrb[0].mxu0
      %1389 = vmatprep.mubr.f32.mxu0 0.0
      %1390 = vmatmul.mubr.f32.gmra.mrb[0].mxu0 %v1187
      %v1391 = vpop.f32.mrb[0].mxu0
      %v1392 = vadd.f32 0.0, %v1391
      %v1393 = vpop.f32.mrb[0].mxu0
      %1394 = vmatprep.mubr.f32.mxu0 0.0
      %1395 = vmatmul.mubr.f32.gmra.mrb[0].mxu0 %v1190
      %v1396 = vpop.f32.mrb[0].mxu0
      %v1397 = vadd.f32 0.0, %v1396
      %v1398 = vpop.f32.mrb[0].mxu0
      %1399 = vmatprep.mubr.f32.mxu0 0.0
      %1400 = vmatmul.mubr.f32.gmra.mrb[0].mxu0 %v1193
      %v1401 = vpop.f32.mrb[0].mxu0
      %v1402 = vadd.f32 0.0, %v1401
      %v1403 = vpop.f32.mrb[0].mxu0
      %1404 = vmatprep.mubr.f32.mxu0 0.0
      %1405 = vmatmul.mubr.f32.gmra.mrb[0].mxu0 %v1196
      %v1406 = vpop.f32.mrb[0].mxu0
      %v1407 = vadd.f32 0.0, %v1406
      %v1408 = vpop.f32.mrb[0].mxu0
      %1409 = vmatprep.mubr.f32.mxu0 0.0
      %1410 = vmatmul.mubr.f32.gmra.mrb[0].mxu0 %v1199
      %v1411 = vpop.f32.mrb[0].mxu0
      %v1412 = vadd.f32 0.0, %v1411
      %v1413 = vpop.f32.mrb[0].mxu0
      %1414 = vmatprep.mubr.f32.mxu0 0.0
      %1415 = vmatmul.mubr.f32.gmra.mrb[0].mxu0 %v1202
      %v1416 = vpop.f32.mrb[0].mxu0
      %v1417 = vadd.f32 0.0, %v1416
      %v1418 = vpop.f32.mrb[0].mxu0
      %1419 = vmatprep.mubr.f32.mxu0 0.0
      %1420 = vmatmul.mubr.f32.gmra.mrb[0].mxu0 %v1205
      %v1421 = vpop.f32.mrb[0].mxu0
      %v1422 = vadd.f32 0.0, %v1421
      %v1423 = vpop.f32.mrb[0].mxu0
      %1424 = vmatprep.mubr.f32.mxu0 0.0
      %1425 = vmatmul.mubr.f32.gmra.mrb[0].mxu0 %v1208
      %v1426 = vpop.f32.mrb[0].mxu0
      %v1427 = vadd.f32 0.0, %v1426
      %v1428 = vpop.f32.mrb[0].mxu0
      %1429 = vmatprep.mubr.f32.mxu0 0.0
      %1430 = vmatmul.mubr.f32.gmra.mrb[0].mxu0 %v1211
      %v1431 = vpop.f32.mrb[0].mxu0
      %v1432 = vadd.f32 0.0, %v1431
      %v1433 = vpop.f32.mrb[0].mxu0
      %1434 = vmatprep.mubr.f32.mxu0 0.0
      %1435 = vmatmul.mubr.f32.gmra.mrb[0].mxu0 %v1214
      %v1436 = vpop.f32.mrb[0].mxu0
      %v1437 = vadd.f32 0.0, %v1436
      %v1438 = vpop.f32.mrb[0].mxu0
      %1439 = vmatprep.mubr.f32.mxu0 0.0
      %1440 = vmatmul.mubr.f32.gmra.mrb[0].mxu0 %v1217
      %v1441 = vpop.f32.mrb[0].mxu0
      %v1442 = vadd.f32 0.0, %v1441
      %v1443 = vpop.f32.mrb[0].mxu0
      %1444 = vmatprep.mubr.f32.mxu0 0.0
      %1445 = vmatmul.mubr.f32.gmra.mrb[0].mxu0 %v1220
      %v1446 = vpop.f32.mrb[0].mxu0
      %v1447 = vadd.f32 0.0, %v1446
      %v1448 = vpop.f32.mrb[0].mxu0
      %1449 = vdwg.mxu0
      %v1450 = vadd.f32 %v934, %v1292
      %v1451 = vadd.f32 %v939, %v1297
      %v1452 = vadd.f32 %v944, %v1302
      %v1453 = vadd.f32 %v949, %v1307
      %v1454 = vadd.f32 %v954, %v1312
      %v1455 = vadd.f32 %v959, %v1317
      %v1456 = vadd.f32 %v964, %v1322
      %v1457 = vadd.f32 %v969, %v1327
      %v1458 = vadd.f32 %v974, %v1332
      %v1459 = vadd.f32 %v979, %v1337
      %v1460 = vadd.f32 %v984, %v1342
      %v1461 = vadd.f32 %v989, %v1347
      %v1462 = vadd.f32 %v994, %v1352
      %v1463 = vadd.f32 %v999, %v1357
      %v1464 = vadd.f32 %v1004, %v1362
      %v1465 = vadd.f32 %v1009, %v1367
      %v1466 = vadd.f32 %v1014, %v1372
      %v1467 = vadd.f32 %v1019, %v1377
      %v1468 = vadd.f32 %v1024, %v1382
      %v1469 = vadd.f32 %v1029, %v1387
      %v1470 = vadd.f32 %v1034, %v1392
      %v1471 = vadd.f32 %v1039, %v1397
      %v1472 = vadd.f32 %v1044, %v1402
      %v1473 = vadd.f32 %v1049, %v1407
      %v1474 = vadd.f32 %v1054, %v1412
      %v1475 = vadd.f32 %v1059, %v1417
      %v1476 = vadd.f32 %v1064, %v1422
      %v1477 = vadd.f32 %v1069, %v1427
      %v1478 = vadd.f32 %v1074, %v1432
      %v1479 = vadd.f32 %v1079, %v1437
      %v1480 = vadd.f32 %v1084, %v1442
      %v1481 = vadd.f32 %v1089, %v1447
      %v1482 = vld [vmem:[%s257] sm:$0xff]
      %v1483 = vld [vmem:[%s257 + $0x8] sm:$0xff]
      %v1484 = vld [vmem:[%s257 + $0x18] sm:$0xff]
      %v1485 = vld [vmem:[%s257 + $0x20] sm:$0xff]
      %v1486 = vld [vmem:[%s257 + $0x30] sm:$0xff]
      %v1487 = vld [vmem:[%s257 + $0x38] sm:$0xff]
      %v1488 = vld [vmem:[%s257 + $0x48] sm:$0xff]
      %v1489 = vld [vmem:[%s257 + $0x50] sm:$0xff]
      %v1490 = vld [vmem:[%s257 + $0x60] sm:$0xff]
      %v1491 = vld [vmem:[%s257 + $0x68] sm:$0xff]
      %v1492 = vld [vmem:[%s257 + $0x78] sm:$0xff]
      %v1493 = vld [vmem:[%s257 + $0x80] sm:$0xff]
      %v1494 = vld [vmem:[%s257 + $0x90] sm:$0xff]
      %v1495 = vld [vmem:[%s257 + $0x98] sm:$0xff]
      %v1496 = vld [vmem:[%s257 + $0xa8] sm:$0xff]
      %v1497 = vld [vmem:[%s257 + $0xb0] sm:$0xff]
      %v1498 = vld [vmem:[%s257 + $0xc0] sm:$0xff]
      %v1499 = vld [vmem:[%s257 + $0xc8] sm:$0xff]
      %v1500 = vld [vmem:[%s257 + $0xd8] sm:$0xff]
      %v1501 = vld [vmem:[%s257 + $0xe0] sm:$0xff]
      %v1502 = vld [vmem:[%s257 + $0xf0] sm:$0xff]
      %v1503 = vld [vmem:[%s257 + $0xf8] sm:$0xff]
      %v1504 = vld [vmem:[%s257 + $0x108] sm:$0xff]
      %v1505 = vld [vmem:[%s257 + $0x110] sm:$0xff]
      %v1506 = vld [vmem:[%s257 + $0x120] sm:$0xff]
      %v1507 = vld [vmem:[%s257 + $0x128] sm:$0xff]
      %v1508 = vld [vmem:[%s257 + $0x138] sm:$0xff]
      %v1509 = vld [vmem:[%s257 + $0x140] sm:$0xff]
      %v1510 = vld [vmem:[%s257 + $0x150] sm:$0xff]
      %v1511 = vld [vmem:[%s257 + $0x158] sm:$0xff]
      %v1512 = vld [vmem:[%s257 + $0x168] sm:$0xff]
      %v1513 = vld [vmem:[%s257 + $0x170] sm:$0xff]
      %s1514 = scalar_lea.vmem %s1, 12
      %v1515 = vld [vmem:[%s1514] sm:$0xf]
      %v1517 = vsel %vm258, %v1482, 0
      %v1520 = vsel %vm258, %v1483, 0
      %v1523 = vsel %vm258, %v1484, 0
      %v1526 = vsel %vm258, %v1485, 0
      %v1529 = vsel %vm258, %v1486, 0
      %v1532 = vsel %vm258, %v1487, 0
      %v1535 = vsel %vm258, %v1488, 0
      %v1538 = vsel %vm258, %v1489, 0
      %v1541 = vsel %vm258, %v1490, 0
      %v1544 = vsel %vm258, %v1491, 0
      %v1547 = vsel %vm258, %v1492, 0
      %v1550 = vsel %vm258, %v1493, 0
      %v1553 = vsel %vm258, %v1494, 0
      %v1556 = vsel %vm258, %v1495, 0
      %v1559 = vsel %vm258, %v1496, 0
      %v1562 = vsel %vm258, %v1497, 0
      %v1565 = vsel %vm258, %v1498, 0
      %v1568 = vsel %vm258, %v1499, 0
      %v1571 = vsel %vm258, %v1500, 0
      %v1574 = vsel %vm258, %v1501, 0
      %v1577 = vsel %vm258, %v1502, 0
      %v1580 = vsel %vm258, %v1503, 0
      %v1583 = vsel %vm258, %v1504, 0
      %v1586 = vsel %vm258, %v1505, 0
      %v1589 = vsel %vm258, %v1506, 0
      %v1592 = vsel %vm258, %v1507, 0
      %v1595 = vsel %vm258, %v1508, 0
      %v1598 = vsel %vm258, %v1509, 0
      %v1601 = vsel %vm258, %v1510, 0
      %v1604 = vsel %vm258, %v1511, 0
      %v1607 = vsel %vm258, %v1512, 0
      %v1610 = vsel %vm258, %v1513, 0
      %v1613 = vsel %vm539, %v1515, 0
      %1615 = vmatprep.subr.mxu0 0.0
      %1616 = vmatpush1.msra.mxu0 %v1613
      %1617 = vmatprep.subr.mxu0 0.0
      %1618 = vmatpush1.msra.mxu0 0.0
      %1619 = vmatprep.subr.mxu0 0.0
      %1620 = vmatpush1.msra.mxu0 0.0
      %1621 = vmatprep.subr.mxu0 0.0
      %1622 = vmatpush1.msra.mxu0 0.0
      %1623 = vmatprep.subr.mxu0 0.0
      %1624 = vmatpush1.msra.mxu0 0.0
      %1625 = vmatprep.subr.mxu0 0.0
      %1626 = vmatpush1.msra.mxu0 0.0
      %1627 = vmatprep.subr.mxu0 0.0
      %1628 = vmatpush1.msra.mxu0 0.0
      %1629 = vmatprep.subr.mxu0 0.0
      %1630 = vmatpush1.msra.mxu0 0.0
      %1631 = vmatprep.subr.mxu0 0.0
      %1632 = vmatpush1.msra.mxu0 0.0
      %1633 = vmatprep.subr.mxu0 0.0
      %1634 = vmatpush1.msra.mxu0 0.0
      %1635 = vmatprep.subr.mxu0 0.0
      %1636 = vmatpush1.msra.mxu0 0.0
      %1637 = vmatprep.subr.mxu0 0.0
      %1638 = vmatpush1.msra.mxu0 0.0
      %1639 = vmatprep.subr.mxu0 0.0
      %1640 = vmatpush1.msra.mxu0 0.0
      %1641 = vmatprep.subr.mxu0 0.0
      %1642 = vmatpush1.msra.mxu0 0.0
      %1643 = vmatprep.subr.mxu0 0.0
      %1644 = vmatpush1.msra.mxu0 0.0
      %1645 = vmatprep.subr.mxu0 0.0
      %1646 = vmatpush1.msra.mxu0 0.0
      %1647 = vmatprep.subr.mxu0 0.0
      %1648 = vmatpush1.msra.mxu0 0.0
      %1649 = vmatprep.subr.mxu0 0.0
      %1650 = vmatpush1.msra.mxu0 0.0
      %1651 = vmatprep.subr.mxu0 0.0
      %1652 = vmatpush1.msra.mxu0 0.0
      %1653 = vmatprep.subr.mxu0 0.0
      %1654 = vmatpush1.msra.mxu0 0.0
      %1655 = vmatprep.subr.mxu0 0.0
      %1656 = vmatpush1.msra.mxu0 0.0
      %1657 = vmatprep.subr.mxu0 0.0
      %1658 = vmatpush1.msra.mxu0 0.0
      %1659 = vmatprep.subr.mxu0 0.0
      %1660 = vmatpush1.msra.mxu0 0.0
      %1661 = vmatprep.subr.mxu0 0.0
      %1662 = vmatpush1.msra.mxu0 0.0
      %1663 = vmatprep.subr.mxu0 0.0
      %1664 = vmatpush1.msra.mxu0 0.0
      %1665 = vmatprep.subr.mxu0 0.0
      %1666 = vmatpush1.msra.mxu0 0.0
      %1667 = vmatprep.subr.mxu0 0.0
      %1668 = vmatpush1.msra.mxu0 0.0
      %1669 = vmatprep.subr.mxu0 0.0
      %1670 = vmatpush1.msra.mxu0 0.0
      %1671 = vmatprep.subr.mxu0 0.0
      %1672 = vmatpush1.msra.mxu0 0.0
      %1673 = vmatprep.subr.mxu0 0.0
      %1674 = vmatpush1.msra.mxu0 0.0
      %1675 = vmatprep.subr.mxu0 0.0
      %1676 = vmatpush1.msra.mxu0 0.0
      %1677 = vmatprep.subr.mxu0 0.0
      %1678 = vmatpush1.msra.mxu0 0.0
      %1679 = vmatprep.mubr.f32.mxu0 0.0
      %1680 = vmatmul.mubr.f32.gmra.mrb[0].mxu0 %v1517
      %v1681 = vpop.f32.mrb[0].mxu0
      %v1682 = vadd.f32 0.0, %v1681
      %v1683 = vpop.f32.mrb[0].mxu0
      %1684 = vmatprep.mubr.f32.mxu0 0.0
      %1685 = vmatmul.mubr.f32.gmra.mrb[0].mxu0 %v1520
      %v1686 = vpop.f32.mrb[0].mxu0
      %v1687 = vadd.f32 0.0, %v1686
      %v1688 = vpop.f32.mrb[0].mxu0
      %1689 = vmatprep.mubr.f32.mxu0 0.0
      %1690 = vmatmul.mubr.f32.gmra.mrb[0].mxu0 %v1523
      %v1691 = vpop.f32.mrb[0].mxu0
      %v1692 = vadd.f32 0.0, %v1691
      %v1693 = vpop.f32.mrb[0].mxu0
      %1694 = vmatprep.mubr.f32.mxu0 0.0
      %1695 = vmatmul.mubr.f32.gmra.mrb[0].mxu0 %v1526
      %v1696 = vpop.f32.mrb[0].mxu0
      %v1697 = vadd.f32 0.0, %v1696
      %v1698 = vpop.f32.mrb[0].mxu0
      %1699 = vmatprep.mubr.f32.mxu0 0.0
      %1700 = vmatmul.mubr.f32.gmra.mrb[0].mxu0 %v1529
      %v1701 = vpop.f32.mrb[0].mxu0
      %v1702 = vadd.f32 0.0, %v1701
      %v1703 = vpop.f32.mrb[0].mxu0
      %1704 = vmatprep.mubr.f32.mxu0 0.0
      %1705 = vmatmul.mubr.f32.gmra.mrb[0].mxu0 %v1532
      %v1706 = vpop.f32.mrb[0].mxu0
      %v1707 = vadd.f32 0.0, %v1706
      %v1708 = vpop.f32.mrb[0].mxu0
      %1709 = vmatprep.mubr.f32.mxu0 0.0
      %1710 = vmatmul.mubr.f32.gmra.mrb[0].mxu0 %v1535
      %v1711 = vpop.f32.mrb[0].mxu0
      %v1712 = vadd.f32 0.0, %v1711
      %v1713 = vpop.f32.mrb[0].mxu0
      %1714 = vmatprep.mubr.f32.mxu0 0.0
      %1715 = vmatmul.mubr.f32.gmra.mrb[0].mxu0 %v1538
      %v1716 = vpop.f32.mrb[0].mxu0
      %v1717 = vadd.f32 0.0, %v1716
      %v1718 = vpop.f32.mrb[0].mxu0
      %1719 = vmatprep.mubr.f32.mxu0 0.0
      %1720 = vmatmul.mubr.f32.gmra.mrb[0].mxu0 %v1541
      %v1721 = vpop.f32.mrb[0].mxu0
      %v1722 = vadd.f32 0.0, %v1721
      %v1723 = vpop.f32.mrb[0].mxu0
      %1724 = vmatprep.mubr.f32.mxu0 0.0
      %1725 = vmatmul.mubr.f32.gmra.mrb[0].mxu0 %v1544
      %v1726 = vpop.f32.mrb[0].mxu0
      %v1727 = vadd.f32 0.0, %v1726
      %v1728 = vpop.f32.mrb[0].mxu0
      %1729 = vmatprep.mubr.f32.mxu0 0.0
      %1730 = vmatmul.mubr.f32.gmra.mrb[0].mxu0 %v1547
      %v1731 = vpop.f32.mrb[0].mxu0
      %v1732 = vadd.f32 0.0, %v1731
      %v1733 = vpop.f32.mrb[0].mxu0
      %1734 = vmatprep.mubr.f32.mxu0 0.0
      %1735 = vmatmul.mubr.f32.gmra.mrb[0].mxu0 %v1550
      %v1736 = vpop.f32.mrb[0].mxu0
      %v1737 = vadd.f32 0.0, %v1736
      %v1738 = vpop.f32.mrb[0].mxu0
      %1739 = vmatprep.mubr.f32.mxu0 0.0
      %1740 = vmatmul.mubr.f32.gmra.mrb[0].mxu0 %v1553
      %v1741 = vpop.f32.mrb[0].mxu0
      %v1742 = vadd.f32 0.0, %v1741
      %v1743 = vpop.f32.mrb[0].mxu0
      %1744 = vmatprep.mubr.f32.mxu0 0.0
      %1745 = vmatmul.mubr.f32.gmra.mrb[0].mxu0 %v1556
      %v1746 = vpop.f32.mrb[0].mxu0
      %v1747 = vadd.f32 0.0, %v1746
      %v1748 = vpop.f32.mrb[0].mxu0
      %1749 = vmatprep.mubr.f32.mxu0 0.0
      %1750 = vmatmul.mubr.f32.gmra.mrb[0].mxu0 %v1559
      %v1751 = vpop.f32.mrb[0].mxu0
      %v1752 = vadd.f32 0.0, %v1751
      %v1753 = vpop.f32.mrb[0].mxu0
      %1754 = vmatprep.mubr.f32.mxu0 0.0
      %1755 = vmatmul.mubr.f32.gmra.mrb[0].mxu0 %v1562
      %v1756 = vpop.f32.mrb[0].mxu0
      %v1757 = vadd.f32 0.0, %v1756
      %v1758 = vpop.f32.mrb[0].mxu0
      %1759 = vmatprep.mubr.f32.mxu0 0.0
      %1760 = vmatmul.mubr.f32.gmra.mrb[0].mxu0 %v1565
      %v1761 = vpop.f32.mrb[0].mxu0
      %v1762 = vadd.f32 0.0, %v1761
      %v1763 = vpop.f32.mrb[0].mxu0
      %1764 = vmatprep.mubr.f32.mxu0 0.0
      %1765 = vmatmul.mubr.f32.gmra.mrb[0].mxu0 %v1568
      %v1766 = vpop.f32.mrb[0].mxu0
      %v1767 = vadd.f32 0.0, %v1766
      %v1768 = vpop.f32.mrb[0].mxu0
      %1769 = vmatprep.mubr.f32.mxu0 0.0
      %1770 = vmatmul.mubr.f32.gmra.mrb[0].mxu0 %v1571
      %v1771 = vpop.f32.mrb[0].mxu0
      %v1772 = vadd.f32 0.0, %v1771
      %v1773 = vpop.f32.mrb[0].mxu0
      %1774 = vmatprep.mubr.f32.mxu0 0.0
      %1775 = vmatmul.mubr.f32.gmra.mrb[0].mxu0 %v1574
      %v1776 = vpop.f32.mrb[0].mxu0
      %v1777 = vadd.f32 0.0, %v1776
      %v1778 = vpop.f32.mrb[0].mxu0
      %1779 = vmatprep.mubr.f32.mxu0 0.0
      %1780 = vmatmul.mubr.f32.gmra.mrb[0].mxu0 %v1577
      %v1781 = vpop.f32.mrb[0].mxu0
      %v1782 = vadd.f32 0.0, %v1781
      %v1783 = vpop.f32.mrb[0].mxu0
      %1784 = vmatprep.mubr.f32.mxu0 0.0
      %1785 = vmatmul.mubr.f32.gmra.mrb[0].mxu0 %v1580
      %v1786 = vpop.f32.mrb[0].mxu0
      %v1787 = vadd.f32 0.0, %v1786
      %v1788 = vpop.f32.mrb[0].mxu0
      %1789 = vmatprep.mubr.f32.mxu0 0.0
      %1790 = vmatmul.mubr.f32.gmra.mrb[0].mxu0 %v1583
      %v1791 = vpop.f32.mrb[0].mxu0
      %v1792 = vadd.f32 0.0, %v1791
      %v1793 = vpop.f32.mrb[0].mxu0
      %1794 = vmatprep.mubr.f32.mxu0 0.0
      %1795 = vmatmul.mubr.f32.gmra.mrb[0].mxu0 %v1586
      %v1796 = vpop.f32.mrb[0].mxu0
      %v1797 = vadd.f32 0.0, %v1796
      %v1798 = vpop.f32.mrb[0].mxu0
      %1799 = vmatprep.mubr.f32.mxu0 0.0
      %1800 = vmatmul.mubr.f32.gmra.mrb[0].mxu0 %v1589
      %v1801 = vpop.f32.mrb[0].mxu0
      %v1802 = vadd.f32 0.0, %v1801
      %v1803 = vpop.f32.mrb[0].mxu0
      %1804 = vmatprep.mubr.f32.mxu0 0.0
      %1805 = vmatmul.mubr.f32.gmra.mrb[0].mxu0 %v1592
      %v1806 = vpop.f32.mrb[0].mxu0
      %v1807 = vadd.f32 0.0, %v1806
      %v1808 = vpop.f32.mrb[0].mxu0
      %1809 = vmatprep.mubr.f32.mxu0 0.0
      %1810 = vmatmul.mubr.f32.gmra.mrb[0].mxu0 %v1595
      %v1811 = vpop.f32.mrb[0].mxu0
      %v1812 = vadd.f32 0.0, %v1811
      %v1813 = vpop.f32.mrb[0].mxu0
      %1814 = vmatprep.mubr.f32.mxu0 0.0
      %1815 = vmatmul.mubr.f32.gmra.mrb[0].mxu0 %v1598
      %v1816 = vpop.f32.mrb[0].mxu0
      %v1817 = vadd.f32 0.0, %v1816
      %v1818 = vpop.f32.mrb[0].mxu0
      %1819 = vmatprep.mubr.f32.mxu0 0.0
      %1820 = vmatmul.mubr.f32.gmra.mrb[0].mxu0 %v1601
      %v1821 = vpop.f32.mrb[0].mxu0
      %v1822 = vadd.f32 0.0, %v1821
      %v1823 = vpop.f32.mrb[0].mxu0
      %1824 = vmatprep.mubr.f32.mxu0 0.0
      %1825 = vmatmul.mubr.f32.gmra.mrb[0].mxu0 %v1604
      %v1826 = vpop.f32.mrb[0].mxu0
      %v1827 = vadd.f32 0.0, %v1826
      %v1828 = vpop.f32.mrb[0].mxu0
      %1829 = vmatprep.mubr.f32.mxu0 0.0
      %1830 = vmatmul.mubr.f32.gmra.mrb[0].mxu0 %v1607
      %v1831 = vpop.f32.mrb[0].mxu0
      %v1832 = vadd.f32 0.0, %v1831
      %v1833 = vpop.f32.mrb[0].mxu0
      %1834 = vmatprep.mubr.f32.mxu0 0.0
      %1835 = vmatmul.mubr.f32.gmra.mrb[0].mxu0 %v1610
      %v1836 = vpop.f32.mrb[0].mxu0
      %v1837 = vadd.f32 0.0, %v1836
      %v1838 = vpop.f32.mrb[0].mxu0
      %1839 = vdwg.mxu0
      %v1840 = vadd.f32 %v1450, %v1682
      %v1841 = vadd.f32 %v1451, %v1687
      %v1842 = vadd.f32 %v1452, %v1692
      %v1843 = vadd.f32 %v1453, %v1697
      %v1844 = vadd.f32 %v1454, %v1702
      %v1845 = vadd.f32 %v1455, %v1707
      %v1846 = vadd.f32 %v1456, %v1712
      %v1847 = vadd.f32 %v1457, %v1717
      %v1848 = vadd.f32 %v1458, %v1722
      %v1849 = vadd.f32 %v1459, %v1727
      %v1850 = vadd.f32 %v1460, %v1732
      %v1851 = vadd.f32 %v1461, %v1737
      %v1852 = vadd.f32 %v1462, %v1742
      %v1853 = vadd.f32 %v1463, %v1747
      %v1854 = vadd.f32 %v1464, %v1752
      %v1855 = vadd.f32 %v1465, %v1757
      %v1856 = vadd.f32 %v1466, %v1762
      %v1857 = vadd.f32 %v1467, %v1767
      %v1858 = vadd.f32 %v1468, %v1772
      %v1859 = vadd.f32 %v1469, %v1777
      %v1860 = vadd.f32 %v1470, %v1782
      %v1861 = vadd.f32 %v1471, %v1787
      %v1862 = vadd.f32 %v1472, %v1792
      %v1863 = vadd.f32 %v1473, %v1797
      %v1864 = vadd.f32 %v1474, %v1802
      %v1865 = vadd.f32 %v1475, %v1807
      %v1866 = vadd.f32 %v1476, %v1812
      %v1867 = vadd.f32 %v1477, %v1817
      %v1868 = vadd.f32 %v1478, %v1822
      %v1869 = vadd.f32 %v1479, %v1827
      %v1870 = vadd.f32 %v1480, %v1832
      %v1871 = vadd.f32 %v1481, %v1837
      %v1872 = vld [vmem:[%s257 + $0x1] sm:$0xff]
      %v1873 = vld [vmem:[%s257 + $0x9] sm:$0xff]
      %v1874 = vld [vmem:[%s257 + $0x19] sm:$0xff]
      %v1875 = vld [vmem:[%s257 + $0x21] sm:$0xff]
      %v1876 = vld [vmem:[%s257 + $0x31] sm:$0xff]
      %v1877 = vld [vmem:[%s257 + $0x39] sm:$0xff]
      %v1878 = vld [vmem:[%s257 + $0x49] sm:$0xff]
      %v1879 = vld [vmem:[%s257 + $0x51] sm:$0xff]
      %v1880 = vld [vmem:[%s257 + $0x61] sm:$0xff]
      %v1881 = vld [vmem:[%s257 + $0x69] sm:$0xff]
      %v1882 = vld [vmem:[%s257 + $0x79] sm:$0xff]
      %v1883 = vld [vmem:[%s257 + $0x81] sm:$0xff]
      %v1884 = vld [vmem:[%s257 + $0x91] sm:$0xff]
      %v1885 = vld [vmem:[%s257 + $0x99] sm:$0xff]
      %v1886 = vld [vmem:[%s257 + $0xa9] sm:$0xff]
      %v1887 = vld [vmem:[%s257 + $0xb1] sm:$0xff]
      %v1888 = vld [vmem:[%s257 + $0xc1] sm:$0xff]
      %v1889 = vld [vmem:[%s257 + $0xc9] sm:$0xff]
      %v1890 = vld [vmem:[%s257 + $0xd9] sm:$0xff]
      %v1891 = vld [vmem:[%s257 + $0xe1] sm:$0xff]
      %v1892 = vld [vmem:[%s257 + $0xf1] sm:$0xff]
      %v1893 = vld [vmem:[%s257 + $0xf9] sm:$0xff]
      %v1894 = vld [vmem:[%s257 + $0x109] sm:$0xff]
      %v1895 = vld [vmem:[%s257 + $0x111] sm:$0xff]
      %v1896 = vld [vmem:[%s257 + $0x121] sm:$0xff]
      %v1897 = vld [vmem:[%s257 + $0x129] sm:$0xff]
      %v1898 = vld [vmem:[%s257 + $0x139] sm:$0xff]
      %v1899 = vld [vmem:[%s257 + $0x141] sm:$0xff]
      %v1900 = vld [vmem:[%s257 + $0x151] sm:$0xff]
      %v1901 = vld [vmem:[%s257 + $0x159] sm:$0xff]
      %v1902 = vld [vmem:[%s257 + $0x169] sm:$0xff]
      %v1903 = vld [vmem:[%s257 + $0x171] sm:$0xff]
      %s1904 = scalar_lea.vmem %s1, 16
      %v1905 = vld [vmem:[%s1904] sm:$0xf]
      %v1907 = vsel %vm258, %v1872, 0
      %v1910 = vsel %vm258, %v1873, 0
      %v1913 = vsel %vm258, %v1874, 0
      %v1916 = vsel %vm258, %v1875, 0
      %v1919 = vsel %vm258, %v1876, 0
      %v1922 = vsel %vm258, %v1877, 0
      %v1925 = vsel %vm258, %v1878, 0
      %v1928 = vsel %vm258, %v1879, 0
      %v1931 = vsel %vm258, %v1880, 0
      %v1934 = vsel %vm258, %v1881, 0
      %v1937 = vsel %vm258, %v1882, 0
      %v1940 = vsel %vm258, %v1883, 0
      %v1943 = vsel %vm258, %v1884, 0
      %v1946 = vsel %vm258, %v1885, 0
      %v1949 = vsel %vm258, %v1886, 0
      %v1952 = vsel %vm258, %v1887, 0
      %v1955 = vsel %vm258, %v1888, 0
      %v1958 = vsel %vm258, %v1889, 0
      %v1961 = vsel %vm258, %v1890, 0
      %v1964 = vsel %vm258, %v1891, 0
      %v1967 = vsel %vm258, %v1892, 0
      %v1970 = vsel %vm258, %v1893, 0
      %v1973 = vsel %vm258, %v1894, 0
      %v1976 = vsel %vm258, %v1895, 0
      %v1979 = vsel %vm258, %v1896, 0
      %v1982 = vsel %vm258, %v1897, 0
      %v1985 = vsel %vm258, %v1898, 0
      %v1988 = vsel %vm258, %v1899, 0
      %v1991 = vsel %vm258, %v1900, 0
      %v1994 = vsel %vm258, %v1901, 0
      %v1997 = vsel %vm258, %v1902, 0
      %v2000 = vsel %vm258, %v1903, 0
      %v2003 = vsel %vm539, %v1905, 0
      %2005 = vmatprep.subr.mxu0 0.0
      %2006 = vmatpush1.msra.mxu0 %v2003
      %2007 = vmatprep.subr.mxu0 0.0
      %2008 = vmatpush1.msra.mxu0 0.0
      %2009 = vmatprep.subr.mxu0 0.0
      %2010 = vmatpush1.msra.mxu0 0.0
      %2011 = vmatprep.subr.mxu0 0.0
      %2012 = vmatpush1.msra.mxu0 0.0
      %2013 = vmatprep.subr.mxu0 0.0
      %2014 = vmatpush1.msra.mxu0 0.0
      %2015 = vmatprep.subr.mxu0 0.0
      %2016 = vmatpush1.msra.mxu0 0.0
      %2017 = vmatprep.subr.mxu0 0.0
      %2018 = vmatpush1.msra.mxu0 0.0
      %2019 = vmatprep.subr.mxu0 0.0
      %2020 = vmatpush1.msra.mxu0 0.0
      %2021 = vmatprep.subr.mxu0 0.0
      %2022 = vmatpush1.msra.mxu0 0.0
      %2023 = vmatprep.subr.mxu0 0.0
      %2024 = vmatpush1.msra.mxu0 0.0
      %2025 = vmatprep.subr.mxu0 0.0
      %2026 = vmatpush1.msra.mxu0 0.0
      %2027 = vmatprep.subr.mxu0 0.0
      %2028 = vmatpush1.msra.mxu0 0.0
      %2029 = vmatprep.subr.mxu0 0.0
      %2030 = vmatpush1.msra.mxu0 0.0
      %2031 = vmatprep.subr.mxu0 0.0
      %2032 = vmatpush1.msra.mxu0 0.0
      %2033 = vmatprep.subr.mxu0 0.0
      %2034 = vmatpush1.msra.mxu0 0.0
      %2035 = vmatprep.subr.mxu0 0.0
      %2036 = vmatpush1.msra.mxu0 0.0
      %2037 = vmatprep.subr.mxu0 0.0
      %2038 = vmatpush1.msra.mxu0 0.0
      %2039 = vmatprep.subr.mxu0 0.0
      %2040 = vmatpush1.msra.mxu0 0.0
      %2041 = vmatprep.subr.mxu0 0.0
      %2042 = vmatpush1.msra.mxu0 0.0
      %2043 = vmatprep.subr.mxu0 0.0
      %2044 = vmatpush1.msra.mxu0 0.0
      %2045 = vmatprep.subr.mxu0 0.0
      %2046 = vmatpush1.msra.mxu0 0.0
      %2047 = vmatprep.subr.mxu0 0.0
      %2048 = vmatpush1.msra.mxu0 0.0
      %2049 = vmatprep.subr.mxu0 0.0
      %2050 = vmatpush1.msra.mxu0 0.0
      %2051 = vmatprep.subr.mxu0 0.0
      %2052 = vmatpush1.msra.mxu0 0.0
      %2053 = vmatprep.subr.mxu0 0.0
      %2054 = vmatpush1.msra.mxu0 0.0
      %2055 = vmatprep.subr.mxu0 0.0
      %2056 = vmatpush1.msra.mxu0 0.0
      %2057 = vmatprep.subr.mxu0 0.0
      %2058 = vmatpush1.msra.mxu0 0.0
      %2059 = vmatprep.subr.mxu0 0.0
      %2060 = vmatpush1.msra.mxu0 0.0
      %2061 = vmatprep.subr.mxu0 0.0
      %2062 = vmatpush1.msra.mxu0 0.0
      %2063 = vmatprep.subr.mxu0 0.0
      %2064 = vmatpush1.msra.mxu0 0.0
      %2065 = vmatprep.subr.mxu0 0.0
      %2066 = vmatpush1.msra.mxu0 0.0
      %2067 = vmatprep.subr.mxu0 0.0
      %2068 = vmatpush1.msra.mxu0 0.0
      %2069 = vmatprep.mubr.f32.mxu0 0.0
      %2070 = vmatmul.mubr.f32.gmra.mrb[0].mxu0 %v1907
      %v2071 = vpop.f32.mrb[0].mxu0
      %v2072 = vadd.f32 0.0, %v2071
      %v2073 = vpop.f32.mrb[0].mxu0
      %2074 = vmatprep.mubr.f32.mxu0 0.0
      %2075 = vmatmul.mubr.f32.gmra.mrb[0].mxu0 %v1910
      %v2076 = vpop.f32.mrb[0].mxu0
      %v2077 = vadd.f32 0.0, %v2076
      %v2078 = vpop.f32.mrb[0].mxu0
      %2079 = vmatprep.mubr.f32.mxu0 0.0
      %2080 = vmatmul.mubr.f32.gmra.mrb[0].mxu0 %v1913
      %v2081 = vpop.f32.mrb[0].mxu0
      %v2082 = vadd.f32 0.0, %v2081
      %v2083 = vpop.f32.mrb[0].mxu0
      %2084 = vmatprep.mubr.f32.mxu0 0.0
      %2085 = vmatmul.mubr.f32.gmra.mrb[0].mxu0 %v1916
      %v2086 = vpop.f32.mrb[0].mxu0
      %v2087 = vadd.f32 0.0, %v2086
      %v2088 = vpop.f32.mrb[0].mxu0
      %2089 = vmatprep.mubr.f32.mxu0 0.0
      %2090 = vmatmul.mubr.f32.gmra.mrb[0].mxu0 %v1919
      %v2091 = vpop.f32.mrb[0].mxu0
      %v2092 = vadd.f32 0.0, %v2091
      %v2093 = vpop.f32.mrb[0].mxu0
      %2094 = vmatprep.mubr.f32.mxu0 0.0
      %2095 = vmatmul.mubr.f32.gmra.mrb[0].mxu0 %v1922
      %v2096 = vpop.f32.mrb[0].mxu0
      %v2097 = vadd.f32 0.0, %v2096
      %v2098 = vpop.f32.mrb[0].mxu0
      %2099 = vmatprep.mubr.f32.mxu0 0.0
      %2100 = vmatmul.mubr.f32.gmra.mrb[0].mxu0 %v1925
      %v2101 = vpop.f32.mrb[0].mxu0
      %v2102 = vadd.f32 0.0, %v2101
      %v2103 = vpop.f32.mrb[0].mxu0
      %2104 = vmatprep.mubr.f32.mxu0 0.0
      %2105 = vmatmul.mubr.f32.gmra.mrb[0].mxu0 %v1928
      %v2106 = vpop.f32.mrb[0].mxu0
      %v2107 = vadd.f32 0.0, %v2106
      %v2108 = vpop.f32.mrb[0].mxu0
      %2109 = vmatprep.mubr.f32.mxu0 0.0
      %2110 = vmatmul.mubr.f32.gmra.mrb[0].mxu0 %v1931
      %v2111 = vpop.f32.mrb[0].mxu0
      %v2112 = vadd.f32 0.0, %v2111
      %v2113 = vpop.f32.mrb[0].mxu0
      %2114 = vmatprep.mubr.f32.mxu0 0.0
      %2115 = vmatmul.mubr.f32.gmra.mrb[0].mxu0 %v1934
      %v2116 = vpop.f32.mrb[0].mxu0
      %v2117 = vadd.f32 0.0, %v2116
      %v2118 = vpop.f32.mrb[0].mxu0
      %2119 = vmatprep.mubr.f32.mxu0 0.0
      %2120 = vmatmul.mubr.f32.gmra.mrb[0].mxu0 %v1937
      %v2121 = vpop.f32.mrb[0].mxu0
      %v2122 = vadd.f32 0.0, %v2121
      %v2123 = vpop.f32.mrb[0].mxu0
      %2124 = vmatprep.mubr.f32.mxu0 0.0
      %2125 = vmatmul.mubr.f32.gmra.mrb[0].mxu0 %v1940
      %v2126 = vpop.f32.mrb[0].mxu0
      %v2127 = vadd.f32 0.0, %v2126
      %v2128 = vpop.f32.mrb[0].mxu0
      %2129 = vmatprep.mubr.f32.mxu0 0.0
      %2130 = vmatmul.mubr.f32.gmra.mrb[0].mxu0 %v1943
      %v2131 = vpop.f32.mrb[0].mxu0
      %v2132 = vadd.f32 0.0, %v2131
      %v2133 = vpop.f32.mrb[0].mxu0
      %2134 = vmatprep.mubr.f32.mxu0 0.0
      %2135 = vmatmul.mubr.f32.gmra.mrb[0].mxu0 %v1946
      %v2136 = vpop.f32.mrb[0].mxu0
      %v2137 = vadd.f32 0.0, %v2136
      %v2138 = vpop.f32.mrb[0].mxu0
      %2139 = vmatprep.mubr.f32.mxu0 0.0
      %2140 = vmatmul.mubr.f32.gmra.mrb[0].mxu0 %v1949
      %v2141 = vpop.f32.mrb[0].mxu0
      %v2142 = vadd.f32 0.0, %v2141
      %v2143 = vpop.f32.mrb[0].mxu0
      %2144 = vmatprep.mubr.f32.mxu0 0.0
      %2145 = vmatmul.mubr.f32.gmra.mrb[0].mxu0 %v1952
      %v2146 = vpop.f32.mrb[0].mxu0
      %v2147 = vadd.f32 0.0, %v2146
      %v2148 = vpop.f32.mrb[0].mxu0
      %2149 = vmatprep.mubr.f32.mxu0 0.0
      %2150 = vmatmul.mubr.f32.gmra.mrb[0].mxu0 %v1955
      %v2151 = vpop.f32.mrb[0].mxu0
      %v2152 = vadd.f32 0.0, %v2151
      %v2153 = vpop.f32.mrb[0].mxu0
      %2154 = vmatprep.mubr.f32.mxu0 0.0
      %2155 = vmatmul.mubr.f32.gmra.mrb[0].mxu0 %v1958
      %v2156 = vpop.f32.mrb[0].mxu0
      %v2157 = vadd.f32 0.0, %v2156
      %v2158 = vpop.f32.mrb[0].mxu0
      %2159 = vmatprep.mubr.f32.mxu0 0.0
      %2160 = vmatmul.mubr.f32.gmra.mrb[0].mxu0 %v1961
      %v2161 = vpop.f32.mrb[0].mxu0
      %v2162 = vadd.f32 0.0, %v2161
      %v2163 = vpop.f32.mrb[0].mxu0
      %2164 = vmatprep.mubr.f32.mxu0 0.0
      %2165 = vmatmul.mubr.f32.gmra.mrb[0].mxu0 %v1964
      %v2166 = vpop.f32.mrb[0].mxu0
      %v2167 = vadd.f32 0.0, %v2166
      %v2168 = vpop.f32.mrb[0].mxu0
      %2169 = vmatprep.mubr.f32.mxu0 0.0
      %2170 = vmatmul.mubr.f32.gmra.mrb[0].mxu0 %v1967
      %v2171 = vpop.f32.mrb[0].mxu0
      %v2172 = vadd.f32 0.0, %v2171
      %v2173 = vpop.f32.mrb[0].mxu0
      %2174 = vmatprep.mubr.f32.mxu0 0.0
      %2175 = vmatmul.mubr.f32.gmra.mrb[0].mxu0 %v1970
      %v2176 = vpop.f32.mrb[0].mxu0
      %v2177 = vadd.f32 0.0, %v2176
      %v2178 = vpop.f32.mrb[0].mxu0
      %2179 = vmatprep.mubr.f32.mxu0 0.0
      %2180 = vmatmul.mubr.f32.gmra.mrb[0].mxu0 %v1973
      %v2181 = vpop.f32.mrb[0].mxu0
      %v2182 = vadd.f32 0.0, %v2181
      %v2183 = vpop.f32.mrb[0].mxu0
      %2184 = vmatprep.mubr.f32.mxu0 0.0
      %2185 = vmatmul.mubr.f32.gmra.mrb[0].mxu0 %v1976
      %v2186 = vpop.f32.mrb[0].mxu0
      %v2187 = vadd.f32 0.0, %v2186
      %v2188 = vpop.f32.mrb[0].mxu0
      %2189 = vmatprep.mubr.f32.mxu0 0.0
      %2190 = vmatmul.mubr.f32.gmra.mrb[0].mxu0 %v1979
      %v2191 = vpop.f32.mrb[0].mxu0
      %v2192 = vadd.f32 0.0, %v2191
      %v2193 = vpop.f32.mrb[0].mxu0
      %2194 = vmatprep.mubr.f32.mxu0 0.0
      %2195 = vmatmul.mubr.f32.gmra.mrb[0].mxu0 %v1982
      %v2196 = vpop.f32.mrb[0].mxu0
      %v2197 = vadd.f32 0.0, %v2196
      %v2198 = vpop.f32.mrb[0].mxu0
      %2199 = vmatprep.mubr.f32.mxu0 0.0
      %2200 = vmatmul.mubr.f32.gmra.mrb[0].mxu0 %v1985
      %v2201 = vpop.f32.mrb[0].mxu0
      %v2202 = vadd.f32 0.0, %v2201
      %v2203 = vpop.f32.mrb[0].mxu0
      %2204 = vmatprep.mubr.f32.mxu0 0.0
      %2205 = vmatmul.mubr.f32.gmra.mrb[0].mxu0 %v1988
      %v2206 = vpop.f32.mrb[0].mxu0
      %v2207 = vadd.f32 0.0, %v2206
      %v2208 = vpop.f32.mrb[0].mxu0
      %2209 = vmatprep.mubr.f32.mxu0 0.0
      %2210 = vmatmul.mubr.f32.gmra.mrb[0].mxu0 %v1991
      %v2211 = vpop.f32.mrb[0].mxu0
      %v2212 = vadd.f32 0.0, %v2211
      %v2213 = vpop.f32.mrb[0].mxu0
      %2214 = vmatprep.mubr.f32.mxu0 0.0
      %2215 = vmatmul.mubr.f32.gmra.mrb[0].mxu0 %v1994
      %v2216 = vpop.f32.mrb[0].mxu0
      %v2217 = vadd.f32 0.0, %v2216
      %v2218 = vpop.f32.mrb[0].mxu0
      %2219 = vmatprep.mubr.f32.mxu0 0.0
      %2220 = vmatmul.mubr.f32.gmra.mrb[0].mxu0 %v1997
      %v2221 = vpop.f32.mrb[0].mxu0
      %v2222 = vadd.f32 0.0, %v2221
      %v2223 = vpop.f32.mrb[0].mxu0
      %2224 = vmatprep.mubr.f32.mxu0 0.0
      %2225 = vmatmul.mubr.f32.gmra.mrb[0].mxu0 %v2000
      %v2226 = vpop.f32.mrb[0].mxu0
      %v2227 = vadd.f32 0.0, %v2226
      %v2228 = vpop.f32.mrb[0].mxu0
      %2229 = vdwg.mxu0
      %v2230 = vadd.f32 %v1840, %v2072
      %v2231 = vadd.f32 %v1841, %v2077
      %v2232 = vadd.f32 %v1842, %v2082
      %v2233 = vadd.f32 %v1843, %v2087
      %v2234 = vadd.f32 %v1844, %v2092
      %v2235 = vadd.f32 %v1845, %v2097
      %v2236 = vadd.f32 %v1846, %v2102
      %v2237 = vadd.f32 %v1847, %v2107
      %v2238 = vadd.f32 %v1848, %v2112
      %v2239 = vadd.f32 %v1849, %v2117
      %v2240 = vadd.f32 %v1850, %v2122
      %v2241 = vadd.f32 %v1851, %v2127
      %v2242 = vadd.f32 %v1852, %v2132
      %v2243 = vadd.f32 %v1853, %v2137
      %v2244 = vadd.f32 %v1854, %v2142
      %v2245 = vadd.f32 %v1855, %v2147
      %v2246 = vadd.f32 %v1856, %v2152
      %v2247 = vadd.f32 %v1857, %v2157
      %v2248 = vadd.f32 %v1858, %v2162
      %v2249 = vadd.f32 %v1859, %v2167
      %v2250 = vadd.f32 %v1860, %v2172
      %v2251 = vadd.f32 %v1861, %v2177
      %v2252 = vadd.f32 %v1862, %v2182
      %v2253 = vadd.f32 %v1863, %v2187
      %v2254 = vadd.f32 %v1864, %v2192
      %v2255 = vadd.f32 %v1865, %v2197
      %v2256 = vadd.f32 %v1866, %v2202
      %v2257 = vadd.f32 %v1867, %v2207
      %v2258 = vadd.f32 %v1868, %v2212
      %v2259 = vadd.f32 %v1869, %v2217
      %v2260 = vadd.f32 %v1870, %v2222
      %v2261 = vadd.f32 %v1871, %v2227
      %v2262 = vld [vmem:[%s257 + $0x2] sm:$0xff]
      %v2263 = vld [vmem:[%s257 + $0xa] sm:$0xff]
      %v2264 = vld [vmem:[%s257 + $0x1a] sm:$0xff]
      %v2265 = vld [vmem:[%s257 + $0x22] sm:$0xff]
      %v2266 = vld [vmem:[%s257 + $0x32] sm:$0xff]
      %v2267 = vld [vmem:[%s257 + $0x3a] sm:$0xff]
      %v2268 = vld [vmem:[%s257 + $0x4a] sm:$0xff]
      %v2269 = vld [vmem:[%s257 + $0x52] sm:$0xff]
      %v2270 = vld [vmem:[%s257 + $0x62] sm:$0xff]
      %v2271 = vld [vmem:[%s257 + $0x6a] sm:$0xff]
      %v2272 = vld [vmem:[%s257 + $0x7a] sm:$0xff]
      %v2273 = vld [vmem:[%s257 + $0x82] sm:$0xff]
      %v2274 = vld [vmem:[%s257 + $0x92] sm:$0xff]
      %v2275 = vld [vmem:[%s257 + $0x9a] sm:$0xff]
      %v2276 = vld [vmem:[%s257 + $0xaa] sm:$0xff]
      %v2277 = vld [vmem:[%s257 + $0xb2] sm:$0xff]
      %v2278 = vld [vmem:[%s257 + $0xc2] sm:$0xff]
      %v2279 = vld [vmem:[%s257 + $0xca] sm:$0xff]
      %v2280 = vld [vmem:[%s257 + $0xda] sm:$0xff]
      %v2281 = vld [vmem:[%s257 + $0xe2] sm:$0xff]
      %v2282 = vld [vmem:[%s257 + $0xf2] sm:$0xff]
      %v2283 = vld [vmem:[%s257 + $0xfa] sm:$0xff]
      %v2284 = vld [vmem:[%s257 + $0x10a] sm:$0xff]
      %v2285 = vld [vmem:[%s257 + $0x112] sm:$0xff]
      %v2286 = vld [vmem:[%s257 + $0x122] sm:$0xff]
      %v2287 = vld [vmem:[%s257 + $0x12a] sm:$0xff]
      %v2288 = vld [vmem:[%s257 + $0x13a] sm:$0xff]
      %v2289 = vld [vmem:[%s257 + $0x142] sm:$0xff]
      %v2290 = vld [vmem:[%s257 + $0x152] sm:$0xff]
      %v2291 = vld [vmem:[%s257 + $0x15a] sm:$0xff]
      %v2292 = vld [vmem:[%s257 + $0x16a] sm:$0xff]
      %v2293 = vld [vmem:[%s257 + $0x172] sm:$0xff]
      %s2294 = scalar_lea.vmem %s1, 20
      %v2295 = vld [vmem:[%s2294] sm:$0xf]
      %v2297 = vsel %vm258, %v2262, 0
      %v2300 = vsel %vm258, %v2263, 0
      %v2303 = vsel %vm258, %v2264, 0
      %v2306 = vsel %vm258, %v2265, 0
      %v2309 = vsel %vm258, %v2266, 0
      %v2312 = vsel %vm258, %v2267, 0
      %v2315 = vsel %vm258, %v2268, 0
      %v2318 = vsel %vm258, %v2269, 0
      %v2321 = vsel %vm258, %v2270, 0
      %v2324 = vsel %vm258, %v2271, 0
      %v2327 = vsel %vm258, %v2272, 0
      %v2330 = vsel %vm258, %v2273, 0
      %v2333 = vsel %vm258, %v2274, 0
      %v2336 = vsel %vm258, %v2275, 0
      %v2339 = vsel %vm258, %v2276, 0
      %v2342 = vsel %vm258, %v2277, 0
      %v2345 = vsel %vm258, %v2278, 0
      %v2348 = vsel %vm258, %v2279, 0
      %v2351 = vsel %vm258, %v2280, 0
      %v2354 = vsel %vm258, %v2281, 0
      %v2357 = vsel %vm258, %v2282, 0
      %v2360 = vsel %vm258, %v2283, 0
      %v2363 = vsel %vm258, %v2284, 0
      %v2366 = vsel %vm258, %v2285, 0
      %v2369 = vsel %vm258, %v2286, 0
      %v2372 = vsel %vm258, %v2287, 0
      %v2375 = vsel %vm258, %v2288, 0
      %v2378 = vsel %vm258, %v2289, 0
      %v2381 = vsel %vm258, %v2290, 0
      %v2384 = vsel %vm258, %v2291, 0
      %v2387 = vsel %vm258, %v2292, 0
      %v2390 = vsel %vm258, %v2293, 0
      %v2393 = vsel %vm539, %v2295, 0
      %2395 = vmatprep.subr.mxu0 0.0
      %2396 = vmatpush1.msra.mxu0 %v2393
      %2397 = vmatprep.subr.mxu0 0.0
      %2398 = vmatpush1.msra.mxu0 0.0
      %2399 = vmatprep.subr.mxu0 0.0
      %2400 = vmatpush1.msra.mxu0 0.0
      %2401 = vmatprep.subr.mxu0 0.0
      %2402 = vmatpush1.msra.mxu0 0.0
      %2403 = vmatprep.subr.mxu0 0.0
      %2404 = vmatpush1.msra.mxu0 0.0
      %2405 = vmatprep.subr.mxu0 0.0
      %2406 = vmatpush1.msra.mxu0 0.0
      %2407 = vmatprep.subr.mxu0 0.0
      %2408 = vmatpush1.msra.mxu0 0.0
      %2409 = vmatprep.subr.mxu0 0.0
      %2410 = vmatpush1.msra.mxu0 0.0
      %2411 = vmatprep.subr.mxu0 0.0
      %2412 = vmatpush1.msra.mxu0 0.0
      %2413 = vmatprep.subr.mxu0 0.0
      %2414 = vmatpush1.msra.mxu0 0.0
      %2415 = vmatprep.subr.mxu0 0.0
      %2416 = vmatpush1.msra.mxu0 0.0
      %2417 = vmatprep.subr.mxu0 0.0
      %2418 = vmatpush1.msra.mxu0 0.0
      %2419 = vmatprep.subr.mxu0 0.0
      %2420 = vmatpush1.msra.mxu0 0.0
      %2421 = vmatprep.subr.mxu0 0.0
      %2422 = vmatpush1.msra.mxu0 0.0
      %2423 = vmatprep.subr.mxu0 0.0
      %2424 = vmatpush1.msra.mxu0 0.0
      %2425 = vmatprep.subr.mxu0 0.0
      %2426 = vmatpush1.msra.mxu0 0.0
      %2427 = vmatprep.subr.mxu0 0.0
      %2428 = vmatpush1.msra.mxu0 0.0
      %2429 = vmatprep.subr.mxu0 0.0
      %2430 = vmatpush1.msra.mxu0 0.0
      %2431 = vmatprep.subr.mxu0 0.0
      %2432 = vmatpush1.msra.mxu0 0.0
      %2433 = vmatprep.subr.mxu0 0.0
      %2434 = vmatpush1.msra.mxu0 0.0
      %2435 = vmatprep.subr.mxu0 0.0
      %2436 = vmatpush1.msra.mxu0 0.0
      %2437 = vmatprep.subr.mxu0 0.0
      %2438 = vmatpush1.msra.mxu0 0.0
      %2439 = vmatprep.subr.mxu0 0.0
      %2440 = vmatpush1.msra.mxu0 0.0
      %2441 = vmatprep.subr.mxu0 0.0
      %2442 = vmatpush1.msra.mxu0 0.0
      %2443 = vmatprep.subr.mxu0 0.0
      %2444 = vmatpush1.msra.mxu0 0.0
      %2445 = vmatprep.subr.mxu0 0.0
      %2446 = vmatpush1.msra.mxu0 0.0
      %2447 = vmatprep.subr.mxu0 0.0
      %2448 = vmatpush1.msra.mxu0 0.0
      %2449 = vmatprep.subr.mxu0 0.0
      %2450 = vmatpush1.msra.mxu0 0.0
      %2451 = vmatprep.subr.mxu0 0.0
      %2452 = vmatpush1.msra.mxu0 0.0
      %2453 = vmatprep.subr.mxu0 0.0
      %2454 = vmatpush1.msra.mxu0 0.0
      %2455 = vmatprep.subr.mxu0 0.0
      %2456 = vmatpush1.msra.mxu0 0.0
      %2457 = vmatprep.subr.mxu0 0.0
      %2458 = vmatpush1.msra.mxu0 0.0
      %2459 = vmatprep.mubr.f32.mxu0 0.0
      %2460 = vmatmul.mubr.f32.gmra.mrb[0].mxu0 %v2297
      %v2461 = vpop.f32.mrb[0].mxu0
      %v2462 = vadd.f32 0.0, %v2461
      %v2463 = vpop.f32.mrb[0].mxu0
      %2464 = vmatprep.mubr.f32.mxu0 0.0
      %2465 = vmatmul.mubr.f32.gmra.mrb[0].mxu0 %v2300
      %v2466 = vpop.f32.mrb[0].mxu0
      %v2467 = vadd.f32 0.0, %v2466
      %v2468 = vpop.f32.mrb[0].mxu0
      %2469 = vmatprep.mubr.f32.mxu0 0.0
      %2470 = vmatmul.mubr.f32.gmra.mrb[0].mxu0 %v2303
      %v2471 = vpop.f32.mrb[0].mxu0
      %v2472 = vadd.f32 0.0, %v2471
      %v2473 = vpop.f32.mrb[0].mxu0
      %2474 = vmatprep.mubr.f32.mxu0 0.0
      %2475 = vmatmul.mubr.f32.gmra.mrb[0].mxu0 %v2306
      %v2476 = vpop.f32.mrb[0].mxu0
      %v2477 = vadd.f32 0.0, %v2476
      %v2478 = vpop.f32.mrb[0].mxu0
      %2479 = vmatprep.mubr.f32.mxu0 0.0
      %2480 = vmatmul.mubr.f32.gmra.mrb[0].mxu0 %v2309
      %v2481 = vpop.f32.mrb[0].mxu0
      %v2482 = vadd.f32 0.0, %v2481
      %v2483 = vpop.f32.mrb[0].mxu0
      %2484 = vmatprep.mubr.f32.mxu0 0.0
      %2485 = vmatmul.mubr.f32.gmra.mrb[0].mxu0 %v2312
      %v2486 = vpop.f32.mrb[0].mxu0
      %v2487 = vadd.f32 0.0, %v2486
      %v2488 = vpop.f32.mrb[0].mxu0
      %2489 = vmatprep.mubr.f32.mxu0 0.0
      %2490 = vmatmul.mubr.f32.gmra.mrb[0].mxu0 %v2315
      %v2491 = vpop.f32.mrb[0].mxu0
      %v2492 = vadd.f32 0.0, %v2491
      %v2493 = vpop.f32.mrb[0].mxu0
      %2494 = vmatprep.mubr.f32.mxu0 0.0
      %2495 = vmatmul.mubr.f32.gmra.mrb[0].mxu0 %v2318
      %v2496 = vpop.f32.mrb[0].mxu0
      %v2497 = vadd.f32 0.0, %v2496
      %v2498 = vpop.f32.mrb[0].mxu0
      %2499 = vmatprep.mubr.f32.mxu0 0.0
      %2500 = vmatmul.mubr.f32.gmra.mrb[0].mxu0 %v2321
      %v2501 = vpop.f32.mrb[0].mxu0
      %v2502 = vadd.f32 0.0, %v2501
      %v2503 = vpop.f32.mrb[0].mxu0
      %2504 = vmatprep.mubr.f32.mxu0 0.0
      %2505 = vmatmul.mubr.f32.gmra.mrb[0].mxu0 %v2324
      %v2506 = vpop.f32.mrb[0].mxu0
      %v2507 = vadd.f32 0.0, %v2506
      %v2508 = vpop.f32.mrb[0].mxu0
      %2509 = vmatprep.mubr.f32.mxu0 0.0
      %2510 = vmatmul.mubr.f32.gmra.mrb[0].mxu0 %v2327
      %v2511 = vpop.f32.mrb[0].mxu0
      %v2512 = vadd.f32 0.0, %v2511
      %v2513 = vpop.f32.mrb[0].mxu0
      %2514 = vmatprep.mubr.f32.mxu0 0.0
      %2515 = vmatmul.mubr.f32.gmra.mrb[0].mxu0 %v2330
      %v2516 = vpop.f32.mrb[0].mxu0
      %v2517 = vadd.f32 0.0, %v2516
      %v2518 = vpop.f32.mrb[0].mxu0
      %2519 = vmatprep.mubr.f32.mxu0 0.0
      %2520 = vmatmul.mubr.f32.gmra.mrb[0].mxu0 %v2333
      %v2521 = vpop.f32.mrb[0].mxu0
      %v2522 = vadd.f32 0.0, %v2521
      %v2523 = vpop.f32.mrb[0].mxu0
      %2524 = vmatprep.mubr.f32.mxu0 0.0
      %2525 = vmatmul.mubr.f32.gmra.mrb[0].mxu0 %v2336
      %v2526 = vpop.f32.mrb[0].mxu0
      %v2527 = vadd.f32 0.0, %v2526
      %v2528 = vpop.f32.mrb[0].mxu0
      %2529 = vmatprep.mubr.f32.mxu0 0.0
      %2530 = vmatmul.mubr.f32.gmra.mrb[0].mxu0 %v2339
      %v2531 = vpop.f32.mrb[0].mxu0
      %v2532 = vadd.f32 0.0, %v2531
      %v2533 = vpop.f32.mrb[0].mxu0
      %2534 = vmatprep.mubr.f32.mxu0 0.0
      %2535 = vmatmul.mubr.f32.gmra.mrb[0].mxu0 %v2342
      %v2536 = vpop.f32.mrb[0].mxu0
      %v2537 = vadd.f32 0.0, %v2536
      %v2538 = vpop.f32.mrb[0].mxu0
      %2539 = vmatprep.mubr.f32.mxu0 0.0
      %2540 = vmatmul.mubr.f32.gmra.mrb[0].mxu0 %v2345
      %v2541 = vpop.f32.mrb[0].mxu0
      %v2542 = vadd.f32 0.0, %v2541
      %v2543 = vpop.f32.mrb[0].mxu0
      %2544 = vmatprep.mubr.f32.mxu0 0.0
      %2545 = vmatmul.mubr.f32.gmra.mrb[0].mxu0 %v2348
      %v2546 = vpop.f32.mrb[0].mxu0
      %v2547 = vadd.f32 0.0, %v2546
      %v2548 = vpop.f32.mrb[0].mxu0
      %2549 = vmatprep.mubr.f32.mxu0 0.0
      %2550 = vmatmul.mubr.f32.gmra.mrb[0].mxu0 %v2351
      %v2551 = vpop.f32.mrb[0].mxu0
      %v2552 = vadd.f32 0.0, %v2551
      %v2553 = vpop.f32.mrb[0].mxu0
      %2554 = vmatprep.mubr.f32.mxu0 0.0
      %2555 = vmatmul.mubr.f32.gmra.mrb[0].mxu0 %v2354
      %v2556 = vpop.f32.mrb[0].mxu0
      %v2557 = vadd.f32 0.0, %v2556
      %v2558 = vpop.f32.mrb[0].mxu0
      %2559 = vmatprep.mubr.f32.mxu0 0.0
      %2560 = vmatmul.mubr.f32.gmra.mrb[0].mxu0 %v2357
      %v2561 = vpop.f32.mrb[0].mxu0
      %v2562 = vadd.f32 0.0, %v2561
      %v2563 = vpop.f32.mrb[0].mxu0
      %2564 = vmatprep.mubr.f32.mxu0 0.0
      %2565 = vmatmul.mubr.f32.gmra.mrb[0].mxu0 %v2360
      %v2566 = vpop.f32.mrb[0].mxu0
      %v2567 = vadd.f32 0.0, %v2566
      %v2568 = vpop.f32.mrb[0].mxu0
      %2569 = vmatprep.mubr.f32.mxu0 0.0
      %2570 = vmatmul.mubr.f32.gmra.mrb[0].mxu0 %v2363
      %v2571 = vpop.f32.mrb[0].mxu0
      %v2572 = vadd.f32 0.0, %v2571
      %v2573 = vpop.f32.mrb[0].mxu0
      %2574 = vmatprep.mubr.f32.mxu0 0.0
      %2575 = vmatmul.mubr.f32.gmra.mrb[0].mxu0 %v2366
      %v2576 = vpop.f32.mrb[0].mxu0
      %v2577 = vadd.f32 0.0, %v2576
      %v2578 = vpop.f32.mrb[0].mxu0
      %2579 = vmatprep.mubr.f32.mxu0 0.0
      %2580 = vmatmul.mubr.f32.gmra.mrb[0].mxu0 %v2369
      %v2581 = vpop.f32.mrb[0].mxu0
      %v2582 = vadd.f32 0.0, %v2581
      %v2583 = vpop.f32.mrb[0].mxu0
      %2584 = vmatprep.mubr.f32.mxu0 0.0
      %2585 = vmatmul.mubr.f32.gmra.mrb[0].mxu0 %v2372
      %v2586 = vpop.f32.mrb[0].mxu0
      %v2587 = vadd.f32 0.0, %v2586
      %v2588 = vpop.f32.mrb[0].mxu0
      %2589 = vmatprep.mubr.f32.mxu0 0.0
      %2590 = vmatmul.mubr.f32.gmra.mrb[0].mxu0 %v2375
      %v2591 = vpop.f32.mrb[0].mxu0
      %v2592 = vadd.f32 0.0, %v2591
      %v2593 = vpop.f32.mrb[0].mxu0
      %2594 = vmatprep.mubr.f32.mxu0 0.0
      %2595 = vmatmul.mubr.f32.gmra.mrb[0].mxu0 %v2378
      %v2596 = vpop.f32.mrb[0].mxu0
      %v2597 = vadd.f32 0.0, %v2596
      %v2598 = vpop.f32.mrb[0].mxu0
      %2599 = vmatprep.mubr.f32.mxu0 0.0
      %2600 = vmatmul.mubr.f32.gmra.mrb[0].mxu0 %v2381
      %v2601 = vpop.f32.mrb[0].mxu0
      %v2602 = vadd.f32 0.0, %v2601
      %v2603 = vpop.f32.mrb[0].mxu0
      %2604 = vmatprep.mubr.f32.mxu0 0.0
      %2605 = vmatmul.mubr.f32.gmra.mrb[0].mxu0 %v2384
      %v2606 = vpop.f32.mrb[0].mxu0
      %v2607 = vadd.f32 0.0, %v2606
      %v2608 = vpop.f32.mrb[0].mxu0
      %2609 = vmatprep.mubr.f32.mxu0 0.0
      %2610 = vmatmul.mubr.f32.gmra.mrb[0].mxu0 %v2387
      %v2611 = vpop.f32.mrb[0].mxu0
      %v2612 = vadd.f32 0.0, %v2611
      %v2613 = vpop.f32.mrb[0].mxu0
      %2614 = vmatprep.mubr.f32.mxu0 0.0
      %2615 = vmatmul.mubr.f32.gmra.mrb[0].mxu0 %v2390
      %v2616 = vpop.f32.mrb[0].mxu0
      %v2617 = vadd.f32 0.0, %v2616
      %v2618 = vpop.f32.mrb[0].mxu0
      %2619 = vdwg.mxu0
      %v2620 = vadd.f32 %v2230, %v2462
      %v2621 = vadd.f32 %v2231, %v2467
      %v2622 = vadd.f32 %v2232, %v2472
      %v2623 = vadd.f32 %v2233, %v2477
      %v2624 = vadd.f32 %v2234, %v2482
      %v2625 = vadd.f32 %v2235, %v2487
      %v2626 = vadd.f32 %v2236, %v2492
      %v2627 = vadd.f32 %v2237, %v2497
      %v2628 = vadd.f32 %v2238, %v2502
      %v2629 = vadd.f32 %v2239, %v2507
      %v2630 = vadd.f32 %v2240, %v2512
      %v2631 = vadd.f32 %v2241, %v2517
      %v2632 = vadd.f32 %v2242, %v2522
      %v2633 = vadd.f32 %v2243, %v2527
      %v2634 = vadd.f32 %v2244, %v2532
      %v2635 = vadd.f32 %v2245, %v2537
      %v2636 = vadd.f32 %v2246, %v2542
      %v2637 = vadd.f32 %v2247, %v2547
      %v2638 = vadd.f32 %v2248, %v2552
      %v2639 = vadd.f32 %v2249, %v2557
      %v2640 = vadd.f32 %v2250, %v2562
      %v2641 = vadd.f32 %v2251, %v2567
      %v2642 = vadd.f32 %v2252, %v2572
      %v2643 = vadd.f32 %v2253, %v2577
      %v2644 = vadd.f32 %v2254, %v2582
      %v2645 = vadd.f32 %v2255, %v2587
      %v2646 = vadd.f32 %v2256, %v2592
      %v2647 = vadd.f32 %v2257, %v2597
      %v2648 = vadd.f32 %v2258, %v2602
      %v2649 = vadd.f32 %v2259, %v2607
      %v2650 = vadd.f32 %v2260, %v2612
      %v2651 = vadd.f32 %v2261, %v2617
      %v2652 = vld [vmem:[%s291] sm:$0xff]
      %v2653 = vld [vmem:[%s291 + $0x8] sm:$0xff]
      %v2654 = vld [vmem:[%s291 + $0x18] sm:$0xff]
      %v2655 = vld [vmem:[%s291 + $0x20] sm:$0xff]
      %v2656 = vld [vmem:[%s291 + $0x30] sm:$0xff]
      %v2657 = vld [vmem:[%s291 + $0x38] sm:$0xff]
      %v2658 = vld [vmem:[%s291 + $0x48] sm:$0xff]
      %v2659 = vld [vmem:[%s291 + $0x50] sm:$0xff]
      %v2660 = vld [vmem:[%s291 + $0x60] sm:$0xff]
      %v2661 = vld [vmem:[%s291 + $0x68] sm:$0xff]
      %v2662 = vld [vmem:[%s291 + $0x78] sm:$0xff]
      %v2663 = vld [vmem:[%s291 + $0x80] sm:$0xff]
      %v2664 = vld [vmem:[%s291 + $0x90] sm:$0xff]
      %v2665 = vld [vmem:[%s291 + $0x98] sm:$0xff]
      %v2666 = vld [vmem:[%s291 + $0xa8] sm:$0xff]
      %v2667 = vld [vmem:[%s291 + $0xb0] sm:$0xff]
      %v2668 = vld [vmem:[%s291 + $0xc0] sm:$0xff]
      %v2669 = vld [vmem:[%s291 + $0xc8] sm:$0xff]
      %v2670 = vld [vmem:[%s291 + $0xd8] sm:$0xff]
      %v2671 = vld [vmem:[%s291 + $0xe0] sm:$0xff]
      %v2672 = vld [vmem:[%s291 + $0xf0] sm:$0xff]
      %v2673 = vld [vmem:[%s291 + $0xf8] sm:$0xff]
      %v2674 = vld [vmem:[%s291 + $0x108] sm:$0xff]
      %v2675 = vld [vmem:[%s291 + $0x110] sm:$0xff]
      %v2676 = vld [vmem:[%s291 + $0x120] sm:$0xff]
      %v2677 = vld [vmem:[%s291 + $0x128] sm:$0xff]
      %v2678 = vld [vmem:[%s291 + $0x138] sm:$0xff]
      %v2679 = vld [vmem:[%s291 + $0x140] sm:$0xff]
      %v2680 = vld [vmem:[%s291 + $0x150] sm:$0xff]
      %v2681 = vld [vmem:[%s291 + $0x158] sm:$0xff]
      %v2682 = vld [vmem:[%s291 + $0x168] sm:$0xff]
      %v2683 = vld [vmem:[%s291 + $0x170] sm:$0xff]
      %s2684 = scalar_lea.vmem %s1, 24
      %v2685 = vld [vmem:[%s2684] sm:$0xf]
      %v2687 = vsel %vm258, %v2652, 0
      %v2690 = vsel %vm258, %v2653, 0
      %v2693 = vsel %vm258, %v2654, 0
      %v2696 = vsel %vm258, %v2655, 0
      %v2699 = vsel %vm258, %v2656, 0
      %v2702 = vsel %vm258, %v2657, 0
      %v2705 = vsel %vm258, %v2658, 0
      %v2708 = vsel %vm258, %v2659, 0
      %v2711 = vsel %vm258, %v2660, 0
      %v2714 = vsel %vm258, %v2661, 0
      %v2717 = vsel %vm258, %v2662, 0
      %v2720 = vsel %vm258, %v2663, 0
      %v2723 = vsel %vm258, %v2664, 0
      %v2726 = vsel %vm258, %v2665, 0
      %v2729 = vsel %vm258, %v2666, 0
      %v2732 = vsel %vm258, %v2667, 0
      %v2735 = vsel %vm258, %v2668, 0
      %v2738 = vsel %vm258, %v2669, 0
      %v2741 = vsel %vm258, %v2670, 0
      %v2744 = vsel %vm258, %v2671, 0
      %v2747 = vsel %vm258, %v2672, 0
      %v2750 = vsel %vm258, %v2673, 0
      %v2753 = vsel %vm258, %v2674, 0
      %v2756 = vsel %vm258, %v2675, 0
      %v2759 = vsel %vm258, %v2676, 0
      %v2762 = vsel %vm258, %v2677, 0
      %v2765 = vsel %vm258, %v2678, 0
      %v2768 = vsel %vm258, %v2679, 0
      %v2771 = vsel %vm258, %v2680, 0
      %v2774 = vsel %vm258, %v2681, 0
      %v2777 = vsel %vm258, %v2682, 0
      %v2780 = vsel %vm258, %v2683, 0
      %v2783 = vsel %vm539, %v2685, 0
      %2785 = vmatprep.subr.mxu0 0.0
      %2786 = vmatpush1.msra.mxu0 %v2783
      %2787 = vmatprep.subr.mxu0 0.0
      %2788 = vmatpush1.msra.mxu0 0.0
      %2789 = vmatprep.subr.mxu0 0.0
      %2790 = vmatpush1.msra.mxu0 0.0
      %2791 = vmatprep.subr.mxu0 0.0
      %2792 = vmatpush1.msra.mxu0 0.0
      %2793 = vmatprep.subr.mxu0 0.0
      %2794 = vmatpush1.msra.mxu0 0.0
      %2795 = vmatprep.subr.mxu0 0.0
      %2796 = vmatpush1.msra.mxu0 0.0
      %2797 = vmatprep.subr.mxu0 0.0
      %2798 = vmatpush1.msra.mxu0 0.0
      %2799 = vmatprep.subr.mxu0 0.0
      %2800 = vmatpush1.msra.mxu0 0.0
      %2801 = vmatprep.subr.mxu0 0.0
      %2802 = vmatpush1.msra.mxu0 0.0
      %2803 = vmatprep.subr.mxu0 0.0
      %2804 = vmatpush1.msra.mxu0 0.0
      %2805 = vmatprep.subr.mxu0 0.0
      %2806 = vmatpush1.msra.mxu0 0.0
      %2807 = vmatprep.subr.mxu0 0.0
      %2808 = vmatpush1.msra.mxu0 0.0
      %2809 = vmatprep.subr.mxu0 0.0
      %2810 = vmatpush1.msra.mxu0 0.0
      %2811 = vmatprep.subr.mxu0 0.0
      %2812 = vmatpush1.msra.mxu0 0.0
      %2813 = vmatprep.subr.mxu0 0.0
      %2814 = vmatpush1.msra.mxu0 0.0
      %2815 = vmatprep.subr.mxu0 0.0
      %2816 = vmatpush1.msra.mxu0 0.0
      %2817 = vmatprep.subr.mxu0 0.0
      %2818 = vmatpush1.msra.mxu0 0.0
      %2819 = vmatprep.subr.mxu0 0.0
      %2820 = vmatpush1.msra.mxu0 0.0
      %2821 = vmatprep.subr.mxu0 0.0
      %2822 = vmatpush1.msra.mxu0 0.0
      %2823 = vmatprep.subr.mxu0 0.0
      %2824 = vmatpush1.msra.mxu0 0.0
      %2825 = vmatprep.subr.mxu0 0.0
      %2826 = vmatpush1.msra.mxu0 0.0
      %2827 = vmatprep.subr.mxu0 0.0
      %2828 = vmatpush1.msra.mxu0 0.0
      %2829 = vmatprep.subr.mxu0 0.0
      %2830 = vmatpush1.msra.mxu0 0.0
      %2831 = vmatprep.subr.mxu0 0.0
      %2832 = vmatpush1.msra.mxu0 0.0
      %2833 = vmatprep.subr.mxu0 0.0
      %2834 = vmatpush1.msra.mxu0 0.0
      %2835 = vmatprep.subr.mxu0 0.0
      %2836 = vmatpush1.msra.mxu0 0.0
      %2837 = vmatprep.subr.mxu0 0.0
      %2838 = vmatpush1.msra.mxu0 0.0
      %2839 = vmatprep.subr.mxu0 0.0
      %2840 = vmatpush1.msra.mxu0 0.0
      %2841 = vmatprep.subr.mxu0 0.0
      %2842 = vmatpush1.msra.mxu0 0.0
      %2843 = vmatprep.subr.mxu0 0.0
      %2844 = vmatpush1.msra.mxu0 0.0
      %2845 = vmatprep.subr.mxu0 0.0
      %2846 = vmatpush1.msra.mxu0 0.0
      %2847 = vmatprep.subr.mxu0 0.0
      %2848 = vmatpush1.msra.mxu0 0.0
      %2849 = vmatprep.mubr.f32.mxu0 0.0
      %2850 = vmatmul.mubr.f32.gmra.mrb[0].mxu0 %v2687
      %v2851 = vpop.f32.mrb[0].mxu0
      %v2852 = vadd.f32 0.0, %v2851
      %v2853 = vpop.f32.mrb[0].mxu0
      %2854 = vmatprep.mubr.f32.mxu0 0.0
      %2855 = vmatmul.mubr.f32.gmra.mrb[0].mxu0 %v2690
      %v2856 = vpop.f32.mrb[0].mxu0
      %v2857 = vadd.f32 0.0, %v2856
      %v2858 = vpop.f32.mrb[0].mxu0
      %2859 = vmatprep.mubr.f32.mxu0 0.0
      %2860 = vmatmul.mubr.f32.gmra.mrb[0].mxu0 %v2693
      %v2861 = vpop.f32.mrb[0].mxu0
      %v2862 = vadd.f32 0.0, %v2861
      %v2863 = vpop.f32.mrb[0].mxu0
      %2864 = vmatprep.mubr.f32.mxu0 0.0
      %2865 = vmatmul.mubr.f32.gmra.mrb[0].mxu0 %v2696
      %v2866 = vpop.f32.mrb[0].mxu0
      %v2867 = vadd.f32 0.0, %v2866
      %v2868 = vpop.f32.mrb[0].mxu0
      %2869 = vmatprep.mubr.f32.mxu0 0.0
      %2870 = vmatmul.mubr.f32.gmra.mrb[0].mxu0 %v2699
      %v2871 = vpop.f32.mrb[0].mxu0
      %v2872 = vadd.f32 0.0, %v2871
      %v2873 = vpop.f32.mrb[0].mxu0
      %2874 = vmatprep.mubr.f32.mxu0 0.0
      %2875 = vmatmul.mubr.f32.gmra.mrb[0].mxu0 %v2702
      %v2876 = vpop.f32.mrb[0].mxu0
      %v2877 = vadd.f32 0.0, %v2876
      %v2878 = vpop.f32.mrb[0].mxu0
      %2879 = vmatprep.mubr.f32.mxu0 0.0
      %2880 = vmatmul.mubr.f32.gmra.mrb[0].mxu0 %v2705
      %v2881 = vpop.f32.mrb[0].mxu0
      %v2882 = vadd.f32 0.0, %v2881
      %v2883 = vpop.f32.mrb[0].mxu0
      %2884 = vmatprep.mubr.f32.mxu0 0.0
      %2885 = vmatmul.mubr.f32.gmra.mrb[0].mxu0 %v2708
      %v2886 = vpop.f32.mrb[0].mxu0
      %v2887 = vadd.f32 0.0, %v2886
      %v2888 = vpop.f32.mrb[0].mxu0
      %2889 = vmatprep.mubr.f32.mxu0 0.0
      %2890 = vmatmul.mubr.f32.gmra.mrb[0].mxu0 %v2711
      %v2891 = vpop.f32.mrb[0].mxu0
      %v2892 = vadd.f32 0.0, %v2891
      %v2893 = vpop.f32.mrb[0].mxu0
      %2894 = vmatprep.mubr.f32.mxu0 0.0
      %2895 = vmatmul.mubr.f32.gmra.mrb[0].mxu0 %v2714
      %v2896 = vpop.f32.mrb[0].mxu0
      %v2897 = vadd.f32 0.0, %v2896
      %v2898 = vpop.f32.mrb[0].mxu0
      %2899 = vmatprep.mubr.f32.mxu0 0.0
      %2900 = vmatmul.mubr.f32.gmra.mrb[0].mxu0 %v2717
      %v2901 = vpop.f32.mrb[0].mxu0
      %v2902 = vadd.f32 0.0, %v2901
      %v2903 = vpop.f32.mrb[0].mxu0
      %2904 = vmatprep.mubr.f32.mxu0 0.0
      %2905 = vmatmul.mubr.f32.gmra.mrb[0].mxu0 %v2720
      %v2906 = vpop.f32.mrb[0].mxu0
      %v2907 = vadd.f32 0.0, %v2906
      %v2908 = vpop.f32.mrb[0].mxu0
      %2909 = vmatprep.mubr.f32.mxu0 0.0
      %2910 = vmatmul.mubr.f32.gmra.mrb[0].mxu0 %v2723
      %v2911 = vpop.f32.mrb[0].mxu0
      %v2912 = vadd.f32 0.0, %v2911
      %v2913 = vpop.f32.mrb[0].mxu0
      %2914 = vmatprep.mubr.f32.mxu0 0.0
      %2915 = vmatmul.mubr.f32.gmra.mrb[0].mxu0 %v2726
      %v2916 = vpop.f32.mrb[0].mxu0
      %v2917 = vadd.f32 0.0, %v2916
      %v2918 = vpop.f32.mrb[0].mxu0
      %2919 = vmatprep.mubr.f32.mxu0 0.0
      %2920 = vmatmul.mubr.f32.gmra.mrb[0].mxu0 %v2729
      %v2921 = vpop.f32.mrb[0].mxu0
      %v2922 = vadd.f32 0.0, %v2921
      %v2923 = vpop.f32.mrb[0].mxu0
      %2924 = vmatprep.mubr.f32.mxu0 0.0
      %2925 = vmatmul.mubr.f32.gmra.mrb[0].mxu0 %v2732
      %v2926 = vpop.f32.mrb[0].mxu0
      %v2927 = vadd.f32 0.0, %v2926
      %v2928 = vpop.f32.mrb[0].mxu0
      %2929 = vmatprep.mubr.f32.mxu0 0.0
      %2930 = vmatmul.mubr.f32.gmra.mrb[0].mxu0 %v2735
      %v2931 = vpop.f32.mrb[0].mxu0
      %v2932 = vadd.f32 0.0, %v2931
      %v2933 = vpop.f32.mrb[0].mxu0
      %2934 = vmatprep.mubr.f32.mxu0 0.0
      %2935 = vmatmul.mubr.f32.gmra.mrb[0].mxu0 %v2738
      %v2936 = vpop.f32.mrb[0].mxu0
      %v2937 = vadd.f32 0.0, %v2936
      %v2938 = vpop.f32.mrb[0].mxu0
      %2939 = vmatprep.mubr.f32.mxu0 0.0
      %2940 = vmatmul.mubr.f32.gmra.mrb[0].mxu0 %v2741
      %v2941 = vpop.f32.mrb[0].mxu0
      %v2942 = vadd.f32 0.0, %v2941
      %v2943 = vpop.f32.mrb[0].mxu0
      %2944 = vmatprep.mubr.f32.mxu0 0.0
      %2945 = vmatmul.mubr.f32.gmra.mrb[0].mxu0 %v2744
      %v2946 = vpop.f32.mrb[0].mxu0
      %v2947 = vadd.f32 0.0, %v2946
      %v2948 = vpop.f32.mrb[0].mxu0
      %2949 = vmatprep.mubr.f32.mxu0 0.0
      %2950 = vmatmul.mubr.f32.gmra.mrb[0].mxu0 %v2747
      %v2951 = vpop.f32.mrb[0].mxu0
      %v2952 = vadd.f32 0.0, %v2951
      %v2953 = vpop.f32.mrb[0].mxu0
      %2954 = vmatprep.mubr.f32.mxu0 0.0
      %2955 = vmatmul.mubr.f32.gmra.mrb[0].mxu0 %v2750
      %v2956 = vpop.f32.mrb[0].mxu0
      %v2957 = vadd.f32 0.0, %v2956
      %v2958 = vpop.f32.mrb[0].mxu0
      %2959 = vmatprep.mubr.f32.mxu0 0.0
      %2960 = vmatmul.mubr.f32.gmra.mrb[0].mxu0 %v2753
      %v2961 = vpop.f32.mrb[0].mxu0
      %v2962 = vadd.f32 0.0, %v2961
      %v2963 = vpop.f32.mrb[0].mxu0
      %2964 = vmatprep.mubr.f32.mxu0 0.0
      %2965 = vmatmul.mubr.f32.gmra.mrb[0].mxu0 %v2756
      %v2966 = vpop.f32.mrb[0].mxu0
      %v2967 = vadd.f32 0.0, %v2966
      %v2968 = vpop.f32.mrb[0].mxu0
      %2969 = vmatprep.mubr.f32.mxu0 0.0
      %2970 = vmatmul.mubr.f32.gmra.mrb[0].mxu0 %v2759
      %v2971 = vpop.f32.mrb[0].mxu0
      %v2972 = vadd.f32 0.0, %v2971
      %v2973 = vpop.f32.mrb[0].mxu0
      %2974 = vmatprep.mubr.f32.mxu0 0.0
      %2975 = vmatmul.mubr.f32.gmra.mrb[0].mxu0 %v2762
      %v2976 = vpop.f32.mrb[0].mxu0
      %v2977 = vadd.f32 0.0, %v2976
      %v2978 = vpop.f32.mrb[0].mxu0
      %2979 = vmatprep.mubr.f32.mxu0 0.0
      %2980 = vmatmul.mubr.f32.gmra.mrb[0].mxu0 %v2765
      %v2981 = vpop.f32.mrb[0].mxu0
      %v2982 = vadd.f32 0.0, %v2981
      %v2983 = vpop.f32.mrb[0].mxu0
      %2984 = vmatprep.mubr.f32.mxu0 0.0
      %2985 = vmatmul.mubr.f32.gmra.mrb[0].mxu0 %v2768
      %v2986 = vpop.f32.mrb[0].mxu0
      %v2987 = vadd.f32 0.0, %v2986
      %v2988 = vpop.f32.mrb[0].mxu0
      %2989 = vmatprep.mubr.f32.mxu0 0.0
      %2990 = vmatmul.mubr.f32.gmra.mrb[0].mxu0 %v2771
      %v2991 = vpop.f32.mrb[0].mxu0
      %v2992 = vadd.f32 0.0, %v2991
      %v2993 = vpop.f32.mrb[0].mxu0
      %2994 = vmatprep.mubr.f32.mxu0 0.0
      %2995 = vmatmul.mubr.f32.gmra.mrb[0].mxu0 %v2774
      %v2996 = vpop.f32.mrb[0].mxu0
      %v2997 = vadd.f32 0.0, %v2996
      %v2998 = vpop.f32.mrb[0].mxu0
      %2999 = vmatprep.mubr.f32.mxu0 0.0
      %3000 = vmatmul.mubr.f32.gmra.mrb[0].mxu0 %v2777
      %v3001 = vpop.f32.mrb[0].mxu0
      %v3002 = vadd.f32 0.0, %v3001
      %v3003 = vpop.f32.mrb[0].mxu0
      %3004 = vmatprep.mubr.f32.mxu0 0.0
      %3005 = vmatmul.mubr.f32.gmra.mrb[0].mxu0 %v2780
      %v3006 = vpop.f32.mrb[0].mxu0
      %v3007 = vadd.f32 0.0, %v3006
      %v3008 = vpop.f32.mrb[0].mxu0
      %3009 = vdwg.mxu0
      %v3010 = vadd.f32 %v2620, %v2852
      %v3011 = vadd.f32 %v2621, %v2857
      %v3012 = vadd.f32 %v2622, %v2862
      %v3013 = vadd.f32 %v2623, %v2867
      %v3014 = vadd.f32 %v2624, %v2872
      %v3015 = vadd.f32 %v2625, %v2877
      %v3016 = vadd.f32 %v2626, %v2882
      %v3017 = vadd.f32 %v2627, %v2887
      %v3018 = vadd.f32 %v2628, %v2892
      %v3019 = vadd.f32 %v2629, %v2897
      %v3020 = vadd.f32 %v2630, %v2902
      %v3021 = vadd.f32 %v2631, %v2907
      %v3022 = vadd.f32 %v2632, %v2912
      %v3023 = vadd.f32 %v2633, %v2917
      %v3024 = vadd.f32 %v2634, %v2922
      %v3025 = vadd.f32 %v2635, %v2927
      %v3026 = vadd.f32 %v2636, %v2932
      %v3027 = vadd.f32 %v2637, %v2937
      %v3028 = vadd.f32 %v2638, %v2942
      %v3029 = vadd.f32 %v2639, %v2947
      %v3030 = vadd.f32 %v2640, %v2952
      %v3031 = vadd.f32 %v2641, %v2957
      %v3032 = vadd.f32 %v2642, %v2962
      %v3033 = vadd.f32 %v2643, %v2967
      %v3034 = vadd.f32 %v2644, %v2972
      %v3035 = vadd.f32 %v2645, %v2977
      %v3036 = vadd.f32 %v2646, %v2982
      %v3037 = vadd.f32 %v2647, %v2987
      %v3038 = vadd.f32 %v2648, %v2992
      %v3039 = vadd.f32 %v2649, %v2997
      %v3040 = vadd.f32 %v2650, %v3002
      %v3041 = vadd.f32 %v2651, %v3007
      %v3042 = vld [vmem:[%s291 + $0x1] sm:$0xff]
      %v3043 = vld [vmem:[%s291 + $0x9] sm:$0xff]
      %v3044 = vld [vmem:[%s291 + $0x19] sm:$0xff]
      %v3045 = vld [vmem:[%s291 + $0x21] sm:$0xff]
      %v3046 = vld [vmem:[%s291 + $0x31] sm:$0xff]
      %v3047 = vld [vmem:[%s291 + $0x39] sm:$0xff]
      %v3048 = vld [vmem:[%s291 + $0x49] sm:$0xff]
      %v3049 = vld [vmem:[%s291 + $0x51] sm:$0xff]
      %v3050 = vld [vmem:[%s291 + $0x61] sm:$0xff]
      %v3051 = vld [vmem:[%s291 + $0x69] sm:$0xff]
      %v3052 = vld [vmem:[%s291 + $0x79] sm:$0xff]
      %v3053 = vld [vmem:[%s291 + $0x81] sm:$0xff]
      %v3054 = vld [vmem:[%s291 + $0x91] sm:$0xff]
      %v3055 = vld [vmem:[%s291 + $0x99] sm:$0xff]
      %v3056 = vld [vmem:[%s291 + $0xa9] sm:$0xff]
      %v3057 = vld [vmem:[%s291 + $0xb1] sm:$0xff]
      %v3058 = vld [vmem:[%s291 + $0xc1] sm:$0xff]
      %v3059 = vld [vmem:[%s291 + $0xc9] sm:$0xff]
      %v3060 = vld [vmem:[%s291 + $0xd9] sm:$0xff]
      %v3061 = vld [vmem:[%s291 + $0xe1] sm:$0xff]
      %v3062 = vld [vmem:[%s291 + $0xf1] sm:$0xff]
      %v3063 = vld [vmem:[%s291 + $0xf9] sm:$0xff]
      %v3064 = vld [vmem:[%s291 + $0x109] sm:$0xff]
      %v3065 = vld [vmem:[%s291 + $0x111] sm:$0xff]
      %v3066 = vld [vmem:[%s291 + $0x121] sm:$0xff]
      %v3067 = vld [vmem:[%s291 + $0x129] sm:$0xff]
      %v3068 = vld [vmem:[%s291 + $0x139] sm:$0xff]
      %v3069 = vld [vmem:[%s291 + $0x141] sm:$0xff]
      %v3070 = vld [vmem:[%s291 + $0x151] sm:$0xff]
      %v3071 = vld [vmem:[%s291 + $0x159] sm:$0xff]
      %v3072 = vld [vmem:[%s291 + $0x169] sm:$0xff]
      %v3073 = vld [vmem:[%s291 + $0x171] sm:$0xff]
      %s3074 = scalar_lea.vmem %s1, 28
      %v3075 = vld [vmem:[%s3074] sm:$0xf]
      %v3077 = vsel %vm258, %v3042, 0
      %v3080 = vsel %vm258, %v3043, 0
      %v3083 = vsel %vm258, %v3044, 0
      %v3086 = vsel %vm258, %v3045, 0
      %v3089 = vsel %vm258, %v3046, 0
      %v3092 = vsel %vm258, %v3047, 0
      %v3095 = vsel %vm258, %v3048, 0
      %v3098 = vsel %vm258, %v3049, 0
      %v3101 = vsel %vm258, %v3050, 0
      %v3104 = vsel %vm258, %v3051, 0
      %v3107 = vsel %vm258, %v3052, 0
      %v3110 = vsel %vm258, %v3053, 0
      %v3113 = vsel %vm258, %v3054, 0
      %v3116 = vsel %vm258, %v3055, 0
      %v3119 = vsel %vm258, %v3056, 0
      %v3122 = vsel %vm258, %v3057, 0
      %v3125 = vsel %vm258, %v3058, 0
      %v3128 = vsel %vm258, %v3059, 0
      %v3131 = vsel %vm258, %v3060, 0
      %v3134 = vsel %vm258, %v3061, 0
      %v3137 = vsel %vm258, %v3062, 0
      %v3140 = vsel %vm258, %v3063, 0
      %v3143 = vsel %vm258, %v3064, 0
      %v3146 = vsel %vm258, %v3065, 0
      %v3149 = vsel %vm258, %v3066, 0
      %v3152 = vsel %vm258, %v3067, 0
      %v3155 = vsel %vm258, %v3068, 0
      %v3158 = vsel %vm258, %v3069, 0
      %v3161 = vsel %vm258, %v3070, 0
      %v3164 = vsel %vm258, %v3071, 0
      %v3167 = vsel %vm258, %v3072, 0
      %v3170 = vsel %vm258, %v3073, 0
      %v3173 = vsel %vm539, %v3075, 0
      %3175 = vmatprep.subr.mxu0 0.0
      %3176 = vmatpush1.msra.mxu0 %v3173
      %3177 = vmatprep.subr.mxu0 0.0
      %3178 = vmatpush1.msra.mxu0 0.0
      %3179 = vmatprep.subr.mxu0 0.0
      %3180 = vmatpush1.msra.mxu0 0.0
      %3181 = vmatprep.subr.mxu0 0.0
      %3182 = vmatpush1.msra.mxu0 0.0
      %3183 = vmatprep.subr.mxu0 0.0
      %3184 = vmatpush1.msra.mxu0 0.0
      %3185 = vmatprep.subr.mxu0 0.0
      %3186 = vmatpush1.msra.mxu0 0.0
      %3187 = vmatprep.subr.mxu0 0.0
      %3188 = vmatpush1.msra.mxu0 0.0
      %3189 = vmatprep.subr.mxu0 0.0
      %3190 = vmatpush1.msra.mxu0 0.0
      %3191 = vmatprep.subr.mxu0 0.0
      %3192 = vmatpush1.msra.mxu0 0.0
      %3193 = vmatprep.subr.mxu0 0.0
      %3194 = vmatpush1.msra.mxu0 0.0
      %3195 = vmatprep.subr.mxu0 0.0
      %3196 = vmatpush1.msra.mxu0 0.0
      %3197 = vmatprep.subr.mxu0 0.0
      %3198 = vmatpush1.msra.mxu0 0.0
      %3199 = vmatprep.subr.mxu0 0.0
      %3200 = vmatpush1.msra.mxu0 0.0
      %3201 = vmatprep.subr.mxu0 0.0
      %3202 = vmatpush1.msra.mxu0 0.0
      %3203 = vmatprep.subr.mxu0 0.0
      %3204 = vmatpush1.msra.mxu0 0.0
      %3205 = vmatprep.subr.mxu0 0.0
      %3206 = vmatpush1.msra.mxu0 0.0
      %3207 = vmatprep.subr.mxu0 0.0
      %3208 = vmatpush1.msra.mxu0 0.0
      %3209 = vmatprep.subr.mxu0 0.0
      %3210 = vmatpush1.msra.mxu0 0.0
      %3211 = vmatprep.subr.mxu0 0.0
      %3212 = vmatpush1.msra.mxu0 0.0
      %3213 = vmatprep.subr.mxu0 0.0
      %3214 = vmatpush1.msra.mxu0 0.0
      %3215 = vmatprep.subr.mxu0 0.0
      %3216 = vmatpush1.msra.mxu0 0.0
      %3217 = vmatprep.subr.mxu0 0.0
      %3218 = vmatpush1.msra.mxu0 0.0
      %3219 = vmatprep.subr.mxu0 0.0
      %3220 = vmatpush1.msra.mxu0 0.0
      %3221 = vmatprep.subr.mxu0 0.0
      %3222 = vmatpush1.msra.mxu0 0.0
      %3223 = vmatprep.subr.mxu0 0.0
      %3224 = vmatpush1.msra.mxu0 0.0
      %3225 = vmatprep.subr.mxu0 0.0
      %3226 = vmatpush1.msra.mxu0 0.0
      %3227 = vmatprep.subr.mxu0 0.0
      %3228 = vmatpush1.msra.mxu0 0.0
      %3229 = vmatprep.subr.mxu0 0.0
      %3230 = vmatpush1.msra.mxu0 0.0
      %3231 = vmatprep.subr.mxu0 0.0
      %3232 = vmatpush1.msra.mxu0 0.0
      %3233 = vmatprep.subr.mxu0 0.0
      %3234 = vmatpush1.msra.mxu0 0.0
      %3235 = vmatprep.subr.mxu0 0.0
      %3236 = vmatpush1.msra.mxu0 0.0
      %3237 = vmatprep.subr.mxu0 0.0
      %3238 = vmatpush1.msra.mxu0 0.0
      %3239 = vmatprep.mubr.f32.mxu0 0.0
      %3240 = vmatmul.mubr.f32.gmra.mrb[0].mxu0 %v3077
      %v3241 = vpop.f32.mrb[0].mxu0
      %v3242 = vadd.f32 0.0, %v3241
      %v3243 = vpop.f32.mrb[0].mxu0
      %3244 = vmatprep.mubr.f32.mxu0 0.0
      %3245 = vmatmul.mubr.f32.gmra.mrb[0].mxu0 %v3080
      %v3246 = vpop.f32.mrb[0].mxu0
      %v3247 = vadd.f32 0.0, %v3246
      %v3248 = vpop.f32.mrb[0].mxu0
      %3249 = vmatprep.mubr.f32.mxu0 0.0
      %3250 = vmatmul.mubr.f32.gmra.mrb[0].mxu0 %v3083
      %v3251 = vpop.f32.mrb[0].mxu0
      %v3252 = vadd.f32 0.0, %v3251
      %v3253 = vpop.f32.mrb[0].mxu0
      %3254 = vmatprep.mubr.f32.mxu0 0.0
      %3255 = vmatmul.mubr.f32.gmra.mrb[0].mxu0 %v3086
      %v3256 = vpop.f32.mrb[0].mxu0
      %v3257 = vadd.f32 0.0, %v3256
      %v3258 = vpop.f32.mrb[0].mxu0
      %3259 = vmatprep.mubr.f32.mxu0 0.0
      %3260 = vmatmul.mubr.f32.gmra.mrb[0].mxu0 %v3089
      %v3261 = vpop.f32.mrb[0].mxu0
      %v3262 = vadd.f32 0.0, %v3261
      %v3263 = vpop.f32.mrb[0].mxu0
      %3264 = vmatprep.mubr.f32.mxu0 0.0
      %3265 = vmatmul.mubr.f32.gmra.mrb[0].mxu0 %v3092
      %v3266 = vpop.f32.mrb[0].mxu0
      %v3267 = vadd.f32 0.0, %v3266
      %v3268 = vpop.f32.mrb[0].mxu0
      %3269 = vmatprep.mubr.f32.mxu0 0.0
      %3270 = vmatmul.mubr.f32.gmra.mrb[0].mxu0 %v3095
      %v3271 = vpop.f32.mrb[0].mxu0
      %v3272 = vadd.f32 0.0, %v3271
      %v3273 = vpop.f32.mrb[0].mxu0
      %3274 = vmatprep.mubr.f32.mxu0 0.0
      %3275 = vmatmul.mubr.f32.gmra.mrb[0].mxu0 %v3098
      %v3276 = vpop.f32.mrb[0].mxu0
      %v3277 = vadd.f32 0.0, %v3276
      %v3278 = vpop.f32.mrb[0].mxu0
      %3279 = vmatprep.mubr.f32.mxu0 0.0
      %3280 = vmatmul.mubr.f32.gmra.mrb[0].mxu0 %v3101
      %v3281 = vpop.f32.mrb[0].mxu0
      %v3282 = vadd.f32 0.0, %v3281
      %v3283 = vpop.f32.mrb[0].mxu0
      %3284 = vmatprep.mubr.f32.mxu0 0.0
      %3285 = vmatmul.mubr.f32.gmra.mrb[0].mxu0 %v3104
      %v3286 = vpop.f32.mrb[0].mxu0
      %v3287 = vadd.f32 0.0, %v3286
      %v3288 = vpop.f32.mrb[0].mxu0
      %3289 = vmatprep.mubr.f32.mxu0 0.0
      %3290 = vmatmul.mubr.f32.gmra.mrb[0].mxu0 %v3107
      %v3291 = vpop.f32.mrb[0].mxu0
      %v3292 = vadd.f32 0.0, %v3291
      %v3293 = vpop.f32.mrb[0].mxu0
      %3294 = vmatprep.mubr.f32.mxu0 0.0
      %3295 = vmatmul.mubr.f32.gmra.mrb[0].mxu0 %v3110
      %v3296 = vpop.f32.mrb[0].mxu0
      %v3297 = vadd.f32 0.0, %v3296
      %v3298 = vpop.f32.mrb[0].mxu0
      %3299 = vmatprep.mubr.f32.mxu0 0.0
      %3300 = vmatmul.mubr.f32.gmra.mrb[0].mxu0 %v3113
      %v3301 = vpop.f32.mrb[0].mxu0
      %v3302 = vadd.f32 0.0, %v3301
      %v3303 = vpop.f32.mrb[0].mxu0
      %3304 = vmatprep.mubr.f32.mxu0 0.0
      %3305 = vmatmul.mubr.f32.gmra.mrb[0].mxu0 %v3116
      %v3306 = vpop.f32.mrb[0].mxu0
      %v3307 = vadd.f32 0.0, %v3306
      %v3308 = vpop.f32.mrb[0].mxu0
      %3309 = vmatprep.mubr.f32.mxu0 0.0
      %3310 = vmatmul.mubr.f32.gmra.mrb[0].mxu0 %v3119
      %v3311 = vpop.f32.mrb[0].mxu0
      %v3312 = vadd.f32 0.0, %v3311
      %v3313 = vpop.f32.mrb[0].mxu0
      %3314 = vmatprep.mubr.f32.mxu0 0.0
      %3315 = vmatmul.mubr.f32.gmra.mrb[0].mxu0 %v3122
      %v3316 = vpop.f32.mrb[0].mxu0
      %v3317 = vadd.f32 0.0, %v3316
      %v3318 = vpop.f32.mrb[0].mxu0
      %3319 = vmatprep.mubr.f32.mxu0 0.0
      %3320 = vmatmul.mubr.f32.gmra.mrb[0].mxu0 %v3125
      %v3321 = vpop.f32.mrb[0].mxu0
      %v3322 = vadd.f32 0.0, %v3321
      %v3323 = vpop.f32.mrb[0].mxu0
      %3324 = vmatprep.mubr.f32.mxu0 0.0
      %3325 = vmatmul.mubr.f32.gmra.mrb[0].mxu0 %v3128
      %v3326 = vpop.f32.mrb[0].mxu0
      %v3327 = vadd.f32 0.0, %v3326
      %v3328 = vpop.f32.mrb[0].mxu0
      %3329 = vmatprep.mubr.f32.mxu0 0.0
      %3330 = vmatmul.mubr.f32.gmra.mrb[0].mxu0 %v3131
      %v3331 = vpop.f32.mrb[0].mxu0
      %v3332 = vadd.f32 0.0, %v3331
      %v3333 = vpop.f32.mrb[0].mxu0
      %3334 = vmatprep.mubr.f32.mxu0 0.0
      %3335 = vmatmul.mubr.f32.gmra.mrb[0].mxu0 %v3134
      %v3336 = vpop.f32.mrb[0].mxu0
      %v3337 = vadd.f32 0.0, %v3336
      %v3338 = vpop.f32.mrb[0].mxu0
      %3339 = vmatprep.mubr.f32.mxu0 0.0
      %3340 = vmatmul.mubr.f32.gmra.mrb[0].mxu0 %v3137
      %v3341 = vpop.f32.mrb[0].mxu0
      %v3342 = vadd.f32 0.0, %v3341
      %v3343 = vpop.f32.mrb[0].mxu0
      %3344 = vmatprep.mubr.f32.mxu0 0.0
      %3345 = vmatmul.mubr.f32.gmra.mrb[0].mxu0 %v3140
      %v3346 = vpop.f32.mrb[0].mxu0
      %v3347 = vadd.f32 0.0, %v3346
      %v3348 = vpop.f32.mrb[0].mxu0
      %3349 = vmatprep.mubr.f32.mxu0 0.0
      %3350 = vmatmul.mubr.f32.gmra.mrb[0].mxu0 %v3143
      %v3351 = vpop.f32.mrb[0].mxu0
      %v3352 = vadd.f32 0.0, %v3351
      %v3353 = vpop.f32.mrb[0].mxu0
      %3354 = vmatprep.mubr.f32.mxu0 0.0
      %3355 = vmatmul.mubr.f32.gmra.mrb[0].mxu0 %v3146
      %v3356 = vpop.f32.mrb[0].mxu0
      %v3357 = vadd.f32 0.0, %v3356
      %v3358 = vpop.f32.mrb[0].mxu0
      %3359 = vmatprep.mubr.f32.mxu0 0.0
      %3360 = vmatmul.mubr.f32.gmra.mrb[0].mxu0 %v3149
      %v3361 = vpop.f32.mrb[0].mxu0
      %v3362 = vadd.f32 0.0, %v3361
      %v3363 = vpop.f32.mrb[0].mxu0
      %3364 = vmatprep.mubr.f32.mxu0 0.0
      %3365 = vmatmul.mubr.f32.gmra.mrb[0].mxu0 %v3152
      %v3366 = vpop.f32.mrb[0].mxu0
      %v3367 = vadd.f32 0.0, %v3366
      %v3368 = vpop.f32.mrb[0].mxu0
      %3369 = vmatprep.mubr.f32.mxu0 0.0
      %3370 = vmatmul.mubr.f32.gmra.mrb[0].mxu0 %v3155
      %v3371 = vpop.f32.mrb[0].mxu0
      %v3372 = vadd.f32 0.0, %v3371
      %v3373 = vpop.f32.mrb[0].mxu0
      %3374 = vmatprep.mubr.f32.mxu0 0.0
      %3375 = vmatmul.mubr.f32.gmra.mrb[0].mxu0 %v3158
      %v3376 = vpop.f32.mrb[0].mxu0
      %v3377 = vadd.f32 0.0, %v3376
      %v3378 = vpop.f32.mrb[0].mxu0
      %3379 = vmatprep.mubr.f32.mxu0 0.0
      %3380 = vmatmul.mubr.f32.gmra.mrb[0].mxu0 %v3161
      %v3381 = vpop.f32.mrb[0].mxu0
      %v3382 = vadd.f32 0.0, %v3381
      %v3383 = vpop.f32.mrb[0].mxu0
      %3384 = vmatprep.mubr.f32.mxu0 0.0
      %3385 = vmatmul.mubr.f32.gmra.mrb[0].mxu0 %v3164
      %v3386 = vpop.f32.mrb[0].mxu0
      %v3387 = vadd.f32 0.0, %v3386
      %v3388 = vpop.f32.mrb[0].mxu0
      %3389 = vmatprep.mubr.f32.mxu0 0.0
      %3390 = vmatmul.mubr.f32.gmra.mrb[0].mxu0 %v3167
      %v3391 = vpop.f32.mrb[0].mxu0
      %v3392 = vadd.f32 0.0, %v3391
      %v3393 = vpop.f32.mrb[0].mxu0
      %3394 = vmatprep.mubr.f32.mxu0 0.0
      %3395 = vmatmul.mubr.f32.gmra.mrb[0].mxu0 %v3170
      %v3396 = vpop.f32.mrb[0].mxu0
      %v3397 = vadd.f32 0.0, %v3396
      %v3398 = vpop.f32.mrb[0].mxu0
      %3399 = vdwg.mxu0
      %v3400 = vadd.f32 %v3010, %v3242
      %v3401 = vadd.f32 %v3011, %v3247
      %v3402 = vadd.f32 %v3012, %v3252
      %v3403 = vadd.f32 %v3013, %v3257
      %v3404 = vadd.f32 %v3014, %v3262
      %v3405 = vadd.f32 %v3015, %v3267
      %v3406 = vadd.f32 %v3016, %v3272
      %v3407 = vadd.f32 %v3017, %v3277
      %v3408 = vadd.f32 %v3018, %v3282
      %v3409 = vadd.f32 %v3019, %v3287
      %v3410 = vadd.f32 %v3020, %v3292
      %v3411 = vadd.f32 %v3021, %v3297
      %v3412 = vadd.f32 %v3022, %v3302
      %v3413 = vadd.f32 %v3023, %v3307
      %v3414 = vadd.f32 %v3024, %v3312
      %v3415 = vadd.f32 %v3025, %v3317
      %v3416 = vadd.f32 %v3026, %v3322
      %v3417 = vadd.f32 %v3027, %v3327
      %v3418 = vadd.f32 %v3028, %v3332
      %v3419 = vadd.f32 %v3029, %v3337
      %v3420 = vadd.f32 %v3030, %v3342
      %v3421 = vadd.f32 %v3031, %v3347
      %v3422 = vadd.f32 %v3032, %v3352
      %v3423 = vadd.f32 %v3033, %v3357
      %v3424 = vadd.f32 %v3034, %v3362
      %v3425 = vadd.f32 %v3035, %v3367
      %v3426 = vadd.f32 %v3036, %v3372
      %v3427 = vadd.f32 %v3037, %v3377
      %v3428 = vadd.f32 %v3038, %v3382
      %v3429 = vadd.f32 %v3039, %v3387
      %v3430 = vadd.f32 %v3040, %v3392
      %v3431 = vadd.f32 %v3041, %v3397
      %v3432 = vld [vmem:[%s291 + $0x2] sm:$0xff]
      %v3433 = vld [vmem:[%s291 + $0xa] sm:$0xff]
      %v3434 = vld [vmem:[%s291 + $0x1a] sm:$0xff]
      %v3435 = vld [vmem:[%s291 + $0x22] sm:$0xff]
      %v3436 = vld [vmem:[%s291 + $0x32] sm:$0xff]
      %v3437 = vld [vmem:[%s291 + $0x3a] sm:$0xff]
      %v3438 = vld [vmem:[%s291 + $0x4a] sm:$0xff]
      %v3439 = vld [vmem:[%s291 + $0x52] sm:$0xff]
      %v3440 = vld [vmem:[%s291 + $0x62] sm:$0xff]
      %v3441 = vld [vmem:[%s291 + $0x6a] sm:$0xff]
      %v3442 = vld [vmem:[%s291 + $0x7a] sm:$0xff]
      %v3443 = vld [vmem:[%s291 + $0x82] sm:$0xff]
      %v3444 = vld [vmem:[%s291 + $0x92] sm:$0xff]
      %v3445 = vld [vmem:[%s291 + $0x9a] sm:$0xff]
      %v3446 = vld [vmem:[%s291 + $0xaa] sm:$0xff]
      %v3447 = vld [vmem:[%s291 + $0xb2] sm:$0xff]
      %v3448 = vld [vmem:[%s291 + $0xc2] sm:$0xff]
      %v3449 = vld [vmem:[%s291 + $0xca] sm:$0xff]
      %v3450 = vld [vmem:[%s291 + $0xda] sm:$0xff]
      %v3451 = vld [vmem:[%s291 + $0xe2] sm:$0xff]
      %v3452 = vld [vmem:[%s291 + $0xf2] sm:$0xff]
      %v3453 = vld [vmem:[%s291 + $0xfa] sm:$0xff]
      %v3454 = vld [vmem:[%s291 + $0x10a] sm:$0xff]
      %v3455 = vld [vmem:[%s291 + $0x112] sm:$0xff]
      %v3456 = vld [vmem:[%s291 + $0x122] sm:$0xff]
      %v3457 = vld [vmem:[%s291 + $0x12a] sm:$0xff]
      %v3458 = vld [vmem:[%s291 + $0x13a] sm:$0xff]
      %v3459 = vld [vmem:[%s291 + $0x142] sm:$0xff]
      %v3460 = vld [vmem:[%s291 + $0x152] sm:$0xff]
      %v3461 = vld [vmem:[%s291 + $0x15a] sm:$0xff]
      %v3462 = vld [vmem:[%s291 + $0x16a] sm:$0xff]
      %v3463 = vld [vmem:[%s291 + $0x172] sm:$0xff]
      %s3464 = scalar_lea.vmem %s1, 32
      %v3465 = vld [vmem:[%s3464] sm:$0xf]
      %v3467 = vsel %vm258, %v3432, 0
      %v3470 = vsel %vm258, %v3433, 0
      %v3473 = vsel %vm258, %v3434, 0
      %v3476 = vsel %vm258, %v3435, 0
      %v3479 = vsel %vm258, %v3436, 0
      %v3482 = vsel %vm258, %v3437, 0
      %v3485 = vsel %vm258, %v3438, 0
      %v3488 = vsel %vm258, %v3439, 0
      %v3491 = vsel %vm258, %v3440, 0
      %v3494 = vsel %vm258, %v3441, 0
      %v3497 = vsel %vm258, %v3442, 0
      %v3500 = vsel %vm258, %v3443, 0
      %v3503 = vsel %vm258, %v3444, 0
      %v3506 = vsel %vm258, %v3445, 0
      %v3509 = vsel %vm258, %v3446, 0
      %v3512 = vsel %vm258, %v3447, 0
      %v3515 = vsel %vm258, %v3448, 0
      %v3518 = vsel %vm258, %v3449, 0
      %v3521 = vsel %vm258, %v3450, 0
      %v3524 = vsel %vm258, %v3451, 0
      %v3527 = vsel %vm258, %v3452, 0
      %v3530 = vsel %vm258, %v3453, 0
      %v3533 = vsel %vm258, %v3454, 0
      %v3536 = vsel %vm258, %v3455, 0
      %v3539 = vsel %vm258, %v3456, 0
      %v3542 = vsel %vm258, %v3457, 0
      %v3545 = vsel %vm258, %v3458, 0
      %v3548 = vsel %vm258, %v3459, 0
      %v3551 = vsel %vm258, %v3460, 0
      %v3554 = vsel %vm258, %v3461, 0
      %v3557 = vsel %vm258, %v3462, 0
      %v3560 = vsel %vm258, %v3463, 0
      %v3563 = vsel %vm539, %v3465, 0
      %3565 = vmatprep.subr.mxu0 0.0
      %3566 = vmatpush1.msra.mxu0 %v3563
      %3567 = vmatprep.subr.mxu0 0.0
      %3568 = vmatpush1.msra.mxu0 0.0
      %3569 = vmatprep.subr.mxu0 0.0
      %3570 = vmatpush1.msra.mxu0 0.0
      %3571 = vmatprep.subr.mxu0 0.0
      %3572 = vmatpush1.msra.mxu0 0.0
      %3573 = vmatprep.subr.mxu0 0.0
      %3574 = vmatpush1.msra.mxu0 0.0
      %3575 = vmatprep.subr.mxu0 0.0
      %3576 = vmatpush1.msra.mxu0 0.0
      %3577 = vmatprep.subr.mxu0 0.0
      %3578 = vmatpush1.msra.mxu0 0.0
      %3579 = vmatprep.subr.mxu0 0.0
      %3580 = vmatpush1.msra.mxu0 0.0
      %3581 = vmatprep.subr.mxu0 0.0
      %3582 = vmatpush1.msra.mxu0 0.0
      %3583 = vmatprep.subr.mxu0 0.0
      %3584 = vmatpush1.msra.mxu0 0.0
      %3585 = vmatprep.subr.mxu0 0.0
      %3586 = vmatpush1.msra.mxu0 0.0
      %3587 = vmatprep.subr.mxu0 0.0
      %3588 = vmatpush1.msra.mxu0 0.0
      %3589 = vmatprep.subr.mxu0 0.0
      %3590 = vmatpush1.msra.mxu0 0.0
      %3591 = vmatprep.subr.mxu0 0.0
      %3592 = vmatpush1.msra.mxu0 0.0
      %3593 = vmatprep.subr.mxu0 0.0
      %3594 = vmatpush1.msra.mxu0 0.0
      %3595 = vmatprep.subr.mxu0 0.0
      %3596 = vmatpush1.msra.mxu0 0.0
      %3597 = vmatprep.subr.mxu0 0.0
      %3598 = vmatpush1.msra.mxu0 0.0
      %3599 = vmatprep.subr.mxu0 0.0
      %3600 = vmatpush1.msra.mxu0 0.0
      %3601 = vmatprep.subr.mxu0 0.0
      %3602 = vmatpush1.msra.mxu0 0.0
      %3603 = vmatprep.subr.mxu0 0.0
      %3604 = vmatpush1.msra.mxu0 0.0
      %3605 = vmatprep.subr.mxu0 0.0
      %3606 = vmatpush1.msra.mxu0 0.0
      %3607 = vmatprep.subr.mxu0 0.0
      %3608 = vmatpush1.msra.mxu0 0.0
      %3609 = vmatprep.subr.mxu0 0.0
      %3610 = vmatpush1.msra.mxu0 0.0
      %3611 = vmatprep.subr.mxu0 0.0
      %3612 = vmatpush1.msra.mxu0 0.0
      %3613 = vmatprep.subr.mxu0 0.0
      %3614 = vmatpush1.msra.mxu0 0.0
      %3615 = vmatprep.subr.mxu0 0.0
      %3616 = vmatpush1.msra.mxu0 0.0
      %3617 = vmatprep.subr.mxu0 0.0
      %3618 = vmatpush1.msra.mxu0 0.0
      %3619 = vmatprep.subr.mxu0 0.0
      %3620 = vmatpush1.msra.mxu0 0.0
      %3621 = vmatprep.subr.mxu0 0.0
      %3622 = vmatpush1.msra.mxu0 0.0
      %3623 = vmatprep.subr.mxu0 0.0
      %3624 = vmatpush1.msra.mxu0 0.0
      %3625 = vmatprep.subr.mxu0 0.0
      %3626 = vmatpush1.msra.mxu0 0.0
      %3627 = vmatprep.subr.mxu0 0.0
      %3628 = vmatpush1.msra.mxu0 0.0
      %3629 = vmatprep.mubr.f32.mxu0 0.0
      %3630 = vmatmul.mubr.f32.gmra.mrb[0].mxu0 %v3467
      %v3631 = vpop.f32.mrb[0].mxu0
      %v3632 = vadd.f32 0.0, %v3631
      %v3633 = vpop.f32.mrb[0].mxu0
      %3634 = vmatprep.mubr.f32.mxu0 0.0
      %3635 = vmatmul.mubr.f32.gmra.mrb[0].mxu0 %v3470
      %v3636 = vpop.f32.mrb[0].mxu0
      %v3637 = vadd.f32 0.0, %v3636
      %v3638 = vpop.f32.mrb[0].mxu0
      %3639 = vmatprep.mubr.f32.mxu0 0.0
      %3640 = vmatmul.mubr.f32.gmra.mrb[0].mxu0 %v3473
      %v3641 = vpop.f32.mrb[0].mxu0
      %v3642 = vadd.f32 0.0, %v3641
      %v3643 = vpop.f32.mrb[0].mxu0
      %3644 = vmatprep.mubr.f32.mxu0 0.0
      %3645 = vmatmul.mubr.f32.gmra.mrb[0].mxu0 %v3476
      %v3646 = vpop.f32.mrb[0].mxu0
      %v3647 = vadd.f32 0.0, %v3646
      %v3648 = vpop.f32.mrb[0].mxu0
      %3649 = vmatprep.mubr.f32.mxu0 0.0
      %3650 = vmatmul.mubr.f32.gmra.mrb[0].mxu0 %v3479
      %v3651 = vpop.f32.mrb[0].mxu0
      %v3652 = vadd.f32 0.0, %v3651
      %v3653 = vpop.f32.mrb[0].mxu0
      %3654 = vmatprep.mubr.f32.mxu0 0.0
      %3655 = vmatmul.mubr.f32.gmra.mrb[0].mxu0 %v3482
      %v3656 = vpop.f32.mrb[0].mxu0
      %v3657 = vadd.f32 0.0, %v3656
      %v3658 = vpop.f32.mrb[0].mxu0
      %3659 = vmatprep.mubr.f32.mxu0 0.0
      %3660 = vmatmul.mubr.f32.gmra.mrb[0].mxu0 %v3485
      %v3661 = vpop.f32.mrb[0].mxu0
      %v3662 = vadd.f32 0.0, %v3661
      %v3663 = vpop.f32.mrb[0].mxu0
      %3664 = vmatprep.mubr.f32.mxu0 0.0
      %3665 = vmatmul.mubr.f32.gmra.mrb[0].mxu0 %v3488
      %v3666 = vpop.f32.mrb[0].mxu0
      %v3667 = vadd.f32 0.0, %v3666
      %v3668 = vpop.f32.mrb[0].mxu0
      %3669 = vmatprep.mubr.f32.mxu0 0.0
      %3670 = vmatmul.mubr.f32.gmra.mrb[0].mxu0 %v3491
      %v3671 = vpop.f32.mrb[0].mxu0
      %v3672 = vadd.f32 0.0, %v3671
      %v3673 = vpop.f32.mrb[0].mxu0
      %3674 = vmatprep.mubr.f32.mxu0 0.0
      %3675 = vmatmul.mubr.f32.gmra.mrb[0].mxu0 %v3494
      %v3676 = vpop.f32.mrb[0].mxu0
      %v3677 = vadd.f32 0.0, %v3676
      %v3678 = vpop.f32.mrb[0].mxu0
      %3679 = vmatprep.mubr.f32.mxu0 0.0
      %3680 = vmatmul.mubr.f32.gmra.mrb[0].mxu0 %v3497
      %v3681 = vpop.f32.mrb[0].mxu0
      %v3682 = vadd.f32 0.0, %v3681
      %v3683 = vpop.f32.mrb[0].mxu0
      %3684 = vmatprep.mubr.f32.mxu0 0.0
      %3685 = vmatmul.mubr.f32.gmra.mrb[0].mxu0 %v3500
      %v3686 = vpop.f32.mrb[0].mxu0
      %v3687 = vadd.f32 0.0, %v3686
      %v3688 = vpop.f32.mrb[0].mxu0
      %3689 = vmatprep.mubr.f32.mxu0 0.0
      %3690 = vmatmul.mubr.f32.gmra.mrb[0].mxu0 %v3503
      %v3691 = vpop.f32.mrb[0].mxu0
      %v3692 = vadd.f32 0.0, %v3691
      %v3693 = vpop.f32.mrb[0].mxu0
      %3694 = vmatprep.mubr.f32.mxu0 0.0
      %3695 = vmatmul.mubr.f32.gmra.mrb[0].mxu0 %v3506
      %v3696 = vpop.f32.mrb[0].mxu0
      %v3697 = vadd.f32 0.0, %v3696
      %v3698 = vpop.f32.mrb[0].mxu0
      %3699 = vmatprep.mubr.f32.mxu0 0.0
      %3700 = vmatmul.mubr.f32.gmra.mrb[0].mxu0 %v3509
      %v3701 = vpop.f32.mrb[0].mxu0
      %v3702 = vadd.f32 0.0, %v3701
      %v3703 = vpop.f32.mrb[0].mxu0
      %3704 = vmatprep.mubr.f32.mxu0 0.0
      %3705 = vmatmul.mubr.f32.gmra.mrb[0].mxu0 %v3512
      %v3706 = vpop.f32.mrb[0].mxu0
      %v3707 = vadd.f32 0.0, %v3706
      %v3708 = vpop.f32.mrb[0].mxu0
      %3709 = vmatprep.mubr.f32.mxu0 0.0
      %3710 = vmatmul.mubr.f32.gmra.mrb[0].mxu0 %v3515
      %v3711 = vpop.f32.mrb[0].mxu0
      %v3712 = vadd.f32 0.0, %v3711
      %v3713 = vpop.f32.mrb[0].mxu0
      %3714 = vmatprep.mubr.f32.mxu0 0.0
      %3715 = vmatmul.mubr.f32.gmra.mrb[0].mxu0 %v3518
      %v3716 = vpop.f32.mrb[0].mxu0
      %v3717 = vadd.f32 0.0, %v3716
      %v3718 = vpop.f32.mrb[0].mxu0
      %3719 = vmatprep.mubr.f32.mxu0 0.0
      %3720 = vmatmul.mubr.f32.gmra.mrb[0].mxu0 %v3521
      %v3721 = vpop.f32.mrb[0].mxu0
      %v3722 = vadd.f32 0.0, %v3721
      %v3723 = vpop.f32.mrb[0].mxu0
      %3724 = vmatprep.mubr.f32.mxu0 0.0
      %3725 = vmatmul.mubr.f32.gmra.mrb[0].mxu0 %v3524
      %v3726 = vpop.f32.mrb[0].mxu0
      %v3727 = vadd.f32 0.0, %v3726
      %v3728 = vpop.f32.mrb[0].mxu0
      %3729 = vmatprep.mubr.f32.mxu0 0.0
      %3730 = vmatmul.mubr.f32.gmra.mrb[0].mxu0 %v3527
      %v3731 = vpop.f32.mrb[0].mxu0
      %v3732 = vadd.f32 0.0, %v3731
      %v3733 = vpop.f32.mrb[0].mxu0
      %3734 = vmatprep.mubr.f32.mxu0 0.0
      %3735 = vmatmul.mubr.f32.gmra.mrb[0].mxu0 %v3530
      %v3736 = vpop.f32.mrb[0].mxu0
      %v3737 = vadd.f32 0.0, %v3736
      %v3738 = vpop.f32.mrb[0].mxu0
      %3739 = vmatprep.mubr.f32.mxu0 0.0
      %3740 = vmatmul.mubr.f32.gmra.mrb[0].mxu0 %v3533
      %v3741 = vpop.f32.mrb[0].mxu0
      %v3742 = vadd.f32 0.0, %v3741
      %v3743 = vpop.f32.mrb[0].mxu0
      %3744 = vmatprep.mubr.f32.mxu0 0.0
      %3745 = vmatmul.mubr.f32.gmra.mrb[0].mxu0 %v3536
      %v3746 = vpop.f32.mrb[0].mxu0
      %v3747 = vadd.f32 0.0, %v3746
      %v3748 = vpop.f32.mrb[0].mxu0
      %3749 = vmatprep.mubr.f32.mxu0 0.0
      %3750 = vmatmul.mubr.f32.gmra.mrb[0].mxu0 %v3539
      %v3751 = vpop.f32.mrb[0].mxu0
      %v3752 = vadd.f32 0.0, %v3751
      %v3753 = vpop.f32.mrb[0].mxu0
      %3754 = vmatprep.mubr.f32.mxu0 0.0
      %3755 = vmatmul.mubr.f32.gmra.mrb[0].mxu0 %v3542
      %v3756 = vpop.f32.mrb[0].mxu0
      %v3757 = vadd.f32 0.0, %v3756
      %v3758 = vpop.f32.mrb[0].mxu0
      %3759 = vmatprep.mubr.f32.mxu0 0.0
      %3760 = vmatmul.mubr.f32.gmra.mrb[0].mxu0 %v3545
      %v3761 = vpop.f32.mrb[0].mxu0
      %v3762 = vadd.f32 0.0, %v3761
      %v3763 = vpop.f32.mrb[0].mxu0
      %3764 = vmatprep.mubr.f32.mxu0 0.0
      %3765 = vmatmul.mubr.f32.gmra.mrb[0].mxu0 %v3548
      %v3766 = vpop.f32.mrb[0].mxu0
      %v3767 = vadd.f32 0.0, %v3766
      %v3768 = vpop.f32.mrb[0].mxu0
      %3769 = vmatprep.mubr.f32.mxu0 0.0
      %3770 = vmatmul.mubr.f32.gmra.mrb[0].mxu0 %v3551
      %v3771 = vpop.f32.mrb[0].mxu0
      %v3772 = vadd.f32 0.0, %v3771
      %v3773 = vpop.f32.mrb[0].mxu0
      %3774 = vmatprep.mubr.f32.mxu0 0.0
      %3775 = vmatmul.mubr.f32.gmra.mrb[0].mxu0 %v3554
      %v3776 = vpop.f32.mrb[0].mxu0
      %v3777 = vadd.f32 0.0, %v3776
      %v3778 = vpop.f32.mrb[0].mxu0
      %3779 = vmatprep.mubr.f32.mxu0 0.0
      %3780 = vmatmul.mubr.f32.gmra.mrb[0].mxu0 %v3557
      %v3781 = vpop.f32.mrb[0].mxu0
      %v3782 = vadd.f32 0.0, %v3781
      %v3783 = vpop.f32.mrb[0].mxu0
      %3784 = vmatprep.mubr.f32.mxu0 0.0
      %3785 = vmatmul.mubr.f32.gmra.mrb[0].mxu0 %v3560
      %v3786 = vpop.f32.mrb[0].mxu0
      %v3787 = vadd.f32 0.0, %v3786
      %v3788 = vpop.f32.mrb[0].mxu0
      %3789 = vdwg.mxu0
      %v3790 = vadd.f32 %v3400, %v3632
      %v3791 = vadd.f32 %v3401, %v3637
      %v3792 = vadd.f32 %v3402, %v3642
      %v3793 = vadd.f32 %v3403, %v3647
      %v3794 = vadd.f32 %v3404, %v3652
      %v3795 = vadd.f32 %v3405, %v3657
      %v3796 = vadd.f32 %v3406, %v3662
      %v3797 = vadd.f32 %v3407, %v3667
      %v3798 = vadd.f32 %v3408, %v3672
      %v3799 = vadd.f32 %v3409, %v3677
      %v3800 = vadd.f32 %v3410, %v3682
      %v3801 = vadd.f32 %v3411, %v3687
      %v3802 = vadd.f32 %v3412, %v3692
      %v3803 = vadd.f32 %v3413, %v3697
      %v3804 = vadd.f32 %v3414, %v3702
      %v3805 = vadd.f32 %v3415, %v3707
      %v3806 = vadd.f32 %v3416, %v3712
      %v3807 = vadd.f32 %v3417, %v3717
      %v3808 = vadd.f32 %v3418, %v3722
      %v3809 = vadd.f32 %v3419, %v3727
      %v3810 = vadd.f32 %v3420, %v3732
      %v3811 = vadd.f32 %v3421, %v3737
      %v3812 = vadd.f32 %v3422, %v3742
      %v3813 = vadd.f32 %v3423, %v3747
      %v3814 = vadd.f32 %v3424, %v3752
      %v3815 = vadd.f32 %v3425, %v3757
      %v3816 = vadd.f32 %v3426, %v3762
      %v3817 = vadd.f32 %v3427, %v3767
      %v3818 = vadd.f32 %v3428, %v3772
      %v3819 = vadd.f32 %v3429, %v3777
      %v3820 = vadd.f32 %v3430, %v3782
      %v3821 = vadd.f32 %v3431, %v3787
      %v3823 = vlaneseq
      %v3824 = vshrl.u32 %v3823, 7
      %v3825 = vsub.s32 0, %v3824
      %v3826 = vrot.slane %v375, %v3825
      %v3828 = vadd.f32 %v3790, %v3826
      %v3829 = vadd.f32 %v3791, %v3826
      %v3830 = vadd.f32 %v3792, %v3826
      %v3831 = vadd.f32 %v3793, %v3826
      %v3832 = vadd.f32 %v3794, %v3826
      %v3833 = vadd.f32 %v3795, %v3826
      %v3834 = vadd.f32 %v3796, %v3826
      %v3835 = vadd.f32 %v3797, %v3826
      %v3836 = vadd.f32 %v3798, %v3826
      %v3837 = vadd.f32 %v3799, %v3826
      %v3838 = vadd.f32 %v3800, %v3826
      %v3839 = vadd.f32 %v3801, %v3826
      %v3840 = vadd.f32 %v3802, %v3826
      %v3841 = vadd.f32 %v3803, %v3826
      %v3842 = vadd.f32 %v3804, %v3826
      %v3843 = vadd.f32 %v3805, %v3826
      %v3844 = vadd.f32 %v3806, %v3826
      %v3845 = vadd.f32 %v3807, %v3826
      %v3846 = vadd.f32 %v3808, %v3826
      %v3847 = vadd.f32 %v3809, %v3826
      %v3848 = vadd.f32 %v3810, %v3826
      %v3849 = vadd.f32 %v3811, %v3826
      %v3850 = vadd.f32 %v3812, %v3826
      %v3851 = vadd.f32 %v3813, %v3826
      %v3852 = vadd.f32 %v3814, %v3826
      %v3853 = vadd.f32 %v3815, %v3826
      %v3854 = vadd.f32 %v3816, %v3826
      %v3855 = vadd.f32 %v3817, %v3826
      %v3856 = vadd.f32 %v3818, %v3826
      %v3857 = vadd.f32 %v3819, %v3826
      %v3858 = vadd.f32 %v3820, %v3826
      %v3859 = vadd.f32 %v3821, %v3826
      %v3860 = vsel %vm258, %v3828, 0.0
      %v3861 = vsel %vm258, %v3829, 0.0
      %v3862 = vadd.f32 %v3860, %v3861
      %v3863 = vsel %vm258, %v3830, 0.0
      %v3864 = vadd.f32 %v3862, %v3863
      %v3865 = vsel %vm258, %v3831, 0.0
      %v3866 = vadd.f32 %v3864, %v3865
      %v3867 = vsel %vm258, %v3832, 0.0
      %v3868 = vadd.f32 %v3866, %v3867
      %v3869 = vsel %vm258, %v3833, 0.0
      %v3870 = vadd.f32 %v3868, %v3869
      %v3871 = vsel %vm258, %v3834, 0.0
      %v3872 = vadd.f32 %v3870, %v3871
      %v3873 = vsel %vm258, %v3835, 0.0
      %v3874 = vadd.f32 %v3872, %v3873
      %v3875 = vsel %vm258, %v3836, 0.0
      %v3876 = vadd.f32 %v3874, %v3875
      %v3877 = vsel %vm258, %v3837, 0.0
      %v3878 = vadd.f32 %v3876, %v3877
      %v3879 = vsel %vm258, %v3838, 0.0
      %v3880 = vadd.f32 %v3878, %v3879
      %v3881 = vsel %vm258, %v3839, 0.0
      %v3882 = vadd.f32 %v3880, %v3881
      %v3883 = vsel %vm258, %v3840, 0.0
      %v3884 = vadd.f32 %v3882, %v3883
      %v3885 = vsel %vm258, %v3841, 0.0
      %v3886 = vadd.f32 %v3884, %v3885
      %v3887 = vsel %vm258, %v3842, 0.0
      %v3888 = vadd.f32 %v3886, %v3887
      %v3889 = vsel %vm258, %v3843, 0.0
      %v3890 = vadd.f32 %v3888, %v3889
      %v3891 = vsel %vm258, %v3844, 0.0
      %v3892 = vadd.f32 %v3890, %v3891
      %v3893 = vsel %vm258, %v3845, 0.0
      %v3894 = vadd.f32 %v3892, %v3893
      %v3895 = vsel %vm258, %v3846, 0.0
      %v3896 = vadd.f32 %v3894, %v3895
      %v3897 = vsel %vm258, %v3847, 0.0
      %v3898 = vadd.f32 %v3896, %v3897
      %v3899 = vsel %vm258, %v3848, 0.0
      %v3900 = vadd.f32 %v3898, %v3899
      %v3901 = vsel %vm258, %v3849, 0.0
      %v3902 = vadd.f32 %v3900, %v3901
      %v3903 = vsel %vm258, %v3850, 0.0
      %v3904 = vadd.f32 %v3902, %v3903
      %v3905 = vsel %vm258, %v3851, 0.0
      %v3906 = vadd.f32 %v3904, %v3905
      %v3907 = vsel %vm258, %v3852, 0.0
      %v3908 = vadd.f32 %v3906, %v3907
      %v3909 = vsel %vm258, %v3853, 0.0
      %v3910 = vadd.f32 %v3908, %v3909
      %v3911 = vsel %vm258, %v3854, 0.0
      %v3912 = vadd.f32 %v3910, %v3911
      %v3913 = vsel %vm258, %v3855, 0.0
      %v3914 = vadd.f32 %v3912, %v3913
      %v3915 = vsel %vm258, %v3856, 0.0
      %v3916 = vadd.f32 %v3914, %v3915
      %v3917 = vsel %vm258, %v3857, 0.0
      %v3918 = vadd.f32 %v3916, %v3917
      %v3919 = vsel %vm258, %v3858, 0.0
      %v3920 = vadd.f32 %v3918, %v3919
      %v3921 = vsel %vm258, %v3859, 0.0
      %v3922 = vadd.f32 %v3920, %v3921
      %v3923 = vrot.slane %v3922, 4
      %v3924 = vadd.f32 %v3922, %v3923
      %v3925 = vrot.slane %v3924, 2
      %v3926 = vadd.f32 %v3924, %v3925
      %v3927 = vrot.slane %v3926, 1
      %v3928 = vadd.f32 %v3926, %v3927
      %v3929 = vrcp.pop 256.0
      %v3930 = vmul.f32 %v3928, %v3929
      %v3931 = vsub.f32 %v3828, %v3930
      %v3932 = vsub.f32 %v3829, %v3930
      %v3933 = vsub.f32 %v3830, %v3930
      %v3934 = vsub.f32 %v3831, %v3930
      %v3935 = vsub.f32 %v3832, %v3930
      %v3936 = vsub.f32 %v3833, %v3930
      %v3937 = vsub.f32 %v3834, %v3930
      %v3938 = vsub.f32 %v3835, %v3930
      %v3939 = vsub.f32 %v3836, %v3930
      %v3940 = vsub.f32 %v3837, %v3930
      %v3941 = vsub.f32 %v3838, %v3930
      %v3942 = vsub.f32 %v3839, %v3930
      %v3943 = vsub.f32 %v3840, %v3930
      %v3944 = vsub.f32 %v3841, %v3930
      %v3945 = vsub.f32 %v3842, %v3930
      %v3946 = vsub.f32 %v3843, %v3930
      %v3947 = vsub.f32 %v3844, %v3930
      %v3948 = vsub.f32 %v3845, %v3930
      %v3949 = vsub.f32 %v3846, %v3930
      %v3950 = vsub.f32 %v3847, %v3930
      %v3951 = vsub.f32 %v3848, %v3930
      %v3952 = vsub.f32 %v3849, %v3930
      %v3953 = vsub.f32 %v3850, %v3930
      %v3954 = vsub.f32 %v3851, %v3930
      %v3955 = vsub.f32 %v3852, %v3930
      %v3956 = vsub.f32 %v3853, %v3930
      %v3957 = vsub.f32 %v3854, %v3930
      %v3958 = vsub.f32 %v3855, %v3930
      %v3959 = vsub.f32 %v3856, %v3930
      %v3960 = vsub.f32 %v3857, %v3930
      %v3961 = vsub.f32 %v3858, %v3930
      %v3962 = vsub.f32 %v3859, %v3930
      %v3963 = vmul.f32 %v3931, %v3931
      %v3964 = vmul.f32 %v3932, %v3932
      %v3965 = vmul.f32 %v3933, %v3933
      %v3966 = vmul.f32 %v3934, %v3934
      %v3967 = vmul.f32 %v3935, %v3935
      %v3968 = vmul.f32 %v3936, %v3936
      %v3969 = vmul.f32 %v3937, %v3937
      %v3970 = vmul.f32 %v3938, %v3938
      %v3971 = vmul.f32 %v3939, %v3939
      %v3972 = vmul.f32 %v3940, %v3940
      %v3973 = vmul.f32 %v3941, %v3941
      %v3974 = vmul.f32 %v3942, %v3942
      %v3975 = vmul.f32 %v3943, %v3943
      %v3976 = vmul.f32 %v3944, %v3944
      %v3977 = vmul.f32 %v3945, %v3945
      %v3978 = vmul.f32 %v3946, %v3946
      %v3979 = vmul.f32 %v3947, %v3947
      %v3980 = vmul.f32 %v3948, %v3948
      %v3981 = vmul.f32 %v3949, %v3949
      %v3982 = vmul.f32 %v3950, %v3950
      %v3983 = vmul.f32 %v3951, %v3951
      %v3984 = vmul.f32 %v3952, %v3952
      %v3985 = vmul.f32 %v3953, %v3953
      %v3986 = vmul.f32 %v3954, %v3954
      %v3987 = vmul.f32 %v3955, %v3955
      %v3988 = vmul.f32 %v3956, %v3956
      %v3989 = vmul.f32 %v3957, %v3957
      %v3990 = vmul.f32 %v3958, %v3958
      %v3991 = vmul.f32 %v3959, %v3959
      %v3992 = vmul.f32 %v3960, %v3960
      %v3993 = vmul.f32 %v3961, %v3961
      %v3994 = vmul.f32 %v3962, %v3962
      %v3995 = vsel %vm258, %v3963, 0.0
      %v3996 = vsel %vm258, %v3964, 0.0
      %v3997 = vadd.f32 %v3995, %v3996
      %v3998 = vsel %vm258, %v3965, 0.0
      %v3999 = vadd.f32 %v3997, %v3998
      %v4000 = vsel %vm258, %v3966, 0.0
      %v4001 = vadd.f32 %v3999, %v4000
      %v4002 = vsel %vm258, %v3967, 0.0
      %v4003 = vadd.f32 %v4001, %v4002
      %v4004 = vsel %vm258, %v3968, 0.0
      %v4005 = vadd.f32 %v4003, %v4004
      %v4006 = vsel %vm258, %v3969, 0.0
      %v4007 = vadd.f32 %v4005, %v4006
      %v4008 = vsel %vm258, %v3970, 0.0
      %v4009 = vadd.f32 %v4007, %v4008
      %v4010 = vsel %vm258, %v3971, 0.0
      %v4011 = vadd.f32 %v4009, %v4010
      %v4012 = vsel %vm258, %v3972, 0.0
      %v4013 = vadd.f32 %v4011, %v4012
      %v4014 = vsel %vm258, %v3973, 0.0
      %v4015 = vadd.f32 %v4013, %v4014
      %v4016 = vsel %vm258, %v3974, 0.0
      %v4017 = vadd.f32 %v4015, %v4016
      %v4018 = vsel %vm258, %v3975, 0.0
      %v4019 = vadd.f32 %v4017, %v4018
      %v4020 = vsel %vm258, %v3976, 0.0
      %v4021 = vadd.f32 %v4019, %v4020
      %v4022 = vsel %vm258, %v3977, 0.0
      %v4023 = vadd.f32 %v4021, %v4022
      %v4024 = vsel %vm258, %v3978, 0.0
      %v4025 = vadd.f32 %v4023, %v4024
      %v4026 = vsel %vm258, %v3979, 0.0
      %v4027 = vadd.f32 %v4025, %v4026
      %v4028 = vsel %vm258, %v3980, 0.0
      %v4029 = vadd.f32 %v4027, %v4028
      %v4030 = vsel %vm258, %v3981, 0.0
      %v4031 = vadd.f32 %v4029, %v4030
      %v4032 = vsel %vm258, %v3982, 0.0
      %v4033 = vadd.f32 %v4031, %v4032
      %v4034 = vsel %vm258, %v3983, 0.0
      %v4035 = vadd.f32 %v4033, %v4034
      %v4036 = vsel %vm258, %v3984, 0.0
      %v4037 = vadd.f32 %v4035, %v4036
      %v4038 = vsel %vm258, %v3985, 0.0
      %v4039 = vadd.f32 %v4037, %v4038
      %v4040 = vsel %vm258, %v3986, 0.0
      %v4041 = vadd.f32 %v4039, %v4040
      %v4042 = vsel %vm258, %v3987, 0.0
      %v4043 = vadd.f32 %v4041, %v4042
      %v4044 = vsel %vm258, %v3988, 0.0
      %v4045 = vadd.f32 %v4043, %v4044
      %v4046 = vsel %vm258, %v3989, 0.0
      %v4047 = vadd.f32 %v4045, %v4046
      %v4048 = vsel %vm258, %v3990, 0.0
      %v4049 = vadd.f32 %v4047, %v4048
      %v4050 = vsel %vm258, %v3991, 0.0
      %v4051 = vadd.f32 %v4049, %v4050
      %v4052 = vsel %vm258, %v3992, 0.0
      %v4053 = vadd.f32 %v4051, %v4052
      %v4054 = vsel %vm258, %v3993, 0.0
      %v4055 = vadd.f32 %v4053, %v4054
      %v4056 = vsel %vm258, %v3994, 0.0
      %v4057 = vadd.f32 %v4055, %v4056
      %v4058 = vrot.slane %v4057, 4
      %v4059 = vadd.f32 %v4057, %v4058
      %v4060 = vrot.slane %v4059, 2
      %v4061 = vadd.f32 %v4059, %v4060
      %v4062 = vrot.slane %v4061, 1
      %v4063 = vadd.f32 %v4061, %v4062
      %v4064 = vmul.f32 %v4063, %v3929
      %v4065 = vadd.f32 %v4064, 1e-05
      %v4066 = vrsqrt.pop %v4065
      %v4067 = vmul.f32 %v3931, %v4066
      %v4068 = vmul.f32 %v3932, %v4066
      %v4069 = vmul.f32 %v3933, %v4066
      %v4070 = vmul.f32 %v3934, %v4066
      %v4071 = vmul.f32 %v3935, %v4066
      %v4072 = vmul.f32 %v3936, %v4066
      %v4073 = vmul.f32 %v3937, %v4066
      %v4074 = vmul.f32 %v3938, %v4066
      %v4075 = vmul.f32 %v3939, %v4066
      %v4076 = vmul.f32 %v3940, %v4066
      %v4077 = vmul.f32 %v3941, %v4066
      %v4078 = vmul.f32 %v3942, %v4066
      %v4079 = vmul.f32 %v3943, %v4066
      %v4080 = vmul.f32 %v3944, %v4066
      %v4081 = vmul.f32 %v3945, %v4066
      %v4082 = vmul.f32 %v3946, %v4066
      %v4083 = vmul.f32 %v3947, %v4066
      %v4084 = vmul.f32 %v3948, %v4066
      %v4085 = vmul.f32 %v3949, %v4066
      %v4086 = vmul.f32 %v3950, %v4066
      %v4087 = vmul.f32 %v3951, %v4066
      %v4088 = vmul.f32 %v3952, %v4066
      %v4089 = vmul.f32 %v3953, %v4066
      %v4090 = vmul.f32 %v3954, %v4066
      %v4091 = vmul.f32 %v3955, %v4066
      %v4092 = vmul.f32 %v3956, %v4066
      %v4093 = vmul.f32 %v3957, %v4066
      %v4094 = vmul.f32 %v3958, %v4066
      %v4095 = vmul.f32 %v3959, %v4066
      %v4096 = vmul.f32 %v3960, %v4066
      %v4097 = vmul.f32 %v3961, %v4066
      %v4098 = vmul.f32 %v3962, %v4066
      %vm4099 = vcmp.gt.f32.partialorder %v4067, 0.0
      %vm4100 = vcmp.gt.f32.partialorder %v4068, 0.0
      %vm4101 = vcmp.gt.f32.partialorder %v4069, 0.0
      %vm4102 = vcmp.gt.f32.partialorder %v4070, 0.0
      %vm4103 = vcmp.gt.f32.partialorder %v4071, 0.0
      %vm4104 = vcmp.gt.f32.partialorder %v4072, 0.0
      %vm4105 = vcmp.gt.f32.partialorder %v4073, 0.0
      %vm4106 = vcmp.gt.f32.partialorder %v4074, 0.0
      %vm4107 = vcmp.gt.f32.partialorder %v4075, 0.0
      %vm4108 = vcmp.gt.f32.partialorder %v4076, 0.0
      %vm4109 = vcmp.gt.f32.partialorder %v4077, 0.0
      %vm4110 = vcmp.gt.f32.partialorder %v4078, 0.0
      %vm4111 = vcmp.gt.f32.partialorder %v4079, 0.0
      %vm4112 = vcmp.gt.f32.partialorder %v4080, 0.0
      %vm4113 = vcmp.gt.f32.partialorder %v4081, 0.0
      %vm4114 = vcmp.gt.f32.partialorder %v4082, 0.0
      %vm4115 = vcmp.gt.f32.partialorder %v4083, 0.0
      %vm4116 = vcmp.gt.f32.partialorder %v4084, 0.0
      %vm4117 = vcmp.gt.f32.partialorder %v4085, 0.0
      %vm4118 = vcmp.gt.f32.partialorder %v4086, 0.0
      %vm4119 = vcmp.gt.f32.partialorder %v4087, 0.0
      %vm4120 = vcmp.gt.f32.partialorder %v4088, 0.0
      %vm4121 = vcmp.gt.f32.partialorder %v4089, 0.0
      %vm4122 = vcmp.gt.f32.partialorder %v4090, 0.0
      %vm4123 = vcmp.gt.f32.partialorder %v4091, 0.0
      %vm4124 = vcmp.gt.f32.partialorder %v4092, 0.0
      %vm4125 = vcmp.gt.f32.partialorder %v4093, 0.0
      %vm4126 = vcmp.gt.f32.partialorder %v4094, 0.0
      %vm4127 = vcmp.gt.f32.partialorder %v4095, 0.0
      %vm4128 = vcmp.gt.f32.partialorder %v4096, 0.0
      %vm4129 = vcmp.gt.f32.partialorder %v4097, 0.0
      %vm4130 = vcmp.gt.f32.partialorder %v4098, 0.0
      %v4131 = vmul.f32 %v4067, 0.01
      %v4132 = vmul.f32 %v4068, 0.01
      %v4133 = vmul.f32 %v4069, 0.01
      %v4134 = vmul.f32 %v4070, 0.01
      %v4135 = vmul.f32 %v4071, 0.01
      %v4136 = vmul.f32 %v4072, 0.01
      %v4137 = vmul.f32 %v4073, 0.01
      %v4138 = vmul.f32 %v4074, 0.01
      %v4139 = vmul.f32 %v4075, 0.01
      %v4140 = vmul.f32 %v4076, 0.01
      %v4141 = vmul.f32 %v4077, 0.01
      %v4142 = vmul.f32 %v4078, 0.01
      %v4143 = vmul.f32 %v4079, 0.01
      %v4144 = vmul.f32 %v4080, 0.01
      %v4145 = vmul.f32 %v4081, 0.01
      %v4146 = vmul.f32 %v4082, 0.01
      %v4147 = vmul.f32 %v4083, 0.01
      %v4148 = vmul.f32 %v4084, 0.01
      %v4149 = vmul.f32 %v4085, 0.01
      %v4150 = vmul.f32 %v4086, 0.01
      %v4151 = vmul.f32 %v4087, 0.01
      %v4152 = vmul.f32 %v4088, 0.01
      %v4153 = vmul.f32 %v4089, 0.01
      %v4154 = vmul.f32 %v4090, 0.01
      %v4155 = vmul.f32 %v4091, 0.01
      %v4156 = vmul.f32 %v4092, 0.01
      %v4157 = vmul.f32 %v4093, 0.01
      %v4158 = vmul.f32 %v4094, 0.01
      %v4159 = vmul.f32 %v4095, 0.01
      %v4160 = vmul.f32 %v4096, 0.01
      %v4161 = vmul.f32 %v4097, 0.01
      %v4162 = vmul.f32 %v4098, 0.01
      %v4163 = vsel %vm4099, %v4067, %v4131
      %v4164 = vsel %vm4100, %v4068, %v4132
      %v4165 = vsel %vm4101, %v4069, %v4133
      %v4166 = vsel %vm4102, %v4070, %v4134
      %v4167 = vsel %vm4103, %v4071, %v4135
      %v4168 = vsel %vm4104, %v4072, %v4136
      %v4169 = vsel %vm4105, %v4073, %v4137
      %v4170 = vsel %vm4106, %v4074, %v4138
      %v4171 = vsel %vm4107, %v4075, %v4139
      %v4172 = vsel %vm4108, %v4076, %v4140
      %v4173 = vsel %vm4109, %v4077, %v4141
      %v4174 = vsel %vm4110, %v4078, %v4142
      %v4175 = vsel %vm4111, %v4079, %v4143
      %v4176 = vsel %vm4112, %v4080, %v4144
      %v4177 = vsel %vm4113, %v4081, %v4145
      %v4178 = vsel %vm4114, %v4082, %v4146
      %v4179 = vsel %vm4115, %v4083, %v4147
      %v4180 = vsel %vm4116, %v4084, %v4148
      %v4181 = vsel %vm4117, %v4085, %v4149
      %v4182 = vsel %vm4118, %v4086, %v4150
      %v4183 = vsel %vm4119, %v4087, %v4151
      %v4184 = vsel %vm4120, %v4088, %v4152
      %v4185 = vsel %vm4121, %v4089, %v4153
      %v4186 = vsel %vm4122, %v4090, %v4154
      %v4187 = vsel %vm4123, %v4091, %v4155
      %v4188 = vsel %vm4124, %v4092, %v4156
      %v4189 = vsel %vm4125, %v4093, %v4157
      %v4190 = vsel %vm4126, %v4094, %v4158
      %v4191 = vsel %vm4127, %v4095, %v4159
      %v4192 = vsel %vm4128, %v4096, %v4160
      %v4193 = vsel %vm4129, %v4097, %v4161
      %v4194 = vsel %vm4130, %v4098, %v4162
      %4195 = vst.msk [vmem:[%s257 + $0x1] sm:$0xff] %vm258, %v4163
      %4196 = vst.msk [vmem:[%s257 + $0x9] sm:$0xff] %vm258, %v4164
      %4197 = vst.msk [vmem:[%s257 + $0x19] sm:$0xff] %vm258, %v4165
      %4198 = vst.msk [vmem:[%s257 + $0x21] sm:$0xff] %vm258, %v4166
      %4199 = vst.msk [vmem:[%s257 + $0x31] sm:$0xff] %vm258, %v4167
      %4200 = vst.msk [vmem:[%s257 + $0x39] sm:$0xff] %vm258, %v4168
      %4201 = vst.msk [vmem:[%s257 + $0x49] sm:$0xff] %vm258, %v4169
      %4202 = vst.msk [vmem:[%s257 + $0x51] sm:$0xff] %vm258, %v4170
      %4203 = vst.msk [vmem:[%s257 + $0x61] sm:$0xff] %vm258, %v4171
      %4204 = vst.msk [vmem:[%s257 + $0x69] sm:$0xff] %vm258, %v4172
      %4205 = vst.msk [vmem:[%s257 + $0x79] sm:$0xff] %vm258, %v4173
      %4206 = vst.msk [vmem:[%s257 + $0x81] sm:$0xff] %vm258, %v4174
      %4207 = vst.msk [vmem:[%s257 + $0x91] sm:$0xff] %vm258, %v4175
      %4208 = vst.msk [vmem:[%s257 + $0x99] sm:$0xff] %vm258, %v4176
      %4209 = vst.msk [vmem:[%s257 + $0xa9] sm:$0xff] %vm258, %v4177
      %4210 = vst.msk [vmem:[%s257 + $0xb1] sm:$0xff] %vm258, %v4178
      %4211 = vst.msk [vmem:[%s257 + $0xc1] sm:$0xff] %vm258, %v4179
      %4212 = vst.msk [vmem:[%s257 + $0xc9] sm:$0xff] %vm258, %v4180
      %4213 = vst.msk [vmem:[%s257 + $0xd9] sm:$0xff] %vm258, %v4181
      %4214 = vst.msk [vmem:[%s257 + $0xe1] sm:$0xff] %vm258, %v4182
      %4215 = vst.msk [vmem:[%s257 + $0xf1] sm:$0xff] %vm258, %v4183
      %4216 = vst.msk [vmem:[%s257 + $0xf9] sm:$0xff] %vm258, %v4184
      %4217 = vst.msk [vmem:[%s257 + $0x109] sm:$0xff] %vm258, %v4185
      %4218 = vst.msk [vmem:[%s257 + $0x111] sm:$0xff] %vm258, %v4186
      %4219 = vst.msk [vmem:[%s257 + $0x121] sm:$0xff] %vm258, %v4187
      %4220 = vst.msk [vmem:[%s257 + $0x129] sm:$0xff] %vm258, %v4188
      %4221 = vst.msk [vmem:[%s257 + $0x139] sm:$0xff] %vm258, %v4189
      %4222 = vst.msk [vmem:[%s257 + $0x141] sm:$0xff] %vm258, %v4190
      %4223 = vst.msk [vmem:[%s257 + $0x151] sm:$0xff] %vm258, %v4191
      %4224 = vst.msk [vmem:[%s257 + $0x159] sm:$0xff] %vm258, %v4192
      %4225 = vst.msk [vmem:[%s257 + $0x169] sm:$0xff] %vm258, %v4193
      %4226 = vst.msk [vmem:[%s257 + $0x171] sm:$0xff] %vm258, %v4194
      %v4227 = vld [vmem:[%s291 + $0x1] sm:$0xff]
      %v4228 = vld [vmem:[%s291 + $0x9] sm:$0xff]
      %4229 = vst.msk [vmem:[#allocation2 + $0x1] sm:$0xff] %vm258, %v4227
      %4230 = vst.msk [vmem:[#allocation2 + $0x9] sm:$0xff] %vm258, %v4228
      %v4231 = vld [vmem:[%s296 + $0x1] sm:$0xff]
      %v4232 = vld [vmem:[%s296 + $0x9] sm:$0xff]
      %4233 = vst.msk [vmem:[%s299 + $0x1] sm:$0xff] %vm258, %v4231
      %4234 = vst.msk [vmem:[%s299 + $0x9] sm:$0xff] %vm258, %v4232
      %v4235 = vld [vmem:[#allocation2 + $0x2] sm:$0x1]
      %v4236 = vld [vmem:[#allocation2 + $0x1a] sm:$0x1]
      %v4237 = vld [vmem:[#allocation2 + $0x32] sm:$0x1]
      %v4238 = vld [vmem:[#allocation2 + $0x4a] sm:$0x1]
      %v4239 = vld [vmem:[#allocation2 + $0x62] sm:$0x1]
      %v4240 = vld [vmem:[#allocation2 + $0x7a] sm:$0x1]
      %v4241 = vld [vmem:[#allocation2 + $0x92] sm:$0x1]
      %v4242 = vld [vmem:[#allocation2 + $0xaa] sm:$0x1]
      %v4243 = vld [vmem:[#allocation2 + $0xc2] sm:$0x1]
      %v4244 = vld [vmem:[#allocation2 + $0xda] sm:$0x1]
      %v4245 = vld [vmem:[#allocation2 + $0xf2] sm:$0x1]
      %v4246 = vld [vmem:[#allocation2 + $0x10a] sm:$0x1]
      %v4247 = vld [vmem:[#allocation2 + $0x122] sm:$0x1]
      %v4248 = vld [vmem:[#allocation2 + $0x13a] sm:$0x1]
      %v4249 = vld [vmem:[#allocation2 + $0x152] sm:$0x1]
      %v4250 = vld [vmem:[#allocation2 + $0x16a] sm:$0x1]
      %v4251 = vld [vmem:[#allocation2 + $0x182] sm:$0x1]
      %v4252 = vld [vmem:[#allocation2 + $0x19a] sm:$0x1]
      %4253 = vst.msk [vmem:[#allocation2] sm:$0x1] %vm320, %v4235
      %4254 = vst.msk [vmem:[#allocation2 + $0x18] sm:$0x1] %vm320, %v4236
      %4255 = vst.msk [vmem:[#allocation2 + $0x30] sm:$0x1] %vm320, %v4237
      %4256 = vst.msk [vmem:[#allocation2 + $0x48] sm:$0x1] %vm320, %v4238
      %4257 = vst.msk [vmem:[#allocation2 + $0x60] sm:$0x1] %vm320, %v4239
      %4258 = vst.msk [vmem:[#allocation2 + $0x78] sm:$0x1] %vm320, %v4240
      %4259 = vst.msk [vmem:[#allocation2 + $0x90] sm:$0x1] %vm320, %v4241
      %4260 = vst.msk [vmem:[#allocation2 + $0xa8] sm:$0x1] %vm320, %v4242
      %4261 = vst.msk [vmem:[#allocation2 + $0xc0] sm:$0x1] %vm320, %v4243
      %4262 = vst.msk [vmem:[#allocation2 + $0xd8] sm:$0x1] %vm320, %v4244
      %4263 = vst.msk [vmem:[#allocation2 + $0xf0] sm:$0x1] %vm320, %v4245
      %4264 = vst.msk [vmem:[#allocation2 + $0x108] sm:$0x1] %vm320, %v4246
      %4265 = vst.msk [vmem:[#allocation2 + $0x120] sm:$0x1] %vm320, %v4247
      %4266 = vst.msk [vmem:[#allocation2 + $0x138] sm:$0x1] %vm320, %v4248
      %4267 = vst.msk [vmem:[#allocation2 + $0x150] sm:$0x1] %vm320, %v4249
      %4268 = vst.msk [vmem:[#allocation2 + $0x168] sm:$0x1] %vm320, %v4250
      %4269 = vst.msk [vmem:[#allocation2 + $0x180] sm:$0x1] %vm320, %v4251
      %4270 = vst.msk [vmem:[#allocation2 + $0x198] sm:$0x1] %vm320, %v4252
      %v4271 = vld [vmem:[#allocation2 + $0xf] sm:$0x1]
      %v4272 = vld [vmem:[#allocation2 + $0x27] sm:$0x1]
      %v4273 = vld [vmem:[#allocation2 + $0x3f] sm:$0x1]
      %v4274 = vld [vmem:[#allocation2 + $0x57] sm:$0x1]
      %v4275 = vld [vmem:[#allocation2 + $0x6f] sm:$0x1]
      %v4276 = vld [vmem:[#allocation2 + $0x87] sm:$0x1]
      %v4277 = vld [vmem:[#allocation2 + $0x9f] sm:$0x1]
      %v4278 = vld [vmem:[#allocation2 + $0xb7] sm:$0x1]
      %v4279 = vld [vmem:[#allocation2 + $0xcf] sm:$0x1]
      %v4280 = vld [vmem:[#allocation2 + $0xe7] sm:$0x1]
      %v4281 = vld [vmem:[#allocation2 + $0xff] sm:$0x1]
      %v4282 = vld [vmem:[#allocation2 + $0x117] sm:$0x1]
      %v4283 = vld [vmem:[#allocation2 + $0x12f] sm:$0x1]
      %v4284 = vld [vmem:[#allocation2 + $0x147] sm:$0x1]
      %v4285 = vld [vmem:[#allocation2 + $0x15f] sm:$0x1]
      %v4286 = vld [vmem:[#allocation2 + $0x177] sm:$0x1]
      %v4287 = vld [vmem:[#allocation2 + $0x18f] sm:$0x1]
      %v4288 = vld [vmem:[#allocation2 + $0x1a7] sm:$0x1]
      %4289 = vst.msk [vmem:[#allocation2 + $0x11] sm:$0x1] %vm320, %v4271
      %4290 = vst.msk [vmem:[#allocation2 + $0x29] sm:$0x1] %vm320, %v4272
      %4291 = vst.msk [vmem:[#allocation2 + $0x41] sm:$0x1] %vm320, %v4273
      %4292 = vst.msk [vmem:[#allocation2 + $0x59] sm:$0x1] %vm320, %v4274
      %4293 = vst.msk [vmem:[#allocation2 + $0x71] sm:$0x1] %vm320, %v4275
      %4294 = vst.msk [vmem:[#allocation2 + $0x89] sm:$0x1] %vm320, %v4276
      %4295 = vst.msk [vmem:[#allocation2 + $0xa1] sm:$0x1] %vm320, %v4277
      %4296 = vst.msk [vmem:[#allocation2 + $0xb9] sm:$0x1] %vm320, %v4278
      %4297 = vst.msk [vmem:[#allocation2 + $0xd1] sm:$0x1] %vm320, %v4279
      %4298 = vst.msk [vmem:[#allocation2 + $0xe9] sm:$0x1] %vm320, %v4280
      %4299 = vst.msk [vmem:[#allocation2 + $0x101] sm:$0x1] %vm320, %v4281
      %4300 = vst.msk [vmem:[#allocation2 + $0x119] sm:$0x1] %vm320, %v4282
      %4301 = vst.msk [vmem:[#allocation2 + $0x131] sm:$0x1] %vm320, %v4283
      %4302 = vst.msk [vmem:[#allocation2 + $0x149] sm:$0x1] %vm320, %v4284
      %4303 = vst.msk [vmem:[#allocation2 + $0x161] sm:$0x1] %vm320, %v4285
      %4304 = vst.msk [vmem:[#allocation2 + $0x179] sm:$0x1] %vm320, %v4286
      %4305 = vst.msk [vmem:[#allocation2 + $0x191] sm:$0x1] %vm320, %v4287
      %4306 = vst.msk [vmem:[#allocation2 + $0x1a9] sm:$0x1] %vm320, %v4288
      %v4307 = vld [vmem:[%s4] sm:$0x1]
      %v4308 = vld [vmem:[#allocation2] sm:$0xff]
      %v4309 = vld [vmem:[#allocation2 + $0x8] sm:$0xff]
      %v4310 = vld [vmem:[#allocation2 + $0x18] sm:$0xff]
      %v4311 = vld [vmem:[#allocation2 + $0x20] sm:$0xff]
      %v4312 = vld [vmem:[#allocation2 + $0x30] sm:$0xff]
      %v4313 = vld [vmem:[#allocation2 + $0x38] sm:$0xff]
      %v4314 = vld [vmem:[#allocation2 + $0x48] sm:$0xff]
      %v4315 = vld [vmem:[#allocation2 + $0x50] sm:$0xff]
      %v4316 = vld [vmem:[#allocation2 + $0x60] sm:$0xff]
      %v4317 = vld [vmem:[#allocation2 + $0x68] sm:$0xff]
      %v4318 = vld [vmem:[#allocation2 + $0x78] sm:$0xff]
      %v4319 = vld [vmem:[#allocation2 + $0x80] sm:$0xff]
      %v4320 = vld [vmem:[#allocation2 + $0x90] sm:$0xff]
      %v4321 = vld [vmem:[#allocation2 + $0x98] sm:$0xff]
      %v4322 = vld [vmem:[#allocation2 + $0xa8] sm:$0xff]
      %v4323 = vld [vmem:[#allocation2 + $0xb0] sm:$0xff]
      %v4324 = vld [vmem:[#allocation2 + $0xc0] sm:$0xff]
      %v4325 = vld [vmem:[#allocation2 + $0xc8] sm:$0xff]
      %v4326 = vld [vmem:[#allocation2 + $0xd8] sm:$0xff]
      %v4327 = vld [vmem:[#allocation2 + $0xe0] sm:$0xff]
      %v4328 = vld [vmem:[#allocation2 + $0xf0] sm:$0xff]
      %v4329 = vld [vmem:[#allocation2 + $0xf8] sm:$0xff]
      %v4330 = vld [vmem:[#allocation2 + $0x108] sm:$0xff]
      %v4331 = vld [vmem:[#allocation2 + $0x110] sm:$0xff]
      %v4332 = vld [vmem:[#allocation2 + $0x120] sm:$0xff]
      %v4333 = vld [vmem:[#allocation2 + $0x128] sm:$0xff]
      %v4334 = vld [vmem:[#allocation2 + $0x138] sm:$0xff]
      %v4335 = vld [vmem:[#allocation2 + $0x140] sm:$0xff]
      %v4336 = vld [vmem:[#allocation2 + $0x150] sm:$0xff]
      %v4337 = vld [vmem:[#allocation2 + $0x158] sm:$0xff]
      %v4338 = vld [vmem:[#allocation2 + $0x168] sm:$0xff]
      %v4339 = vld [vmem:[#allocation2 + $0x170] sm:$0xff]
      %v4340 = vld [vmem:[%s3] sm:$0xf]
      %v4341 = vld [vmem:[#allocation2 + $0x1] sm:$0xff]
      %v4342 = vld [vmem:[#allocation2 + $0x9] sm:$0xff]
      %v4343 = vld [vmem:[#allocation2 + $0x19] sm:$0xff]
      %v4344 = vld [vmem:[#allocation2 + $0x21] sm:$0xff]
      %v4345 = vld [vmem:[#allocation2 + $0x31] sm:$0xff]
      %v4346 = vld [vmem:[#allocation2 + $0x39] sm:$0xff]
      %v4347 = vld [vmem:[#allocation2 + $0x49] sm:$0xff]
      %v4348 = vld [vmem:[#allocation2 + $0x51] sm:$0xff]
      %v4349 = vld [vmem:[#allocation2 + $0x61] sm:$0xff]
      %v4350 = vld [vmem:[#allocation2 + $0x69] sm:$0xff]
      %v4351 = vld [vmem:[#allocation2 + $0x79] sm:$0xff]
      %v4352 = vld [vmem:[#allocation2 + $0x81] sm:$0xff]
      %v4353 = vld [vmem:[#allocation2 + $0x91] sm:$0xff]
      %v4354 = vld [vmem:[#allocation2 + $0x99] sm:$0xff]
      %v4355 = vld [vmem:[#allocation2 + $0xa9] sm:$0xff]
      %v4356 = vld [vmem:[#allocation2 + $0xb1] sm:$0xff]
      %v4357 = vld [vmem:[#allocation2 + $0xc1] sm:$0xff]
      %v4358 = vld [vmem:[#allocation2 + $0xc9] sm:$0xff]
      %v4359 = vld [vmem:[#allocation2 + $0xd9] sm:$0xff]
      %v4360 = vld [vmem:[#allocation2 + $0xe1] sm:$0xff]
      %v4361 = vld [vmem:[#allocation2 + $0xf1] sm:$0xff]
      %v4362 = vld [vmem:[#allocation2 + $0xf9] sm:$0xff]
      %v4363 = vld [vmem:[#allocation2 + $0x109] sm:$0xff]
      %v4364 = vld [vmem:[#allocation2 + $0x111] sm:$0xff]
      %v4365 = vld [vmem:[#allocation2 + $0x121] sm:$0xff]
      %v4366 = vld [vmem:[#allocation2 + $0x129] sm:$0xff]
      %v4367 = vld [vmem:[#allocation2 + $0x139] sm:$0xff]
      %v4368 = vld [vmem:[#allocation2 + $0x141] sm:$0xff]
      %v4369 = vld [vmem:[#allocation2 + $0x151] sm:$0xff]
      %v4370 = vld [vmem:[#allocation2 + $0x159] sm:$0xff]
      %v4371 = vld [vmem:[#allocation2 + $0x169] sm:$0xff]
      %v4372 = vld [vmem:[#allocation2 + $0x171] sm:$0xff]
      %s4373 = scalar_lea.vmem %s3, 4
      %v4374 = vld [vmem:[%s4373] sm:$0xf]
      %v4376 = vsel %vm258, %v4341, 0
      %v4379 = vsel %vm258, %v4342, 0
      %v4382 = vsel %vm258, %v4343, 0
      %v4385 = vsel %vm258, %v4344, 0
      %v4388 = vsel %vm258, %v4345, 0
      %v4391 = vsel %vm258, %v4346, 0
      %v4394 = vsel %vm258, %v4347, 0
      %v4397 = vsel %vm258, %v4348, 0
      %v4400 = vsel %vm258, %v4349, 0
      %v4403 = vsel %vm258, %v4350, 0
      %v4406 = vsel %vm258, %v4351, 0
      %v4409 = vsel %vm258, %v4352, 0
      %v4412 = vsel %vm258, %v4353, 0
      %v4415 = vsel %vm258, %v4354, 0
      %v4418 = vsel %vm258, %v4355, 0
      %v4421 = vsel %vm258, %v4356, 0
      %v4424 = vsel %vm258, %v4357, 0
      %v4427 = vsel %vm258, %v4358, 0
      %v4430 = vsel %vm258, %v4359, 0
      %v4433 = vsel %vm258, %v4360, 0
      %v4436 = vsel %vm258, %v4361, 0
      %v4439 = vsel %vm258, %v4362, 0
      %v4442 = vsel %vm258, %v4363, 0
      %v4445 = vsel %vm258, %v4364, 0
      %v4448 = vsel %vm258, %v4365, 0
      %v4451 = vsel %vm258, %v4366, 0
      %v4454 = vsel %vm258, %v4367, 0
      %v4457 = vsel %vm258, %v4368, 0
      %v4460 = vsel %vm258, %v4369, 0
      %v4463 = vsel %vm258, %v4370, 0
      %v4466 = vsel %vm258, %v4371, 0
      %v4469 = vsel %vm258, %v4372, 0
      %v4472 = vsel %vm539, %v4374, 0
      %4474 = vmatprep.subr.mxu0 0.0
      %4475 = vmatpush1.msra.mxu0 %v4472
      %4476 = vmatprep.subr.mxu0 0.0
      %4477 = vmatpush1.msra.mxu0 0.0
      %4478 = vmatprep.subr.mxu0 0.0
      %4479 = vmatpush1.msra.mxu0 0.0
      %4480 = vmatprep.subr.mxu0 0.0
      %4481 = vmatpush1.msra.mxu0 0.0
      %4482 = vmatprep.subr.mxu0 0.0
      %4483 = vmatpush1.msra.mxu0 0.0
      %4484 = vmatprep.subr.mxu0 0.0
      %4485 = vmatpush1.msra.mxu0 0.0
      %4486 = vmatprep.subr.mxu0 0.0
      %4487 = vmatpush1.msra.mxu0 0.0
      %4488 = vmatprep.subr.mxu0 0.0
      %4489 = vmatpush1.msra.mxu0 0.0
      %4490 = vmatprep.subr.mxu0 0.0
      %4491 = vmatpush1.msra.mxu0 0.0
      %4492 = vmatprep.subr.mxu0 0.0
      %4493 = vmatpush1.msra.mxu0 0.0
      %4494 = vmatprep.subr.mxu0 0.0
      %4495 = vmatpush1.msra.mxu0 0.0
      %4496 = vmatprep.subr.mxu0 0.0
      %4497 = vmatpush1.msra.mxu0 0.0
      %4498 = vmatprep.subr.mxu0 0.0
      %4499 = vmatpush1.msra.mxu0 0.0
      %4500 = vmatprep.subr.mxu0 0.0
      %4501 = vmatpush1.msra.mxu0 0.0
      %4502 = vmatprep.subr.mxu0 0.0
      %4503 = vmatpush1.msra.mxu0 0.0
      %4504 = vmatprep.subr.mxu0 0.0
      %4505 = vmatpush1.msra.mxu0 0.0
      %4506 = vmatprep.subr.mxu0 0.0
      %4507 = vmatpush1.msra.mxu0 0.0
      %4508 = vmatprep.subr.mxu0 0.0
      %4509 = vmatpush1.msra.mxu0 0.0
      %4510 = vmatprep.subr.mxu0 0.0
      %4511 = vmatpush1.msra.mxu0 0.0
      %4512 = vmatprep.subr.mxu0 0.0
      %4513 = vmatpush1.msra.mxu0 0.0
      %4514 = vmatprep.subr.mxu0 0.0
      %4515 = vmatpush1.msra.mxu0 0.0
      %4516 = vmatprep.subr.mxu0 0.0
      %4517 = vmatpush1.msra.mxu0 0.0
      %4518 = vmatprep.subr.mxu0 0.0
      %4519 = vmatpush1.msra.mxu0 0.0
      %4520 = vmatprep.subr.mxu0 0.0
      %4521 = vmatpush1.msra.mxu0 0.0
      %4522 = vmatprep.subr.mxu0 0.0
      %4523 = vmatpush1.msra.mxu0 0.0
      %4524 = vmatprep.subr.mxu0 0.0
      %4525 = vmatpush1.msra.mxu0 0.0
      %4526 = vmatprep.subr.mxu0 0.0
      %4527 = vmatpush1.msra.mxu0 0.0
      %4528 = vmatprep.subr.mxu0 0.0
      %4529 = vmatpush1.msra.mxu0 0.0
      %4530 = vmatprep.subr.mxu0 0.0
      %4531 = vmatpush1.msra.mxu0 0.0
      %4532 = vmatprep.subr.mxu0 0.0
      %4533 = vmatpush1.msra.mxu0 0.0
      %4534 = vmatprep.subr.mxu0 0.0
      %4535 = vmatpush1.msra.mxu0 0.0
      %4536 = vmatprep.subr.mxu0 0.0
      %4537 = vmatpush1.msra.mxu0 0.0
      %4538 = vmatprep.mubr.f32.mxu0 0.0
      %4539 = vmatmul.mubr.f32.gmra.mrb[0].mxu0 %v4376
      %v4540 = vpop.f32.mrb[0].mxu0
      %v4541 = vadd.f32 0.0, %v4540
      %v4542 = vpop.f32.mrb[0].mxu0
      %4543 = vmatprep.mubr.f32.mxu0 0.0
      %4544 = vmatmul.mubr.f32.gmra.mrb[0].mxu0 %v4379
      %v4545 = vpop.f32.mrb[0].mxu0
      %v4546 = vadd.f32 0.0, %v4545
      %v4547 = vpop.f32.mrb[0].mxu0
      %4548 = vmatprep.mubr.f32.mxu0 0.0
      %4549 = vmatmul.mubr.f32.gmra.mrb[0].mxu0 %v4382
      %v4550 = vpop.f32.mrb[0].mxu0
      %v4551 = vadd.f32 0.0, %v4550
      %v4552 = vpop.f32.mrb[0].mxu0
      %4553 = vmatprep.mubr.f32.mxu0 0.0
      %4554 = vmatmul.mubr.f32.gmra.mrb[0].mxu0 %v4385
      %v4555 = vpop.f32.mrb[0].mxu0
      %v4556 = vadd.f32 0.0, %v4555
      %v4557 = vpop.f32.mrb[0].mxu0
      %4558 = vmatprep.mubr.f32.mxu0 0.0
      %4559 = vmatmul.mubr.f32.gmra.mrb[0].mxu0 %v4388
      %v4560 = vpop.f32.mrb[0].mxu0
      %v4561 = vadd.f32 0.0, %v4560
      %v4562 = vpop.f32.mrb[0].mxu0
      %4563 = vmatprep.mubr.f32.mxu0 0.0
      %4564 = vmatmul.mubr.f32.gmra.mrb[0].mxu0 %v4391
      %v4565 = vpop.f32.mrb[0].mxu0
      %v4566 = vadd.f32 0.0, %v4565
      %v4567 = vpop.f32.mrb[0].mxu0
      %4568 = vmatprep.mubr.f32.mxu0 0.0
      %4569 = vmatmul.mubr.f32.gmra.mrb[0].mxu0 %v4394
      %v4570 = vpop.f32.mrb[0].mxu0
      %v4571 = vadd.f32 0.0, %v4570
      %v4572 = vpop.f32.mrb[0].mxu0
      %4573 = vmatprep.mubr.f32.mxu0 0.0
      %4574 = vmatmul.mubr.f32.gmra.mrb[0].mxu0 %v4397
      %v4575 = vpop.f32.mrb[0].mxu0
      %v4576 = vadd.f32 0.0, %v4575
      %v4577 = vpop.f32.mrb[0].mxu0
      %4578 = vmatprep.mubr.f32.mxu0 0.0
      %4579 = vmatmul.mubr.f32.gmra.mrb[0].mxu0 %v4400
      %v4580 = vpop.f32.mrb[0].mxu0
      %v4581 = vadd.f32 0.0, %v4580
      %v4582 = vpop.f32.mrb[0].mxu0
      %4583 = vmatprep.mubr.f32.mxu0 0.0
      %4584 = vmatmul.mubr.f32.gmra.mrb[0].mxu0 %v4403
      %v4585 = vpop.f32.mrb[0].mxu0
      %v4586 = vadd.f32 0.0, %v4585
      %v4587 = vpop.f32.mrb[0].mxu0
      %4588 = vmatprep.mubr.f32.mxu0 0.0
      %4589 = vmatmul.mubr.f32.gmra.mrb[0].mxu0 %v4406
      %v4590 = vpop.f32.mrb[0].mxu0
      %v4591 = vadd.f32 0.0, %v4590
      %v4592 = vpop.f32.mrb[0].mxu0
      %4593 = vmatprep.mubr.f32.mxu0 0.0
      %4594 = vmatmul.mubr.f32.gmra.mrb[0].mxu0 %v4409
      %v4595 = vpop.f32.mrb[0].mxu0
      %v4596 = vadd.f32 0.0, %v4595
      %v4597 = vpop.f32.mrb[0].mxu0
      %4598 = vmatprep.mubr.f32.mxu0 0.0
      %4599 = vmatmul.mubr.f32.gmra.mrb[0].mxu0 %v4412
      %v4600 = vpop.f32.mrb[0].mxu0
      %v4601 = vadd.f32 0.0, %v4600
      %v4602 = vpop.f32.mrb[0].mxu0
      %4603 = vmatprep.mubr.f32.mxu0 0.0
      %4604 = vmatmul.mubr.f32.gmra.mrb[0].mxu0 %v4415
      %v4605 = vpop.f32.mrb[0].mxu0
      %v4606 = vadd.f32 0.0, %v4605
      %v4607 = vpop.f32.mrb[0].mxu0
      %4608 = vmatprep.mubr.f32.mxu0 0.0
      %4609 = vmatmul.mubr.f32.gmra.mrb[0].mxu0 %v4418
      %v4610 = vpop.f32.mrb[0].mxu0
      %v4611 = vadd.f32 0.0, %v4610
      %v4612 = vpop.f32.mrb[0].mxu0
      %4613 = vmatprep.mubr.f32.mxu0 0.0
      %4614 = vmatmul.mubr.f32.gmra.mrb[0].mxu0 %v4421
      %v4615 = vpop.f32.mrb[0].mxu0
      %v4616 = vadd.f32 0.0, %v4615
      %v4617 = vpop.f32.mrb[0].mxu0
      %4618 = vmatprep.mubr.f32.mxu0 0.0
      %4619 = vmatmul.mubr.f32.gmra.mrb[0].mxu0 %v4424
      %v4620 = vpop.f32.mrb[0].mxu0
      %v4621 = vadd.f32 0.0, %v4620
      %v4622 = vpop.f32.mrb[0].mxu0
      %4623 = vmatprep.mubr.f32.mxu0 0.0
      %4624 = vmatmul.mubr.f32.gmra.mrb[0].mxu0 %v4427
      %v4625 = vpop.f32.mrb[0].mxu0
      %v4626 = vadd.f32 0.0, %v4625
      %v4627 = vpop.f32.mrb[0].mxu0
      %4628 = vmatprep.mubr.f32.mxu0 0.0
      %4629 = vmatmul.mubr.f32.gmra.mrb[0].mxu0 %v4430
      %v4630 = vpop.f32.mrb[0].mxu0
      %v4631 = vadd.f32 0.0, %v4630
      %v4632 = vpop.f32.mrb[0].mxu0
      %4633 = vmatprep.mubr.f32.mxu0 0.0
      %4634 = vmatmul.mubr.f32.gmra.mrb[0].mxu0 %v4433
      %v4635 = vpop.f32.mrb[0].mxu0
      %v4636 = vadd.f32 0.0, %v4635
      %v4637 = vpop.f32.mrb[0].mxu0
      %4638 = vmatprep.mubr.f32.mxu0 0.0
      %4639 = vmatmul.mubr.f32.gmra.mrb[0].mxu0 %v4436
      %v4640 = vpop.f32.mrb[0].mxu0
      %v4641 = vadd.f32 0.0, %v4640
      %v4642 = vpop.f32.mrb[0].mxu0
      %4643 = vmatprep.mubr.f32.mxu0 0.0
      %4644 = vmatmul.mubr.f32.gmra.mrb[0].mxu0 %v4439
      %v4645 = vpop.f32.mrb[0].mxu0
      %v4646 = vadd.f32 0.0, %v4645
      %v4647 = vpop.f32.mrb[0].mxu0
      %4648 = vmatprep.mubr.f32.mxu0 0.0
      %4649 = vmatmul.mubr.f32.gmra.mrb[0].mxu0 %v4442
      %v4650 = vpop.f32.mrb[0].mxu0
      %v4651 = vadd.f32 0.0, %v4650
      %v4652 = vpop.f32.mrb[0].mxu0
      %4653 = vmatprep.mubr.f32.mxu0 0.0
      %4654 = vmatmul.mubr.f32.gmra.mrb[0].mxu0 %v4445
      %v4655 = vpop.f32.mrb[0].mxu0
      %v4656 = vadd.f32 0.0, %v4655
      %v4657 = vpop.f32.mrb[0].mxu0
      %4658 = vmatprep.mubr.f32.mxu0 0.0
      %4659 = vmatmul.mubr.f32.gmra.mrb[0].mxu0 %v4448
      %v4660 = vpop.f32.mrb[0].mxu0
      %v4661 = vadd.f32 0.0, %v4660
      %v4662 = vpop.f32.mrb[0].mxu0
      %4663 = vmatprep.mubr.f32.mxu0 0.0
      %4664 = vmatmul.mubr.f32.gmra.mrb[0].mxu0 %v4451
      %v4665 = vpop.f32.mrb[0].mxu0
      %v4666 = vadd.f32 0.0, %v4665
      %v4667 = vpop.f32.mrb[0].mxu0
      %4668 = vmatprep.mubr.f32.mxu0 0.0
      %4669 = vmatmul.mubr.f32.gmra.mrb[0].mxu0 %v4454
      %v4670 = vpop.f32.mrb[0].mxu0
      %v4671 = vadd.f32 0.0, %v4670
      %v4672 = vpop.f32.mrb[0].mxu0
      %4673 = vmatprep.mubr.f32.mxu0 0.0
      %4674 = vmatmul.mubr.f32.gmra.mrb[0].mxu0 %v4457
      %v4675 = vpop.f32.mrb[0].mxu0
      %v4676 = vadd.f32 0.0, %v4675
      %v4677 = vpop.f32.mrb[0].mxu0
      %4678 = vmatprep.mubr.f32.mxu0 0.0
      %4679 = vmatmul.mubr.f32.gmra.mrb[0].mxu0 %v4460
      %v4680 = vpop.f32.mrb[0].mxu0
      %v4681 = vadd.f32 0.0, %v4680
      %v4682 = vpop.f32.mrb[0].mxu0
      %4683 = vmatprep.mubr.f32.mxu0 0.0
      %4684 = vmatmul.mubr.f32.gmra.mrb[0].mxu0 %v4463
      %v4685 = vpop.f32.mrb[0].mxu0
      %v4686 = vadd.f32 0.0, %v4685
      %v4687 = vpop.f32.mrb[0].mxu0
      %4688 = vmatprep.mubr.f32.mxu0 0.0
      %4689 = vmatmul.mubr.f32.gmra.mrb[0].mxu0 %v4466
      %v4690 = vpop.f32.mrb[0].mxu0
      %v4691 = vadd.f32 0.0, %v4690
      %v4692 = vpop.f32.mrb[0].mxu0
      %4693 = vmatprep.mubr.f32.mxu0 0.0
      %4694 = vmatmul.mubr.f32.gmra.mrb[0].mxu0 %v4469
      %v4695 = vpop.f32.mrb[0].mxu0
      %v4696 = vadd.f32 0.0, %v4695
      %v4697 = vpop.f32.mrb[0].mxu0
      %4698 = vdwg.mxu0
      %v4700 = vsel %vm258, %v4308, 0
      %v4703 = vsel %vm258, %v4309, 0
      %v4706 = vsel %vm258, %v4310, 0
      %v4709 = vsel %vm258, %v4311, 0
      %v4712 = vsel %vm258, %v4312, 0
      %v4715 = vsel %vm258, %v4313, 0
      %v4718 = vsel %vm258, %v4314, 0
      %v4721 = vsel %vm258, %v4315, 0
      %v4724 = vsel %vm258, %v4316, 0
      %v4727 = vsel %vm258, %v4317, 0
      %v4730 = vsel %vm258, %v4318, 0
      %v4733 = vsel %vm258, %v4319, 0
      %v4736 = vsel %vm258, %v4320, 0
      %v4739 = vsel %vm258, %v4321, 0
      %v4742 = vsel %vm258, %v4322, 0
      %v4745 = vsel %vm258, %v4323, 0
      %v4748 = vsel %vm258, %v4324, 0
      %v4751 = vsel %vm258, %v4325, 0
      %v4754 = vsel %vm258, %v4326, 0
      %v4757 = vsel %vm258, %v4327, 0
      %v4760 = vsel %vm258, %v4328, 0
      %v4763 = vsel %vm258, %v4329, 0
      %v4766 = vsel %vm258, %v4330, 0
      %v4769 = vsel %vm258, %v4331, 0
      %v4772 = vsel %vm258, %v4332, 0
      %v4775 = vsel %vm258, %v4333, 0
      %v4778 = vsel %vm258, %v4334, 0
      %v4781 = vsel %vm258, %v4335, 0
      %v4784 = vsel %vm258, %v4336, 0
      %v4787 = vsel %vm258, %v4337, 0
      %v4790 = vsel %vm258, %v4338, 0
      %v4793 = vsel %vm258, %v4339, 0
      %v4796 = vsel %vm539, %v4340, 0
      %4798 = vmatprep.subr.mxu0 0.0
      %4799 = vmatpush1.msra.mxu0 %v4796
      %4800 = vmatprep.subr.mxu0 0.0
      %4801 = vmatpush1.msra.mxu0 0.0
      %4802 = vmatprep.subr.mxu0 0.0
      %4803 = vmatpush1.msra.mxu0 0.0
      %4804 = vmatprep.subr.mxu0 0.0
      %4805 = vmatpush1.msra.mxu0 0.0
      %4806 = vmatprep.subr.mxu0 0.0
      %4807 = vmatpush1.msra.mxu0 0.0
      %4808 = vmatprep.subr.mxu0 0.0
      %4809 = vmatpush1.msra.mxu0 0.0
      %4810 = vmatprep.subr.mxu0 0.0
      %4811 = vmatpush1.msra.mxu0 0.0
      %4812 = vmatprep.subr.mxu0 0.0
      %4813 = vmatpush1.msra.mxu0 0.0
      %4814 = vmatprep.subr.mxu0 0.0
      %4815 = vmatpush1.msra.mxu0 0.0
      %4816 = vmatprep.subr.mxu0 0.0
      %4817 = vmatpush1.msra.mxu0 0.0
      %4818 = vmatprep.subr.mxu0 0.0
      %4819 = vmatpush1.msra.mxu0 0.0
      %4820 = vmatprep.subr.mxu0 0.0
      %4821 = vmatpush1.msra.mxu0 0.0
      %4822 = vmatprep.subr.mxu0 0.0
      %4823 = vmatpush1.msra.mxu0 0.0
      %4824 = vmatprep.subr.mxu0 0.0
      %4825 = vmatpush1.msra.mxu0 0.0
      %4826 = vmatprep.subr.mxu0 0.0
      %4827 = vmatpush1.msra.mxu0 0.0
      %4828 = vmatprep.subr.mxu0 0.0
      %4829 = vmatpush1.msra.mxu0 0.0
      %4830 = vmatprep.subr.mxu0 0.0
      %4831 = vmatpush1.msra.mxu0 0.0
      %4832 = vmatprep.subr.mxu0 0.0
      %4833 = vmatpush1.msra.mxu0 0.0
      %4834 = vmatprep.subr.mxu0 0.0
      %4835 = vmatpush1.msra.mxu0 0.0
      %4836 = vmatprep.subr.mxu0 0.0
      %4837 = vmatpush1.msra.mxu0 0.0
      %4838 = vmatprep.subr.mxu0 0.0
      %4839 = vmatpush1.msra.mxu0 0.0
      %4840 = vmatprep.subr.mxu0 0.0
      %4841 = vmatpush1.msra.mxu0 0.0
      %4842 = vmatprep.subr.mxu0 0.0
      %4843 = vmatpush1.msra.mxu0 0.0
      %4844 = vmatprep.subr.mxu0 0.0
      %4845 = vmatpush1.msra.mxu0 0.0
      %4846 = vmatprep.subr.mxu0 0.0
      %4847 = vmatpush1.msra.mxu0 0.0
      %4848 = vmatprep.subr.mxu0 0.0
      %4849 = vmatpush1.msra.mxu0 0.0
      %4850 = vmatprep.subr.mxu0 0.0
      %4851 = vmatpush1.msra.mxu0 0.0
      %4852 = vmatprep.subr.mxu0 0.0
      %4853 = vmatpush1.msra.mxu0 0.0
      %4854 = vmatprep.subr.mxu0 0.0
      %4855 = vmatpush1.msra.mxu0 0.0
      %4856 = vmatprep.subr.mxu0 0.0
      %4857 = vmatpush1.msra.mxu0 0.0
      %4858 = vmatprep.subr.mxu0 0.0
      %4859 = vmatpush1.msra.mxu0 0.0
      %4860 = vmatprep.subr.mxu0 0.0
      %4861 = vmatpush1.msra.mxu0 0.0
      %4862 = vmatprep.mubr.f32.mxu0 0.0
      %4863 = vmatmul.mubr.f32.gmra.mrb[0].mxu0 %v4700
      %v4864 = vpop.f32.mrb[0].mxu0
      %v4865 = vadd.f32 %v4541, %v4864
      %v4866 = vpop.f32.mrb[0].mxu0
      %4867 = vmatprep.mubr.f32.mxu0 0.0
      %4868 = vmatmul.mubr.f32.gmra.mrb[0].mxu0 %v4703
      %v4869 = vpop.f32.mrb[0].mxu0
      %v4870 = vadd.f32 %v4546, %v4869
      %v4871 = vpop.f32.mrb[0].mxu0
      %4872 = vmatprep.mubr.f32.mxu0 0.0
      %4873 = vmatmul.mubr.f32.gmra.mrb[0].mxu0 %v4706
      %v4874 = vpop.f32.mrb[0].mxu0
      %v4875 = vadd.f32 %v4551, %v4874
      %v4876 = vpop.f32.mrb[0].mxu0
      %4877 = vmatprep.mubr.f32.mxu0 0.0
      %4878 = vmatmul.mubr.f32.gmra.mrb[0].mxu0 %v4709
      %v4879 = vpop.f32.mrb[0].mxu0
      %v4880 = vadd.f32 %v4556, %v4879
      %v4881 = vpop.f32.mrb[0].mxu0
      %4882 = vmatprep.mubr.f32.mxu0 0.0
      %4883 = vmatmul.mubr.f32.gmra.mrb[0].mxu0 %v4712
      %v4884 = vpop.f32.mrb[0].mxu0
      %v4885 = vadd.f32 %v4561, %v4884
      %v4886 = vpop.f32.mrb[0].mxu0
      %4887 = vmatprep.mubr.f32.mxu0 0.0
      %4888 = vmatmul.mubr.f32.gmra.mrb[0].mxu0 %v4715
      %v4889 = vpop.f32.mrb[0].mxu0
      %v4890 = vadd.f32 %v4566, %v4889
      %v4891 = vpop.f32.mrb[0].mxu0
      %4892 = vmatprep.mubr.f32.mxu0 0.0
      %4893 = vmatmul.mubr.f32.gmra.mrb[0].mxu0 %v4718
      %v4894 = vpop.f32.mrb[0].mxu0
      %v4895 = vadd.f32 %v4571, %v4894
      %v4896 = vpop.f32.mrb[0].mxu0
      %4897 = vmatprep.mubr.f32.mxu0 0.0
      %4898 = vmatmul.mubr.f32.gmra.mrb[0].mxu0 %v4721
      %v4899 = vpop.f32.mrb[0].mxu0
      %v4900 = vadd.f32 %v4576, %v4899
      %v4901 = vpop.f32.mrb[0].mxu0
      %4902 = vmatprep.mubr.f32.mxu0 0.0
      %4903 = vmatmul.mubr.f32.gmra.mrb[0].mxu0 %v4724
      %v4904 = vpop.f32.mrb[0].mxu0
      %v4905 = vadd.f32 %v4581, %v4904
      %v4906 = vpop.f32.mrb[0].mxu0
      %4907 = vmatprep.mubr.f32.mxu0 0.0
      %4908 = vmatmul.mubr.f32.gmra.mrb[0].mxu0 %v4727
      %v4909 = vpop.f32.mrb[0].mxu0
      %v4910 = vadd.f32 %v4586, %v4909
      %v4911 = vpop.f32.mrb[0].mxu0
      %4912 = vmatprep.mubr.f32.mxu0 0.0
      %4913 = vmatmul.mubr.f32.gmra.mrb[0].mxu0 %v4730
      %v4914 = vpop.f32.mrb[0].mxu0
      %v4915 = vadd.f32 %v4591, %v4914
      %v4916 = vpop.f32.mrb[0].mxu0
      %4917 = vmatprep.mubr.f32.mxu0 0.0
      %4918 = vmatmul.mubr.f32.gmra.mrb[0].mxu0 %v4733
      %v4919 = vpop.f32.mrb[0].mxu0
      %v4920 = vadd.f32 %v4596, %v4919
      %v4921 = vpop.f32.mrb[0].mxu0
      %4922 = vmatprep.mubr.f32.mxu0 0.0
      %4923 = vmatmul.mubr.f32.gmra.mrb[0].mxu0 %v4736
      %v4924 = vpop.f32.mrb[0].mxu0
      %v4925 = vadd.f32 %v4601, %v4924
      %v4926 = vpop.f32.mrb[0].mxu0
      %4927 = vmatprep.mubr.f32.mxu0 0.0
      %4928 = vmatmul.mubr.f32.gmra.mrb[0].mxu0 %v4739
      %v4929 = vpop.f32.mrb[0].mxu0
      %v4930 = vadd.f32 %v4606, %v4929
      %v4931 = vpop.f32.mrb[0].mxu0
      %4932 = vmatprep.mubr.f32.mxu0 0.0
      %4933 = vmatmul.mubr.f32.gmra.mrb[0].mxu0 %v4742
      %v4934 = vpop.f32.mrb[0].mxu0
      %v4935 = vadd.f32 %v4611, %v4934
      %v4936 = vpop.f32.mrb[0].mxu0
      %4937 = vmatprep.mubr.f32.mxu0 0.0
      %4938 = vmatmul.mubr.f32.gmra.mrb[0].mxu0 %v4745
      %v4939 = vpop.f32.mrb[0].mxu0
      %v4940 = vadd.f32 %v4616, %v4939
      %v4941 = vpop.f32.mrb[0].mxu0
      %4942 = vmatprep.mubr.f32.mxu0 0.0
      %4943 = vmatmul.mubr.f32.gmra.mrb[0].mxu0 %v4748
      %v4944 = vpop.f32.mrb[0].mxu0
      %v4945 = vadd.f32 %v4621, %v4944
      %v4946 = vpop.f32.mrb[0].mxu0
      %4947 = vmatprep.mubr.f32.mxu0 0.0
      %4948 = vmatmul.mubr.f32.gmra.mrb[0].mxu0 %v4751
      %v4949 = vpop.f32.mrb[0].mxu0
      %v4950 = vadd.f32 %v4626, %v4949
      %v4951 = vpop.f32.mrb[0].mxu0
      %4952 = vmatprep.mubr.f32.mxu0 0.0
      %4953 = vmatmul.mubr.f32.gmra.mrb[0].mxu0 %v4754
      %v4954 = vpop.f32.mrb[0].mxu0
      %v4955 = vadd.f32 %v4631, %v4954
      %v4956 = vpop.f32.mrb[0].mxu0
      %4957 = vmatprep.mubr.f32.mxu0 0.0
      %4958 = vmatmul.mubr.f32.gmra.mrb[0].mxu0 %v4757
      %v4959 = vpop.f32.mrb[0].mxu0
      %v4960 = vadd.f32 %v4636, %v4959
      %v4961 = vpop.f32.mrb[0].mxu0
      %4962 = vmatprep.mubr.f32.mxu0 0.0
      %4963 = vmatmul.mubr.f32.gmra.mrb[0].mxu0 %v4760
      %v4964 = vpop.f32.mrb[0].mxu0
      %v4965 = vadd.f32 %v4641, %v4964
      %v4966 = vpop.f32.mrb[0].mxu0
      %4967 = vmatprep.mubr.f32.mxu0 0.0
      %4968 = vmatmul.mubr.f32.gmra.mrb[0].mxu0 %v4763
      %v4969 = vpop.f32.mrb[0].mxu0
      %v4970 = vadd.f32 %v4646, %v4969
      %v4971 = vpop.f32.mrb[0].mxu0
      %4972 = vmatprep.mubr.f32.mxu0 0.0
      %4973 = vmatmul.mubr.f32.gmra.mrb[0].mxu0 %v4766
      %v4974 = vpop.f32.mrb[0].mxu0
      %v4975 = vadd.f32 %v4651, %v4974
      %v4976 = vpop.f32.mrb[0].mxu0
      %4977 = vmatprep.mubr.f32.mxu0 0.0
      %4978 = vmatmul.mubr.f32.gmra.mrb[0].mxu0 %v4769
      %v4979 = vpop.f32.mrb[0].mxu0
      %v4980 = vadd.f32 %v4656, %v4979
      %v4981 = vpop.f32.mrb[0].mxu0
      %4982 = vmatprep.mubr.f32.mxu0 0.0
      %4983 = vmatmul.mubr.f32.gmra.mrb[0].mxu0 %v4772
      %v4984 = vpop.f32.mrb[0].mxu0
      %v4985 = vadd.f32 %v4661, %v4984
      %v4986 = vpop.f32.mrb[0].mxu0
      %4987 = vmatprep.mubr.f32.mxu0 0.0
      %4988 = vmatmul.mubr.f32.gmra.mrb[0].mxu0 %v4775
      %v4989 = vpop.f32.mrb[0].mxu0
      %v4990 = vadd.f32 %v4666, %v4989
      %v4991 = vpop.f32.mrb[0].mxu0
      %4992 = vmatprep.mubr.f32.mxu0 0.0
      %4993 = vmatmul.mubr.f32.gmra.mrb[0].mxu0 %v4778
      %v4994 = vpop.f32.mrb[0].mxu0
      %v4995 = vadd.f32 %v4671, %v4994
      %v4996 = vpop.f32.mrb[0].mxu0
      %4997 = vmatprep.mubr.f32.mxu0 0.0
      %4998 = vmatmul.mubr.f32.gmra.mrb[0].mxu0 %v4781
      %v4999 = vpop.f32.mrb[0].mxu0
      %v5000 = vadd.f32 %v4676, %v4999
      %v5001 = vpop.f32.mrb[0].mxu0
      %5002 = vmatprep.mubr.f32.mxu0 0.0
      %5003 = vmatmul.mubr.f32.gmra.mrb[0].mxu0 %v4784
      %v5004 = vpop.f32.mrb[0].mxu0
      %v5005 = vadd.f32 %v4681, %v5004
      %v5006 = vpop.f32.mrb[0].mxu0
      %5007 = vmatprep.mubr.f32.mxu0 0.0
      %5008 = vmatmul.mubr.f32.gmra.mrb[0].mxu0 %v4787
      %v5009 = vpop.f32.mrb[0].mxu0
      %v5010 = vadd.f32 %v4686, %v5009
      %v5011 = vpop.f32.mrb[0].mxu0
      %5012 = vmatprep.mubr.f32.mxu0 0.0
      %5013 = vmatmul.mubr.f32.gmra.mrb[0].mxu0 %v4790
      %v5014 = vpop.f32.mrb[0].mxu0
      %v5015 = vadd.f32 %v4691, %v5014
      %v5016 = vpop.f32.mrb[0].mxu0
      %5017 = vmatprep.mubr.f32.mxu0 0.0
      %5018 = vmatmul.mubr.f32.gmra.mrb[0].mxu0 %v4793
      %v5019 = vpop.f32.mrb[0].mxu0
      %v5020 = vadd.f32 %v4696, %v5019
      %v5021 = vpop.f32.mrb[0].mxu0
      %5022 = vdwg.mxu0
      %v5023 = vld [vmem:[#allocation2 + $0x2] sm:$0xff]
      %v5024 = vld [vmem:[#allocation2 + $0xa] sm:$0xff]
      %v5025 = vld [vmem:[#allocation2 + $0x1a] sm:$0xff]
      %v5026 = vld [vmem:[#allocation2 + $0x22] sm:$0xff]
      %v5027 = vld [vmem:[#allocation2 + $0x32] sm:$0xff]
      %v5028 = vld [vmem:[#allocation2 + $0x3a] sm:$0xff]
      %v5029 = vld [vmem:[#allocation2 + $0x4a] sm:$0xff]
      %v5030 = vld [vmem:[#allocation2 + $0x52] sm:$0xff]
      %v5031 = vld [vmem:[#allocation2 + $0x62] sm:$0xff]
      %v5032 = vld [vmem:[#allocation2 + $0x6a] sm:$0xff]
      %v5033 = vld [vmem:[#allocation2 + $0x7a] sm:$0xff]
      %v5034 = vld [vmem:[#allocation2 + $0x82] sm:$0xff]
      %v5035 = vld [vmem:[#allocation2 + $0x92] sm:$0xff]
      %v5036 = vld [vmem:[#allocation2 + $0x9a] sm:$0xff]
      %v5037 = vld [vmem:[#allocation2 + $0xaa] sm:$0xff]
      %v5038 = vld [vmem:[#allocation2 + $0xb2] sm:$0xff]
      %v5039 = vld [vmem:[#allocation2 + $0xc2] sm:$0xff]
      %v5040 = vld [vmem:[#allocation2 + $0xca] sm:$0xff]
      %v5041 = vld [vmem:[#allocation2 + $0xda] sm:$0xff]
      %v5042 = vld [vmem:[#allocation2 + $0xe2] sm:$0xff]
      %v5043 = vld [vmem:[#allocation2 + $0xf2] sm:$0xff]
      %v5044 = vld [vmem:[#allocation2 + $0xfa] sm:$0xff]
      %v5045 = vld [vmem:[#allocation2 + $0x10a] sm:$0xff]
      %v5046 = vld [vmem:[#allocation2 + $0x112] sm:$0xff]
      %v5047 = vld [vmem:[#allocation2 + $0x122] sm:$0xff]
      %v5048 = vld [vmem:[#allocation2 + $0x12a] sm:$0xff]
      %v5049 = vld [vmem:[#allocation2 + $0x13a] sm:$0xff]
      %v5050 = vld [vmem:[#allocation2 + $0x142] sm:$0xff]
      %v5051 = vld [vmem:[#allocation2 + $0x152] sm:$0xff]
      %v5052 = vld [vmem:[#allocation2 + $0x15a] sm:$0xff]
      %v5053 = vld [vmem:[#allocation2 + $0x16a] sm:$0xff]
      %v5054 = vld [vmem:[#allocation2 + $0x172] sm:$0xff]
      %s5055 = scalar_lea.vmem %s3, 8
      %v5056 = vld [vmem:[%s5055] sm:$0xf]
      %v5058 = vsel %vm258, %v5023, 0
      %v5061 = vsel %vm258, %v5024, 0
      %v5064 = vsel %vm258, %v5025, 0
      %v5067 = vsel %vm258, %v5026, 0
      %v5070 = vsel %vm258, %v5027, 0
      %v5073 = vsel %vm258, %v5028, 0
      %v5076 = vsel %vm258, %v5029, 0
      %v5079 = vsel %vm258, %v5030, 0
      %v5082 = vsel %vm258, %v5031, 0
      %v5085 = vsel %vm258, %v5032, 0
      %v5088 = vsel %vm258, %v5033, 0
      %v5091 = vsel %vm258, %v5034, 0
      %v5094 = vsel %vm258, %v5035, 0
      %v5097 = vsel %vm258, %v5036, 0
      %v5100 = vsel %vm258, %v5037, 0
      %v5103 = vsel %vm258, %v5038, 0
      %v5106 = vsel %vm258, %v5039, 0
      %v5109 = vsel %vm258, %v5040, 0
      %v5112 = vsel %vm258, %v5041, 0
      %v5115 = vsel %vm258, %v5042, 0
      %v5118 = vsel %vm258, %v5043, 0
      %v5121 = vsel %vm258, %v5044, 0
      %v5124 = vsel %vm258, %v5045, 0
      %v5127 = vsel %vm258, %v5046, 0
      %v5130 = vsel %vm258, %v5047, 0
      %v5133 = vsel %vm258, %v5048, 0
      %v5136 = vsel %vm258, %v5049, 0
      %v5139 = vsel %vm258, %v5050, 0
      %v5142 = vsel %vm258, %v5051, 0
      %v5145 = vsel %vm258, %v5052, 0
      %v5148 = vsel %vm258, %v5053, 0
      %v5151 = vsel %vm258, %v5054, 0
      %v5154 = vsel %vm539, %v5056, 0
      %5156 = vmatprep.subr.mxu0 0.0
      %5157 = vmatpush1.msra.mxu0 %v5154
      %5158 = vmatprep.subr.mxu0 0.0
      %5159 = vmatpush1.msra.mxu0 0.0
      %5160 = vmatprep.subr.mxu0 0.0
      %5161 = vmatpush1.msra.mxu0 0.0
      %5162 = vmatprep.subr.mxu0 0.0
      %5163 = vmatpush1.msra.mxu0 0.0
      %5164 = vmatprep.subr.mxu0 0.0
      %5165 = vmatpush1.msra.mxu0 0.0
      %5166 = vmatprep.subr.mxu0 0.0
      %5167 = vmatpush1.msra.mxu0 0.0
      %5168 = vmatprep.subr.mxu0 0.0
      %5169 = vmatpush1.msra.mxu0 0.0
      %5170 = vmatprep.subr.mxu0 0.0
      %5171 = vmatpush1.msra.mxu0 0.0
      %5172 = vmatprep.subr.mxu0 0.0
      %5173 = vmatpush1.msra.mxu0 0.0
      %5174 = vmatprep.subr.mxu0 0.0
      %5175 = vmatpush1.msra.mxu0 0.0
      %5176 = vmatprep.subr.mxu0 0.0
      %5177 = vmatpush1.msra.mxu0 0.0
      %5178 = vmatprep.subr.mxu0 0.0
      %5179 = vmatpush1.msra.mxu0 0.0
      %5180 = vmatprep.subr.mxu0 0.0
      %5181 = vmatpush1.msra.mxu0 0.0
      %5182 = vmatprep.subr.mxu0 0.0
      %5183 = vmatpush1.msra.mxu0 0.0
      %5184 = vmatprep.subr.mxu0 0.0
      %5185 = vmatpush1.msra.mxu0 0.0
      %5186 = vmatprep.subr.mxu0 0.0
      %5187 = vmatpush1.msra.mxu0 0.0
      %5188 = vmatprep.subr.mxu0 0.0
      %5189 = vmatpush1.msra.mxu0 0.0
      %5190 = vmatprep.subr.mxu0 0.0
      %5191 = vmatpush1.msra.mxu0 0.0
      %5192 = vmatprep.subr.mxu0 0.0
      %5193 = vmatpush1.msra.mxu0 0.0
      %5194 = vmatprep.subr.mxu0 0.0
      %5195 = vmatpush1.msra.mxu0 0.0
      %5196 = vmatprep.subr.mxu0 0.0
      %5197 = vmatpush1.msra.mxu0 0.0
      %5198 = vmatprep.subr.mxu0 0.0
      %5199 = vmatpush1.msra.mxu0 0.0
      %5200 = vmatprep.subr.mxu0 0.0
      %5201 = vmatpush1.msra.mxu0 0.0
      %5202 = vmatprep.subr.mxu0 0.0
      %5203 = vmatpush1.msra.mxu0 0.0
      %5204 = vmatprep.subr.mxu0 0.0
      %5205 = vmatpush1.msra.mxu0 0.0
      %5206 = vmatprep.subr.mxu0 0.0
      %5207 = vmatpush1.msra.mxu0 0.0
      %5208 = vmatprep.subr.mxu0 0.0
      %5209 = vmatpush1.msra.mxu0 0.0
      %5210 = vmatprep.subr.mxu0 0.0
      %5211 = vmatpush1.msra.mxu0 0.0
      %5212 = vmatprep.subr.mxu0 0.0
      %5213 = vmatpush1.msra.mxu0 0.0
      %5214 = vmatprep.subr.mxu0 0.0
      %5215 = vmatpush1.msra.mxu0 0.0
      %5216 = vmatprep.subr.mxu0 0.0
      %5217 = vmatpush1.msra.mxu0 0.0
      %5218 = vmatprep.subr.mxu0 0.0
      %5219 = vmatpush1.msra.mxu0 0.0
      %5220 = vmatprep.mubr.f32.mxu0 0.0
      %5221 = vmatmul.mubr.f32.gmra.mrb[0].mxu0 %v5058
      %v5222 = vpop.f32.mrb[0].mxu0
      %v5223 = vadd.f32 0.0, %v5222
      %v5224 = vpop.f32.mrb[0].mxu0
      %5225 = vmatprep.mubr.f32.mxu0 0.0
      %5226 = vmatmul.mubr.f32.gmra.mrb[0].mxu0 %v5061
      %v5227 = vpop.f32.mrb[0].mxu0
      %v5228 = vadd.f32 0.0, %v5227
      %v5229 = vpop.f32.mrb[0].mxu0
      %5230 = vmatprep.mubr.f32.mxu0 0.0
      %5231 = vmatmul.mubr.f32.gmra.mrb[0].mxu0 %v5064
      %v5232 = vpop.f32.mrb[0].mxu0
      %v5233 = vadd.f32 0.0, %v5232
      %v5234 = vpop.f32.mrb[0].mxu0
      %5235 = vmatprep.mubr.f32.mxu0 0.0
      %5236 = vmatmul.mubr.f32.gmra.mrb[0].mxu0 %v5067
      %v5237 = vpop.f32.mrb[0].mxu0
      %v5238 = vadd.f32 0.0, %v5237
      %v5239 = vpop.f32.mrb[0].mxu0
      %5240 = vmatprep.mubr.f32.mxu0 0.0
      %5241 = vmatmul.mubr.f32.gmra.mrb[0].mxu0 %v5070
      %v5242 = vpop.f32.mrb[0].mxu0
      %v5243 = vadd.f32 0.0, %v5242
      %v5244 = vpop.f32.mrb[0].mxu0
      %5245 = vmatprep.mubr.f32.mxu0 0.0
      %5246 = vmatmul.mubr.f32.gmra.mrb[0].mxu0 %v5073
      %v5247 = vpop.f32.mrb[0].mxu0
      %v5248 = vadd.f32 0.0, %v5247
      %v5249 = vpop.f32.mrb[0].mxu0
      %5250 = vmatprep.mubr.f32.mxu0 0.0
      %5251 = vmatmul.mubr.f32.gmra.mrb[0].mxu0 %v5076
      %v5252 = vpop.f32.mrb[0].mxu0
      %v5253 = vadd.f32 0.0, %v5252
      %v5254 = vpop.f32.mrb[0].mxu0
      %5255 = vmatprep.mubr.f32.mxu0 0.0
      %5256 = vmatmul.mubr.f32.gmra.mrb[0].mxu0 %v5079
      %v5257 = vpop.f32.mrb[0].mxu0
      %v5258 = vadd.f32 0.0, %v5257
      %v5259 = vpop.f32.mrb[0].mxu0
      %5260 = vmatprep.mubr.f32.mxu0 0.0
      %5261 = vmatmul.mubr.f32.gmra.mrb[0].mxu0 %v5082
      %v5262 = vpop.f32.mrb[0].mxu0
      %v5263 = vadd.f32 0.0, %v5262
      %v5264 = vpop.f32.mrb[0].mxu0
      %5265 = vmatprep.mubr.f32.mxu0 0.0
      %5266 = vmatmul.mubr.f32.gmra.mrb[0].mxu0 %v5085
      %v5267 = vpop.f32.mrb[0].mxu0
      %v5268 = vadd.f32 0.0, %v5267
      %v5269 = vpop.f32.mrb[0].mxu0
      %5270 = vmatprep.mubr.f32.mxu0 0.0
      %5271 = vmatmul.mubr.f32.gmra.mrb[0].mxu0 %v5088
      %v5272 = vpop.f32.mrb[0].mxu0
      %v5273 = vadd.f32 0.0, %v5272
      %v5274 = vpop.f32.mrb[0].mxu0
      %5275 = vmatprep.mubr.f32.mxu0 0.0
      %5276 = vmatmul.mubr.f32.gmra.mrb[0].mxu0 %v5091
      %v5277 = vpop.f32.mrb[0].mxu0
      %v5278 = vadd.f32 0.0, %v5277
      %v5279 = vpop.f32.mrb[0].mxu0
      %5280 = vmatprep.mubr.f32.mxu0 0.0
      %5281 = vmatmul.mubr.f32.gmra.mrb[0].mxu0 %v5094
      %v5282 = vpop.f32.mrb[0].mxu0
      %v5283 = vadd.f32 0.0, %v5282
      %v5284 = vpop.f32.mrb[0].mxu0
      %5285 = vmatprep.mubr.f32.mxu0 0.0
      %5286 = vmatmul.mubr.f32.gmra.mrb[0].mxu0 %v5097
      %v5287 = vpop.f32.mrb[0].mxu0
      %v5288 = vadd.f32 0.0, %v5287
      %v5289 = vpop.f32.mrb[0].mxu0
      %5290 = vmatprep.mubr.f32.mxu0 0.0
      %5291 = vmatmul.mubr.f32.gmra.mrb[0].mxu0 %v5100
      %v5292 = vpop.f32.mrb[0].mxu0
      %v5293 = vadd.f32 0.0, %v5292
      %v5294 = vpop.f32.mrb[0].mxu0
      %5295 = vmatprep.mubr.f32.mxu0 0.0
      %5296 = vmatmul.mubr.f32.gmra.mrb[0].mxu0 %v5103
      %v5297 = vpop.f32.mrb[0].mxu0
      %v5298 = vadd.f32 0.0, %v5297
      %v5299 = vpop.f32.mrb[0].mxu0
      %5300 = vmatprep.mubr.f32.mxu0 0.0
      %5301 = vmatmul.mubr.f32.gmra.mrb[0].mxu0 %v5106
      %v5302 = vpop.f32.mrb[0].mxu0
      %v5303 = vadd.f32 0.0, %v5302
      %v5304 = vpop.f32.mrb[0].mxu0
      %5305 = vmatprep.mubr.f32.mxu0 0.0
      %5306 = vmatmul.mubr.f32.gmra.mrb[0].mxu0 %v5109
      %v5307 = vpop.f32.mrb[0].mxu0
      %v5308 = vadd.f32 0.0, %v5307
      %v5309 = vpop.f32.mrb[0].mxu0
      %5310 = vmatprep.mubr.f32.mxu0 0.0
      %5311 = vmatmul.mubr.f32.gmra.mrb[0].mxu0 %v5112
      %v5312 = vpop.f32.mrb[0].mxu0
      %v5313 = vadd.f32 0.0, %v5312
      %v5314 = vpop.f32.mrb[0].mxu0
      %5315 = vmatprep.mubr.f32.mxu0 0.0
      %5316 = vmatmul.mubr.f32.gmra.mrb[0].mxu0 %v5115
      %v5317 = vpop.f32.mrb[0].mxu0
      %v5318 = vadd.f32 0.0, %v5317
      %v5319 = vpop.f32.mrb[0].mxu0
      %5320 = vmatprep.mubr.f32.mxu0 0.0
      %5321 = vmatmul.mubr.f32.gmra.mrb[0].mxu0 %v5118
      %v5322 = vpop.f32.mrb[0].mxu0
      %v5323 = vadd.f32 0.0, %v5322
      %v5324 = vpop.f32.mrb[0].mxu0
      %5325 = vmatprep.mubr.f32.mxu0 0.0
      %5326 = vmatmul.mubr.f32.gmra.mrb[0].mxu0 %v5121
      %v5327 = vpop.f32.mrb[0].mxu0
      %v5328 = vadd.f32 0.0, %v5327
      %v5329 = vpop.f32.mrb[0].mxu0
      %5330 = vmatprep.mubr.f32.mxu0 0.0
      %5331 = vmatmul.mubr.f32.gmra.mrb[0].mxu0 %v5124
      %v5332 = vpop.f32.mrb[0].mxu0
      %v5333 = vadd.f32 0.0, %v5332
      %v5334 = vpop.f32.mrb[0].mxu0
      %5335 = vmatprep.mubr.f32.mxu0 0.0
      %5336 = vmatmul.mubr.f32.gmra.mrb[0].mxu0 %v5127
      %v5337 = vpop.f32.mrb[0].mxu0
      %v5338 = vadd.f32 0.0, %v5337
      %v5339 = vpop.f32.mrb[0].mxu0
      %5340 = vmatprep.mubr.f32.mxu0 0.0
      %5341 = vmatmul.mubr.f32.gmra.mrb[0].mxu0 %v5130
      %v5342 = vpop.f32.mrb[0].mxu0
      %v5343 = vadd.f32 0.0, %v5342
      %v5344 = vpop.f32.mrb[0].mxu0
      %5345 = vmatprep.mubr.f32.mxu0 0.0
      %5346 = vmatmul.mubr.f32.gmra.mrb[0].mxu0 %v5133
      %v5347 = vpop.f32.mrb[0].mxu0
      %v5348 = vadd.f32 0.0, %v5347
      %v5349 = vpop.f32.mrb[0].mxu0
      %5350 = vmatprep.mubr.f32.mxu0 0.0
      %5351 = vmatmul.mubr.f32.gmra.mrb[0].mxu0 %v5136
      %v5352 = vpop.f32.mrb[0].mxu0
      %v5353 = vadd.f32 0.0, %v5352
      %v5354 = vpop.f32.mrb[0].mxu0
      %5355 = vmatprep.mubr.f32.mxu0 0.0
      %5356 = vmatmul.mubr.f32.gmra.mrb[0].mxu0 %v5139
      %v5357 = vpop.f32.mrb[0].mxu0
      %v5358 = vadd.f32 0.0, %v5357
      %v5359 = vpop.f32.mrb[0].mxu0
      %5360 = vmatprep.mubr.f32.mxu0 0.0
      %5361 = vmatmul.mubr.f32.gmra.mrb[0].mxu0 %v5142
      %v5362 = vpop.f32.mrb[0].mxu0
      %v5363 = vadd.f32 0.0, %v5362
      %v5364 = vpop.f32.mrb[0].mxu0
      %5365 = vmatprep.mubr.f32.mxu0 0.0
      %5366 = vmatmul.mubr.f32.gmra.mrb[0].mxu0 %v5145
      %v5367 = vpop.f32.mrb[0].mxu0
      %v5368 = vadd.f32 0.0, %v5367
      %v5369 = vpop.f32.mrb[0].mxu0
      %5370 = vmatprep.mubr.f32.mxu0 0.0
      %5371 = vmatmul.mubr.f32.gmra.mrb[0].mxu0 %v5148
      %v5372 = vpop.f32.mrb[0].mxu0
      %v5373 = vadd.f32 0.0, %v5372
      %v5374 = vpop.f32.mrb[0].mxu0
      %5375 = vmatprep.mubr.f32.mxu0 0.0
      %5376 = vmatmul.mubr.f32.gmra.mrb[0].mxu0 %v5151
      %v5377 = vpop.f32.mrb[0].mxu0
      %v5378 = vadd.f32 0.0, %v5377
      %v5379 = vpop.f32.mrb[0].mxu0
      %5380 = vdwg.mxu0
      %v5381 = vadd.f32 %v4865, %v5223
      %v5382 = vadd.f32 %v4870, %v5228
      %v5383 = vadd.f32 %v4875, %v5233
      %v5384 = vadd.f32 %v4880, %v5238
      %v5385 = vadd.f32 %v4885, %v5243
      %v5386 = vadd.f32 %v4890, %v5248
      %v5387 = vadd.f32 %v4895, %v5253
      %v5388 = vadd.f32 %v4900, %v5258
      %v5389 = vadd.f32 %v4905, %v5263
      %v5390 = vadd.f32 %v4910, %v5268
      %v5391 = vadd.f32 %v4915, %v5273
      %v5392 = vadd.f32 %v4920, %v5278
      %v5393 = vadd.f32 %v4925, %v5283
      %v5394 = vadd.f32 %v4930, %v5288
      %v5395 = vadd.f32 %v4935, %v5293
      %v5396 = vadd.f32 %v4940, %v5298
      %v5397 = vadd.f32 %v4945, %v5303
      %v5398 = vadd.f32 %v4950, %v5308
      %v5399 = vadd.f32 %v4955, %v5313
      %v5400 = vadd.f32 %v4960, %v5318
      %v5401 = vadd.f32 %v4965, %v5323
      %v5402 = vadd.f32 %v4970, %v5328
      %v5403 = vadd.f32 %v4975, %v5333
      %v5404 = vadd.f32 %v4980, %v5338
      %v5405 = vadd.f32 %v4985, %v5343
      %v5406 = vadd.f32 %v4990, %v5348
      %v5407 = vadd.f32 %v4995, %v5353
      %v5408 = vadd.f32 %v5000, %v5358
      %v5409 = vadd.f32 %v5005, %v5363
      %v5410 = vadd.f32 %v5010, %v5368
      %v5411 = vadd.f32 %v5015, %v5373
      %v5412 = vadd.f32 %v5020, %v5378
      %v5413 = vld [vmem:[%s257] sm:$0xff]
      %v5414 = vld [vmem:[%s257 + $0x8] sm:$0xff]
      %v5415 = vld [vmem:[%s257 + $0x18] sm:$0xff]
      %v5416 = vld [vmem:[%s257 + $0x20] sm:$0xff]
      %v5417 = vld [vmem:[%s257 + $0x30] sm:$0xff]
      %v5418 = vld [vmem:[%s257 + $0x38] sm:$0xff]
      %v5419 = vld [vmem:[%s257 + $0x48] sm:$0xff]
      %v5420 = vld [vmem:[%s257 + $0x50] sm:$0xff]
      %v5421 = vld [vmem:[%s257 + $0x60] sm:$0xff]
      %v5422 = vld [vmem:[%s257 + $0x68] sm:$0xff]
      %v5423 = vld [vmem:[%s257 + $0x78] sm:$0xff]
      %v5424 = vld [vmem:[%s257 + $0x80] sm:$0xff]
      %v5425 = vld [vmem:[%s257 + $0x90] sm:$0xff]
      %v5426 = vld [vmem:[%s257 + $0x98] sm:$0xff]
      %v5427 = vld [vmem:[%s257 + $0xa8] sm:$0xff]
      %v5428 = vld [vmem:[%s257 + $0xb0] sm:$0xff]
      %v5429 = vld [vmem:[%s257 + $0xc0] sm:$0xff]
      %v5430 = vld [vmem:[%s257 + $0xc8] sm:$0xff]
      %v5431 = vld [vmem:[%s257 + $0xd8] sm:$0xff]
      %v5432 = vld [vmem:[%s257 + $0xe0] sm:$0xff]
      %v5433 = vld [vmem:[%s257 + $0xf0] sm:$0xff]
      %v5434 = vld [vmem:[%s257 + $0xf8] sm:$0xff]
      %v5435 = vld [vmem:[%s257 + $0x108] sm:$0xff]
      %v5436 = vld [vmem:[%s257 + $0x110] sm:$0xff]
      %v5437 = vld [vmem:[%s257 + $0x120] sm:$0xff]
      %v5438 = vld [vmem:[%s257 + $0x128] sm:$0xff]
      %v5439 = vld [vmem:[%s257 + $0x138] sm:$0xff]
      %v5440 = vld [vmem:[%s257 + $0x140] sm:$0xff]
      %v5441 = vld [vmem:[%s257 + $0x150] sm:$0xff]
      %v5442 = vld [vmem:[%s257 + $0x158] sm:$0xff]
      %v5443 = vld [vmem:[%s257 + $0x168] sm:$0xff]
      %v5444 = vld [vmem:[%s257 + $0x170] sm:$0xff]
      %s5445 = scalar_lea.vmem %s3, 12
      %v5446 = vld [vmem:[%s5445] sm:$0xf]
      %v5448 = vsel %vm258, %v5413, 0
      %v5451 = vsel %vm258, %v5414, 0
      %v5454 = vsel %vm258, %v5415, 0
      %v5457 = vsel %vm258, %v5416, 0
      %v5460 = vsel %vm258, %v5417, 0
      %v5463 = vsel %vm258, %v5418, 0
      %v5466 = vsel %vm258, %v5419, 0
      %v5469 = vsel %vm258, %v5420, 0
      %v5472 = vsel %vm258, %v5421, 0
      %v5475 = vsel %vm258, %v5422, 0
      %v5478 = vsel %vm258, %v5423, 0
      %v5481 = vsel %vm258, %v5424, 0
      %v5484 = vsel %vm258, %v5425, 0
      %v5487 = vsel %vm258, %v5426, 0
      %v5490 = vsel %vm258, %v5427, 0
      %v5493 = vsel %vm258, %v5428, 0
      %v5496 = vsel %vm258, %v5429, 0
      %v5499 = vsel %vm258, %v5430, 0
      %v5502 = vsel %vm258, %v5431, 0
      %v5505 = vsel %vm258, %v5432, 0
      %v5508 = vsel %vm258, %v5433, 0
      %v5511 = vsel %vm258, %v5434, 0
      %v5514 = vsel %vm258, %v5435, 0
      %v5517 = vsel %vm258, %v5436, 0
      %v5520 = vsel %vm258, %v5437, 0
      %v5523 = vsel %vm258, %v5438, 0
      %v5526 = vsel %vm258, %v5439, 0
      %v5529 = vsel %vm258, %v5440, 0
      %v5532 = vsel %vm258, %v5441, 0
      %v5535 = vsel %vm258, %v5442, 0
      %v5538 = vsel %vm258, %v5443, 0
      %v5541 = vsel %vm258, %v5444, 0
      %v5544 = vsel %vm539, %v5446, 0
      %5546 = vmatprep.subr.mxu0 0.0
      %5547 = vmatpush1.msra.mxu0 %v5544
      %5548 = vmatprep.subr.mxu0 0.0
      %5549 = vmatpush1.msra.mxu0 0.0
      %5550 = vmatprep.subr.mxu0 0.0
      %5551 = vmatpush1.msra.mxu0 0.0
      %5552 = vmatprep.subr.mxu0 0.0
      %5553 = vmatpush1.msra.mxu0 0.0
      %5554 = vmatprep.subr.mxu0 0.0
      %5555 = vmatpush1.msra.mxu0 0.0
      %5556 = vmatprep.subr.mxu0 0.0
      %5557 = vmatpush1.msra.mxu0 0.0
      %5558 = vmatprep.subr.mxu0 0.0
      %5559 = vmatpush1.msra.mxu0 0.0
      %5560 = vmatprep.subr.mxu0 0.0
      %5561 = vmatpush1.msra.mxu0 0.0
      %5562 = vmatprep.subr.mxu0 0.0
      %5563 = vmatpush1.msra.mxu0 0.0
      %5564 = vmatprep.subr.mxu0 0.0
      %5565 = vmatpush1.msra.mxu0 0.0
      %5566 = vmatprep.subr.mxu0 0.0
      %5567 = vmatpush1.msra.mxu0 0.0
      %5568 = vmatprep.subr.mxu0 0.0
      %5569 = vmatpush1.msra.mxu0 0.0
      %5570 = vmatprep.subr.mxu0 0.0
      %5571 = vmatpush1.msra.mxu0 0.0
      %5572 = vmatprep.subr.mxu0 0.0
      %5573 = vmatpush1.msra.mxu0 0.0
      %5574 = vmatprep.subr.mxu0 0.0
      %5575 = vmatpush1.msra.mxu0 0.0
      %5576 = vmatprep.subr.mxu0 0.0
      %5577 = vmatpush1.msra.mxu0 0.0
      %5578 = vmatprep.subr.mxu0 0.0
      %5579 = vmatpush1.msra.mxu0 0.0
      %5580 = vmatprep.subr.mxu0 0.0
      %5581 = vmatpush1.msra.mxu0 0.0
      %5582 = vmatprep.subr.mxu0 0.0
      %5583 = vmatpush1.msra.mxu0 0.0
      %5584 = vmatprep.subr.mxu0 0.0
      %5585 = vmatpush1.msra.mxu0 0.0
      %5586 = vmatprep.subr.mxu0 0.0
      %5587 = vmatpush1.msra.mxu0 0.0
      %5588 = vmatprep.subr.mxu0 0.0
      %5589 = vmatpush1.msra.mxu0 0.0
      %5590 = vmatprep.subr.mxu0 0.0
      %5591 = vmatpush1.msra.mxu0 0.0
      %5592 = vmatprep.subr.mxu0 0.0
      %5593 = vmatpush1.msra.mxu0 0.0
      %5594 = vmatprep.subr.mxu0 0.0
      %5595 = vmatpush1.msra.mxu0 0.0
      %5596 = vmatprep.subr.mxu0 0.0
      %5597 = vmatpush1.msra.mxu0 0.0
      %5598 = vmatprep.subr.mxu0 0.0
      %5599 = vmatpush1.msra.mxu0 0.0
      %5600 = vmatprep.subr.mxu0 0.0
      %5601 = vmatpush1.msra.mxu0 0.0
      %5602 = vmatprep.subr.mxu0 0.0
      %5603 = vmatpush1.msra.mxu0 0.0
      %5604 = vmatprep.subr.mxu0 0.0
      %5605 = vmatpush1.msra.mxu0 0.0
      %5606 = vmatprep.subr.mxu0 0.0
      %5607 = vmatpush1.msra.mxu0 0.0
      %5608 = vmatprep.subr.mxu0 0.0
      %5609 = vmatpush1.msra.mxu0 0.0
      %5610 = vmatprep.mubr.f32.mxu0 0.0
      %5611 = vmatmul.mubr.f32.gmra.mrb[0].mxu0 %v5448
      %v5612 = vpop.f32.mrb[0].mxu0
      %v5613 = vadd.f32 0.0, %v5612
      %v5614 = vpop.f32.mrb[0].mxu0
      %5615 = vmatprep.mubr.f32.mxu0 0.0
      %5616 = vmatmul.mubr.f32.gmra.mrb[0].mxu0 %v5451
      %v5617 = vpop.f32.mrb[0].mxu0
      %v5618 = vadd.f32 0.0, %v5617
      %v5619 = vpop.f32.mrb[0].mxu0
      %5620 = vmatprep.mubr.f32.mxu0 0.0
      %5621 = vmatmul.mubr.f32.gmra.mrb[0].mxu0 %v5454
      %v5622 = vpop.f32.mrb[0].mxu0
      %v5623 = vadd.f32 0.0, %v5622
      %v5624 = vpop.f32.mrb[0].mxu0
      %5625 = vmatprep.mubr.f32.mxu0 0.0
      %5626 = vmatmul.mubr.f32.gmra.mrb[0].mxu0 %v5457
      %v5627 = vpop.f32.mrb[0].mxu0
      %v5628 = vadd.f32 0.0, %v5627
      %v5629 = vpop.f32.mrb[0].mxu0
      %5630 = vmatprep.mubr.f32.mxu0 0.0
      %5631 = vmatmul.mubr.f32.gmra.mrb[0].mxu0 %v5460
      %v5632 = vpop.f32.mrb[0].mxu0
      %v5633 = vadd.f32 0.0, %v5632
      %v5634 = vpop.f32.mrb[0].mxu0
      %5635 = vmatprep.mubr.f32.mxu0 0.0
      %5636 = vmatmul.mubr.f32.gmra.mrb[0].mxu0 %v5463
      %v5637 = vpop.f32.mrb[0].mxu0
      %v5638 = vadd.f32 0.0, %v5637
      %v5639 = vpop.f32.mrb[0].mxu0
      %5640 = vmatprep.mubr.f32.mxu0 0.0
      %5641 = vmatmul.mubr.f32.gmra.mrb[0].mxu0 %v5466
      %v5642 = vpop.f32.mrb[0].mxu0
      %v5643 = vadd.f32 0.0, %v5642
      %v5644 = vpop.f32.mrb[0].mxu0
      %5645 = vmatprep.mubr.f32.mxu0 0.0
      %5646 = vmatmul.mubr.f32.gmra.mrb[0].mxu0 %v5469
      %v5647 = vpop.f32.mrb[0].mxu0
      %v5648 = vadd.f32 0.0, %v5647
      %v5649 = vpop.f32.mrb[0].mxu0
      %5650 = vmatprep.mubr.f32.mxu0 0.0
      %5651 = vmatmul.mubr.f32.gmra.mrb[0].mxu0 %v5472
      %v5652 = vpop.f32.mrb[0].mxu0
      %v5653 = vadd.f32 0.0, %v5652
      %v5654 = vpop.f32.mrb[0].mxu0
      %5655 = vmatprep.mubr.f32.mxu0 0.0
      %5656 = vmatmul.mubr.f32.gmra.mrb[0].mxu0 %v5475
      %v5657 = vpop.f32.mrb[0].mxu0
      %v5658 = vadd.f32 0.0, %v5657
      %v5659 = vpop.f32.mrb[0].mxu0
      %5660 = vmatprep.mubr.f32.mxu0 0.0
      %5661 = vmatmul.mubr.f32.gmra.mrb[0].mxu0 %v5478
      %v5662 = vpop.f32.mrb[0].mxu0
      %v5663 = vadd.f32 0.0, %v5662
      %v5664 = vpop.f32.mrb[0].mxu0
      %5665 = vmatprep.mubr.f32.mxu0 0.0
      %5666 = vmatmul.mubr.f32.gmra.mrb[0].mxu0 %v5481
      %v5667 = vpop.f32.mrb[0].mxu0
      %v5668 = vadd.f32 0.0, %v5667
      %v5669 = vpop.f32.mrb[0].mxu0
      %5670 = vmatprep.mubr.f32.mxu0 0.0
      %5671 = vmatmul.mubr.f32.gmra.mrb[0].mxu0 %v5484
      %v5672 = vpop.f32.mrb[0].mxu0
      %v5673 = vadd.f32 0.0, %v5672
      %v5674 = vpop.f32.mrb[0].mxu0
      %5675 = vmatprep.mubr.f32.mxu0 0.0
      %5676 = vmatmul.mubr.f32.gmra.mrb[0].mxu0 %v5487
      %v5677 = vpop.f32.mrb[0].mxu0
      %v5678 = vadd.f32 0.0, %v5677
      %v5679 = vpop.f32.mrb[0].mxu0
      %5680 = vmatprep.mubr.f32.mxu0 0.0
      %5681 = vmatmul.mubr.f32.gmra.mrb[0].mxu0 %v5490
      %v5682 = vpop.f32.mrb[0].mxu0
      %v5683 = vadd.f32 0.0, %v5682
      %v5684 = vpop.f32.mrb[0].mxu0
      %5685 = vmatprep.mubr.f32.mxu0 0.0
      %5686 = vmatmul.mubr.f32.gmra.mrb[0].mxu0 %v5493
      %v5687 = vpop.f32.mrb[0].mxu0
      %v5688 = vadd.f32 0.0, %v5687
      %v5689 = vpop.f32.mrb[0].mxu0
      %5690 = vmatprep.mubr.f32.mxu0 0.0
      %5691 = vmatmul.mubr.f32.gmra.mrb[0].mxu0 %v5496
      %v5692 = vpop.f32.mrb[0].mxu0
      %v5693 = vadd.f32 0.0, %v5692
      %v5694 = vpop.f32.mrb[0].mxu0
      %5695 = vmatprep.mubr.f32.mxu0 0.0
      %5696 = vmatmul.mubr.f32.gmra.mrb[0].mxu0 %v5499
      %v5697 = vpop.f32.mrb[0].mxu0
      %v5698 = vadd.f32 0.0, %v5697
      %v5699 = vpop.f32.mrb[0].mxu0
      %5700 = vmatprep.mubr.f32.mxu0 0.0
      %5701 = vmatmul.mubr.f32.gmra.mrb[0].mxu0 %v5502
      %v5702 = vpop.f32.mrb[0].mxu0
      %v5703 = vadd.f32 0.0, %v5702
      %v5704 = vpop.f32.mrb[0].mxu0
      %5705 = vmatprep.mubr.f32.mxu0 0.0
      %5706 = vmatmul.mubr.f32.gmra.mrb[0].mxu0 %v5505
      %v5707 = vpop.f32.mrb[0].mxu0
      %v5708 = vadd.f32 0.0, %v5707
      %v5709 = vpop.f32.mrb[0].mxu0
      %5710 = vmatprep.mubr.f32.mxu0 0.0
      %5711 = vmatmul.mubr.f32.gmra.mrb[0].mxu0 %v5508
      %v5712 = vpop.f32.mrb[0].mxu0
      %v5713 = vadd.f32 0.0, %v5712
      %v5714 = vpop.f32.mrb[0].mxu0
      %5715 = vmatprep.mubr.f32.mxu0 0.0
      %5716 = vmatmul.mubr.f32.gmra.mrb[0].mxu0 %v5511
      %v5717 = vpop.f32.mrb[0].mxu0
      %v5718 = vadd.f32 0.0, %v5717
      %v5719 = vpop.f32.mrb[0].mxu0
      %5720 = vmatprep.mubr.f32.mxu0 0.0
      %5721 = vmatmul.mubr.f32.gmra.mrb[0].mxu0 %v5514
      %v5722 = vpop.f32.mrb[0].mxu0
      %v5723 = vadd.f32 0.0, %v5722
      %v5724 = vpop.f32.mrb[0].mxu0
      %5725 = vmatprep.mubr.f32.mxu0 0.0
      %5726 = vmatmul.mubr.f32.gmra.mrb[0].mxu0 %v5517
      %v5727 = vpop.f32.mrb[0].mxu0
      %v5728 = vadd.f32 0.0, %v5727
      %v5729 = vpop.f32.mrb[0].mxu0
      %5730 = vmatprep.mubr.f32.mxu0 0.0
      %5731 = vmatmul.mubr.f32.gmra.mrb[0].mxu0 %v5520
      %v5732 = vpop.f32.mrb[0].mxu0
      %v5733 = vadd.f32 0.0, %v5732
      %v5734 = vpop.f32.mrb[0].mxu0
      %5735 = vmatprep.mubr.f32.mxu0 0.0
      %5736 = vmatmul.mubr.f32.gmra.mrb[0].mxu0 %v5523
      %v5737 = vpop.f32.mrb[0].mxu0
      %v5738 = vadd.f32 0.0, %v5737
      %v5739 = vpop.f32.mrb[0].mxu0
      %5740 = vmatprep.mubr.f32.mxu0 0.0
      %5741 = vmatmul.mubr.f32.gmra.mrb[0].mxu0 %v5526
      %v5742 = vpop.f32.mrb[0].mxu0
      %v5743 = vadd.f32 0.0, %v5742
      %v5744 = vpop.f32.mrb[0].mxu0
      %5745 = vmatprep.mubr.f32.mxu0 0.0
      %5746 = vmatmul.mubr.f32.gmra.mrb[0].mxu0 %v5529
      %v5747 = vpop.f32.mrb[0].mxu0
      %v5748 = vadd.f32 0.0, %v5747
      %v5749 = vpop.f32.mrb[0].mxu0
      %5750 = vmatprep.mubr.f32.mxu0 0.0
      %5751 = vmatmul.mubr.f32.gmra.mrb[0].mxu0 %v5532
      %v5752 = vpop.f32.mrb[0].mxu0
      %v5753 = vadd.f32 0.0, %v5752
      %v5754 = vpop.f32.mrb[0].mxu0
      %5755 = vmatprep.mubr.f32.mxu0 0.0
      %5756 = vmatmul.mubr.f32.gmra.mrb[0].mxu0 %v5535
      %v5757 = vpop.f32.mrb[0].mxu0
      %v5758 = vadd.f32 0.0, %v5757
      %v5759 = vpop.f32.mrb[0].mxu0
      %5760 = vmatprep.mubr.f32.mxu0 0.0
      %5761 = vmatmul.mubr.f32.gmra.mrb[0].mxu0 %v5538
      %v5762 = vpop.f32.mrb[0].mxu0
      %v5763 = vadd.f32 0.0, %v5762
      %v5764 = vpop.f32.mrb[0].mxu0
      %5765 = vmatprep.mubr.f32.mxu0 0.0
      %5766 = vmatmul.mubr.f32.gmra.mrb[0].mxu0 %v5541
      %v5767 = vpop.f32.mrb[0].mxu0
      %v5768 = vadd.f32 0.0, %v5767
      %v5769 = vpop.f32.mrb[0].mxu0
      %5770 = vdwg.mxu0
      %v5771 = vadd.f32 %v5381, %v5613
      %v5772 = vadd.f32 %v5382, %v5618
      %v5773 = vadd.f32 %v5383, %v5623
      %v5774 = vadd.f32 %v5384, %v5628
      %v5775 = vadd.f32 %v5385, %v5633
      %v5776 = vadd.f32 %v5386, %v5638
      %v5777 = vadd.f32 %v5387, %v5643
      %v5778 = vadd.f32 %v5388, %v5648
      %v5779 = vadd.f32 %v5389, %v5653
      %v5780 = vadd.f32 %v5390, %v5658
      %v5781 = vadd.f32 %v5391, %v5663
      %v5782 = vadd.f32 %v5392, %v5668
      %v5783 = vadd.f32 %v5393, %v5673
      %v5784 = vadd.f32 %v5394, %v5678
      %v5785 = vadd.f32 %v5395, %v5683
      %v5786 = vadd.f32 %v5396, %v5688
      %v5787 = vadd.f32 %v5397, %v5693
      %v5788 = vadd.f32 %v5398, %v5698
      %v5789 = vadd.f32 %v5399, %v5703
      %v5790 = vadd.f32 %v5400, %v5708
      %v5791 = vadd.f32 %v5401, %v5713
      %v5792 = vadd.f32 %v5402, %v5718
      %v5793 = vadd.f32 %v5403, %v5723
      %v5794 = vadd.f32 %v5404, %v5728
      %v5795 = vadd.f32 %v5405, %v5733
      %v5796 = vadd.f32 %v5406, %v5738
      %v5797 = vadd.f32 %v5407, %v5743
      %v5798 = vadd.f32 %v5408, %v5748
      %v5799 = vadd.f32 %v5409, %v5753
      %v5800 = vadd.f32 %v5410, %v5758
      %v5801 = vadd.f32 %v5411, %v5763
      %v5802 = vadd.f32 %v5412, %v5768
      %v5803 = vld [vmem:[%s257 + $0x1] sm:$0xff]
      %v5804 = vld [vmem:[%s257 + $0x9] sm:$0xff]
      %v5805 = vld [vmem:[%s257 + $0x19] sm:$0xff]
      %v5806 = vld [vmem:[%s257 + $0x21] sm:$0xff]
      %v5807 = vld [vmem:[%s257 + $0x31] sm:$0xff]
      %v5808 = vld [vmem:[%s257 + $0x39] sm:$0xff]
      %v5809 = vld [vmem:[%s257 + $0x49] sm:$0xff]
      %v5810 = vld [vmem:[%s257 + $0x51] sm:$0xff]
      %v5811 = vld [vmem:[%s257 + $0x61] sm:$0xff]
      %v5812 = vld [vmem:[%s257 + $0x69] sm:$0xff]
      %v5813 = vld [vmem:[%s257 + $0x79] sm:$0xff]
      %v5814 = vld [vmem:[%s257 + $0x81] sm:$0xff]
      %v5815 = vld [vmem:[%s257 + $0x91] sm:$0xff]
      %v5816 = vld [vmem:[%s257 + $0x99] sm:$0xff]
      %v5817 = vld [vmem:[%s257 + $0xa9] sm:$0xff]
      %v5818 = vld [vmem:[%s257 + $0xb1] sm:$0xff]
      %v5819 = vld [vmem:[%s257 + $0xc1] sm:$0xff]
      %v5820 = vld [vmem:[%s257 + $0xc9] sm:$0xff]
      %v5821 = vld [vmem:[%s257 + $0xd9] sm:$0xff]
      %v5822 = vld [vmem:[%s257 + $0xe1] sm:$0xff]
      %v5823 = vld [vmem:[%s257 + $0xf1] sm:$0xff]
      %v5824 = vld [vmem:[%s257 + $0xf9] sm:$0xff]
      %v5825 = vld [vmem:[%s257 + $0x109] sm:$0xff]
      %v5826 = vld [vmem:[%s257 + $0x111] sm:$0xff]
      %v5827 = vld [vmem:[%s257 + $0x121] sm:$0xff]
      %v5828 = vld [vmem:[%s257 + $0x129] sm:$0xff]
      %v5829 = vld [vmem:[%s257 + $0x139] sm:$0xff]
      %v5830 = vld [vmem:[%s257 + $0x141] sm:$0xff]
      %v5831 = vld [vmem:[%s257 + $0x151] sm:$0xff]
      %v5832 = vld [vmem:[%s257 + $0x159] sm:$0xff]
      %v5833 = vld [vmem:[%s257 + $0x169] sm:$0xff]
      %v5834 = vld [vmem:[%s257 + $0x171] sm:$0xff]
      %s5835 = scalar_lea.vmem %s3, 16
      %v5836 = vld [vmem:[%s5835] sm:$0xf]
      %v5838 = vsel %vm258, %v5803, 0
      %v5841 = vsel %vm258, %v5804, 0
      %v5844 = vsel %vm258, %v5805, 0
      %v5847 = vsel %vm258, %v5806, 0
      %v5850 = vsel %vm258, %v5807, 0
      %v5853 = vsel %vm258, %v5808, 0
      %v5856 = vsel %vm258, %v5809, 0
      %v5859 = vsel %vm258, %v5810, 0
      %v5862 = vsel %vm258, %v5811, 0
      %v5865 = vsel %vm258, %v5812, 0
      %v5868 = vsel %vm258, %v5813, 0
      %v5871 = vsel %vm258, %v5814, 0
      %v5874 = vsel %vm258, %v5815, 0
      %v5877 = vsel %vm258, %v5816, 0
      %v5880 = vsel %vm258, %v5817, 0
      %v5883 = vsel %vm258, %v5818, 0
      %v5886 = vsel %vm258, %v5819, 0
      %v5889 = vsel %vm258, %v5820, 0
      %v5892 = vsel %vm258, %v5821, 0
      %v5895 = vsel %vm258, %v5822, 0
      %v5898 = vsel %vm258, %v5823, 0
      %v5901 = vsel %vm258, %v5824, 0
      %v5904 = vsel %vm258, %v5825, 0
      %v5907 = vsel %vm258, %v5826, 0
      %v5910 = vsel %vm258, %v5827, 0
      %v5913 = vsel %vm258, %v5828, 0
      %v5916 = vsel %vm258, %v5829, 0
      %v5919 = vsel %vm258, %v5830, 0
      %v5922 = vsel %vm258, %v5831, 0
      %v5925 = vsel %vm258, %v5832, 0
      %v5928 = vsel %vm258, %v5833, 0
      %v5931 = vsel %vm258, %v5834, 0
      %v5934 = vsel %vm539, %v5836, 0
      %5936 = vmatprep.subr.mxu0 0.0
      %5937 = vmatpush1.msra.mxu0 %v5934
      %5938 = vmatprep.subr.mxu0 0.0
      %5939 = vmatpush1.msra.mxu0 0.0
      %5940 = vmatprep.subr.mxu0 0.0
      %5941 = vmatpush1.msra.mxu0 0.0
      %5942 = vmatprep.subr.mxu0 0.0
      %5943 = vmatpush1.msra.mxu0 0.0
      %5944 = vmatprep.subr.mxu0 0.0
      %5945 = vmatpush1.msra.mxu0 0.0
      %5946 = vmatprep.subr.mxu0 0.0
      %5947 = vmatpush1.msra.mxu0 0.0
      %5948 = vmatprep.subr.mxu0 0.0
      %5949 = vmatpush1.msra.mxu0 0.0
      %5950 = vmatprep.subr.mxu0 0.0
      %5951 = vmatpush1.msra.mxu0 0.0
      %5952 = vmatprep.subr.mxu0 0.0
      %5953 = vmatpush1.msra.mxu0 0.0
      %5954 = vmatprep.subr.mxu0 0.0
      %5955 = vmatpush1.msra.mxu0 0.0
      %5956 = vmatprep.subr.mxu0 0.0
      %5957 = vmatpush1.msra.mxu0 0.0
      %5958 = vmatprep.subr.mxu0 0.0
      %5959 = vmatpush1.msra.mxu0 0.0
      %5960 = vmatprep.subr.mxu0 0.0
      %5961 = vmatpush1.msra.mxu0 0.0
      %5962 = vmatprep.subr.mxu0 0.0
      %5963 = vmatpush1.msra.mxu0 0.0
      %5964 = vmatprep.subr.mxu0 0.0
      %5965 = vmatpush1.msra.mxu0 0.0
      %5966 = vmatprep.subr.mxu0 0.0
      %5967 = vmatpush1.msra.mxu0 0.0
      %5968 = vmatprep.subr.mxu0 0.0
      %5969 = vmatpush1.msra.mxu0 0.0
      %5970 = vmatprep.subr.mxu0 0.0
      %5971 = vmatpush1.msra.mxu0 0.0
      %5972 = vmatprep.subr.mxu0 0.0
      %5973 = vmatpush1.msra.mxu0 0.0
      %5974 = vmatprep.subr.mxu0 0.0
      %5975 = vmatpush1.msra.mxu0 0.0
      %5976 = vmatprep.subr.mxu0 0.0
      %5977 = vmatpush1.msra.mxu0 0.0
      %5978 = vmatprep.subr.mxu0 0.0
      %5979 = vmatpush1.msra.mxu0 0.0
      %5980 = vmatprep.subr.mxu0 0.0
      %5981 = vmatpush1.msra.mxu0 0.0
      %5982 = vmatprep.subr.mxu0 0.0
      %5983 = vmatpush1.msra.mxu0 0.0
      %5984 = vmatprep.subr.mxu0 0.0
      %5985 = vmatpush1.msra.mxu0 0.0
      %5986 = vmatprep.subr.mxu0 0.0
      %5987 = vmatpush1.msra.mxu0 0.0
      %5988 = vmatprep.subr.mxu0 0.0
      %5989 = vmatpush1.msra.mxu0 0.0
      %5990 = vmatprep.subr.mxu0 0.0
      %5991 = vmatpush1.msra.mxu0 0.0
      %5992 = vmatprep.subr.mxu0 0.0
      %5993 = vmatpush1.msra.mxu0 0.0
      %5994 = vmatprep.subr.mxu0 0.0
      %5995 = vmatpush1.msra.mxu0 0.0
      %5996 = vmatprep.subr.mxu0 0.0
      %5997 = vmatpush1.msra.mxu0 0.0
      %5998 = vmatprep.subr.mxu0 0.0
      %5999 = vmatpush1.msra.mxu0 0.0
      %6000 = vmatprep.mubr.f32.mxu0 0.0
      %6001 = vmatmul.mubr.f32.gmra.mrb[0].mxu0 %v5838
      %v6002 = vpop.f32.mrb[0].mxu0
      %v6003 = vadd.f32 0.0, %v6002
      %v6004 = vpop.f32.mrb[0].mxu0
      %6005 = vmatprep.mubr.f32.mxu0 0.0
      %6006 = vmatmul.mubr.f32.gmra.mrb[0].mxu0 %v5841
      %v6007 = vpop.f32.mrb[0].mxu0
      %v6008 = vadd.f32 0.0, %v6007
      %v6009 = vpop.f32.mrb[0].mxu0
      %6010 = vmatprep.mubr.f32.mxu0 0.0
      %6011 = vmatmul.mubr.f32.gmra.mrb[0].mxu0 %v5844
      %v6012 = vpop.f32.mrb[0].mxu0
      %v6013 = vadd.f32 0.0, %v6012
      %v6014 = vpop.f32.mrb[0].mxu0
      %6015 = vmatprep.mubr.f32.mxu0 0.0
      %6016 = vmatmul.mubr.f32.gmra.mrb[0].mxu0 %v5847
      %v6017 = vpop.f32.mrb[0].mxu0
      %v6018 = vadd.f32 0.0, %v6017
      %v6019 = vpop.f32.mrb[0].mxu0
      %6020 = vmatprep.mubr.f32.mxu0 0.0
      %6021 = vmatmul.mubr.f32.gmra.mrb[0].mxu0 %v5850
      %v6022 = vpop.f32.mrb[0].mxu0
      %v6023 = vadd.f32 0.0, %v6022
      %v6024 = vpop.f32.mrb[0].mxu0
      %6025 = vmatprep.mubr.f32.mxu0 0.0
      %6026 = vmatmul.mubr.f32.gmra.mrb[0].mxu0 %v5853
      %v6027 = vpop.f32.mrb[0].mxu0
      %v6028 = vadd.f32 0.0, %v6027
      %v6029 = vpop.f32.mrb[0].mxu0
      %6030 = vmatprep.mubr.f32.mxu0 0.0
      %6031 = vmatmul.mubr.f32.gmra.mrb[0].mxu0 %v5856
      %v6032 = vpop.f32.mrb[0].mxu0
      %v6033 = vadd.f32 0.0, %v6032
      %v6034 = vpop.f32.mrb[0].mxu0
      %6035 = vmatprep.mubr.f32.mxu0 0.0
      %6036 = vmatmul.mubr.f32.gmra.mrb[0].mxu0 %v5859
      %v6037 = vpop.f32.mrb[0].mxu0
      %v6038 = vadd.f32 0.0, %v6037
      %v6039 = vpop.f32.mrb[0].mxu0
      %6040 = vmatprep.mubr.f32.mxu0 0.0
      %6041 = vmatmul.mubr.f32.gmra.mrb[0].mxu0 %v5862
      %v6042 = vpop.f32.mrb[0].mxu0
      %v6043 = vadd.f32 0.0, %v6042
      %v6044 = vpop.f32.mrb[0].mxu0
      %6045 = vmatprep.mubr.f32.mxu0 0.0
      %6046 = vmatmul.mubr.f32.gmra.mrb[0].mxu0 %v5865
      %v6047 = vpop.f32.mrb[0].mxu0
      %v6048 = vadd.f32 0.0, %v6047
      %v6049 = vpop.f32.mrb[0].mxu0
      %6050 = vmatprep.mubr.f32.mxu0 0.0
      %6051 = vmatmul.mubr.f32.gmra.mrb[0].mxu0 %v5868
      %v6052 = vpop.f32.mrb[0].mxu0
      %v6053 = vadd.f32 0.0, %v6052
      %v6054 = vpop.f32.mrb[0].mxu0
      %6055 = vmatprep.mubr.f32.mxu0 0.0
      %6056 = vmatmul.mubr.f32.gmra.mrb[0].mxu0 %v5871
      %v6057 = vpop.f32.mrb[0].mxu0
      %v6058 = vadd.f32 0.0, %v6057
      %v6059 = vpop.f32.mrb[0].mxu0
      %6060 = vmatprep.mubr.f32.mxu0 0.0
      %6061 = vmatmul.mubr.f32.gmra.mrb[0].mxu0 %v5874
      %v6062 = vpop.f32.mrb[0].mxu0
      %v6063 = vadd.f32 0.0, %v6062
      %v6064 = vpop.f32.mrb[0].mxu0
      %6065 = vmatprep.mubr.f32.mxu0 0.0
      %6066 = vmatmul.mubr.f32.gmra.mrb[0].mxu0 %v5877
      %v6067 = vpop.f32.mrb[0].mxu0
      %v6068 = vadd.f32 0.0, %v6067
      %v6069 = vpop.f32.mrb[0].mxu0
      %6070 = vmatprep.mubr.f32.mxu0 0.0
      %6071 = vmatmul.mubr.f32.gmra.mrb[0].mxu0 %v5880
      %v6072 = vpop.f32.mrb[0].mxu0
      %v6073 = vadd.f32 0.0, %v6072
      %v6074 = vpop.f32.mrb[0].mxu0
      %6075 = vmatprep.mubr.f32.mxu0 0.0
      %6076 = vmatmul.mubr.f32.gmra.mrb[0].mxu0 %v5883
      %v6077 = vpop.f32.mrb[0].mxu0
      %v6078 = vadd.f32 0.0, %v6077
      %v6079 = vpop.f32.mrb[0].mxu0
      %6080 = vmatprep.mubr.f32.mxu0 0.0
      %6081 = vmatmul.mubr.f32.gmra.mrb[0].mxu0 %v5886
      %v6082 = vpop.f32.mrb[0].mxu0
      %v6083 = vadd.f32 0.0, %v6082
      %v6084 = vpop.f32.mrb[0].mxu0
      %6085 = vmatprep.mubr.f32.mxu0 0.0
      %6086 = vmatmul.mubr.f32.gmra.mrb[0].mxu0 %v5889
      %v6087 = vpop.f32.mrb[0].mxu0
      %v6088 = vadd.f32 0.0, %v6087
      %v6089 = vpop.f32.mrb[0].mxu0
      %6090 = vmatprep.mubr.f32.mxu0 0.0
      %6091 = vmatmul.mubr.f32.gmra.mrb[0].mxu0 %v5892
      %v6092 = vpop.f32.mrb[0].mxu0
      %v6093 = vadd.f32 0.0, %v6092
      %v6094 = vpop.f32.mrb[0].mxu0
      %6095 = vmatprep.mubr.f32.mxu0 0.0
      %6096 = vmatmul.mubr.f32.gmra.mrb[0].mxu0 %v5895
      %v6097 = vpop.f32.mrb[0].mxu0
      %v6098 = vadd.f32 0.0, %v6097
      %v6099 = vpop.f32.mrb[0].mxu0
      %6100 = vmatprep.mubr.f32.mxu0 0.0
      %6101 = vmatmul.mubr.f32.gmra.mrb[0].mxu0 %v5898
      %v6102 = vpop.f32.mrb[0].mxu0
      %v6103 = vadd.f32 0.0, %v6102
      %v6104 = vpop.f32.mrb[0].mxu0
      %6105 = vmatprep.mubr.f32.mxu0 0.0
      %6106 = vmatmul.mubr.f32.gmra.mrb[0].mxu0 %v5901
      %v6107 = vpop.f32.mrb[0].mxu0
      %v6108 = vadd.f32 0.0, %v6107
      %v6109 = vpop.f32.mrb[0].mxu0
      %6110 = vmatprep.mubr.f32.mxu0 0.0
      %6111 = vmatmul.mubr.f32.gmra.mrb[0].mxu0 %v5904
      %v6112 = vpop.f32.mrb[0].mxu0
      %v6113 = vadd.f32 0.0, %v6112
      %v6114 = vpop.f32.mrb[0].mxu0
      %6115 = vmatprep.mubr.f32.mxu0 0.0
      %6116 = vmatmul.mubr.f32.gmra.mrb[0].mxu0 %v5907
      %v6117 = vpop.f32.mrb[0].mxu0
      %v6118 = vadd.f32 0.0, %v6117
      %v6119 = vpop.f32.mrb[0].mxu0
      %6120 = vmatprep.mubr.f32.mxu0 0.0
      %6121 = vmatmul.mubr.f32.gmra.mrb[0].mxu0 %v5910
      %v6122 = vpop.f32.mrb[0].mxu0
      %v6123 = vadd.f32 0.0, %v6122
      %v6124 = vpop.f32.mrb[0].mxu0
      %6125 = vmatprep.mubr.f32.mxu0 0.0
      %6126 = vmatmul.mubr.f32.gmra.mrb[0].mxu0 %v5913
      %v6127 = vpop.f32.mrb[0].mxu0
      %v6128 = vadd.f32 0.0, %v6127
      %v6129 = vpop.f32.mrb[0].mxu0
      %6130 = vmatprep.mubr.f32.mxu0 0.0
      %6131 = vmatmul.mubr.f32.gmra.mrb[0].mxu0 %v5916
      %v6132 = vpop.f32.mrb[0].mxu0
      %v6133 = vadd.f32 0.0, %v6132
      %v6134 = vpop.f32.mrb[0].mxu0
      %6135 = vmatprep.mubr.f32.mxu0 0.0
      %6136 = vmatmul.mubr.f32.gmra.mrb[0].mxu0 %v5919
      %v6137 = vpop.f32.mrb[0].mxu0
      %v6138 = vadd.f32 0.0, %v6137
      %v6139 = vpop.f32.mrb[0].mxu0
      %6140 = vmatprep.mubr.f32.mxu0 0.0
      %6141 = vmatmul.mubr.f32.gmra.mrb[0].mxu0 %v5922
      %v6142 = vpop.f32.mrb[0].mxu0
      %v6143 = vadd.f32 0.0, %v6142
      %v6144 = vpop.f32.mrb[0].mxu0
      %6145 = vmatprep.mubr.f32.mxu0 0.0
      %6146 = vmatmul.mubr.f32.gmra.mrb[0].mxu0 %v5925
      %v6147 = vpop.f32.mrb[0].mxu0
      %v6148 = vadd.f32 0.0, %v6147
      %v6149 = vpop.f32.mrb[0].mxu0
      %6150 = vmatprep.mubr.f32.mxu0 0.0
      %6151 = vmatmul.mubr.f32.gmra.mrb[0].mxu0 %v5928
      %v6152 = vpop.f32.mrb[0].mxu0
      %v6153 = vadd.f32 0.0, %v6152
      %v6154 = vpop.f32.mrb[0].mxu0
      %6155 = vmatprep.mubr.f32.mxu0 0.0
      %6156 = vmatmul.mubr.f32.gmra.mrb[0].mxu0 %v5931
      %v6157 = vpop.f32.mrb[0].mxu0
      %v6158 = vadd.f32 0.0, %v6157
      %v6159 = vpop.f32.mrb[0].mxu0
      %6160 = vdwg.mxu0
      %v6161 = vadd.f32 %v5771, %v6003
      %v6162 = vadd.f32 %v5772, %v6008
      %v6163 = vadd.f32 %v5773, %v6013
      %v6164 = vadd.f32 %v5774, %v6018
      %v6165 = vadd.f32 %v5775, %v6023
      %v6166 = vadd.f32 %v5776, %v6028
      %v6167 = vadd.f32 %v5777, %v6033
      %v6168 = vadd.f32 %v5778, %v6038
      %v6169 = vadd.f32 %v5779, %v6043
      %v6170 = vadd.f32 %v5780, %v6048
      %v6171 = vadd.f32 %v5781, %v6053
      %v6172 = vadd.f32 %v5782, %v6058
      %v6173 = vadd.f32 %v5783, %v6063
      %v6174 = vadd.f32 %v5784, %v6068
      %v6175 = vadd.f32 %v5785, %v6073
      %v6176 = vadd.f32 %v5786, %v6078
      %v6177 = vadd.f32 %v5787, %v6083
      %v6178 = vadd.f32 %v5788, %v6088
      %v6179 = vadd.f32 %v5789, %v6093
      %v6180 = vadd.f32 %v5790, %v6098
      %v6181 = vadd.f32 %v5791, %v6103
      %v6182 = vadd.f32 %v5792, %v6108
      %v6183 = vadd.f32 %v5793, %v6113
      %v6184 = vadd.f32 %v5794, %v6118
      %v6185 = vadd.f32 %v5795, %v6123
      %v6186 = vadd.f32 %v5796, %v6128
      %v6187 = vadd.f32 %v5797, %v6133
      %v6188 = vadd.f32 %v5798, %v6138
      %v6189 = vadd.f32 %v5799, %v6143
      %v6190 = vadd.f32 %v5800, %v6148
      %v6191 = vadd.f32 %v5801, %v6153
      %v6192 = vadd.f32 %v5802, %v6158
      %v6193 = vld [vmem:[%s257 + $0x2] sm:$0xff]
      %v6194 = vld [vmem:[%s257 + $0xa] sm:$0xff]
      %v6195 = vld [vmem:[%s257 + $0x1a] sm:$0xff]
      %v6196 = vld [vmem:[%s257 + $0x22] sm:$0xff]
      %v6197 = vld [vmem:[%s257 + $0x32] sm:$0xff]
      %v6198 = vld [vmem:[%s257 + $0x3a] sm:$0xff]
      %v6199 = vld [vmem:[%s257 + $0x4a] sm:$0xff]
      %v6200 = vld [vmem:[%s257 + $0x52] sm:$0xff]
      %v6201 = vld [vmem:[%s257 + $0x62] sm:$0xff]
      %v6202 = vld [vmem:[%s257 + $0x6a] sm:$0xff]
      %v6203 = vld [vmem:[%s257 + $0x7a] sm:$0xff]
      %v6204 = vld [vmem:[%s257 + $0x82] sm:$0xff]
      %v6205 = vld [vmem:[%s257 + $0x92] sm:$0xff]
      %v6206 = vld [vmem:[%s257 + $0x9a] sm:$0xff]
      %v6207 = vld [vmem:[%s257 + $0xaa] sm:$0xff]
      %v6208 = vld [vmem:[%s257 + $0xb2] sm:$0xff]
      %v6209 = vld [vmem:[%s257 + $0xc2] sm:$0xff]
      %v6210 = vld [vmem:[%s257 + $0xca] sm:$0xff]
      %v6211 = vld [vmem:[%s257 + $0xda] sm:$0xff]
      %v6212 = vld [vmem:[%s257 + $0xe2] sm:$0xff]
      %v6213 = vld [vmem:[%s257 + $0xf2] sm:$0xff]
      %v6214 = vld [vmem:[%s257 + $0xfa] sm:$0xff]
      %v6215 = vld [vmem:[%s257 + $0x10a] sm:$0xff]
      %v6216 = vld [vmem:[%s257 + $0x112] sm:$0xff]
      %v6217 = vld [vmem:[%s257 + $0x122] sm:$0xff]
      %v6218 = vld [vmem:[%s257 + $0x12a] sm:$0xff]
      %v6219 = vld [vmem:[%s257 + $0x13a] sm:$0xff]
      %v6220 = vld [vmem:[%s257 + $0x142] sm:$0xff]
      %v6221 = vld [vmem:[%s257 + $0x152] sm:$0xff]
      %v6222 = vld [vmem:[%s257 + $0x15a] sm:$0xff]
      %v6223 = vld [vmem:[%s257 + $0x16a] sm:$0xff]
      %v6224 = vld [vmem:[%s257 + $0x172] sm:$0xff]
      %s6225 = scalar_lea.vmem %s3, 20
      %v6226 = vld [vmem:[%s6225] sm:$0xf]
      %v6228 = vsel %vm258, %v6193, 0
      %v6231 = vsel %vm258, %v6194, 0
      %v6234 = vsel %vm258, %v6195, 0
      %v6237 = vsel %vm258, %v6196, 0
      %v6240 = vsel %vm258, %v6197, 0
      %v6243 = vsel %vm258, %v6198, 0
      %v6246 = vsel %vm258, %v6199, 0
      %v6249 = vsel %vm258, %v6200, 0
      %v6252 = vsel %vm258, %v6201, 0
      %v6255 = vsel %vm258, %v6202, 0
      %v6258 = vsel %vm258, %v6203, 0
      %v6261 = vsel %vm258, %v6204, 0
      %v6264 = vsel %vm258, %v6205, 0
      %v6267 = vsel %vm258, %v6206, 0
      %v6270 = vsel %vm258, %v6207, 0
      %v6273 = vsel %vm258, %v6208, 0
      %v6276 = vsel %vm258, %v6209, 0
      %v6279 = vsel %vm258, %v6210, 0
      %v6282 = vsel %vm258, %v6211, 0
      %v6285 = vsel %vm258, %v6212, 0
      %v6288 = vsel %vm258, %v6213, 0
      %v6291 = vsel %vm258, %v6214, 0
      %v6294 = vsel %vm258, %v6215, 0
      %v6297 = vsel %vm258, %v6216, 0
      %v6300 = vsel %vm258, %v6217, 0
      %v6303 = vsel %vm258, %v6218, 0
      %v6306 = vsel %vm258, %v6219, 0
      %v6309 = vsel %vm258, %v6220, 0
      %v6312 = vsel %vm258, %v6221, 0
      %v6315 = vsel %vm258, %v6222, 0
      %v6318 = vsel %vm258, %v6223, 0
      %v6321 = vsel %vm258, %v6224, 0
      %v6324 = vsel %vm539, %v6226, 0
      %6326 = vmatprep.subr.mxu0 0.0
      %6327 = vmatpush1.msra.mxu0 %v6324
      %6328 = vmatprep.subr.mxu0 0.0
      %6329 = vmatpush1.msra.mxu0 0.0
      %6330 = vmatprep.subr.mxu0 0.0
      %6331 = vmatpush1.msra.mxu0 0.0
      %6332 = vmatprep.subr.mxu0 0.0
      %6333 = vmatpush1.msra.mxu0 0.0
      %6334 = vmatprep.subr.mxu0 0.0
      %6335 = vmatpush1.msra.mxu0 0.0
      %6336 = vmatprep.subr.mxu0 0.0
      %6337 = vmatpush1.msra.mxu0 0.0
      %6338 = vmatprep.subr.mxu0 0.0
      %6339 = vmatpush1.msra.mxu0 0.0
      %6340 = vmatprep.subr.mxu0 0.0
      %6341 = vmatpush1.msra.mxu0 0.0
      %6342 = vmatprep.subr.mxu0 0.0
      %6343 = vmatpush1.msra.mxu0 0.0
      %6344 = vmatprep.subr.mxu0 0.0
      %6345 = vmatpush1.msra.mxu0 0.0
      %6346 = vmatprep.subr.mxu0 0.0
      %6347 = vmatpush1.msra.mxu0 0.0
      %6348 = vmatprep.subr.mxu0 0.0
      %6349 = vmatpush1.msra.mxu0 0.0
      %6350 = vmatprep.subr.mxu0 0.0
      %6351 = vmatpush1.msra.mxu0 0.0
      %6352 = vmatprep.subr.mxu0 0.0
      %6353 = vmatpush1.msra.mxu0 0.0
      %6354 = vmatprep.subr.mxu0 0.0
      %6355 = vmatpush1.msra.mxu0 0.0
      %6356 = vmatprep.subr.mxu0 0.0
      %6357 = vmatpush1.msra.mxu0 0.0
      %6358 = vmatprep.subr.mxu0 0.0
      %6359 = vmatpush1.msra.mxu0 0.0
      %6360 = vmatprep.subr.mxu0 0.0
      %6361 = vmatpush1.msra.mxu0 0.0
      %6362 = vmatprep.subr.mxu0 0.0
      %6363 = vmatpush1.msra.mxu0 0.0
      %6364 = vmatprep.subr.mxu0 0.0
      %6365 = vmatpush1.msra.mxu0 0.0
      %6366 = vmatprep.subr.mxu0 0.0
      %6367 = vmatpush1.msra.mxu0 0.0
      %6368 = vmatprep.subr.mxu0 0.0
      %6369 = vmatpush1.msra.mxu0 0.0
      %6370 = vmatprep.subr.mxu0 0.0
      %6371 = vmatpush1.msra.mxu0 0.0
      %6372 = vmatprep.subr.mxu0 0.0
      %6373 = vmatpush1.msra.mxu0 0.0
      %6374 = vmatprep.subr.mxu0 0.0
      %6375 = vmatpush1.msra.mxu0 0.0
      %6376 = vmatprep.subr.mxu0 0.0
      %6377 = vmatpush1.msra.mxu0 0.0
      %6378 = vmatprep.subr.mxu0 0.0
      %6379 = vmatpush1.msra.mxu0 0.0
      %6380 = vmatprep.subr.mxu0 0.0
      %6381 = vmatpush1.msra.mxu0 0.0
      %6382 = vmatprep.subr.mxu0 0.0
      %6383 = vmatpush1.msra.mxu0 0.0
      %6384 = vmatprep.subr.mxu0 0.0
      %6385 = vmatpush1.msra.mxu0 0.0
      %6386 = vmatprep.subr.mxu0 0.0
      %6387 = vmatpush1.msra.mxu0 0.0
      %6388 = vmatprep.subr.mxu0 0.0
      %6389 = vmatpush1.msra.mxu0 0.0
      %6390 = vmatprep.mubr.f32.mxu0 0.0
      %6391 = vmatmul.mubr.f32.gmra.mrb[0].mxu0 %v6228
      %v6392 = vpop.f32.mrb[0].mxu0
      %v6393 = vadd.f32 0.0, %v6392
      %v6394 = vpop.f32.mrb[0].mxu0
      %6395 = vmatprep.mubr.f32.mxu0 0.0
      %6396 = vmatmul.mubr.f32.gmra.mrb[0].mxu0 %v6231
      %v6397 = vpop.f32.mrb[0].mxu0
      %v6398 = vadd.f32 0.0, %v6397
      %v6399 = vpop.f32.mrb[0].mxu0
      %6400 = vmatprep.mubr.f32.mxu0 0.0
      %6401 = vmatmul.mubr.f32.gmra.mrb[0].mxu0 %v6234
      %v6402 = vpop.f32.mrb[0].mxu0
      %v6403 = vadd.f32 0.0, %v6402
      %v6404 = vpop.f32.mrb[0].mxu0
      %6405 = vmatprep.mubr.f32.mxu0 0.0
      %6406 = vmatmul.mubr.f32.gmra.mrb[0].mxu0 %v6237
      %v6407 = vpop.f32.mrb[0].mxu0
      %v6408 = vadd.f32 0.0, %v6407
      %v6409 = vpop.f32.mrb[0].mxu0
      %6410 = vmatprep.mubr.f32.mxu0 0.0
      %6411 = vmatmul.mubr.f32.gmra.mrb[0].mxu0 %v6240
      %v6412 = vpop.f32.mrb[0].mxu0
      %v6413 = vadd.f32 0.0, %v6412
      %v6414 = vpop.f32.mrb[0].mxu0
      %6415 = vmatprep.mubr.f32.mxu0 0.0
      %6416 = vmatmul.mubr.f32.gmra.mrb[0].mxu0 %v6243
      %v6417 = vpop.f32.mrb[0].mxu0
      %v6418 = vadd.f32 0.0, %v6417
      %v6419 = vpop.f32.mrb[0].mxu0
      %6420 = vmatprep.mubr.f32.mxu0 0.0
      %6421 = vmatmul.mubr.f32.gmra.mrb[0].mxu0 %v6246
      %v6422 = vpop.f32.mrb[0].mxu0
      %v6423 = vadd.f32 0.0, %v6422
      %v6424 = vpop.f32.mrb[0].mxu0
      %6425 = vmatprep.mubr.f32.mxu0 0.0
      %6426 = vmatmul.mubr.f32.gmra.mrb[0].mxu0 %v6249
      %v6427 = vpop.f32.mrb[0].mxu0
      %v6428 = vadd.f32 0.0, %v6427
      %v6429 = vpop.f32.mrb[0].mxu0
      %6430 = vmatprep.mubr.f32.mxu0 0.0
      %6431 = vmatmul.mubr.f32.gmra.mrb[0].mxu0 %v6252
      %v6432 = vpop.f32.mrb[0].mxu0
      %v6433 = vadd.f32 0.0, %v6432
      %v6434 = vpop.f32.mrb[0].mxu0
      %6435 = vmatprep.mubr.f32.mxu0 0.0
      %6436 = vmatmul.mubr.f32.gmra.mrb[0].mxu0 %v6255
      %v6437 = vpop.f32.mrb[0].mxu0
      %v6438 = vadd.f32 0.0, %v6437
      %v6439 = vpop.f32.mrb[0].mxu0
      %6440 = vmatprep.mubr.f32.mxu0 0.0
      %6441 = vmatmul.mubr.f32.gmra.mrb[0].mxu0 %v6258
      %v6442 = vpop.f32.mrb[0].mxu0
      %v6443 = vadd.f32 0.0, %v6442
      %v6444 = vpop.f32.mrb[0].mxu0
      %6445 = vmatprep.mubr.f32.mxu0 0.0
      %6446 = vmatmul.mubr.f32.gmra.mrb[0].mxu0 %v6261
      %v6447 = vpop.f32.mrb[0].mxu0
      %v6448 = vadd.f32 0.0, %v6447
      %v6449 = vpop.f32.mrb[0].mxu0
      %6450 = vmatprep.mubr.f32.mxu0 0.0
      %6451 = vmatmul.mubr.f32.gmra.mrb[0].mxu0 %v6264
      %v6452 = vpop.f32.mrb[0].mxu0
      %v6453 = vadd.f32 0.0, %v6452
      %v6454 = vpop.f32.mrb[0].mxu0
      %6455 = vmatprep.mubr.f32.mxu0 0.0
      %6456 = vmatmul.mubr.f32.gmra.mrb[0].mxu0 %v6267
      %v6457 = vpop.f32.mrb[0].mxu0
      %v6458 = vadd.f32 0.0, %v6457
      %v6459 = vpop.f32.mrb[0].mxu0
      %6460 = vmatprep.mubr.f32.mxu0 0.0
      %6461 = vmatmul.mubr.f32.gmra.mrb[0].mxu0 %v6270
      %v6462 = vpop.f32.mrb[0].mxu0
      %v6463 = vadd.f32 0.0, %v6462
      %v6464 = vpop.f32.mrb[0].mxu0
      %6465 = vmatprep.mubr.f32.mxu0 0.0
      %6466 = vmatmul.mubr.f32.gmra.mrb[0].mxu0 %v6273
      %v6467 = vpop.f32.mrb[0].mxu0
      %v6468 = vadd.f32 0.0, %v6467
      %v6469 = vpop.f32.mrb[0].mxu0
      %6470 = vmatprep.mubr.f32.mxu0 0.0
      %6471 = vmatmul.mubr.f32.gmra.mrb[0].mxu0 %v6276
      %v6472 = vpop.f32.mrb[0].mxu0
      %v6473 = vadd.f32 0.0, %v6472
      %v6474 = vpop.f32.mrb[0].mxu0
      %6475 = vmatprep.mubr.f32.mxu0 0.0
      %6476 = vmatmul.mubr.f32.gmra.mrb[0].mxu0 %v6279
      %v6477 = vpop.f32.mrb[0].mxu0
      %v6478 = vadd.f32 0.0, %v6477
      %v6479 = vpop.f32.mrb[0].mxu0
      %6480 = vmatprep.mubr.f32.mxu0 0.0
      %6481 = vmatmul.mubr.f32.gmra.mrb[0].mxu0 %v6282
      %v6482 = vpop.f32.mrb[0].mxu0
      %v6483 = vadd.f32 0.0, %v6482
      %v6484 = vpop.f32.mrb[0].mxu0
      %6485 = vmatprep.mubr.f32.mxu0 0.0
      %6486 = vmatmul.mubr.f32.gmra.mrb[0].mxu0 %v6285
      %v6487 = vpop.f32.mrb[0].mxu0
      %v6488 = vadd.f32 0.0, %v6487
      %v6489 = vpop.f32.mrb[0].mxu0
      %6490 = vmatprep.mubr.f32.mxu0 0.0
      %6491 = vmatmul.mubr.f32.gmra.mrb[0].mxu0 %v6288
      %v6492 = vpop.f32.mrb[0].mxu0
      %v6493 = vadd.f32 0.0, %v6492
      %v6494 = vpop.f32.mrb[0].mxu0
      %6495 = vmatprep.mubr.f32.mxu0 0.0
      %6496 = vmatmul.mubr.f32.gmra.mrb[0].mxu0 %v6291
      %v6497 = vpop.f32.mrb[0].mxu0
      %v6498 = vadd.f32 0.0, %v6497
      %v6499 = vpop.f32.mrb[0].mxu0
      %6500 = vmatprep.mubr.f32.mxu0 0.0
      %6501 = vmatmul.mubr.f32.gmra.mrb[0].mxu0 %v6294
      %v6502 = vpop.f32.mrb[0].mxu0
      %v6503 = vadd.f32 0.0, %v6502
      %v6504 = vpop.f32.mrb[0].mxu0
      %6505 = vmatprep.mubr.f32.mxu0 0.0
      %6506 = vmatmul.mubr.f32.gmra.mrb[0].mxu0 %v6297
      %v6507 = vpop.f32.mrb[0].mxu0
      %v6508 = vadd.f32 0.0, %v6507
      %v6509 = vpop.f32.mrb[0].mxu0
      %6510 = vmatprep.mubr.f32.mxu0 0.0
      %6511 = vmatmul.mubr.f32.gmra.mrb[0].mxu0 %v6300
      %v6512 = vpop.f32.mrb[0].mxu0
      %v6513 = vadd.f32 0.0, %v6512
      %v6514 = vpop.f32.mrb[0].mxu0
      %6515 = vmatprep.mubr.f32.mxu0 0.0
      %6516 = vmatmul.mubr.f32.gmra.mrb[0].mxu0 %v6303
      %v6517 = vpop.f32.mrb[0].mxu0
      %v6518 = vadd.f32 0.0, %v6517
      %v6519 = vpop.f32.mrb[0].mxu0
      %6520 = vmatprep.mubr.f32.mxu0 0.0
      %6521 = vmatmul.mubr.f32.gmra.mrb[0].mxu0 %v6306
      %v6522 = vpop.f32.mrb[0].mxu0
      %v6523 = vadd.f32 0.0, %v6522
      %v6524 = vpop.f32.mrb[0].mxu0
      %6525 = vmatprep.mubr.f32.mxu0 0.0
      %6526 = vmatmul.mubr.f32.gmra.mrb[0].mxu0 %v6309
      %v6527 = vpop.f32.mrb[0].mxu0
      %v6528 = vadd.f32 0.0, %v6527
      %v6529 = vpop.f32.mrb[0].mxu0
      %6530 = vmatprep.mubr.f32.mxu0 0.0
      %6531 = vmatmul.mubr.f32.gmra.mrb[0].mxu0 %v6312
      %v6532 = vpop.f32.mrb[0].mxu0
      %v6533 = vadd.f32 0.0, %v6532
      %v6534 = vpop.f32.mrb[0].mxu0
      %6535 = vmatprep.mubr.f32.mxu0 0.0
      %6536 = vmatmul.mubr.f32.gmra.mrb[0].mxu0 %v6315
      %v6537 = vpop.f32.mrb[0].mxu0
      %v6538 = vadd.f32 0.0, %v6537
      %v6539 = vpop.f32.mrb[0].mxu0
      %6540 = vmatprep.mubr.f32.mxu0 0.0
      %6541 = vmatmul.mubr.f32.gmra.mrb[0].mxu0 %v6318
      %v6542 = vpop.f32.mrb[0].mxu0
      %v6543 = vadd.f32 0.0, %v6542
      %v6544 = vpop.f32.mrb[0].mxu0
      %6545 = vmatprep.mubr.f32.mxu0 0.0
      %6546 = vmatmul.mubr.f32.gmra.mrb[0].mxu0 %v6321
      %v6547 = vpop.f32.mrb[0].mxu0
      %v6548 = vadd.f32 0.0, %v6547
      %v6549 = vpop.f32.mrb[0].mxu0
      %6550 = vdwg.mxu0
      %v6551 = vadd.f32 %v6161, %v6393
      %v6552 = vadd.f32 %v6162, %v6398
      %v6553 = vadd.f32 %v6163, %v6403
      %v6554 = vadd.f32 %v6164, %v6408
      %v6555 = vadd.f32 %v6165, %v6413
      %v6556 = vadd.f32 %v6166, %v6418
      %v6557 = vadd.f32 %v6167, %v6423
      %v6558 = vadd.f32 %v6168, %v6428
      %v6559 = vadd.f32 %v6169, %v6433
      %v6560 = vadd.f32 %v6170, %v6438
      %v6561 = vadd.f32 %v6171, %v6443
      %v6562 = vadd.f32 %v6172, %v6448
      %v6563 = vadd.f32 %v6173, %v6453
      %v6564 = vadd.f32 %v6174, %v6458
      %v6565 = vadd.f32 %v6175, %v6463
      %v6566 = vadd.f32 %v6176, %v6468
      %v6567 = vadd.f32 %v6177, %v6473
      %v6568 = vadd.f32 %v6178, %v6478
      %v6569 = vadd.f32 %v6179, %v6483
      %v6570 = vadd.f32 %v6180, %v6488
      %v6571 = vadd.f32 %v6181, %v6493
      %v6572 = vadd.f32 %v6182, %v6498
      %v6573 = vadd.f32 %v6183, %v6503
      %v6574 = vadd.f32 %v6184, %v6508
      %v6575 = vadd.f32 %v6185, %v6513
      %v6576 = vadd.f32 %v6186, %v6518
      %v6577 = vadd.f32 %v6187, %v6523
      %v6578 = vadd.f32 %v6188, %v6528
      %v6579 = vadd.f32 %v6189, %v6533
      %v6580 = vadd.f32 %v6190, %v6538
      %v6581 = vadd.f32 %v6191, %v6543
      %v6582 = vadd.f32 %v6192, %v6548
      %v6583 = vld [vmem:[%s291] sm:$0xff]
      %v6584 = vld [vmem:[%s291 + $0x8] sm:$0xff]
      %v6585 = vld [vmem:[%s291 + $0x18] sm:$0xff]
      %v6586 = vld [vmem:[%s291 + $0x20] sm:$0xff]
      %v6587 = vld [vmem:[%s291 + $0x30] sm:$0xff]
      %v6588 = vld [vmem:[%s291 + $0x38] sm:$0xff]
      %v6589 = vld [vmem:[%s291 + $0x48] sm:$0xff]
      %v6590 = vld [vmem:[%s291 + $0x50] sm:$0xff]
      %v6591 = vld [vmem:[%s291 + $0x60] sm:$0xff]
      %v6592 = vld [vmem:[%s291 + $0x68] sm:$0xff]
      %v6593 = vld [vmem:[%s291 + $0x78] sm:$0xff]
      %v6594 = vld [vmem:[%s291 + $0x80] sm:$0xff]
      %v6595 = vld [vmem:[%s291 + $0x90] sm:$0xff]
      %v6596 = vld [vmem:[%s291 + $0x98] sm:$0xff]
      %v6597 = vld [vmem:[%s291 + $0xa8] sm:$0xff]
      %v6598 = vld [vmem:[%s291 + $0xb0] sm:$0xff]
      %v6599 = vld [vmem:[%s291 + $0xc0] sm:$0xff]
      %v6600 = vld [vmem:[%s291 + $0xc8] sm:$0xff]
      %v6601 = vld [vmem:[%s291 + $0xd8] sm:$0xff]
      %v6602 = vld [vmem:[%s291 + $0xe0] sm:$0xff]
      %v6603 = vld [vmem:[%s291 + $0xf0] sm:$0xff]
      %v6604 = vld [vmem:[%s291 + $0xf8] sm:$0xff]
      %v6605 = vld [vmem:[%s291 + $0x108] sm:$0xff]
      %v6606 = vld [vmem:[%s291 + $0x110] sm:$0xff]
      %v6607 = vld [vmem:[%s291 + $0x120] sm:$0xff]
      %v6608 = vld [vmem:[%s291 + $0x128] sm:$0xff]
      %v6609 = vld [vmem:[%s291 + $0x138] sm:$0xff]
      %v6610 = vld [vmem:[%s291 + $0x140] sm:$0xff]
      %v6611 = vld [vmem:[%s291 + $0x150] sm:$0xff]
      %v6612 = vld [vmem:[%s291 + $0x158] sm:$0xff]
      %v6613 = vld [vmem:[%s291 + $0x168] sm:$0xff]
      %v6614 = vld [vmem:[%s291 + $0x170] sm:$0xff]
      %s6615 = scalar_lea.vmem %s3, 24
      %v6616 = vld [vmem:[%s6615] sm:$0xf]
      %v6618 = vsel %vm258, %v6583, 0
      %v6621 = vsel %vm258, %v6584, 0
      %v6624 = vsel %vm258, %v6585, 0
      %v6627 = vsel %vm258, %v6586, 0
      %v6630 = vsel %vm258, %v6587, 0
      %v6633 = vsel %vm258, %v6588, 0
      %v6636 = vsel %vm258, %v6589, 0
      %v6639 = vsel %vm258, %v6590, 0
      %v6642 = vsel %vm258, %v6591, 0
      %v6645 = vsel %vm258, %v6592, 0
      %v6648 = vsel %vm258, %v6593, 0
      %v6651 = vsel %vm258, %v6594, 0
      %v6654 = vsel %vm258, %v6595, 0
      %v6657 = vsel %vm258, %v6596, 0
      %v6660 = vsel %vm258, %v6597, 0
      %v6663 = vsel %vm258, %v6598, 0
      %v6666 = vsel %vm258, %v6599, 0
      %v6669 = vsel %vm258, %v6600, 0
      %v6672 = vsel %vm258, %v6601, 0
      %v6675 = vsel %vm258, %v6602, 0
      %v6678 = vsel %vm258, %v6603, 0
      %v6681 = vsel %vm258, %v6604, 0
      %v6684 = vsel %vm258, %v6605, 0
      %v6687 = vsel %vm258, %v6606, 0
      %v6690 = vsel %vm258, %v6607, 0
      %v6693 = vsel %vm258, %v6608, 0
      %v6696 = vsel %vm258, %v6609, 0
      %v6699 = vsel %vm258, %v6610, 0
      %v6702 = vsel %vm258, %v6611, 0
      %v6705 = vsel %vm258, %v6612, 0
      %v6708 = vsel %vm258, %v6613, 0
      %v6711 = vsel %vm258, %v6614, 0
      %v6714 = vsel %vm539, %v6616, 0
      %6716 = vmatprep.subr.mxu0 0.0
      %6717 = vmatpush1.msra.mxu0 %v6714
      %6718 = vmatprep.subr.mxu0 0.0
      %6719 = vmatpush1.msra.mxu0 0.0
      %6720 = vmatprep.subr.mxu0 0.0
      %6721 = vmatpush1.msra.mxu0 0.0
      %6722 = vmatprep.subr.mxu0 0.0
      %6723 = vmatpush1.msra.mxu0 0.0
      %6724 = vmatprep.subr.mxu0 0.0
      %6725 = vmatpush1.msra.mxu0 0.0
      %6726 = vmatprep.subr.mxu0 0.0
      %6727 = vmatpush1.msra.mxu0 0.0
      %6728 = vmatprep.subr.mxu0 0.0
      %6729 = vmatpush1.msra.mxu0 0.0
      %6730 = vmatprep.subr.mxu0 0.0
      %6731 = vmatpush1.msra.mxu0 0.0
      %6732 = vmatprep.subr.mxu0 0.0
      %6733 = vmatpush1.msra.mxu0 0.0
      %6734 = vmatprep.subr.mxu0 0.0
      %6735 = vmatpush1.msra.mxu0 0.0
      %6736 = vmatprep.subr.mxu0 0.0
      %6737 = vmatpush1.msra.mxu0 0.0
      %6738 = vmatprep.subr.mxu0 0.0
      %6739 = vmatpush1.msra.mxu0 0.0
      %6740 = vmatprep.subr.mxu0 0.0
      %6741 = vmatpush1.msra.mxu0 0.0
      %6742 = vmatprep.subr.mxu0 0.0
      %6743 = vmatpush1.msra.mxu0 0.0
      %6744 = vmatprep.subr.mxu0 0.0
      %6745 = vmatpush1.msra.mxu0 0.0
      %6746 = vmatprep.subr.mxu0 0.0
      %6747 = vmatpush1.msra.mxu0 0.0
      %6748 = vmatprep.subr.mxu0 0.0
      %6749 = vmatpush1.msra.mxu0 0.0
      %6750 = vmatprep.subr.mxu0 0.0
      %6751 = vmatpush1.msra.mxu0 0.0
      %6752 = vmatprep.subr.mxu0 0.0
      %6753 = vmatpush1.msra.mxu0 0.0
      %6754 = vmatprep.subr.mxu0 0.0
      %6755 = vmatpush1.msra.mxu0 0.0
      %6756 = vmatprep.subr.mxu0 0.0
      %6757 = vmatpush1.msra.mxu0 0.0
      %6758 = vmatprep.subr.mxu0 0.0
      %6759 = vmatpush1.msra.mxu0 0.0
      %6760 = vmatprep.subr.mxu0 0.0
      %6761 = vmatpush1.msra.mxu0 0.0
      %6762 = vmatprep.subr.mxu0 0.0
      %6763 = vmatpush1.msra.mxu0 0.0
      %6764 = vmatprep.subr.mxu0 0.0
      %6765 = vmatpush1.msra.mxu0 0.0
      %6766 = vmatprep.subr.mxu0 0.0
      %6767 = vmatpush1.msra.mxu0 0.0
      %6768 = vmatprep.subr.mxu0 0.0
      %6769 = vmatpush1.msra.mxu0 0.0
      %6770 = vmatprep.subr.mxu0 0.0
      %6771 = vmatpush1.msra.mxu0 0.0
      %6772 = vmatprep.subr.mxu0 0.0
      %6773 = vmatpush1.msra.mxu0 0.0
      %6774 = vmatprep.subr.mxu0 0.0
      %6775 = vmatpush1.msra.mxu0 0.0
      %6776 = vmatprep.subr.mxu0 0.0
      %6777 = vmatpush1.msra.mxu0 0.0
      %6778 = vmatprep.subr.mxu0 0.0
      %6779 = vmatpush1.msra.mxu0 0.0
      %6780 = vmatprep.mubr.f32.mxu0 0.0
      %6781 = vmatmul.mubr.f32.gmra.mrb[0].mxu0 %v6618
      %v6782 = vpop.f32.mrb[0].mxu0
      %v6783 = vadd.f32 0.0, %v6782
      %v6784 = vpop.f32.mrb[0].mxu0
      %6785 = vmatprep.mubr.f32.mxu0 0.0
      %6786 = vmatmul.mubr.f32.gmra.mrb[0].mxu0 %v6621
      %v6787 = vpop.f32.mrb[0].mxu0
      %v6788 = vadd.f32 0.0, %v6787
      %v6789 = vpop.f32.mrb[0].mxu0
      %6790 = vmatprep.mubr.f32.mxu0 0.0
      %6791 = vmatmul.mubr.f32.gmra.mrb[0].mxu0 %v6624
      %v6792 = vpop.f32.mrb[0].mxu0
      %v6793 = vadd.f32 0.0, %v6792
      %v6794 = vpop.f32.mrb[0].mxu0
      %6795 = vmatprep.mubr.f32.mxu0 0.0
      %6796 = vmatmul.mubr.f32.gmra.mrb[0].mxu0 %v6627
      %v6797 = vpop.f32.mrb[0].mxu0
      %v6798 = vadd.f32 0.0, %v6797
      %v6799 = vpop.f32.mrb[0].mxu0
      %6800 = vmatprep.mubr.f32.mxu0 0.0
      %6801 = vmatmul.mubr.f32.gmra.mrb[0].mxu0 %v6630
      %v6802 = vpop.f32.mrb[0].mxu0
      %v6803 = vadd.f32 0.0, %v6802
      %v6804 = vpop.f32.mrb[0].mxu0
      %6805 = vmatprep.mubr.f32.mxu0 0.0
      %6806 = vmatmul.mubr.f32.gmra.mrb[0].mxu0 %v6633
      %v6807 = vpop.f32.mrb[0].mxu0
      %v6808 = vadd.f32 0.0, %v6807
      %v6809 = vpop.f32.mrb[0].mxu0
      %6810 = vmatprep.mubr.f32.mxu0 0.0
      %6811 = vmatmul.mubr.f32.gmra.mrb[0].mxu0 %v6636
      %v6812 = vpop.f32.mrb[0].mxu0
      %v6813 = vadd.f32 0.0, %v6812
      %v6814 = vpop.f32.mrb[0].mxu0
      %6815 = vmatprep.mubr.f32.mxu0 0.0
      %6816 = vmatmul.mubr.f32.gmra.mrb[0].mxu0 %v6639
      %v6817 = vpop.f32.mrb[0].mxu0
      %v6818 = vadd.f32 0.0, %v6817
      %v6819 = vpop.f32.mrb[0].mxu0
      %6820 = vmatprep.mubr.f32.mxu0 0.0
      %6821 = vmatmul.mubr.f32.gmra.mrb[0].mxu0 %v6642
      %v6822 = vpop.f32.mrb[0].mxu0
      %v6823 = vadd.f32 0.0, %v6822
      %v6824 = vpop.f32.mrb[0].mxu0
      %6825 = vmatprep.mubr.f32.mxu0 0.0
      %6826 = vmatmul.mubr.f32.gmra.mrb[0].mxu0 %v6645
      %v6827 = vpop.f32.mrb[0].mxu0
      %v6828 = vadd.f32 0.0, %v6827
      %v6829 = vpop.f32.mrb[0].mxu0
      %6830 = vmatprep.mubr.f32.mxu0 0.0
      %6831 = vmatmul.mubr.f32.gmra.mrb[0].mxu0 %v6648
      %v6832 = vpop.f32.mrb[0].mxu0
      %v6833 = vadd.f32 0.0, %v6832
      %v6834 = vpop.f32.mrb[0].mxu0
      %6835 = vmatprep.mubr.f32.mxu0 0.0
      %6836 = vmatmul.mubr.f32.gmra.mrb[0].mxu0 %v6651
      %v6837 = vpop.f32.mrb[0].mxu0
      %v6838 = vadd.f32 0.0, %v6837
      %v6839 = vpop.f32.mrb[0].mxu0
      %6840 = vmatprep.mubr.f32.mxu0 0.0
      %6841 = vmatmul.mubr.f32.gmra.mrb[0].mxu0 %v6654
      %v6842 = vpop.f32.mrb[0].mxu0
      %v6843 = vadd.f32 0.0, %v6842
      %v6844 = vpop.f32.mrb[0].mxu0
      %6845 = vmatprep.mubr.f32.mxu0 0.0
      %6846 = vmatmul.mubr.f32.gmra.mrb[0].mxu0 %v6657
      %v6847 = vpop.f32.mrb[0].mxu0
      %v6848 = vadd.f32 0.0, %v6847
      %v6849 = vpop.f32.mrb[0].mxu0
      %6850 = vmatprep.mubr.f32.mxu0 0.0
      %6851 = vmatmul.mubr.f32.gmra.mrb[0].mxu0 %v6660
      %v6852 = vpop.f32.mrb[0].mxu0
      %v6853 = vadd.f32 0.0, %v6852
      %v6854 = vpop.f32.mrb[0].mxu0
      %6855 = vmatprep.mubr.f32.mxu0 0.0
      %6856 = vmatmul.mubr.f32.gmra.mrb[0].mxu0 %v6663
      %v6857 = vpop.f32.mrb[0].mxu0
      %v6858 = vadd.f32 0.0, %v6857
      %v6859 = vpop.f32.mrb[0].mxu0
      %6860 = vmatprep.mubr.f32.mxu0 0.0
      %6861 = vmatmul.mubr.f32.gmra.mrb[0].mxu0 %v6666
      %v6862 = vpop.f32.mrb[0].mxu0
      %v6863 = vadd.f32 0.0, %v6862
      %v6864 = vpop.f32.mrb[0].mxu0
      %6865 = vmatprep.mubr.f32.mxu0 0.0
      %6866 = vmatmul.mubr.f32.gmra.mrb[0].mxu0 %v6669
      %v6867 = vpop.f32.mrb[0].mxu0
      %v6868 = vadd.f32 0.0, %v6867
      %v6869 = vpop.f32.mrb[0].mxu0
      %6870 = vmatprep.mubr.f32.mxu0 0.0
      %6871 = vmatmul.mubr.f32.gmra.mrb[0].mxu0 %v6672
      %v6872 = vpop.f32.mrb[0].mxu0
      %v6873 = vadd.f32 0.0, %v6872
      %v6874 = vpop.f32.mrb[0].mxu0
      %6875 = vmatprep.mubr.f32.mxu0 0.0
      %6876 = vmatmul.mubr.f32.gmra.mrb[0].mxu0 %v6675
      %v6877 = vpop.f32.mrb[0].mxu0
      %v6878 = vadd.f32 0.0, %v6877
      %v6879 = vpop.f32.mrb[0].mxu0
      %6880 = vmatprep.mubr.f32.mxu0 0.0
      %6881 = vmatmul.mubr.f32.gmra.mrb[0].mxu0 %v6678
      %v6882 = vpop.f32.mrb[0].mxu0
      %v6883 = vadd.f32 0.0, %v6882
      %v6884 = vpop.f32.mrb[0].mxu0
      %6885 = vmatprep.mubr.f32.mxu0 0.0
      %6886 = vmatmul.mubr.f32.gmra.mrb[0].mxu0 %v6681
      %v6887 = vpop.f32.mrb[0].mxu0
      %v6888 = vadd.f32 0.0, %v6887
      %v6889 = vpop.f32.mrb[0].mxu0
      %6890 = vmatprep.mubr.f32.mxu0 0.0
      %6891 = vmatmul.mubr.f32.gmra.mrb[0].mxu0 %v6684
      %v6892 = vpop.f32.mrb[0].mxu0
      %v6893 = vadd.f32 0.0, %v6892
      %v6894 = vpop.f32.mrb[0].mxu0
      %6895 = vmatprep.mubr.f32.mxu0 0.0
      %6896 = vmatmul.mubr.f32.gmra.mrb[0].mxu0 %v6687
      %v6897 = vpop.f32.mrb[0].mxu0
      %v6898 = vadd.f32 0.0, %v6897
      %v6899 = vpop.f32.mrb[0].mxu0
      %6900 = vmatprep.mubr.f32.mxu0 0.0
      %6901 = vmatmul.mubr.f32.gmra.mrb[0].mxu0 %v6690
      %v6902 = vpop.f32.mrb[0].mxu0
      %v6903 = vadd.f32 0.0, %v6902
      %v6904 = vpop.f32.mrb[0].mxu0
      %6905 = vmatprep.mubr.f32.mxu0 0.0
      %6906 = vmatmul.mubr.f32.gmra.mrb[0].mxu0 %v6693
      %v6907 = vpop.f32.mrb[0].mxu0
      %v6908 = vadd.f32 0.0, %v6907
      %v6909 = vpop.f32.mrb[0].mxu0
      %6910 = vmatprep.mubr.f32.mxu0 0.0
      %6911 = vmatmul.mubr.f32.gmra.mrb[0].mxu0 %v6696
      %v6912 = vpop.f32.mrb[0].mxu0
      %v6913 = vadd.f32 0.0, %v6912
      %v6914 = vpop.f32.mrb[0].mxu0
      %6915 = vmatprep.mubr.f32.mxu0 0.0
      %6916 = vmatmul.mubr.f32.gmra.mrb[0].mxu0 %v6699
      %v6917 = vpop.f32.mrb[0].mxu0
      %v6918 = vadd.f32 0.0, %v6917
      %v6919 = vpop.f32.mrb[0].mxu0
      %6920 = vmatprep.mubr.f32.mxu0 0.0
      %6921 = vmatmul.mubr.f32.gmra.mrb[0].mxu0 %v6702
      %v6922 = vpop.f32.mrb[0].mxu0
      %v6923 = vadd.f32 0.0, %v6922
      %v6924 = vpop.f32.mrb[0].mxu0
      %6925 = vmatprep.mubr.f32.mxu0 0.0
      %6926 = vmatmul.mubr.f32.gmra.mrb[0].mxu0 %v6705
      %v6927 = vpop.f32.mrb[0].mxu0
      %v6928 = vadd.f32 0.0, %v6927
      %v6929 = vpop.f32.mrb[0].mxu0
      %6930 = vmatprep.mubr.f32.mxu0 0.0
      %6931 = vmatmul.mubr.f32.gmra.mrb[0].mxu0 %v6708
      %v6932 = vpop.f32.mrb[0].mxu0
      %v6933 = vadd.f32 0.0, %v6932
      %v6934 = vpop.f32.mrb[0].mxu0
      %6935 = vmatprep.mubr.f32.mxu0 0.0
      %6936 = vmatmul.mubr.f32.gmra.mrb[0].mxu0 %v6711
      %v6937 = vpop.f32.mrb[0].mxu0
      %v6938 = vadd.f32 0.0, %v6937
      %v6939 = vpop.f32.mrb[0].mxu0
      %6940 = vdwg.mxu0
      %v6941 = vadd.f32 %v6551, %v6783
      %v6942 = vadd.f32 %v6552, %v6788
      %v6943 = vadd.f32 %v6553, %v6793
      %v6944 = vadd.f32 %v6554, %v6798
      %v6945 = vadd.f32 %v6555, %v6803
      %v6946 = vadd.f32 %v6556, %v6808
      %v6947 = vadd.f32 %v6557, %v6813
      %v6948 = vadd.f32 %v6558, %v6818
      %v6949 = vadd.f32 %v6559, %v6823
      %v6950 = vadd.f32 %v6560, %v6828
      %v6951 = vadd.f32 %v6561, %v6833
      %v6952 = vadd.f32 %v6562, %v6838
      %v6953 = vadd.f32 %v6563, %v6843
      %v6954 = vadd.f32 %v6564, %v6848
      %v6955 = vadd.f32 %v6565, %v6853
      %v6956 = vadd.f32 %v6566, %v6858
      %v6957 = vadd.f32 %v6567, %v6863
      %v6958 = vadd.f32 %v6568, %v6868
      %v6959 = vadd.f32 %v6569, %v6873
      %v6960 = vadd.f32 %v6570, %v6878
      %v6961 = vadd.f32 %v6571, %v6883
      %v6962 = vadd.f32 %v6572, %v6888
      %v6963 = vadd.f32 %v6573, %v6893
      %v6964 = vadd.f32 %v6574, %v6898
      %v6965 = vadd.f32 %v6575, %v6903
      %v6966 = vadd.f32 %v6576, %v6908
      %v6967 = vadd.f32 %v6577, %v6913
      %v6968 = vadd.f32 %v6578, %v6918
      %v6969 = vadd.f32 %v6579, %v6923
      %v6970 = vadd.f32 %v6580, %v6928
      %v6971 = vadd.f32 %v6581, %v6933
      %v6972 = vadd.f32 %v6582, %v6938
      %v6973 = vld [vmem:[%s291 + $0x1] sm:$0xff]
      %v6974 = vld [vmem:[%s291 + $0x9] sm:$0xff]
      %v6975 = vld [vmem:[%s291 + $0x19] sm:$0xff]
      %v6976 = vld [vmem:[%s291 + $0x21] sm:$0xff]
      %v6977 = vld [vmem:[%s291 + $0x31] sm:$0xff]
      %v6978 = vld [vmem:[%s291 + $0x39] sm:$0xff]
      %v6979 = vld [vmem:[%s291 + $0x49] sm:$0xff]
      %v6980 = vld [vmem:[%s291 + $0x51] sm:$0xff]
      %v6981 = vld [vmem:[%s291 + $0x61] sm:$0xff]
      %v6982 = vld [vmem:[%s291 + $0x69] sm:$0xff]
      %v6983 = vld [vmem:[%s291 + $0x79] sm:$0xff]
      %v6984 = vld [vmem:[%s291 + $0x81] sm:$0xff]
      %v6985 = vld [vmem:[%s291 + $0x91] sm:$0xff]
      %v6986 = vld [vmem:[%s291 + $0x99] sm:$0xff]
      %v6987 = vld [vmem:[%s291 + $0xa9] sm:$0xff]
      %v6988 = vld [vmem:[%s291 + $0xb1] sm:$0xff]
      %v6989 = vld [vmem:[%s291 + $0xc1] sm:$0xff]
      %v6990 = vld [vmem:[%s291 + $0xc9] sm:$0xff]
      %v6991 = vld [vmem:[%s291 + $0xd9] sm:$0xff]
      %v6992 = vld [vmem:[%s291 + $0xe1] sm:$0xff]
      %v6993 = vld [vmem:[%s291 + $0xf1] sm:$0xff]
      %v6994 = vld [vmem:[%s291 + $0xf9] sm:$0xff]
      %v6995 = vld [vmem:[%s291 + $0x109] sm:$0xff]
      %v6996 = vld [vmem:[%s291 + $0x111] sm:$0xff]
      %v6997 = vld [vmem:[%s291 + $0x121] sm:$0xff]
      %v6998 = vld [vmem:[%s291 + $0x129] sm:$0xff]
      %v6999 = vld [vmem:[%s291 + $0x139] sm:$0xff]
      %v7000 = vld [vmem:[%s291 + $0x141] sm:$0xff]
      %v7001 = vld [vmem:[%s291 + $0x151] sm:$0xff]
      %v7002 = vld [vmem:[%s291 + $0x159] sm:$0xff]
      %v7003 = vld [vmem:[%s291 + $0x169] sm:$0xff]
      %v7004 = vld [vmem:[%s291 + $0x171] sm:$0xff]
      %s7005 = scalar_lea.vmem %s3, 28
      %v7006 = vld [vmem:[%s7005] sm:$0xf]
      %v7008 = vsel %vm258, %v6973, 0
      %v7011 = vsel %vm258, %v6974, 0
      %v7014 = vsel %vm258, %v6975, 0
      %v7017 = vsel %vm258, %v6976, 0
      %v7020 = vsel %vm258, %v6977, 0
      %v7023 = vsel %vm258, %v6978, 0
      %v7026 = vsel %vm258, %v6979, 0
      %v7029 = vsel %vm258, %v6980, 0
      %v7032 = vsel %vm258, %v6981, 0
      %v7035 = vsel %vm258, %v6982, 0
      %v7038 = vsel %vm258, %v6983, 0
      %v7041 = vsel %vm258, %v6984, 0
      %v7044 = vsel %vm258, %v6985, 0
      %v7047 = vsel %vm258, %v6986, 0
      %v7050 = vsel %vm258, %v6987, 0
      %v7053 = vsel %vm258, %v6988, 0
      %v7056 = vsel %vm258, %v6989, 0
      %v7059 = vsel %vm258, %v6990, 0
      %v7062 = vsel %vm258, %v6991, 0
      %v7065 = vsel %vm258, %v6992, 0
      %v7068 = vsel %vm258, %v6993, 0
      %v7071 = vsel %vm258, %v6994, 0
      %v7074 = vsel %vm258, %v6995, 0
      %v7077 = vsel %vm258, %v6996, 0
      %v7080 = vsel %vm258, %v6997, 0
      %v7083 = vsel %vm258, %v6998, 0
      %v7086 = vsel %vm258, %v6999, 0
      %v7089 = vsel %vm258, %v7000, 0
      %v7092 = vsel %vm258, %v7001, 0
      %v7095 = vsel %vm258, %v7002, 0
      %v7098 = vsel %vm258, %v7003, 0
      %v7101 = vsel %vm258, %v7004, 0
      %v7104 = vsel %vm539, %v7006, 0
      %7106 = vmatprep.subr.mxu0 0.0
      %7107 = vmatpush1.msra.mxu0 %v7104
      %7108 = vmatprep.subr.mxu0 0.0
      %7109 = vmatpush1.msra.mxu0 0.0
      %7110 = vmatprep.subr.mxu0 0.0
      %7111 = vmatpush1.msra.mxu0 0.0
      %7112 = vmatprep.subr.mxu0 0.0
      %7113 = vmatpush1.msra.mxu0 0.0
      %7114 = vmatprep.subr.mxu0 0.0
      %7115 = vmatpush1.msra.mxu0 0.0
      %7116 = vmatprep.subr.mxu0 0.0
      %7117 = vmatpush1.msra.mxu0 0.0
      %7118 = vmatprep.subr.mxu0 0.0
      %7119 = vmatpush1.msra.mxu0 0.0
      %7120 = vmatprep.subr.mxu0 0.0
      %7121 = vmatpush1.msra.mxu0 0.0
      %7122 = vmatprep.subr.mxu0 0.0
      %7123 = vmatpush1.msra.mxu0 0.0
      %7124 = vmatprep.subr.mxu0 0.0
      %7125 = vmatpush1.msra.mxu0 0.0
      %7126 = vmatprep.subr.mxu0 0.0
      %7127 = vmatpush1.msra.mxu0 0.0
      %7128 = vmatprep.subr.mxu0 0.0
      %7129 = vmatpush1.msra.mxu0 0.0
      %7130 = vmatprep.subr.mxu0 0.0
      %7131 = vmatpush1.msra.mxu0 0.0
      %7132 = vmatprep.subr.mxu0 0.0
      %7133 = vmatpush1.msra.mxu0 0.0
      %7134 = vmatprep.subr.mxu0 0.0
      %7135 = vmatpush1.msra.mxu0 0.0
      %7136 = vmatprep.subr.mxu0 0.0
      %7137 = vmatpush1.msra.mxu0 0.0
      %7138 = vmatprep.subr.mxu0 0.0
      %7139 = vmatpush1.msra.mxu0 0.0
      %7140 = vmatprep.subr.mxu0 0.0
      %7141 = vmatpush1.msra.mxu0 0.0
      %7142 = vmatprep.subr.mxu0 0.0
      %7143 = vmatpush1.msra.mxu0 0.0
      %7144 = vmatprep.subr.mxu0 0.0
      %7145 = vmatpush1.msra.mxu0 0.0
      %7146 = vmatprep.subr.mxu0 0.0
      %7147 = vmatpush1.msra.mxu0 0.0
      %7148 = vmatprep.subr.mxu0 0.0
      %7149 = vmatpush1.msra.mxu0 0.0
      %7150 = vmatprep.subr.mxu0 0.0
      %7151 = vmatpush1.msra.mxu0 0.0
      %7152 = vmatprep.subr.mxu0 0.0
      %7153 = vmatpush1.msra.mxu0 0.0
      %7154 = vmatprep.subr.mxu0 0.0
      %7155 = vmatpush1.msra.mxu0 0.0
      %7156 = vmatprep.subr.mxu0 0.0
      %7157 = vmatpush1.msra.mxu0 0.0
      %7158 = vmatprep.subr.mxu0 0.0
      %7159 = vmatpush1.msra.mxu0 0.0
      %7160 = vmatprep.subr.mxu0 0.0
      %7161 = vmatpush1.msra.mxu0 0.0
      %7162 = vmatprep.subr.mxu0 0.0
      %7163 = vmatpush1.msra.mxu0 0.0
      %7164 = vmatprep.subr.mxu0 0.0
      %7165 = vmatpush1.msra.mxu0 0.0
      %7166 = vmatprep.subr.mxu0 0.0
      %7167 = vmatpush1.msra.mxu0 0.0
      %7168 = vmatprep.subr.mxu0 0.0
      %7169 = vmatpush1.msra.mxu0 0.0
      %7170 = vmatprep.mubr.f32.mxu0 0.0
      %7171 = vmatmul.mubr.f32.gmra.mrb[0].mxu0 %v7008
      %v7172 = vpop.f32.mrb[0].mxu0
      %v7173 = vadd.f32 0.0, %v7172
      %v7174 = vpop.f32.mrb[0].mxu0
      %7175 = vmatprep.mubr.f32.mxu0 0.0
      %7176 = vmatmul.mubr.f32.gmra.mrb[0].mxu0 %v7011
      %v7177 = vpop.f32.mrb[0].mxu0
      %v7178 = vadd.f32 0.0, %v7177
      %v7179 = vpop.f32.mrb[0].mxu0
      %7180 = vmatprep.mubr.f32.mxu0 0.0
      %7181 = vmatmul.mubr.f32.gmra.mrb[0].mxu0 %v7014
      %v7182 = vpop.f32.mrb[0].mxu0
      %v7183 = vadd.f32 0.0, %v7182
      %v7184 = vpop.f32.mrb[0].mxu0
      %7185 = vmatprep.mubr.f32.mxu0 0.0
      %7186 = vmatmul.mubr.f32.gmra.mrb[0].mxu0 %v7017
      %v7187 = vpop.f32.mrb[0].mxu0
      %v7188 = vadd.f32 0.0, %v7187
      %v7189 = vpop.f32.mrb[0].mxu0
      %7190 = vmatprep.mubr.f32.mxu0 0.0
      %7191 = vmatmul.mubr.f32.gmra.mrb[0].mxu0 %v7020
      %v7192 = vpop.f32.mrb[0].mxu0
      %v7193 = vadd.f32 0.0, %v7192
      %v7194 = vpop.f32.mrb[0].mxu0
      %7195 = vmatprep.mubr.f32.mxu0 0.0
      %7196 = vmatmul.mubr.f32.gmra.mrb[0].mxu0 %v7023
      %v7197 = vpop.f32.mrb[0].mxu0
      %v7198 = vadd.f32 0.0, %v7197
      %v7199 = vpop.f32.mrb[0].mxu0
      %7200 = vmatprep.mubr.f32.mxu0 0.0
      %7201 = vmatmul.mubr.f32.gmra.mrb[0].mxu0 %v7026
      %v7202 = vpop.f32.mrb[0].mxu0
      %v7203 = vadd.f32 0.0, %v7202
      %v7204 = vpop.f32.mrb[0].mxu0
      %7205 = vmatprep.mubr.f32.mxu0 0.0
      %7206 = vmatmul.mubr.f32.gmra.mrb[0].mxu0 %v7029
      %v7207 = vpop.f32.mrb[0].mxu0
      %v7208 = vadd.f32 0.0, %v7207
      %v7209 = vpop.f32.mrb[0].mxu0
      %7210 = vmatprep.mubr.f32.mxu0 0.0
      %7211 = vmatmul.mubr.f32.gmra.mrb[0].mxu0 %v7032
      %v7212 = vpop.f32.mrb[0].mxu0
      %v7213 = vadd.f32 0.0, %v7212
      %v7214 = vpop.f32.mrb[0].mxu0
      %7215 = vmatprep.mubr.f32.mxu0 0.0
      %7216 = vmatmul.mubr.f32.gmra.mrb[0].mxu0 %v7035
      %v7217 = vpop.f32.mrb[0].mxu0
      %v7218 = vadd.f32 0.0, %v7217
      %v7219 = vpop.f32.mrb[0].mxu0
      %7220 = vmatprep.mubr.f32.mxu0 0.0
      %7221 = vmatmul.mubr.f32.gmra.mrb[0].mxu0 %v7038
      %v7222 = vpop.f32.mrb[0].mxu0
      %v7223 = vadd.f32 0.0, %v7222
      %v7224 = vpop.f32.mrb[0].mxu0
      %7225 = vmatprep.mubr.f32.mxu0 0.0
      %7226 = vmatmul.mubr.f32.gmra.mrb[0].mxu0 %v7041
      %v7227 = vpop.f32.mrb[0].mxu0
      %v7228 = vadd.f32 0.0, %v7227
      %v7229 = vpop.f32.mrb[0].mxu0
      %7230 = vmatprep.mubr.f32.mxu0 0.0
      %7231 = vmatmul.mubr.f32.gmra.mrb[0].mxu0 %v7044
      %v7232 = vpop.f32.mrb[0].mxu0
      %v7233 = vadd.f32 0.0, %v7232
      %v7234 = vpop.f32.mrb[0].mxu0
      %7235 = vmatprep.mubr.f32.mxu0 0.0
      %7236 = vmatmul.mubr.f32.gmra.mrb[0].mxu0 %v7047
      %v7237 = vpop.f32.mrb[0].mxu0
      %v7238 = vadd.f32 0.0, %v7237
      %v7239 = vpop.f32.mrb[0].mxu0
      %7240 = vmatprep.mubr.f32.mxu0 0.0
      %7241 = vmatmul.mubr.f32.gmra.mrb[0].mxu0 %v7050
      %v7242 = vpop.f32.mrb[0].mxu0
      %v7243 = vadd.f32 0.0, %v7242
      %v7244 = vpop.f32.mrb[0].mxu0
      %7245 = vmatprep.mubr.f32.mxu0 0.0
      %7246 = vmatmul.mubr.f32.gmra.mrb[0].mxu0 %v7053
      %v7247 = vpop.f32.mrb[0].mxu0
      %v7248 = vadd.f32 0.0, %v7247
      %v7249 = vpop.f32.mrb[0].mxu0
      %7250 = vmatprep.mubr.f32.mxu0 0.0
      %7251 = vmatmul.mubr.f32.gmra.mrb[0].mxu0 %v7056
      %v7252 = vpop.f32.mrb[0].mxu0
      %v7253 = vadd.f32 0.0, %v7252
      %v7254 = vpop.f32.mrb[0].mxu0
      %7255 = vmatprep.mubr.f32.mxu0 0.0
      %7256 = vmatmul.mubr.f32.gmra.mrb[0].mxu0 %v7059
      %v7257 = vpop.f32.mrb[0].mxu0
      %v7258 = vadd.f32 0.0, %v7257
      %v7259 = vpop.f32.mrb[0].mxu0
      %7260 = vmatprep.mubr.f32.mxu0 0.0
      %7261 = vmatmul.mubr.f32.gmra.mrb[0].mxu0 %v7062
      %v7262 = vpop.f32.mrb[0].mxu0
      %v7263 = vadd.f32 0.0, %v7262
      %v7264 = vpop.f32.mrb[0].mxu0
      %7265 = vmatprep.mubr.f32.mxu0 0.0
      %7266 = vmatmul.mubr.f32.gmra.mrb[0].mxu0 %v7065
      %v7267 = vpop.f32.mrb[0].mxu0
      %v7268 = vadd.f32 0.0, %v7267
      %v7269 = vpop.f32.mrb[0].mxu0
      %7270 = vmatprep.mubr.f32.mxu0 0.0
      %7271 = vmatmul.mubr.f32.gmra.mrb[0].mxu0 %v7068
      %v7272 = vpop.f32.mrb[0].mxu0
      %v7273 = vadd.f32 0.0, %v7272
      %v7274 = vpop.f32.mrb[0].mxu0
      %7275 = vmatprep.mubr.f32.mxu0 0.0
      %7276 = vmatmul.mubr.f32.gmra.mrb[0].mxu0 %v7071
      %v7277 = vpop.f32.mrb[0].mxu0
      %v7278 = vadd.f32 0.0, %v7277
      %v7279 = vpop.f32.mrb[0].mxu0
      %7280 = vmatprep.mubr.f32.mxu0 0.0
      %7281 = vmatmul.mubr.f32.gmra.mrb[0].mxu0 %v7074
      %v7282 = vpop.f32.mrb[0].mxu0
      %v7283 = vadd.f32 0.0, %v7282
      %v7284 = vpop.f32.mrb[0].mxu0
      %7285 = vmatprep.mubr.f32.mxu0 0.0
      %7286 = vmatmul.mubr.f32.gmra.mrb[0].mxu0 %v7077
      %v7287 = vpop.f32.mrb[0].mxu0
      %v7288 = vadd.f32 0.0, %v7287
      %v7289 = vpop.f32.mrb[0].mxu0
      %7290 = vmatprep.mubr.f32.mxu0 0.0
      %7291 = vmatmul.mubr.f32.gmra.mrb[0].mxu0 %v7080
      %v7292 = vpop.f32.mrb[0].mxu0
      %v7293 = vadd.f32 0.0, %v7292
      %v7294 = vpop.f32.mrb[0].mxu0
      %7295 = vmatprep.mubr.f32.mxu0 0.0
      %7296 = vmatmul.mubr.f32.gmra.mrb[0].mxu0 %v7083
      %v7297 = vpop.f32.mrb[0].mxu0
      %v7298 = vadd.f32 0.0, %v7297
      %v7299 = vpop.f32.mrb[0].mxu0
      %7300 = vmatprep.mubr.f32.mxu0 0.0
      %7301 = vmatmul.mubr.f32.gmra.mrb[0].mxu0 %v7086
      %v7302 = vpop.f32.mrb[0].mxu0
      %v7303 = vadd.f32 0.0, %v7302
      %v7304 = vpop.f32.mrb[0].mxu0
      %7305 = vmatprep.mubr.f32.mxu0 0.0
      %7306 = vmatmul.mubr.f32.gmra.mrb[0].mxu0 %v7089
      %v7307 = vpop.f32.mrb[0].mxu0
      %v7308 = vadd.f32 0.0, %v7307
      %v7309 = vpop.f32.mrb[0].mxu0
      %7310 = vmatprep.mubr.f32.mxu0 0.0
      %7311 = vmatmul.mubr.f32.gmra.mrb[0].mxu0 %v7092
      %v7312 = vpop.f32.mrb[0].mxu0
      %v7313 = vadd.f32 0.0, %v7312
      %v7314 = vpop.f32.mrb[0].mxu0
      %7315 = vmatprep.mubr.f32.mxu0 0.0
      %7316 = vmatmul.mubr.f32.gmra.mrb[0].mxu0 %v7095
      %v7317 = vpop.f32.mrb[0].mxu0
      %v7318 = vadd.f32 0.0, %v7317
      %v7319 = vpop.f32.mrb[0].mxu0
      %7320 = vmatprep.mubr.f32.mxu0 0.0
      %7321 = vmatmul.mubr.f32.gmra.mrb[0].mxu0 %v7098
      %v7322 = vpop.f32.mrb[0].mxu0
      %v7323 = vadd.f32 0.0, %v7322
      %v7324 = vpop.f32.mrb[0].mxu0
      %7325 = vmatprep.mubr.f32.mxu0 0.0
      %7326 = vmatmul.mubr.f32.gmra.mrb[0].mxu0 %v7101
      %v7327 = vpop.f32.mrb[0].mxu0
      %v7328 = vadd.f32 0.0, %v7327
      %v7329 = vpop.f32.mrb[0].mxu0
      %7330 = vdwg.mxu0
      %v7331 = vadd.f32 %v6941, %v7173
      %v7332 = vadd.f32 %v6942, %v7178
      %v7333 = vadd.f32 %v6943, %v7183
      %v7334 = vadd.f32 %v6944, %v7188
      %v7335 = vadd.f32 %v6945, %v7193
      %v7336 = vadd.f32 %v6946, %v7198
      %v7337 = vadd.f32 %v6947, %v7203
      %v7338 = vadd.f32 %v6948, %v7208
      %v7339 = vadd.f32 %v6949, %v7213
      %v7340 = vadd.f32 %v6950, %v7218
      %v7341 = vadd.f32 %v6951, %v7223
      %v7342 = vadd.f32 %v6952, %v7228
      %v7343 = vadd.f32 %v6953, %v7233
      %v7344 = vadd.f32 %v6954, %v7238
      %v7345 = vadd.f32 %v6955, %v7243
      %v7346 = vadd.f32 %v6956, %v7248
      %v7347 = vadd.f32 %v6957, %v7253
      %v7348 = vadd.f32 %v6958, %v7258
      %v7349 = vadd.f32 %v6959, %v7263
      %v7350 = vadd.f32 %v6960, %v7268
      %v7351 = vadd.f32 %v6961, %v7273
      %v7352 = vadd.f32 %v6962, %v7278
      %v7353 = vadd.f32 %v6963, %v7283
      %v7354 = vadd.f32 %v6964, %v7288
      %v7355 = vadd.f32 %v6965, %v7293
      %v7356 = vadd.f32 %v6966, %v7298
      %v7357 = vadd.f32 %v6967, %v7303
      %v7358 = vadd.f32 %v6968, %v7308
      %v7359 = vadd.f32 %v6969, %v7313
      %v7360 = vadd.f32 %v6970, %v7318
      %v7361 = vadd.f32 %v6971, %v7323
      %v7362 = vadd.f32 %v6972, %v7328
      %v7363 = vld [vmem:[%s291 + $0x2] sm:$0xff]
      %v7364 = vld [vmem:[%s291 + $0xa] sm:$0xff]
      %v7365 = vld [vmem:[%s291 + $0x1a] sm:$0xff]
      %v7366 = vld [vmem:[%s291 + $0x22] sm:$0xff]
      %v7367 = vld [vmem:[%s291 + $0x32] sm:$0xff]
      %v7368 = vld [vmem:[%s291 + $0x3a] sm:$0xff]
      %v7369 = vld [vmem:[%s291 + $0x4a] sm:$0xff]
      %v7370 = vld [vmem:[%s291 + $0x52] sm:$0xff]
      %v7371 = vld [vmem:[%s291 + $0x62] sm:$0xff]
      %v7372 = vld [vmem:[%s291 + $0x6a] sm:$0xff]
      %v7373 = vld [vmem:[%s291 + $0x7a] sm:$0xff]
      %v7374 = vld [vmem:[%s291 + $0x82] sm:$0xff]
      %v7375 = vld [vmem:[%s291 + $0x92] sm:$0xff]
      %v7376 = vld [vmem:[%s291 + $0x9a] sm:$0xff]
      %v7377 = vld [vmem:[%s291 + $0xaa] sm:$0xff]
      %v7378 = vld [vmem:[%s291 + $0xb2] sm:$0xff]
      %v7379 = vld [vmem:[%s291 + $0xc2] sm:$0xff]
      %v7380 = vld [vmem:[%s291 + $0xca] sm:$0xff]
      %v7381 = vld [vmem:[%s291 + $0xda] sm:$0xff]
      %v7382 = vld [vmem:[%s291 + $0xe2] sm:$0xff]
      %v7383 = vld [vmem:[%s291 + $0xf2] sm:$0xff]
      %v7384 = vld [vmem:[%s291 + $0xfa] sm:$0xff]
      %v7385 = vld [vmem:[%s291 + $0x10a] sm:$0xff]
      %v7386 = vld [vmem:[%s291 + $0x112] sm:$0xff]
      %v7387 = vld [vmem:[%s291 + $0x122] sm:$0xff]
      %v7388 = vld [vmem:[%s291 + $0x12a] sm:$0xff]
      %v7389 = vld [vmem:[%s291 + $0x13a] sm:$0xff]
      %v7390 = vld [vmem:[%s291 + $0x142] sm:$0xff]
      %v7391 = vld [vmem:[%s291 + $0x152] sm:$0xff]
      %v7392 = vld [vmem:[%s291 + $0x15a] sm:$0xff]
      %v7393 = vld [vmem:[%s291 + $0x16a] sm:$0xff]
      %v7394 = vld [vmem:[%s291 + $0x172] sm:$0xff]
      %s7395 = scalar_lea.vmem %s3, 32
      %v7396 = vld [vmem:[%s7395] sm:$0xf]
      %v7398 = vsel %vm258, %v7363, 0
      %v7401 = vsel %vm258, %v7364, 0
      %v7404 = vsel %vm258, %v7365, 0
      %v7407 = vsel %vm258, %v7366, 0
      %v7410 = vsel %vm258, %v7367, 0
      %v7413 = vsel %vm258, %v7368, 0
      %v7416 = vsel %vm258, %v7369, 0
      %v7419 = vsel %vm258, %v7370, 0
      %v7422 = vsel %vm258, %v7371, 0
      %v7425 = vsel %vm258, %v7372, 0
      %v7428 = vsel %vm258, %v7373, 0
      %v7431 = vsel %vm258, %v7374, 0
      %v7434 = vsel %vm258, %v7375, 0
      %v7437 = vsel %vm258, %v7376, 0
      %v7440 = vsel %vm258, %v7377, 0
      %v7443 = vsel %vm258, %v7378, 0
      %v7446 = vsel %vm258, %v7379, 0
      %v7449 = vsel %vm258, %v7380, 0
      %v7452 = vsel %vm258, %v7381, 0
      %v7455 = vsel %vm258, %v7382, 0
      %v7458 = vsel %vm258, %v7383, 0
      %v7461 = vsel %vm258, %v7384, 0
      %v7464 = vsel %vm258, %v7385, 0
      %v7467 = vsel %vm258, %v7386, 0
      %v7470 = vsel %vm258, %v7387, 0
      %v7473 = vsel %vm258, %v7388, 0
      %v7476 = vsel %vm258, %v7389, 0
      %v7479 = vsel %vm258, %v7390, 0
      %v7482 = vsel %vm258, %v7391, 0
      %v7485 = vsel %vm258, %v7392, 0
      %v7488 = vsel %vm258, %v7393, 0
      %v7491 = vsel %vm258, %v7394, 0
      %v7494 = vsel %vm539, %v7396, 0
      %7496 = vmatprep.subr.mxu0 0.0
      %7497 = vmatpush1.msra.mxu0 %v7494
      %7498 = vmatprep.subr.mxu0 0.0
      %7499 = vmatpush1.msra.mxu0 0.0
      %7500 = vmatprep.subr.mxu0 0.0
      %7501 = vmatpush1.msra.mxu0 0.0
      %7502 = vmatprep.subr.mxu0 0.0
      %7503 = vmatpush1.msra.mxu0 0.0
      %7504 = vmatprep.subr.mxu0 0.0
      %7505 = vmatpush1.msra.mxu0 0.0
      %7506 = vmatprep.subr.mxu0 0.0
      %7507 = vmatpush1.msra.mxu0 0.0
      %7508 = vmatprep.subr.mxu0 0.0
      %7509 = vmatpush1.msra.mxu0 0.0
      %7510 = vmatprep.subr.mxu0 0.0
      %7511 = vmatpush1.msra.mxu0 0.0
      %7512 = vmatprep.subr.mxu0 0.0
      %7513 = vmatpush1.msra.mxu0 0.0
      %7514 = vmatprep.subr.mxu0 0.0
      %7515 = vmatpush1.msra.mxu0 0.0
      %7516 = vmatprep.subr.mxu0 0.0
      %7517 = vmatpush1.msra.mxu0 0.0
      %7518 = vmatprep.subr.mxu0 0.0
      %7519 = vmatpush1.msra.mxu0 0.0
      %7520 = vmatprep.subr.mxu0 0.0
      %7521 = vmatpush1.msra.mxu0 0.0
      %7522 = vmatprep.subr.mxu0 0.0
      %7523 = vmatpush1.msra.mxu0 0.0
      %7524 = vmatprep.subr.mxu0 0.0
      %7525 = vmatpush1.msra.mxu0 0.0
      %7526 = vmatprep.subr.mxu0 0.0
      %7527 = vmatpush1.msra.mxu0 0.0
      %7528 = vmatprep.subr.mxu0 0.0
      %7529 = vmatpush1.msra.mxu0 0.0
      %7530 = vmatprep.subr.mxu0 0.0
      %7531 = vmatpush1.msra.mxu0 0.0
      %7532 = vmatprep.subr.mxu0 0.0
      %7533 = vmatpush1.msra.mxu0 0.0
      %7534 = vmatprep.subr.mxu0 0.0
      %7535 = vmatpush1.msra.mxu0 0.0
      %7536 = vmatprep.subr.mxu0 0.0
      %7537 = vmatpush1.msra.mxu0 0.0
      %7538 = vmatprep.subr.mxu0 0.0
      %7539 = vmatpush1.msra.mxu0 0.0
      %7540 = vmatprep.subr.mxu0 0.0
      %7541 = vmatpush1.msra.mxu0 0.0
      %7542 = vmatprep.subr.mxu0 0.0
      %7543 = vmatpush1.msra.mxu0 0.0
      %7544 = vmatprep.subr.mxu0 0.0
      %7545 = vmatpush1.msra.mxu0 0.0
      %7546 = vmatprep.subr.mxu0 0.0
      %7547 = vmatpush1.msra.mxu0 0.0
      %7548 = vmatprep.subr.mxu0 0.0
      %7549 = vmatpush1.msra.mxu0 0.0
      %7550 = vmatprep.subr.mxu0 0.0
      %7551 = vmatpush1.msra.mxu0 0.0
      %7552 = vmatprep.subr.mxu0 0.0
      %7553 = vmatpush1.msra.mxu0 0.0
      %7554 = vmatprep.subr.mxu0 0.0
      %7555 = vmatpush1.msra.mxu0 0.0
      %7556 = vmatprep.subr.mxu0 0.0
      %7557 = vmatpush1.msra.mxu0 0.0
      %7558 = vmatprep.subr.mxu0 0.0
      %7559 = vmatpush1.msra.mxu0 0.0
      %7560 = vmatprep.mubr.f32.mxu0 0.0
      %7561 = vmatmul.mubr.f32.gmra.mrb[0].mxu0 %v7398
      %v7562 = vpop.f32.mrb[0].mxu0
      %v7563 = vadd.f32 0.0, %v7562
      %v7564 = vpop.f32.mrb[0].mxu0
      %7565 = vmatprep.mubr.f32.mxu0 0.0
      %7566 = vmatmul.mubr.f32.gmra.mrb[0].mxu0 %v7401
      %v7567 = vpop.f32.mrb[0].mxu0
      %v7568 = vadd.f32 0.0, %v7567
      %v7569 = vpop.f32.mrb[0].mxu0
      %7570 = vmatprep.mubr.f32.mxu0 0.0
      %7571 = vmatmul.mubr.f32.gmra.mrb[0].mxu0 %v7404
      %v7572 = vpop.f32.mrb[0].mxu0
      %v7573 = vadd.f32 0.0, %v7572
      %v7574 = vpop.f32.mrb[0].mxu0
      %7575 = vmatprep.mubr.f32.mxu0 0.0
      %7576 = vmatmul.mubr.f32.gmra.mrb[0].mxu0 %v7407
      %v7577 = vpop.f32.mrb[0].mxu0
      %v7578 = vadd.f32 0.0, %v7577
      %v7579 = vpop.f32.mrb[0].mxu0
      %7580 = vmatprep.mubr.f32.mxu0 0.0
      %7581 = vmatmul.mubr.f32.gmra.mrb[0].mxu0 %v7410
      %v7582 = vpop.f32.mrb[0].mxu0
      %v7583 = vadd.f32 0.0, %v7582
      %v7584 = vpop.f32.mrb[0].mxu0
      %7585 = vmatprep.mubr.f32.mxu0 0.0
      %7586 = vmatmul.mubr.f32.gmra.mrb[0].mxu0 %v7413
      %v7587 = vpop.f32.mrb[0].mxu0
      %v7588 = vadd.f32 0.0, %v7587
      %v7589 = vpop.f32.mrb[0].mxu0
      %7590 = vmatprep.mubr.f32.mxu0 0.0
      %7591 = vmatmul.mubr.f32.gmra.mrb[0].mxu0 %v7416
      %v7592 = vpop.f32.mrb[0].mxu0
      %v7593 = vadd.f32 0.0, %v7592
      %v7594 = vpop.f32.mrb[0].mxu0
      %7595 = vmatprep.mubr.f32.mxu0 0.0
      %7596 = vmatmul.mubr.f32.gmra.mrb[0].mxu0 %v7419
      %v7597 = vpop.f32.mrb[0].mxu0
      %v7598 = vadd.f32 0.0, %v7597
      %v7599 = vpop.f32.mrb[0].mxu0
      %7600 = vmatprep.mubr.f32.mxu0 0.0
      %7601 = vmatmul.mubr.f32.gmra.mrb[0].mxu0 %v7422
      %v7602 = vpop.f32.mrb[0].mxu0
      %v7603 = vadd.f32 0.0, %v7602
      %v7604 = vpop.f32.mrb[0].mxu0
      %7605 = vmatprep.mubr.f32.mxu0 0.0
      %7606 = vmatmul.mubr.f32.gmra.mrb[0].mxu0 %v7425
      %v7607 = vpop.f32.mrb[0].mxu0
      %v7608 = vadd.f32 0.0, %v7607
      %v7609 = vpop.f32.mrb[0].mxu0
      %7610 = vmatprep.mubr.f32.mxu0 0.0
      %7611 = vmatmul.mubr.f32.gmra.mrb[0].mxu0 %v7428
      %v7612 = vpop.f32.mrb[0].mxu0
      %v7613 = vadd.f32 0.0, %v7612
      %v7614 = vpop.f32.mrb[0].mxu0
      %7615 = vmatprep.mubr.f32.mxu0 0.0
      %7616 = vmatmul.mubr.f32.gmra.mrb[0].mxu0 %v7431
      %v7617 = vpop.f32.mrb[0].mxu0
      %v7618 = vadd.f32 0.0, %v7617
      %v7619 = vpop.f32.mrb[0].mxu0
      %7620 = vmatprep.mubr.f32.mxu0 0.0
      %7621 = vmatmul.mubr.f32.gmra.mrb[0].mxu0 %v7434
      %v7622 = vpop.f32.mrb[0].mxu0
      %v7623 = vadd.f32 0.0, %v7622
      %v7624 = vpop.f32.mrb[0].mxu0
      %7625 = vmatprep.mubr.f32.mxu0 0.0
      %7626 = vmatmul.mubr.f32.gmra.mrb[0].mxu0 %v7437
      %v7627 = vpop.f32.mrb[0].mxu0
      %v7628 = vadd.f32 0.0, %v7627
      %v7629 = vpop.f32.mrb[0].mxu0
      %7630 = vmatprep.mubr.f32.mxu0 0.0
      %7631 = vmatmul.mubr.f32.gmra.mrb[0].mxu0 %v7440
      %v7632 = vpop.f32.mrb[0].mxu0
      %v7633 = vadd.f32 0.0, %v7632
      %v7634 = vpop.f32.mrb[0].mxu0
      %7635 = vmatprep.mubr.f32.mxu0 0.0
      %7636 = vmatmul.mubr.f32.gmra.mrb[0].mxu0 %v7443
      %v7637 = vpop.f32.mrb[0].mxu0
      %v7638 = vadd.f32 0.0, %v7637
      %v7639 = vpop.f32.mrb[0].mxu0
      %7640 = vmatprep.mubr.f32.mxu0 0.0
      %7641 = vmatmul.mubr.f32.gmra.mrb[0].mxu0 %v7446
      %v7642 = vpop.f32.mrb[0].mxu0
      %v7643 = vadd.f32 0.0, %v7642
      %v7644 = vpop.f32.mrb[0].mxu0
      %7645 = vmatprep.mubr.f32.mxu0 0.0
      %7646 = vmatmul.mubr.f32.gmra.mrb[0].mxu0 %v7449
      %v7647 = vpop.f32.mrb[0].mxu0
      %v7648 = vadd.f32 0.0, %v7647
      %v7649 = vpop.f32.mrb[0].mxu0
      %7650 = vmatprep.mubr.f32.mxu0 0.0
      %7651 = vmatmul.mubr.f32.gmra.mrb[0].mxu0 %v7452
      %v7652 = vpop.f32.mrb[0].mxu0
      %v7653 = vadd.f32 0.0, %v7652
      %v7654 = vpop.f32.mrb[0].mxu0
      %7655 = vmatprep.mubr.f32.mxu0 0.0
      %7656 = vmatmul.mubr.f32.gmra.mrb[0].mxu0 %v7455
      %v7657 = vpop.f32.mrb[0].mxu0
      %v7658 = vadd.f32 0.0, %v7657
      %v7659 = vpop.f32.mrb[0].mxu0
      %7660 = vmatprep.mubr.f32.mxu0 0.0
      %7661 = vmatmul.mubr.f32.gmra.mrb[0].mxu0 %v7458
      %v7662 = vpop.f32.mrb[0].mxu0
      %v7663 = vadd.f32 0.0, %v7662
      %v7664 = vpop.f32.mrb[0].mxu0
      %7665 = vmatprep.mubr.f32.mxu0 0.0
      %7666 = vmatmul.mubr.f32.gmra.mrb[0].mxu0 %v7461
      %v7667 = vpop.f32.mrb[0].mxu0
      %v7668 = vadd.f32 0.0, %v7667
      %v7669 = vpop.f32.mrb[0].mxu0
      %7670 = vmatprep.mubr.f32.mxu0 0.0
      %7671 = vmatmul.mubr.f32.gmra.mrb[0].mxu0 %v7464
      %v7672 = vpop.f32.mrb[0].mxu0
      %v7673 = vadd.f32 0.0, %v7672
      %v7674 = vpop.f32.mrb[0].mxu0
      %7675 = vmatprep.mubr.f32.mxu0 0.0
      %7676 = vmatmul.mubr.f32.gmra.mrb[0].mxu0 %v7467
      %v7677 = vpop.f32.mrb[0].mxu0
      %v7678 = vadd.f32 0.0, %v7677
      %v7679 = vpop.f32.mrb[0].mxu0
      %7680 = vmatprep.mubr.f32.mxu0 0.0
      %7681 = vmatmul.mubr.f32.gmra.mrb[0].mxu0 %v7470
      %v7682 = vpop.f32.mrb[0].mxu0
      %v7683 = vadd.f32 0.0, %v7682
      %v7684 = vpop.f32.mrb[0].mxu0
      %7685 = vmatprep.mubr.f32.mxu0 0.0
      %7686 = vmatmul.mubr.f32.gmra.mrb[0].mxu0 %v7473
      %v7687 = vpop.f32.mrb[0].mxu0
      %v7688 = vadd.f32 0.0, %v7687
      %v7689 = vpop.f32.mrb[0].mxu0
      %7690 = vmatprep.mubr.f32.mxu0 0.0
      %7691 = vmatmul.mubr.f32.gmra.mrb[0].mxu0 %v7476
      %v7692 = vpop.f32.mrb[0].mxu0
      %v7693 = vadd.f32 0.0, %v7692
      %v7694 = vpop.f32.mrb[0].mxu0
      %7695 = vmatprep.mubr.f32.mxu0 0.0
      %7696 = vmatmul.mubr.f32.gmra.mrb[0].mxu0 %v7479
      %v7697 = vpop.f32.mrb[0].mxu0
      %v7698 = vadd.f32 0.0, %v7697
      %v7699 = vpop.f32.mrb[0].mxu0
      %7700 = vmatprep.mubr.f32.mxu0 0.0
      %7701 = vmatmul.mubr.f32.gmra.mrb[0].mxu0 %v7482
      %v7702 = vpop.f32.mrb[0].mxu0
      %v7703 = vadd.f32 0.0, %v7702
      %v7704 = vpop.f32.mrb[0].mxu0
      %7705 = vmatprep.mubr.f32.mxu0 0.0
      %7706 = vmatmul.mubr.f32.gmra.mrb[0].mxu0 %v7485
      %v7707 = vpop.f32.mrb[0].mxu0
      %v7708 = vadd.f32 0.0, %v7707
      %v7709 = vpop.f32.mrb[0].mxu0
      %7710 = vmatprep.mubr.f32.mxu0 0.0
      %7711 = vmatmul.mubr.f32.gmra.mrb[0].mxu0 %v7488
      %v7712 = vpop.f32.mrb[0].mxu0
      %v7713 = vadd.f32 0.0, %v7712
      %v7714 = vpop.f32.mrb[0].mxu0
      %7715 = vmatprep.mubr.f32.mxu0 0.0
      %7716 = vmatmul.mubr.f32.gmra.mrb[0].mxu0 %v7491
      %v7717 = vpop.f32.mrb[0].mxu0
      %v7718 = vadd.f32 0.0, %v7717
      %v7719 = vpop.f32.mrb[0].mxu0
      %7720 = vdwg.mxu0
      %v7721 = vadd.f32 %v7331, %v7563
      %v7722 = vadd.f32 %v7332, %v7568
      %v7723 = vadd.f32 %v7333, %v7573
      %v7724 = vadd.f32 %v7334, %v7578
      %v7725 = vadd.f32 %v7335, %v7583
      %v7726 = vadd.f32 %v7336, %v7588
      %v7727 = vadd.f32 %v7337, %v7593
      %v7728 = vadd.f32 %v7338, %v7598
      %v7729 = vadd.f32 %v7339, %v7603
      %v7730 = vadd.f32 %v7340, %v7608
      %v7731 = vadd.f32 %v7341, %v7613
      %v7732 = vadd.f32 %v7342, %v7618
      %v7733 = vadd.f32 %v7343, %v7623
      %v7734 = vadd.f32 %v7344, %v7628
      %v7735 = vadd.f32 %v7345, %v7633
      %v7736 = vadd.f32 %v7346, %v7638
      %v7737 = vadd.f32 %v7347, %v7643
      %v7738 = vadd.f32 %v7348, %v7648
      %v7739 = vadd.f32 %v7349, %v7653
      %v7740 = vadd.f32 %v7350, %v7658
      %v7741 = vadd.f32 %v7351, %v7663
      %v7742 = vadd.f32 %v7352, %v7668
      %v7743 = vadd.f32 %v7353, %v7673
      %v7744 = vadd.f32 %v7354, %v7678
      %v7745 = vadd.f32 %v7355, %v7683
      %v7746 = vadd.f32 %v7356, %v7688
      %v7747 = vadd.f32 %v7357, %v7693
      %v7748 = vadd.f32 %v7358, %v7698
      %v7749 = vadd.f32 %v7359, %v7703
      %v7750 = vadd.f32 %v7360, %v7708
      %v7751 = vadd.f32 %v7361, %v7713
      %v7752 = vadd.f32 %v7362, %v7718
      %v7754 = vlaneseq
      %v7755 = vshrl.u32 %v7754, 7
      %v7756 = vsub.s32 0, %v7755
      %v7757 = vrot.slane %v4307, %v7756
      %v7759 = vadd.f32 %v7721, %v7757
      %v7760 = vadd.f32 %v7722, %v7757
      %v7761 = vadd.f32 %v7723, %v7757
      %v7762 = vadd.f32 %v7724, %v7757
      %v7763 = vadd.f32 %v7725, %v7757
      %v7764 = vadd.f32 %v7726, %v7757
      %v7765 = vadd.f32 %v7727, %v7757
      %v7766 = vadd.f32 %v7728, %v7757
      %v7767 = vadd.f32 %v7729, %v7757
      %v7768 = vadd.f32 %v7730, %v7757
      %v7769 = vadd.f32 %v7731, %v7757
      %v7770 = vadd.f32 %v7732, %v7757
      %v7771 = vadd.f32 %v7733, %v7757
      %v7772 = vadd.f32 %v7734, %v7757
      %v7773 = vadd.f32 %v7735, %v7757
      %v7774 = vadd.f32 %v7736, %v7757
      %v7775 = vadd.f32 %v7737, %v7757
      %v7776 = vadd.f32 %v7738, %v7757
      %v7777 = vadd.f32 %v7739, %v7757
      %v7778 = vadd.f32 %v7740, %v7757
      %v7779 = vadd.f32 %v7741, %v7757
      %v7780 = vadd.f32 %v7742, %v7757
      %v7781 = vadd.f32 %v7743, %v7757
      %v7782 = vadd.f32 %v7744, %v7757
      %v7783 = vadd.f32 %v7745, %v7757
      %v7784 = vadd.f32 %v7746, %v7757
      %v7785 = vadd.f32 %v7747, %v7757
      %v7786 = vadd.f32 %v7748, %v7757
      %v7787 = vadd.f32 %v7749, %v7757
      %v7788 = vadd.f32 %v7750, %v7757
      %v7789 = vadd.f32 %v7751, %v7757
      %v7790 = vadd.f32 %v7752, %v7757
      %v7791 = vsel %vm258, %v7759, 0.0
      %v7792 = vsel %vm258, %v7760, 0.0
      %v7793 = vadd.f32 %v7791, %v7792
      %v7794 = vsel %vm258, %v7761, 0.0
      %v7795 = vadd.f32 %v7793, %v7794
      %v7796 = vsel %vm258, %v7762, 0.0
      %v7797 = vadd.f32 %v7795, %v7796
      %v7798 = vsel %vm258, %v7763, 0.0
      %v7799 = vadd.f32 %v7797, %v7798
      %v7800 = vsel %vm258, %v7764, 0.0
      %v7801 = vadd.f32 %v7799, %v7800
      %v7802 = vsel %vm258, %v7765, 0.0
      %v7803 = vadd.f32 %v7801, %v7802
      %v7804 = vsel %vm258, %v7766, 0.0
      %v7805 = vadd.f32 %v7803, %v7804
      %v7806 = vsel %vm258, %v7767, 0.0
      %v7807 = vadd.f32 %v7805, %v7806
      %v7808 = vsel %vm258, %v7768, 0.0
      %v7809 = vadd.f32 %v7807, %v7808
      %v7810 = vsel %vm258, %v7769, 0.0
      %v7811 = vadd.f32 %v7809, %v7810
      %v7812 = vsel %vm258, %v7770, 0.0
      %v7813 = vadd.f32 %v7811, %v7812
      %v7814 = vsel %vm258, %v7771, 0.0
      %v7815 = vadd.f32 %v7813, %v7814
      %v7816 = vsel %vm258, %v7772, 0.0
      %v7817 = vadd.f32 %v7815, %v7816
      %v7818 = vsel %vm258, %v7773, 0.0
      %v7819 = vadd.f32 %v7817, %v7818
      %v7820 = vsel %vm258, %v7774, 0.0
      %v7821 = vadd.f32 %v7819, %v7820
      %v7822 = vsel %vm258, %v7775, 0.0
      %v7823 = vadd.f32 %v7821, %v7822
      %v7824 = vsel %vm258, %v7776, 0.0
      %v7825 = vadd.f32 %v7823, %v7824
      %v7826 = vsel %vm258, %v7777, 0.0
      %v7827 = vadd.f32 %v7825, %v7826
      %v7828 = vsel %vm258, %v7778, 0.0
      %v7829 = vadd.f32 %v7827, %v7828
      %v7830 = vsel %vm258, %v7779, 0.0
      %v7831 = vadd.f32 %v7829, %v7830
      %v7832 = vsel %vm258, %v7780, 0.0
      %v7833 = vadd.f32 %v7831, %v7832
      %v7834 = vsel %vm258, %v7781, 0.0
      %v7835 = vadd.f32 %v7833, %v7834
      %v7836 = vsel %vm258, %v7782, 0.0
      %v7837 = vadd.f32 %v7835, %v7836
      %v7838 = vsel %vm258, %v7783, 0.0
      %v7839 = vadd.f32 %v7837, %v7838
      %v7840 = vsel %vm258, %v7784, 0.0
      %v7841 = vadd.f32 %v7839, %v7840
      %v7842 = vsel %vm258, %v7785, 0.0
      %v7843 = vadd.f32 %v7841, %v7842
      %v7844 = vsel %vm258, %v7786, 0.0
      %v7845 = vadd.f32 %v7843, %v7844
      %v7846 = vsel %vm258, %v7787, 0.0
      %v7847 = vadd.f32 %v7845, %v7846
      %v7848 = vsel %vm258, %v7788, 0.0
      %v7849 = vadd.f32 %v7847, %v7848
      %v7850 = vsel %vm258, %v7789, 0.0
      %v7851 = vadd.f32 %v7849, %v7850
      %v7852 = vsel %vm258, %v7790, 0.0
      %v7853 = vadd.f32 %v7851, %v7852
      %v7854 = vrot.slane %v7853, 4
      %v7855 = vadd.f32 %v7853, %v7854
      %v7856 = vrot.slane %v7855, 2
      %v7857 = vadd.f32 %v7855, %v7856
      %v7858 = vrot.slane %v7857, 1
      %v7859 = vadd.f32 %v7857, %v7858
      %v7860 = vmul.f32 %v7859, %v3929
      %v7861 = vsub.f32 %v7759, %v7860
      %v7862 = vsub.f32 %v7760, %v7860
      %v7863 = vsub.f32 %v7761, %v7860
      %v7864 = vsub.f32 %v7762, %v7860
      %v7865 = vsub.f32 %v7763, %v7860
      %v7866 = vsub.f32 %v7764, %v7860
      %v7867 = vsub.f32 %v7765, %v7860
      %v7868 = vsub.f32 %v7766, %v7860
      %v7869 = vsub.f32 %v7767, %v7860
      %v7870 = vsub.f32 %v7768, %v7860
      %v7871 = vsub.f32 %v7769, %v7860
      %v7872 = vsub.f32 %v7770, %v7860
      %v7873 = vsub.f32 %v7771, %v7860
      %v7874 = vsub.f32 %v7772, %v7860
      %v7875 = vsub.f32 %v7773, %v7860
      %v7876 = vsub.f32 %v7774, %v7860
      %v7877 = vsub.f32 %v7775, %v7860
      %v7878 = vsub.f32 %v7776, %v7860
      %v7879 = vsub.f32 %v7777, %v7860
      %v7880 = vsub.f32 %v7778, %v7860
      %v7881 = vsub.f32 %v7779, %v7860
      %v7882 = vsub.f32 %v7780, %v7860
      %v7883 = vsub.f32 %v7781, %v7860
      %v7884 = vsub.f32 %v7782, %v7860
      %v7885 = vsub.f32 %v7783, %v7860
      %v7886 = vsub.f32 %v7784, %v7860
      %v7887 = vsub.f32 %v7785, %v7860
      %v7888 = vsub.f32 %v7786, %v7860
      %v7889 = vsub.f32 %v7787, %v7860
      %v7890 = vsub.f32 %v7788, %v7860
      %v7891 = vsub.f32 %v7789, %v7860
      %v7892 = vsub.f32 %v7790, %v7860
      %v7893 = vmul.f32 %v7861, %v7861
      %v7894 = vmul.f32 %v7862, %v7862
      %v7895 = vmul.f32 %v7863, %v7863
      %v7896 = vmul.f32 %v7864, %v7864
      %v7897 = vmul.f32 %v7865, %v7865
      %v7898 = vmul.f32 %v7866, %v7866
      %v7899 = vmul.f32 %v7867, %v7867
      %v7900 = vmul.f32 %v7868, %v7868
      %v7901 = vmul.f32 %v7869, %v7869
      %v7902 = vmul.f32 %v7870, %v7870
      %v7903 = vmul.f32 %v7871, %v7871
      %v7904 = vmul.f32 %v7872, %v7872
      %v7905 = vmul.f32 %v7873, %v7873
      %v7906 = vmul.f32 %v7874, %v7874
      %v7907 = vmul.f32 %v7875, %v7875
      %v7908 = vmul.f32 %v7876, %v7876
      %v7909 = vmul.f32 %v7877, %v7877
      %v7910 = vmul.f32 %v7878, %v7878
      %v7911 = vmul.f32 %v7879, %v7879
      %v7912 = vmul.f32 %v7880, %v7880
      %v7913 = vmul.f32 %v7881, %v7881
      %v7914 = vmul.f32 %v7882, %v7882
      %v7915 = vmul.f32 %v7883, %v7883
      %v7916 = vmul.f32 %v7884, %v7884
      %v7917 = vmul.f32 %v7885, %v7885
      %v7918 = vmul.f32 %v7886, %v7886
      %v7919 = vmul.f32 %v7887, %v7887
      %v7920 = vmul.f32 %v7888, %v7888
      %v7921 = vmul.f32 %v7889, %v7889
      %v7922 = vmul.f32 %v7890, %v7890
      %v7923 = vmul.f32 %v7891, %v7891
      %v7924 = vmul.f32 %v7892, %v7892
      %v7925 = vsel %vm258, %v7893, 0.0
      %v7926 = vsel %vm258, %v7894, 0.0
      %v7927 = vadd.f32 %v7925, %v7926
      %v7928 = vsel %vm258, %v7895, 0.0
      %v7929 = vadd.f32 %v7927, %v7928
      %v7930 = vsel %vm258, %v7896, 0.0
      %v7931 = vadd.f32 %v7929, %v7930
      %v7932 = vsel %vm258, %v7897, 0.0
      %v7933 = vadd.f32 %v7931, %v7932
      %v7934 = vsel %vm258, %v7898, 0.0
      %v7935 = vadd.f32 %v7933, %v7934
      %v7936 = vsel %vm258, %v7899, 0.0
      %v7937 = vadd.f32 %v7935, %v7936
      %v7938 = vsel %vm258, %v7900, 0.0
      %v7939 = vadd.f32 %v7937, %v7938
      %v7940 = vsel %vm258, %v7901, 0.0
      %v7941 = vadd.f32 %v7939, %v7940
      %v7942 = vsel %vm258, %v7902, 0.0
      %v7943 = vadd.f32 %v7941, %v7942
      %v7944 = vsel %vm258, %v7903, 0.0
      %v7945 = vadd.f32 %v7943, %v7944
      %v7946 = vsel %vm258, %v7904, 0.0
      %v7947 = vadd.f32 %v7945, %v7946
      %v7948 = vsel %vm258, %v7905, 0.0
      %v7949 = vadd.f32 %v7947, %v7948
      %v7950 = vsel %vm258, %v7906, 0.0
      %v7951 = vadd.f32 %v7949, %v7950
      %v7952 = vsel %vm258, %v7907, 0.0
      %v7953 = vadd.f32 %v7951, %v7952
      %v7954 = vsel %vm258, %v7908, 0.0
      %v7955 = vadd.f32 %v7953, %v7954
      %v7956 = vsel %vm258, %v7909, 0.0
      %v7957 = vadd.f32 %v7955, %v7956
      %v7958 = vsel %vm258, %v7910, 0.0
      %v7959 = vadd.f32 %v7957, %v7958
      %v7960 = vsel %vm258, %v7911, 0.0
      %v7961 = vadd.f32 %v7959, %v7960
      %v7962 = vsel %vm258, %v7912, 0.0
      %v7963 = vadd.f32 %v7961, %v7962
      %v7964 = vsel %vm258, %v7913, 0.0
      %v7965 = vadd.f32 %v7963, %v7964
      %v7966 = vsel %vm258, %v7914, 0.0
      %v7967 = vadd.f32 %v7965, %v7966
      %v7968 = vsel %vm258, %v7915, 0.0
      %v7969 = vadd.f32 %v7967, %v7968
      %v7970 = vsel %vm258, %v7916, 0.0
      %v7971 = vadd.f32 %v7969, %v7970
      %v7972 = vsel %vm258, %v7917, 0.0
      %v7973 = vadd.f32 %v7971, %v7972
      %v7974 = vsel %vm258, %v7918, 0.0
      %v7975 = vadd.f32 %v7973, %v7974
      %v7976 = vsel %vm258, %v7919, 0.0
      %v7977 = vadd.f32 %v7975, %v7976
      %v7978 = vsel %vm258, %v7920, 0.0
      %v7979 = vadd.f32 %v7977, %v7978
      %v7980 = vsel %vm258, %v7921, 0.0
      %v7981 = vadd.f32 %v7979, %v7980
      %v7982 = vsel %vm258, %v7922, 0.0
      %v7983 = vadd.f32 %v7981, %v7982
      %v7984 = vsel %vm258, %v7923, 0.0
      %v7985 = vadd.f32 %v7983, %v7984
      %v7986 = vsel %vm258, %v7924, 0.0
      %v7987 = vadd.f32 %v7985, %v7986
      %v7988 = vrot.slane %v7987, 4
      %v7989 = vadd.f32 %v7987, %v7988
      %v7990 = vrot.slane %v7989, 2
      %v7991 = vadd.f32 %v7989, %v7990
      %v7992 = vrot.slane %v7991, 1
      %v7993 = vadd.f32 %v7991, %v7992
      %v7994 = vmul.f32 %v7993, %v3929
      %v7995 = vadd.f32 %v7994, 1e-05
      %v7996 = vrsqrt.pop %v7995
      %v7997 = vmul.f32 %v7861, %v7996
      %v7998 = vmul.f32 %v7862, %v7996
      %v7999 = vmul.f32 %v7863, %v7996
      %v8000 = vmul.f32 %v7864, %v7996
      %v8001 = vmul.f32 %v7865, %v7996
      %v8002 = vmul.f32 %v7866, %v7996
      %v8003 = vmul.f32 %v7867, %v7996
      %v8004 = vmul.f32 %v7868, %v7996
      %v8005 = vmul.f32 %v7869, %v7996
      %v8006 = vmul.f32 %v7870, %v7996
      %v8007 = vmul.f32 %v7871, %v7996
      %v8008 = vmul.f32 %v7872, %v7996
      %v8009 = vmul.f32 %v7873, %v7996
      %v8010 = vmul.f32 %v7874, %v7996
      %v8011 = vmul.f32 %v7875, %v7996
      %v8012 = vmul.f32 %v7876, %v7996
      %v8013 = vmul.f32 %v7877, %v7996
      %v8014 = vmul.f32 %v7878, %v7996
      %v8015 = vmul.f32 %v7879, %v7996
      %v8016 = vmul.f32 %v7880, %v7996
      %v8017 = vmul.f32 %v7881, %v7996
      %v8018 = vmul.f32 %v7882, %v7996
      %v8019 = vmul.f32 %v7883, %v7996
      %v8020 = vmul.f32 %v7884, %v7996
      %v8021 = vmul.f32 %v7885, %v7996
      %v8022 = vmul.f32 %v7886, %v7996
      %v8023 = vmul.f32 %v7887, %v7996
      %v8024 = vmul.f32 %v7888, %v7996
      %v8025 = vmul.f32 %v7889, %v7996
      %v8026 = vmul.f32 %v7890, %v7996
      %v8027 = vmul.f32 %v7891, %v7996
      %v8028 = vmul.f32 %v7892, %v7996
      %v8029 = vld [vmem:[%s219] sm:$0xff]
      %v8030 = vld [vmem:[%s219 + $0x8] sm:$0xff]
      %v8031 = vld [vmem:[%s219 + $0x10] sm:$0xff]
      %v8032 = vld [vmem:[%s219 + $0x18] sm:$0xff]
      %v8033 = vld [vmem:[%s219 + $0x20] sm:$0xff]
      %v8034 = vld [vmem:[%s219 + $0x28] sm:$0xff]
      %v8035 = vld [vmem:[%s219 + $0x30] sm:$0xff]
      %v8036 = vld [vmem:[%s219 + $0x38] sm:$0xff]
      %v8037 = vld [vmem:[%s219 + $0x40] sm:$0xff]
      %v8038 = vld [vmem:[%s219 + $0x48] sm:$0xff]
      %v8039 = vld [vmem:[%s219 + $0x50] sm:$0xff]
      %v8040 = vld [vmem:[%s219 + $0x58] sm:$0xff]
      %v8041 = vld [vmem:[%s219 + $0x60] sm:$0xff]
      %v8042 = vld [vmem:[%s219 + $0x68] sm:$0xff]
      %v8043 = vld [vmem:[%s219 + $0x70] sm:$0xff]
      %v8044 = vld [vmem:[%s219 + $0x78] sm:$0xff]
      %v8045 = vld [vmem:[%s219 + $0x80] sm:$0xff]
      %v8046 = vld [vmem:[%s219 + $0x88] sm:$0xff]
      %v8047 = vld [vmem:[%s219 + $0x90] sm:$0xff]
      %v8048 = vld [vmem:[%s219 + $0x98] sm:$0xff]
      %v8049 = vld [vmem:[%s219 + $0xa0] sm:$0xff]
      %v8050 = vld [vmem:[%s219 + $0xa8] sm:$0xff]
      %v8051 = vld [vmem:[%s219 + $0xb0] sm:$0xff]
      %v8052 = vld [vmem:[%s219 + $0xb8] sm:$0xff]
      %v8053 = vld [vmem:[%s219 + $0xc0] sm:$0xff]
      %v8054 = vld [vmem:[%s219 + $0xc8] sm:$0xff]
      %v8055 = vld [vmem:[%s219 + $0xd0] sm:$0xff]
      %v8056 = vld [vmem:[%s219 + $0xd8] sm:$0xff]
      %v8057 = vld [vmem:[%s219 + $0xe0] sm:$0xff]
      %v8058 = vld [vmem:[%s219 + $0xe8] sm:$0xff]
      %v8059 = vld [vmem:[%s219 + $0xf0] sm:$0xff]
      %v8060 = vld [vmem:[%s219 + $0xf8] sm:$0xff]
      %v8061 = vadd.f32 %v8029, %v7997
      %v8062 = vadd.f32 %v8030, %v7998
      %v8063 = vadd.f32 %v8031, %v7999
      %v8064 = vadd.f32 %v8032, %v8000
      %v8065 = vadd.f32 %v8033, %v8001
      %v8066 = vadd.f32 %v8034, %v8002
      %v8067 = vadd.f32 %v8035, %v8003
      %v8068 = vadd.f32 %v8036, %v8004
      %v8069 = vadd.f32 %v8037, %v8005
      %v8070 = vadd.f32 %v8038, %v8006
      %v8071 = vadd.f32 %v8039, %v8007
      %v8072 = vadd.f32 %v8040, %v8008
      %v8073 = vadd.f32 %v8041, %v8009
      %v8074 = vadd.f32 %v8042, %v8010
      %v8075 = vadd.f32 %v8043, %v8011
      %v8076 = vadd.f32 %v8044, %v8012
      %v8077 = vadd.f32 %v8045, %v8013
      %v8078 = vadd.f32 %v8046, %v8014
      %v8079 = vadd.f32 %v8047, %v8015
      %v8080 = vadd.f32 %v8048, %v8016
      %v8081 = vadd.f32 %v8049, %v8017
      %v8082 = vadd.f32 %v8050, %v8018
      %v8083 = vadd.f32 %v8051, %v8019
      %v8084 = vadd.f32 %v8052, %v8020
      %v8085 = vadd.f32 %v8053, %v8021
      %v8086 = vadd.f32 %v8054, %v8022
      %v8087 = vadd.f32 %v8055, %v8023
      %v8088 = vadd.f32 %v8056, %v8024
      %v8089 = vadd.f32 %v8057, %v8025
      %v8090 = vadd.f32 %v8058, %v8026
      %v8091 = vadd.f32 %v8059, %v8027
      %v8092 = vadd.f32 %v8060, %v8028
      %8093 = vst.msk [vmem:[%s224] sm:$0xff] %vm258, %v8061
      %8094 = vst.msk [vmem:[%s224 + $0x8] sm:$0xff] %vm258, %v8062
      %8095 = vst.msk [vmem:[%s224 + $0x10] sm:$0xff] %vm258, %v8063
      %8096 = vst.msk [vmem:[%s224 + $0x18] sm:$0xff] %vm258, %v8064
      %8097 = vst.msk [vmem:[%s224 + $0x20] sm:$0xff] %vm258, %v8065
      %8098 = vst.msk [vmem:[%s224 + $0x28] sm:$0xff] %vm258, %v8066
      %8099 = vst.msk [vmem:[%s224 + $0x30] sm:$0xff] %vm258, %v8067
      %8100 = vst.msk [vmem:[%s224 + $0x38] sm:$0xff] %vm258, %v8068
      %8101 = vst.msk [vmem:[%s224 + $0x40] sm:$0xff] %vm258, %v8069
      %8102 = vst.msk [vmem:[%s224 + $0x48] sm:$0xff] %vm258, %v8070
      %8103 = vst.msk [vmem:[%s224 + $0x50] sm:$0xff] %vm258, %v8071
      %8104 = vst.msk [vmem:[%s224 + $0x58] sm:$0xff] %vm258, %v8072
      %8105 = vst.msk [vmem:[%s224 + $0x60] sm:$0xff] %vm258, %v8073
      %8106 = vst.msk [vmem:[%s224 + $0x68] sm:$0xff] %vm258, %v8074
      %8107 = vst.msk [vmem:[%s224 + $0x70] sm:$0xff] %vm258, %v8075
      %8108 = vst.msk [vmem:[%s224 + $0x78] sm:$0xff] %vm258, %v8076
      %8109 = vst.msk [vmem:[%s224 + $0x80] sm:$0xff] %vm258, %v8077
      %8110 = vst.msk [vmem:[%s224 + $0x88] sm:$0xff] %vm258, %v8078
      %8111 = vst.msk [vmem:[%s224 + $0x90] sm:$0xff] %vm258, %v8079
      %8112 = vst.msk [vmem:[%s224 + $0x98] sm:$0xff] %vm258, %v8080
      %8113 = vst.msk [vmem:[%s224 + $0xa0] sm:$0xff] %vm258, %v8081
      %8114 = vst.msk [vmem:[%s224 + $0xa8] sm:$0xff] %vm258, %v8082
      %8115 = vst.msk [vmem:[%s224 + $0xb0] sm:$0xff] %vm258, %v8083
      %8116 = vst.msk [vmem:[%s224 + $0xb8] sm:$0xff] %vm258, %v8084
      %8117 = vst.msk [vmem:[%s224 + $0xc0] sm:$0xff] %vm258, %v8085
      %8118 = vst.msk [vmem:[%s224 + $0xc8] sm:$0xff] %vm258, %v8086
      %8119 = vst.msk [vmem:[%s224 + $0xd0] sm:$0xff] %vm258, %v8087
      %8120 = vst.msk [vmem:[%s224 + $0xd8] sm:$0xff] %vm258, %v8088
      %8121 = vst.msk [vmem:[%s224 + $0xe0] sm:$0xff] %vm258, %v8089
      %8122 = vst.msk [vmem:[%s224 + $0xe8] sm:$0xff] %vm258, %v8090
      %8123 = vst.msk [vmem:[%s224 + $0xf0] sm:$0xff] %vm258, %v8091
      %8124 = vst.msk [vmem:[%s224 + $0xf8] sm:$0xff] %vm258, %v8092
      %p8125 = scmp.lt.s32.totalorder %s16, 1
      %s8126 = scalar_select %p8125, %s16, 1
      %s8127 = smul.addr %s8126, 32
      %s8128 = smul.addr %s8127, 8
      %s8129 = scalar_lea.vmem %s5, %s8128
      // Predicated region
      $region41: #{tpu_custom_call.1} parent=39 // pred_check
        %p8130 = pneg %p144
      $region42: #{tpu_custom_call.1} parent=39 // pred_check_branch
        %8132 = sbr.rel (%p8130) target = $region44
      $region43: #{tpu_custom_call.1} parent=39 // pred_region
        _
      $region44: #{tpu_custom_call.1} parent=39 // pred_fallthru
        _
    $region40: #{tpu_custom_call.1} parent=5 // pred_fallthru
      _
    %p8133 = scmp.le.s32.totalorder 2, %s11
    // Predicated region
    $region45: #{tpu_custom_call.1} parent=5 // pred_check
      %p8134 = pneg %p8133
    $region46: #{tpu_custom_call.1} parent=5 // pred_check_branch
      %8136 = sbr.rel (%p8134) target = $region48
    $region47: #{tpu_custom_call.1} parent=5 // pred_region
      %s8137 = ssub.s32 %s11, 2
      // Predicated region
      $region49: #{tpu_custom_call.1} parent=47 // pred_check
        %p8138 = pneg %p150
      $region50: #{tpu_custom_call.1} parent=47 // pred_check_branch
        %8140 = sbr.rel (%p8138) target = $region52
      $region51: #{tpu_custom_call.1} parent=47 // pred_region
        %p8141 = scmp.lt.s32.totalorder %s17, 1
        %s8142 = scalar_select %p8141, %s17, 1
        %s8143 = smul.addr %s8142, 32
        %s8144 = smul.addr %s8143, 8
        %s8145 = scalar_lea.vmem %s5, %s8144
      $region52: #{tpu_custom_call.1} parent=47 // pred_fallthru
        _
    $region48: #{tpu_custom_call.1} parent=5 // pred_fallthru
      _
  $region6: #{tpu_custom_call.1} parent=0 // loop_footer
    %s15 = sadd.s32 1, %s11
  $region7: #{tpu_custom_call.1} parent=0 // loop_footer_branch
    %10 = sbr.rel target = $region3
  $region8: #{tpu_custom_call.1} parent=0 // loop_exit
    _

</llo_original>
